<compile_context>
chip_gen: v7x
topology: tpu7x:2x2x1
jax: 0.10.0
libtpu: 0.0.40
codegen_flags: <defaults>
</compile_context>

<pallas_src>
import jax
import jax.numpy as jnp
import numpy as np
from jax.experimental import pallas as pl
from jax.experimental.pallas import tpu as pltpu

C = 32          # channels per image
G = 4           # images packed into the 128-lane axis
CL = G * C      # 128 lanes


# ------------------------------ fused kernel --------------------------------
def _make_fused_kernel(H, W):
    H1, W1 = H, W
    H2, W2 = H // 2, W // 2
    H3, W3 = H // 4, W // 4
    Wp2 = W2 + 2
    P2 = (H2 + 2) * Wp2           # padded-flat pixel count, conv2 stage
    G2 = Wp2 + 1                  # guard rows on each side
    Wp3 = W3 + 2
    P3 = (H3 + 2) * Wp3           # padded-flat pixel count, conv3-5 stage
    G3 = Wp3 + 1

    def kernel(x_ref, w1_ref, b1_ref, w2_ref, b2_ref, w3_ref, b3_ref,
               w4_ref, b4_ref, w5_ref, b5_ref, wfc_ref, bfc_ref,
               p1sel_ref, p2sel_ref, mask3_ref,
               o_ref, pf2_ref, pf3_ref):
        f32 = jnp.float32

        # ---- conv1: wrapper-built im2col (H*W, 36) x group weights (36, 128) --
        y1 = jnp.dot(x_ref[0], w1_ref[...], preferred_element_type=f32)
        y1 = jnp.maximum(y1 + b1_ref[...], 0.0)                  # (H1*W1, 128)

        # ---- pool1: row pairs via aligned reshape, col pairs via select-matmul
        t = y1.reshape(H2, 2 * W1, CL)
        rm = jnp.maximum(t[:, :W1, :], t[:, W1:, :]).reshape(H2 * W1, CL)
        pooled1 = jnp.maximum(
            jnp.dot(p1sel_ref[0], rm, preferred_element_type=f32),
            jnp.dot(p1sel_ref[1], rm, preferred_element_type=f32))  # (H2*W2, CL)

        # ---- conv2 on a padded-flat slab (every tap = contiguous slice) ------
        pf2_ref[...] = jnp.zeros_like(pf2_ref)
        for r in range(H2):
            dst = G2 + (r + 1) * Wp2 + 1
            pf2_ref[dst:dst + W2, :] = pooled1[r * W2:(r + 1) * W2, :]
        acc2 = jnp.zeros((P2, CL), f32)
        for tap in range(9):
            ky, kx = tap // 3, tap % 3
            off = G2 + (ky - 1) * Wp2 + (kx - 1)
            acc2 = acc2 + jnp.dot(pf2_ref[off:off + P2, :], w2_ref[tap],
                                  preferred_element_type=f32)
        y2 = jnp.maximum(acc2 + b2_ref[...], 0.0)   # (P2, CL); pad rows = junk

        # ---- pool2 + interior extraction fused into 4 selection matmuls ------
        pooled2 = jnp.dot(p2sel_ref[0], y2, preferred_element_type=f32)
        for k in range(1, 4):
            pooled2 = jnp.maximum(
                pooled2, jnp.dot(p2sel_ref[k], y2, preferred_element_type=f32))
        # pooled2: (H3*W3, CL)

        # ---- conv3/4/5 on the small padded-flat slab -------------------------
        pf3_ref[...] = jnp.zeros_like(pf3_ref)
        for r in range(H3):
            dst = G3 + (r + 1) * Wp3 + 1
            pf3_ref[dst:dst + W3, :] = pooled2[r * W3:(r + 1) * W3, :]
        mask3 = mask3_ref[...]                                    # (P3, CL)

        def conv_small(w_ref, b_ref):
            acc = jnp.zeros((P3, CL), f32)
            for tap in range(9):
                ky, kx = tap // 3, tap % 3
                off = G3 + (ky - 1) * Wp3 + (kx - 1)
                acc = acc + jnp.dot(pf3_ref[off:off + P3, :], w_ref[tap],
                                    preferred_element_type=f32)
            # mask is load-bearing: pad rows would otherwise carry ReLU(bias)>0
            return jnp.maximum(acc + b_ref[...], 0.0) * mask3

        y3 = conv_small(w3_ref, b3_ref)
        pf3_ref[G3:G3 + P3, :] = y3
        y4 = conv_small(w4_ref, b4_ref)
        pf3_ref[G3:G3 + P3, :] = y4
        y5 = conv_small(w5_ref, b5_ref)

        # ---- GAP + FC (group-block-diagonal, lane-dense (1,128) output) ------
        gap = jnp.sum(y5, axis=0, keepdims=True) * (1.0 / (H3 * W3))  # (1, CL)
        logits = (jnp.dot(gap, wfc_ref[...], preferred_element_type=f32)
                  + bfc_ref[...])
        o_ref[0] = logits.astype(o_ref.dtype)

    return kernel


# --------------------------------- wrapper ----------------------------------
def mnist_forward(x_nchw, p):
    x = x_nchw.astype(jnp.float32)
    N, Cin, H, W = x.shape
    assert Cin == 1 and H % 4 == 0 and W % 4 == 0, (N, Cin, H, W)
    n_cls = p["wfc"].shape[1]

    H2, W2 = H // 2, W // 2
    H3, W3 = H // 4, W // 4
    Wp2 = W2 + 2
    P2 = (H2 + 2) * Wp2
    Wp3 = W3 + 2
    P3 = (H3 + 2) * Wp3
    PF2 = P2 + 2 * (Wp2 + 1)
    PF3 = P3 + 2 * (Wp3 + 1)

    # ---- pad batch to a multiple of G (4 images per lane group) -------------
    NG = -(-N // G)
    Np = NG * G
    if Np != N:
        x = jnp.concatenate(
            [x, jnp.zeros((Np - N,) + x.shape[1:], x.dtype)], axis=0)

    # ---- conv1 im2col in plain JAX (layout plumbing only) -------------------
    xi = x[:, 0]                                              # (Np, H, W)
    xp = jnp.pad(xi, ((0, 0), (1, 1), (1, 1)))
    cols = [xp[:, ky:ky + H, kx:kx + W].reshape(Np, H * W)
            for ky in range(3) for kx in range(3)]
    xcol = jnp.stack(cols, axis=-1)                           # (Np, H*W, 9)
    x1 = (xcol.reshape(NG, G, H * W, 9)
               .transpose(0, 2, 1, 3)
               .reshape(NG, H * W, G * 9))                    # column = g*9 + tap

    # ---- group-block-diagonal weights (identical 32x32 blocks per image) ----
    w1f = p["w1"].reshape(9, C)
    w1bd = jnp.zeros((G * 9, CL), jnp.float32)
    for g in range(G):
        w1bd = w1bd.at[g * 9:(g + 1) * 9, g * C:(g + 1) * C].set(w1f)

    def bd_conv(w):                                           # (3,3,C,C)->(9,CL,CL)
        wf = w.reshape(9, C, C)
        out = jnp.zeros((9, CL, CL), jnp.float32)
        for g in range(G):
            out = out.at[:, g * C:(g + 1) * C, g * C:(g + 1) * C].set(wf)
        return out

    def tile_bias(b):                                         # (C,) -> (1, CL)
        return jnp.tile(b.reshape(1, C), (1, G))

    wfc_bd = jnp.zeros((CL, CL), jnp.float32)
    bfc_bd = jnp.zeros((1, CL), jnp.float32)
    for g in range(G):
        wfc_bd = wfc_bd.at[g * C:(g + 1) * C, g * C:g * C + n_cls].set(p["wfc"])
        bfc_bd = bfc_bd.at[0, g * C:g * C + n_cls].set(p["bfc"])

    # ---- constant pooling-selection matrices & pad-row mask (numpy) ---------
    p1sel = np.zeros((2, H2 * W2, H2 * W), np.float32)
    q = np.arange(H2 * W2)
    qh, qw = q // W2, q % W2
    p1sel[0, q, qh * W + 2 * qw] = 1.0
    p1sel[1, q, qh * W + 2 * qw + 1] = 1.0

    p2sel = np.zeros((4, H3 * W3, P2), np.float32)
    q = np.arange(H3 * W3)
    qh, qw = q // W3, q % W3
    for dy in range(2):
        for dx in range(2):
            p2sel[2 * dy + dx, q,
                  (2 * qh + dy + 1) * Wp2 + (2 * qw + dx + 1)] = 1.0

    pidx = np.arange(P3)
    pr, pc = pidx // Wp3, pidx % Wp3
    inter = ((pr >= 1) & (pr <= H3) & (pc >= 1) & (pc <= W3)).astype(np.float32)
    mask3 = np.tile(inter[:, None], (1, CL))

    kernel = _make_fused_kernel(H, W)

    out = pl.pallas_call(
        kernel,
        out_shape=jax.ShapeDtypeStruct((NG, 1, CL), jnp.float32),
        grid=(NG,),
        in_specs=[
            pl.BlockSpec((1, H * W, G * 9), lambda n: (n, 0, 0)),   # x im2col
            pl.BlockSpec((G * 9, CL), lambda n: (0, 0)),            # w1
            pl.BlockSpec((1, CL), lambda n: (0, 0)),                # b1
            pl.BlockSpec((9, CL, CL), lambda n: (0, 0, 0)),         # w2
            pl.BlockSpec((1, CL), lambda n: (0, 0)),                # b2
            pl.BlockSpec((9, CL, CL), lambda n: (0, 0, 0)),         # w3
            pl.BlockSpec((1, CL), lambda n: (0, 0)),                # b3
            pl.BlockSpec((9, CL, CL), lambda n: (0, 0, 0)),         # w4
            pl.BlockSpec((1, CL), lambda n: (0, 0)),                # b4
            pl.BlockSpec((9, CL, CL), lambda n: (0, 0, 0)),         # w5
            pl.BlockSpec((1, CL), lambda n: (0, 0)),                # b5
            pl.BlockSpec((CL, CL), lambda n: (0, 0)),               # wfc
            pl.BlockSpec((1, CL), lambda n: (0, 0)),                # bfc
            pl.BlockSpec((2, H2 * W2, H2 * W), lambda n: (0, 0, 0)),  # pool1 sel
            pl.BlockSpec((4, H3 * W3, P2), lambda n: (0, 0, 0)),      # pool2 sel
            pl.BlockSpec((P3, CL), lambda n: (0, 0)),                 # pad mask
        ],
        out_specs=pl.BlockSpec((1, 1, CL), lambda n: (n, 0, 0)),
        scratch_shapes=[
            pltpu.VMEM((PF2, CL), jnp.float32),      # padded-flat conv2 slab
            pltpu.VMEM((PF3, CL), jnp.float32),      # padded-flat conv3-5 slab
        ],
        compiler_params=pltpu.CompilerParams(
            dimension_semantics=("parallel",),
            vmem_limit_bytes=32 * 1024 * 1024),
    )(x1, w1bd, tile_bias(p["b1"]),
      bd_conv(p["w2"]), tile_bias(p["b2"]),
      bd_conv(p["w3"]), tile_bias(p["b3"]),
      bd_conv(p["w4"]), tile_bias(p["b4"]),
      bd_conv(p["w5"]), tile_bias(p["b5"]),
      wfc_bd, bfc_bd,
      jnp.asarray(p1sel), jnp.asarray(p2sel), jnp.asarray(mask3))

    # (NG, 1, 128) -> (Np, 32) -> (N, n_cls)
    return out.reshape(Np, C)[:N, :n_cls]


# ------------------------- pure-JAX reference & init ------------------------
def reference_forward(x_nchw, p):
    x = jnp.transpose(x_nchw, (0, 2, 3, 1))

    def conv(x, w, b):
        y = jax.lax.conv_general_dilated(
            x, w, (1, 1), "SAME",
            dimension_numbers=("NHWC", "HWIO", "NHWC"))
        return jax.nn.relu(y + b)

    def pool(x):
        N, H, W, Cc = x.shape
        return x.reshape(N, H // 2, 2, W // 2, 2, Cc).max(axis=(2, 4))

    x = pool(conv(x, p["w1"], p["b1"]))
    x = pool(conv(x, p["w2"], p["b2"]))
    x = conv(x, p["w3"], p["b3"])
    x = conv(x, p["w4"], p["b4"])
    x = conv(x, p["w5"], p["b5"])
    gap = x.mean(axis=(1, 2))
    return gap @ p["wfc"] + p["bfc"]


def init_params(key):
    def conv_init(k, cin, cout):
        kw, kb = jax.random.split(k)
        bound = 1.0 / np.sqrt(cin * 9)
        w = jax.random.uniform(kw, (3, 3, cin, cout), jnp.float32, -bound, bound)
        b = jax.random.uniform(kb, (cout,), jnp.float32, -bound, bound)
        return w, b

    ks = jax.random.split(key, 6)
    p = {}
    p["w1"], p["b1"] = conv_init(ks[0], 1, 32)
    p["w2"], p["b2"] = conv_init(ks[1], 32, 32)
    p["w3"], p["b3"] = conv_init(ks[2], 32, 32)
    p["w4"], p["b4"] = conv_init(ks[3], 32, 32)
    p["w5"], p["b5"] = conv_init(ks[4], 32, 32)
    kw, kb = jax.random.split(ks[5])
    bound = 1.0 / np.sqrt(32)
    p["wfc"] = jax.random.uniform(kw, (32, 10), jnp.float32, -bound, bound)
    p["bfc"] = jax.random.uniform(kb, (10,), jnp.float32, -bound, bound)
    return p


# TODO(synk): DeformableConv2d (deformable=True constructor path) is not used by
# the spec's default forward (deformable=False) and is not implemented.

if __name__ == "__main__":
    key = jax.random.PRNGKey(0)
    k_x, k_p = jax.random.split(key)
    # small MNIST-like input: batch=8 (-> 2 grid steps), 1 channel, 16x16 (NCHW)
    x = jax.random.normal(k_x, (8, 1, 16, 16), jnp.float32)
    params = init_params(k_p)

    out = jax.block_until_ready(mnist_forward(x, params))
    assert out.shape == (8, 10), out.shape

    ref = jax.block_until_ready(reference_forward(x, params))
    np.testing.assert_allclose(np.asarray(out), np.asarray(ref),
                               rtol=2e-4, atol=2e-4)
    print("KERNEL_OK")
</pallas_src>

<mosaic_0001>
module attributes {stable_mosaic.version = 11 : i64} {
  func.func @kernel(%arg0: i32, %arg1: memref<1x256x36xf32, #tpu.memory_space<vmem>>, %arg2: memref<36x128xf32, #tpu.memory_space<vmem>>, %arg3: memref<1x128xf32, #tpu.memory_space<vmem>>, %arg4: memref<9x128x128xf32, #tpu.memory_space<vmem>>, %arg5: memref<1x128xf32, #tpu.memory_space<vmem>>, %arg6: memref<9x128x128xf32, #tpu.memory_space<vmem>>, %arg7: memref<1x128xf32, #tpu.memory_space<vmem>>, %arg8: memref<9x128x128xf32, #tpu.memory_space<vmem>>, %arg9: memref<1x128xf32, #tpu.memory_space<vmem>>, %arg10: memref<9x128x128xf32, #tpu.memory_space<vmem>>, %arg11: memref<1x128xf32, #tpu.memory_space<vmem>>, %arg12: memref<128x128xf32, #tpu.memory_space<vmem>>, %arg13: memref<1x128xf32, #tpu.memory_space<vmem>>, %arg14: memref<2x64x128xf32, #tpu.memory_space<vmem>>, %arg15: memref<4x16x100xf32, #tpu.memory_space<vmem>>, %arg16: memref<36x128xf32, #tpu.memory_space<vmem>>, %arg17: memref<1x1x128xf32, #tpu.memory_space<vmem>>, %arg18: memref<122x128xf32, #tpu.memory_space<vmem>>, %arg19: memref<50x128xf32, #tpu.memory_space<vmem>>) attributes {dimension_semantics = [#tpu.dimension_semantics<parallel>], iteration_bounds = array<i64: 2>, scalar_prefetch = 0 : i64, scratch_operands = 2 : i64, tpu.core_type = #tpu.core_type<tc>, window_params = [{transform_indices = @transform_0, window_bounds = array<i64: 1, 256, 36>}, {pipeline_mode = #tpu.pipeline_mode<synchronous>, transform_indices = @transform_1, window_bounds = array<i64: 36, 128>}, {pipeline_mode = #tpu.pipeline_mode<synchronous>, transform_indices = @transform_2, window_bounds = array<i64: 1, 128>}, {pipeline_mode = #tpu.pipeline_mode<synchronous>, transform_indices = @transform_3, window_bounds = array<i64: 9, 128, 128>}, {pipeline_mode = #tpu.pipeline_mode<synchronous>, transform_indices = @transform_4, window_bounds = array<i64: 1, 128>}, {pipeline_mode = #tpu.pipeline_mode<synchronous>, transform_indices = @transform_5, window_bounds = array<i64: 9, 128, 128>}, {pipeline_mode = #tpu.pipeline_mode<synchronous>, transform_indices = @transform_6, window_bounds = array<i64: 1, 128>}, {pipeline_mode = #tpu.pipeline_mode<synchronous>, transform_indices = @transform_7, window_bounds = array<i64: 9, 128, 128>}, {pipeline_mode = #tpu.pipeline_mode<synchronous>, transform_indices = @transform_8, window_bounds = array<i64: 1, 128>}, {pipeline_mode = #tpu.pipeline_mode<synchronous>, transform_indices = @transform_9, window_bounds = array<i64: 9, 128, 128>}, {pipeline_mode = #tpu.pipeline_mode<synchronous>, transform_indices = @transform_10, window_bounds = array<i64: 1, 128>}, {pipeline_mode = #tpu.pipeline_mode<synchronous>, transform_indices = @transform_11, window_bounds = array<i64: 128, 128>}, {pipeline_mode = #tpu.pipeline_mode<synchronous>, transform_indices = @transform_12, window_bounds = array<i64: 1, 128>}, {pipeline_mode = #tpu.pipeline_mode<synchronous>, transform_indices = @transform_13, window_bounds = array<i64: 2, 64, 128>}, {pipeline_mode = #tpu.pipeline_mode<synchronous>, transform_indices = @transform_14, window_bounds = array<i64: 4, 16, 100>}, {pipeline_mode = #tpu.pipeline_mode<synchronous>, transform_indices = @transform_15, window_bounds = array<i64: 36, 128>}, {transform_indices = @transform_16, window_bounds = array<i64: 1, 1, 128>}]} {
    %c0 = arith.constant 0 : index
    %c0_0 = arith.constant 0 : index
    %c0_1 = arith.constant 0 : index
    %0 = vector.load %arg1[%c0, %c0_0, %c0_1] : memref<1x256x36xf32, #tpu.memory_space<vmem>>, vector<1x256x36xf32>
    %1 = vector.shape_cast %0 : vector<1x256x36xf32> to vector<256x36xf32>
    %c0_2 = arith.constant 0 : index
    %c0_3 = arith.constant 0 : index
    %2 = vector.load %arg2[%c0_2, %c0_3] : memref<36x128xf32, #tpu.memory_space<vmem>>, vector<36x128xf32>
    %cst = arith.constant dense<0.000000e+00> : vector<256x128xf32>
    %3 = tpu.matmul %1, %2, %cst {dimension_numbers = #tpu.dot_dimension_numbers<[1], [0], [0], [1], [0, 0, 1, 1], [], []>} : vector<256x36xf32>, vector<36x128xf32>, vector<256x128xf32> -> vector<256x128xf32>
    %c0_4 = arith.constant 0 : index
    %c0_5 = arith.constant 0 : index
    %4 = vector.load %arg3[%c0_4, %c0_5] : memref<1x128xf32, #tpu.memory_space<vmem>>, vector<1x128xf32>
    %5 = vector.broadcast %4 : vector<1x128xf32> to vector<256x128xf32>
    %6 = arith.addf %3, %5 : vector<256x128xf32>
    %cst_6 = arith.constant 0.000000e+00 : f32
    %7 = vector.broadcast %cst_6 : f32 to vector<256x128xf32>
    %8 = arith.maximumf %6, %7 : vector<256x128xf32>
    %9 = vector.shape_cast %8 : vector<256x128xf32> to vector<8x32x128xf32>
    %10 = vector.extract_strided_slice %9 {offsets = [0, 0, 0], sizes = [8, 16, 128], strides = [1, 1, 1]} : vector<8x32x128xf32> to vector<8x16x128xf32>
    %11 = vector.extract_strided_slice %9 {offsets = [0, 16, 0], sizes = [8, 16, 128], strides = [1, 1, 1]} : vector<8x32x128xf32> to vector<8x16x128xf32>
    %12 = arith.maximumf %10, %11 : vector<8x16x128xf32>
    %13 = vector.shape_cast %12 : vector<8x16x128xf32> to vector<128x128xf32>
    %c0_7 = arith.constant 0 : index
    %c0_8 = arith.constant 0 : index
    %c0_9 = arith.constant 0 : index
    %14 = vector.load %arg14[%c0_7, %c0_8, %c0_9] : memref<2x64x128xf32, #tpu.memory_space<vmem>>, vector<1x64x128xf32>
    %15 = vector.shape_cast %14 : vector<1x64x128xf32> to vector<64x128xf32>
    %cst_10 = arith.constant dense<0.000000e+00> : vector<64x128xf32>
    %16 = tpu.matmul %15, %13, %cst_10 {dimension_numbers = #tpu.dot_dimension_numbers<[1], [0], [0], [1], [0, 0, 1, 1], [], []>} : vector<64x128xf32>, vector<128x128xf32>, vector<64x128xf32> -> vector<64x128xf32>
    %c1 = arith.constant 1 : index
    %c0_11 = arith.constant 0 : index
    %c0_12 = arith.constant 0 : index
    %17 = vector.load %arg14[%c1, %c0_11, %c0_12] : memref<2x64x128xf32, #tpu.memory_space<vmem>>, vector<1x64x128xf32>
    %18 = vector.shape_cast %17 : vector<1x64x128xf32> to vector<64x128xf32>
    %cst_13 = arith.constant dense<0.000000e+00> : vector<64x128xf32>
    %19 = tpu.matmul %18, %13, %cst_13 {dimension_numbers = #tpu.dot_dimension_numbers<[1], [0], [0], [1], [0, 0, 1, 1], [], []>} : vector<64x128xf32>, vector<128x128xf32>, vector<64x128xf32> -> vector<64x128xf32>
    %20 = arith.maximumf %16, %19 : vector<64x128xf32>
    %cst_14 = arith.constant 0.000000e+00 : f32
    %21 = vector.broadcast %cst_14 : f32 to vector<122x128xf32>
    %c0_15 = arith.constant 0 : index
    %c0_16 = arith.constant 0 : index
    %22 = vector.load %arg18[%c0_15, %c0_16] : memref<122x128xf32, #tpu.memory_space<vmem>>, vector<122x128xf32>
    tpu.vector_store %arg18[%c0_15, %c0_16], %21 {strides = array<i32>} : memref<122x128xf32, #tpu.memory_space<vmem>>, vector<122x128xf32>,
    %23 = vector.extract_strided_slice %20 {offsets = [0, 0], sizes = [8, 128], strides = [1, 1]} : vector<64x128xf32> to vector<8x128xf32>
    %c22 = arith.constant 22 : index
    %c0_17 = arith.constant 0 : index
    %24 = vector.load %arg18[%c22, %c0_17] : memref<122x128xf32, #tpu.memory_space<vmem>>, vector<8x128xf32>
    tpu.vector_store %arg18[%c22, %c0_17], %23 {strides = array<i32>} : memref<122x128xf32, #tpu.memory_space<vmem>>, vector<8x128xf32>,
    %25 = vector.extract_strided_slice %20 {offsets = [8, 0], sizes = [8, 128], strides = [1, 1]} : vector<64x128xf32> to vector<8x128xf32>
    %c32 = arith.constant 32 : index
    %c0_18 = arith.constant 0 : index
    %26 = vector.load %arg18[%c32, %c0_18] : memref<122x128xf32, #tpu.memory_space<vmem>>, vector<8x128xf32>
    tpu.vector_store %arg18[%c32, %c0_18], %25 {strides = array<i32>} : memref<122x128xf32, #tpu.memory_space<vmem>>, vector<8x128xf32>,
    %27 = vector.extract_strided_slice %20 {offsets = [16, 0], sizes = [8, 128], strides = [1, 1]} : vector<64x128xf32> to vector<8x128xf32>
    %c42 = arith.constant 42 : index
    %c0_19 = arith.constant 0 : index
    %28 = vector.load %arg18[%c42, %c0_19] : memref<122x128xf32, #tpu.memory_space<vmem>>, vector<8x128xf32>
    tpu.vector_store %arg18[%c42, %c0_19], %27 {strides = array<i32>} : memref<122x128xf32, #tpu.memory_space<vmem>>, vector<8x128xf32>,
    %29 = vector.extract_strided_slice %20 {offsets = [24, 0], sizes = [8, 128], strides = [1, 1]} : vector<64x128xf32> to vector<8x128xf32>
    %c52 = arith.constant 52 : index
    %c0_20 = arith.constant 0 : index
    %30 = vector.load %arg18[%c52, %c0_20] : memref<122x128xf32, #tpu.memory_space<vmem>>, vector<8x128xf32>
    tpu.vector_store %arg18[%c52, %c0_20], %29 {strides = array<i32>} : memref<122x128xf32, #tpu.memory_space<vmem>>, vector<8x128xf32>,
    %31 = vector.extract_strided_slice %20 {offsets = [32, 0], sizes = [8, 128], strides = [1, 1]} : vector<64x128xf32> to vector<8x128xf32>
    %c62 = arith.constant 62 : index
    %c0_21 = arith.constant 0 : index
    %32 = vector.load %arg18[%c62, %c0_21] : memref<122x128xf32, #tpu.memory_space<vmem>>, vector<8x128xf32>
    tpu.vector_store %arg18[%c62, %c0_21], %31 {strides = array<i32>} : memref<122x128xf32, #tpu.memory_space<vmem>>, vector<8x128xf32>,
    %33 = vector.extract_strided_slice %20 {offsets = [40, 0], sizes = [8, 128], strides = [1, 1]} : vector<64x128xf32> to vector<8x128xf32>
    %c72 = arith.constant 72 : index
    %c0_22 = arith.constant 0 : index
    %34 = vector.load %arg18[%c72, %c0_22] : memref<122x128xf32, #tpu.memory_space<vmem>>, vector<8x128xf32>
    tpu.vector_store %arg18[%c72, %c0_22], %33 {strides = array<i32>} : memref<122x128xf32, #tpu.memory_space<vmem>>, vector<8x128xf32>,
    %35 = vector.extract_strided_slice %20 {offsets = [48, 0], sizes = [8, 128], strides = [1, 1]} : vector<64x128xf32> to vector<8x128xf32>
    %c82 = arith.constant 82 : index
    %c0_23 = arith.constant 0 : index
    %36 = vector.load %arg18[%c82, %c0_23] : memref<122x128xf32, #tpu.memory_space<vmem>>, vector<8x128xf32>
    tpu.vector_store %arg18[%c82, %c0_23], %35 {strides = array<i32>} : memref<122x128xf32, #tpu.memory_space<vmem>>, vector<8x128xf32>,
    %37 = vector.extract_strided_slice %20 {offsets = [56, 0], sizes = [8, 128], strides = [1, 1]} : vector<64x128xf32> to vector<8x128xf32>
    %c92 = arith.constant 92 : index
    %c0_24 = arith.constant 0 : index
    %38 = vector.load %arg18[%c92, %c0_24] : memref<122x128xf32, #tpu.memory_space<vmem>>, vector<8x128xf32>
    tpu.vector_store %arg18[%c92, %c0_24], %37 {strides = array<i32>} : memref<122x128xf32, #tpu.memory_space<vmem>>, vector<8x128xf32>,
    %cst_25 = arith.constant 0.000000e+00 : f32
    %39 = vector.broadcast %cst_25 : f32 to vector<100x128xf32>
    %c0_26 = arith.constant 0 : index
    %c0_27 = arith.constant 0 : index
    %40 = vector.load %arg18[%c0_26, %c0_27] : memref<122x128xf32, #tpu.memory_space<vmem>>, vector<100x128xf32>
    %c0_28 = arith.constant 0 : index
    %c0_29 = arith.constant 0 : index
    %c0_30 = arith.constant 0 : index
    %41 = vector.load %arg4[%c0_28, %c0_29, %c0_30] : memref<9x128x128xf32, #tpu.memory_space<vmem>>, vector<1x128x128xf32>
    %42 = vector.shape_cast %41 : vector<1x128x128xf32> to vector<128x128xf32>
    %cst_31 = arith.constant dense<0.000000e+00> : vector<100x128xf32>
    %43 = tpu.matmul %40, %42, %cst_31 {dimension_numbers = #tpu.dot_dimension_numbers<[1], [0], [0], [1], [0, 0, 1, 1], [], []>} : vector<100x128xf32>, vector<128x128xf32>, vector<100x128xf32> -> vector<100x128xf32>
    %44 = arith.addf %39, %43 : vector<100x128xf32>
    %c1_32 = arith.constant 1 : index
    %c0_33 = arith.constant 0 : index
    %45 = vector.load %arg18[%c1_32, %c0_33] : memref<122x128xf32, #tpu.memory_space<vmem>>, vector<100x128xf32>
    %c1_34 = arith.constant 1 : index
    %c0_35 = arith.constant 0 : index
    %c0_36 = arith.constant 0 : index
    %46 = vector.load %arg4[%c1_34, %c0_35, %c0_36] : memref<9x128x128xf32, #tpu.memory_space<vmem>>, vector<1x128x128xf32>
    %47 = vector.shape_cast %46 : vector<1x128x128xf32> to vector<128x128xf32>
    %cst_37 = arith.constant dense<0.000000e+00> : vector<100x128xf32>
    %48 = tpu.matmul %45, %47, %cst_37 {dimension_numbers = #tpu.dot_dimension_numbers<[1], [0], [0], [1], [0, 0, 1, 1], [], []>} : vector<100x128xf32>, vector<128x128xf32>, vector<100x128xf32> -> vector<100x128xf32>
    %49 = arith.addf %44, %48 : vector<100x128xf32>
    %c2 = arith.constant 2 : index
    %c0_38 = arith.constant 0 : index
    %50 = vector.load %arg18[%c2, %c0_38] : memref<122x128xf32, #tpu.memory_space<vmem>>, vector<100x128xf32>
    %c2_39 = arith.constant 2 : index
    %c0_40 = arith.constant 0 : index
    %c0_41 = arith.constant 0 : index
    %51 = vector.load %arg4[%c2_39, %c0_40, %c0_41] : memref<9x128x128xf32, #tpu.memory_space<vmem>>, vector<1x128x128xf32>
    %52 = vector.shape_cast %51 : vector<1x128x128xf32> to vector<128x128xf32>
    %cst_42 = arith.constant dense<0.000000e+00> : vector<100x128xf32>
    %53 = tpu.matmul %50, %52, %cst_42 {dimension_numbers = #tpu.dot_dimension_numbers<[1], [0], [0], [1], [0, 0, 1, 1], [], []>} : vector<100x128xf32>, vector<128x128xf32>, vector<100x128xf32> -> vector<100x128xf32>
    %54 = arith.addf %49, %53 : vector<100x128xf32>
    %c10 = arith.constant 10 : index
    %c0_43 = arith.constant 0 : index
    %55 = vector.load %arg18[%c10, %c0_43] : memref<122x128xf32, #tpu.memory_space<vmem>>, vector<100x128xf32>
    %c3 = arith.constant 3 : index
    %c0_44 = arith.constant 0 : index
    %c0_45 = arith.constant 0 : index
    %56 = vector.load %arg4[%c3, %c0_44, %c0_45] : memref<9x128x128xf32, #tpu.memory_space<vmem>>, vector<1x128x128xf32>
    %57 = vector.shape_cast %56 : vector<1x128x128xf32> to vector<128x128xf32>
    %cst_46 = arith.constant dense<0.000000e+00> : vector<100x128xf32>
    %58 = tpu.matmul %55, %57, %cst_46 {dimension_numbers = #tpu.dot_dimension_numbers<[1], [0], [0], [1], [0, 0, 1, 1], [], []>} : vector<100x128xf32>, vector<128x128xf32>, vector<100x128xf32> -> vector<100x128xf32>
    %59 = arith.addf %54, %58 : vector<100x128xf32>
    %c11 = arith.constant 11 : index
    %c0_47 = arith.constant 0 : index
    %60 = vector.load %arg18[%c11, %c0_47] : memref<122x128xf32, #tpu.memory_space<vmem>>, vector<100x128xf32>
    %c4 = arith.constant 4 : index
    %c0_48 = arith.constant 0 : index
    %c0_49 = arith.constant 0 : index
    %61 = vector.load %arg4[%c4, %c0_48, %c0_49] : memref<9x128x128xf32, #tpu.memory_space<vmem>>, vector<1x128x128xf32>
    %62 = vector.shape_cast %61 : vector<1x128x128xf32> to vector<128x128xf32>
    %cst_50 = arith.constant dense<0.000000e+00> : vector<100x128xf32>
    %63 = tpu.matmul %60, %62, %cst_50 {dimension_numbers = #tpu.dot_dimension_numbers<[1], [0], [0], [1], [0, 0, 1, 1], [], []>} : vector<100x128xf32>, vector<128x128xf32>, vector<100x128xf32> -> vector<100x128xf32>
    %64 = arith.addf %59, %63 : vector<100x128xf32>
    %c12 = arith.constant 12 : index
    %c0_51 = arith.constant 0 : index
    %65 = vector.load %arg18[%c12, %c0_51] : memref<122x128xf32, #tpu.memory_space<vmem>>, vector<100x128xf32>
    %c5 = arith.constant 5 : index
    %c0_52 = arith.constant 0 : index
    %c0_53 = arith.constant 0 : index
    %66 = vector.load %arg4[%c5, %c0_52, %c0_53] : memref<9x128x128xf32, #tpu.memory_space<vmem>>, vector<1x128x128xf32>
    %67 = vector.shape_cast %66 : vector<1x128x128xf32> to vector<128x128xf32>
    %cst_54 = arith.constant dense<0.000000e+00> : vector<100x128xf32>
    %68 = tpu.matmul %65, %67, %cst_54 {dimension_numbers = #tpu.dot_dimension_numbers<[1], [0], [0], [1], [0, 0, 1, 1], [], []>} : vector<100x128xf32>, vector<128x128xf32>, vector<100x128xf32> -> vector<100x128xf32>
    %69 = arith.addf %64, %68 : vector<100x128xf32>
    %c20 = arith.constant 20 : index
    %c0_55 = arith.constant 0 : index
    %70 = vector.load %arg18[%c20, %c0_55] : memref<122x128xf32, #tpu.memory_space<vmem>>, vector<100x128xf32>
    %c6 = arith.constant 6 : index
    %c0_56 = arith.constant 0 : index
    %c0_57 = arith.constant 0 : index
    %71 = vector.load %arg4[%c6, %c0_56, %c0_57] : memref<9x128x128xf32, #tpu.memory_space<vmem>>, vector<1x128x128xf32>
    %72 = vector.shape_cast %71 : vector<1x128x128xf32> to vector<128x128xf32>
    %cst_58 = arith.constant dense<0.000000e+00> : vector<100x128xf32>
    %73 = tpu.matmul %70, %72, %cst_58 {dimension_numbers = #tpu.dot_dimension_numbers<[1], [0], [0], [1], [0, 0, 1, 1], [], []>} : vector<100x128xf32>, vector<128x128xf32>, vector<100x128xf32> -> vector<100x128xf32>
    %74 = arith.addf %69, %73 : vector<100x128xf32>
    %c21 = arith.constant 21 : index
    %c0_59 = arith.constant 0 : index
    %75 = vector.load %arg18[%c21, %c0_59] : memref<122x128xf32, #tpu.memory_space<vmem>>, vector<100x128xf32>
    %c7 = arith.constant 7 : index
    %c0_60 = arith.constant 0 : index
    %c0_61 = arith.constant 0 : index
    %76 = vector.load %arg4[%c7, %c0_60, %c0_61] : memref<9x128x128xf32, #tpu.memory_space<vmem>>, vector<1x128x128xf32>
    %77 = vector.shape_cast %76 : vector<1x128x128xf32> to vector<128x128xf32>
    %cst_62 = arith.constant dense<0.000000e+00> : vector<100x128xf32>
    %78 = tpu.matmul %75, %77, %cst_62 {dimension_numbers = #tpu.dot_dimension_numbers<[1], [0], [0], [1], [0, 0, 1, 1], [], []>} : vector<100x128xf32>, vector<128x128xf32>, vector<100x128xf32> -> vector<100x128xf32>
    %79 = arith.addf %74, %78 : vector<100x128xf32>
    %c22_63 = arith.constant 22 : index
    %c0_64 = arith.constant 0 : index
    %80 = vector.load %arg18[%c22_63, %c0_64] : memref<122x128xf32, #tpu.memory_space<vmem>>, vector<100x128xf32>
    %c8 = arith.constant 8 : index
    %c0_65 = arith.constant 0 : index
    %c0_66 = arith.constant 0 : index
    %81 = vector.load %arg4[%c8, %c0_65, %c0_66] : memref<9x128x128xf32, #tpu.memory_space<vmem>>, vector<1x128x128xf32>
    %82 = vector.shape_cast %81 : vector<1x128x128xf32> to vector<128x128xf32>
    %cst_67 = arith.constant dense<0.000000e+00> : vector<100x128xf32>
    %83 = tpu.matmul %80, %82, %cst_67 {dimension_numbers = #tpu.dot_dimension_numbers<[1], [0], [0], [1], [0, 0, 1, 1], [], []>} : vector<100x128xf32>, vector<128x128xf32>, vector<100x128xf32> -> vector<100x128xf32>
    %84 = arith.addf %79, %83 : vector<100x128xf32>
    %c0_68 = arith.constant 0 : index
    %c0_69 = arith.constant 0 : index
    %85 = vector.load %arg5[%c0_68, %c0_69] : memref<1x128xf32, #tpu.memory_space<vmem>>, vector<1x128xf32>
    %86 = vector.broadcast %85 : vector<1x128xf32> to vector<100x128xf32>
    %87 = arith.addf %84, %86 : vector<100x128xf32>
    %cst_70 = arith.constant 0.000000e+00 : f32
    %88 = vector.broadcast %cst_70 : f32 to vector<100x128xf32>
    %89 = arith.maximumf %87, %88 : vector<100x128xf32>
    %c0_71 = arith.constant 0 : index
    %c0_72 = arith.constant 0 : index
    %c0_73 = arith.constant 0 : index
    %90 = vector.load %arg15[%c0_71, %c0_72, %c0_73] : memref<4x16x100xf32, #tpu.memory_space<vmem>>, vector<1x16x100xf32>
    %91 = vector.shape_cast %90 : vector<1x16x100xf32> to vector<16x100xf32>
    %cst_74 = arith.constant dense<0.000000e+00> : vector<16x128xf32>
    %92 = tpu.matmul %91, %89, %cst_74 {dimension_numbers = #tpu.dot_dimension_numbers<[1], [0], [0], [1], [0, 0, 1, 1], [], []>} : vector<16x100xf32>, vector<100x128xf32>, vector<16x128xf32> -> vector<16x128xf32>
    %c1_75 = arith.constant 1 : index
    %c0_76 = arith.constant 0 : index
    %c0_77 = arith.constant 0 : index
    %93 = vector.load %arg15[%c1_75, %c0_76, %c0_77] : memref<4x16x100xf32, #tpu.memory_space<vmem>>, vector<1x16x100xf32>
    %94 = vector.shape_cast %93 : vector<1x16x100xf32> to vector<16x100xf32>
    %cst_78 = arith.constant dense<0.000000e+00> : vector<16x128xf32>
    %95 = tpu.matmul %94, %89, %cst_78 {dimension_numbers = #tpu.dot_dimension_numbers<[1], [0], [0], [1], [0, 0, 1, 1], [], []>} : vector<16x100xf32>, vector<100x128xf32>, vector<16x128xf32> -> vector<16x128xf32>
    %96 = arith.maximumf %92, %95 : vector<16x128xf32>
    %c2_79 = arith.constant 2 : index
    %c0_80 = arith.constant 0 : index
    %c0_81 = arith.constant 0 : index
    %97 = vector.load %arg15[%c2_79, %c0_80, %c0_81] : memref<4x16x100xf32, #tpu.memory_space<vmem>>, vector<1x16x100xf32>
    %98 = vector.shape_cast %97 : vector<1x16x100xf32> to vector<16x100xf32>
    %cst_82 = arith.constant dense<0.000000e+00> : vector<16x128xf32>
    %99 = tpu.matmul %98, %89, %cst_82 {dimension_numbers = #tpu.dot_dimension_numbers<[1], [0], [0], [1], [0, 0, 1, 1], [], []>} : vector<16x100xf32>, vector<100x128xf32>, vector<16x128xf32> -> vector<16x128xf32>
    %100 = arith.maximumf %96, %99 : vector<16x128xf32>
    %c3_83 = arith.constant 3 : index
    %c0_84 = arith.constant 0 : index
    %c0_85 = arith.constant 0 : index
    %101 = vector.load %arg15[%c3_83, %c0_84, %c0_85] : memref<4x16x100xf32, #tpu.memory_space<vmem>>, vector<1x16x100xf32>
    %102 = vector.shape_cast %101 : vector<1x16x100xf32> to vector<16x100xf32>
    %cst_86 = arith.constant dense<0.000000e+00> : vector<16x128xf32>
    %103 = tpu.matmul %102, %89, %cst_86 {dimension_numbers = #tpu.dot_dimension_numbers<[1], [0], [0], [1], [0, 0, 1, 1], [], []>} : vector<16x100xf32>, vector<100x128xf32>, vector<16x128xf32> -> vector<16x128xf32>
    %104 = arith.maximumf %100, %103 : vector<16x128xf32>
    %cst_87 = arith.constant 0.000000e+00 : f32
    %105 = vector.broadcast %cst_87 : f32 to vector<50x128xf32>
    %c0_88 = arith.constant 0 : index
    %c0_89 = arith.constant 0 : index
    %106 = vector.load %arg19[%c0_88, %c0_89] : memref<50x128xf32, #tpu.memory_space<vmem>>, vector<50x128xf32>
    tpu.vector_store %arg19[%c0_88, %c0_89], %105 {strides = array<i32>} : memref<50x128xf32, #tpu.memory_space<vmem>>, vector<50x128xf32>,
    %107 = vector.extract_strided_slice %104 {offsets = [0, 0], sizes = [4, 128], strides = [1, 1]} : vector<16x128xf32> to vector<4x128xf32>
    %c14 = arith.constant 14 : index
    %c0_90 = arith.constant 0 : index
    %108 = vector.load %arg19[%c14, %c0_90] : memref<50x128xf32, #tpu.memory_space<vmem>>, vector<4x128xf32>
    tpu.vector_store %arg19[%c14, %c0_90], %107 {strides = array<i32>} : memref<50x128xf32, #tpu.memory_space<vmem>>, vector<4x128xf32>,
    %109 = vector.extract_strided_slice %104 {offsets = [4, 0], sizes = [4, 128], strides = [1, 1]} : vector<16x128xf32> to vector<4x128xf32>
    %c20_91 = arith.constant 20 : index
    %c0_92 = arith.constant 0 : index
    %110 = vector.load %arg19[%c20_91, %c0_92] : memref<50x128xf32, #tpu.memory_space<vmem>>, vector<4x128xf32>
    tpu.vector_store %arg19[%c20_91, %c0_92], %109 {strides = array<i32>} : memref<50x128xf32, #tpu.memory_space<vmem>>, vector<4x128xf32>,
    %111 = vector.extract_strided_slice %104 {offsets = [8, 0], sizes = [4, 128], strides = [1, 1]} : vector<16x128xf32> to vector<4x128xf32>
    %c26 = arith.constant 26 : index
    %c0_93 = arith.constant 0 : index
    %112 = vector.load %arg19[%c26, %c0_93] : memref<50x128xf32, #tpu.memory_space<vmem>>, vector<4x128xf32>
    tpu.vector_store %arg19[%c26, %c0_93], %111 {strides = array<i32>} : memref<50x128xf32, #tpu.memory_space<vmem>>, vector<4x128xf32>,
    %113 = vector.extract_strided_slice %104 {offsets = [12, 0], sizes = [4, 128], strides = [1, 1]} : vector<16x128xf32> to vector<4x128xf32>
    %c32_94 = arith.constant 32 : index
    %c0_95 = arith.constant 0 : index
    %114 = vector.load %arg19[%c32_94, %c0_95] : memref<50x128xf32, #tpu.memory_space<vmem>>, vector<4x128xf32>
    tpu.vector_store %arg19[%c32_94, %c0_95], %113 {strides = array<i32>} : memref<50x128xf32, #tpu.memory_space<vmem>>, vector<4x128xf32>,
    %c0_96 = arith.constant 0 : index
    %c0_97 = arith.constant 0 : index
    %115 = vector.load %arg16[%c0_96, %c0_97] : memref<36x128xf32, #tpu.memory_space<vmem>>, vector<36x128xf32>
    %cst_98 = arith.constant 0.000000e+00 : f32
    %116 = vector.broadcast %cst_98 : f32 to vector<36x128xf32>
    %c0_99 = arith.constant 0 : index
    %c0_100 = arith.constant 0 : index
    %117 = vector.load %arg19[%c0_99, %c0_100] : memref<50x128xf32, #tpu.memory_space<vmem>>, vector<36x128xf32>
    %c0_101 = arith.constant 0 : index
    %c0_102 = arith.constant 0 : index
    %c0_103 = arith.constant 0 : index
    %118 = vector.load %arg6[%c0_101, %c0_102, %c0_103] : memref<9x128x128xf32, #tpu.memory_space<vmem>>, vector<1x128x128xf32>
    %119 = vector.shape_cast %118 : vector<1x128x128xf32> to vector<128x128xf32>
    %cst_104 = arith.constant dense<0.000000e+00> : vector<36x128xf32>
    %120 = tpu.matmul %117, %119, %cst_104 {dimension_numbers = #tpu.dot_dimension_numbers<[1], [0], [0], [1], [0, 0, 1, 1], [], []>} : vector<36x128xf32>, vector<128x128xf32>, vector<36x128xf32> -> vector<36x128xf32>
    %121 = arith.addf %116, %120 : vector<36x128xf32>
    %c1_105 = arith.constant 1 : index
    %c0_106 = arith.constant 0 : index
    %122 = vector.load %arg19[%c1_105, %c0_106] : memref<50x128xf32, #tpu.memory_space<vmem>>, vector<36x128xf32>
    %c1_107 = arith.constant 1 : index
    %c0_108 = arith.constant 0 : index
    %c0_109 = arith.constant 0 : index
    %123 = vector.load %arg6[%c1_107, %c0_108, %c0_109] : memref<9x128x128xf32, #tpu.memory_space<vmem>>, vector<1x128x128xf32>
    %124 = vector.shape_cast %123 : vector<1x128x128xf32> to vector<128x128xf32>
    %cst_110 = arith.constant dense<0.000000e+00> : vector<36x128xf32>
    %125 = tpu.matmul %122, %124, %cst_110 {dimension_numbers = #tpu.dot_dimension_numbers<[1], [0], [0], [1], [0, 0, 1, 1], [], []>} : vector<36x128xf32>, vector<128x128xf32>, vector<36x128xf32> -> vector<36x128xf32>
    %126 = arith.addf %121, %125 : vector<36x128xf32>
    %c2_111 = arith.constant 2 : index
    %c0_112 = arith.constant 0 : index
    %127 = vector.load %arg19[%c2_111, %c0_112] : memref<50x128xf32, #tpu.memory_space<vmem>>, vector<36x128xf32>
    %c2_113 = arith.constant 2 : index
    %c0_114 = arith.constant 0 : index
    %c0_115 = arith.constant 0 : index
    %128 = vector.load %arg6[%c2_113, %c0_114, %c0_115] : memref<9x128x128xf32, #tpu.memory_space<vmem>>, vector<1x128x128xf32>
    %129 = vector.shape_cast %128 : vector<1x128x128xf32> to vector<128x128xf32>
    %cst_116 = arith.constant dense<0.000000e+00> : vector<36x128xf32>
    %130 = tpu.matmul %127, %129, %cst_116 {dimension_numbers = #tpu.dot_dimension_numbers<[1], [0], [0], [1], [0, 0, 1, 1], [], []>} : vector<36x128xf32>, vector<128x128xf32>, vector<36x128xf32> -> vector<36x128xf32>
    %131 = arith.addf %126, %130 : vector<36x128xf32>
    %c6_117 = arith.constant 6 : index
    %c0_118 = arith.constant 0 : index
    %132 = vector.load %arg19[%c6_117, %c0_118] : memref<50x128xf32, #tpu.memory_space<vmem>>, vector<36x128xf32>
    %c3_119 = arith.constant 3 : index
    %c0_120 = arith.constant 0 : index
    %c0_121 = arith.constant 0 : index
    %133 = vector.load %arg6[%c3_119, %c0_120, %c0_121] : memref<9x128x128xf32, #tpu.memory_space<vmem>>, vector<1x128x128xf32>
    %134 = vector.shape_cast %133 : vector<1x128x128xf32> to vector<128x128xf32>
    %cst_122 = arith.constant dense<0.000000e+00> : vector<36x128xf32>
    %135 = tpu.matmul %132, %134, %cst_122 {dimension_numbers = #tpu.dot_dimension_numbers<[1], [0], [0], [1], [0, 0, 1, 1], [], []>} : vector<36x128xf32>, vector<128x128xf32>, vector<36x128xf32> -> vector<36x128xf32>
    %136 = arith.addf %131, %135 : vector<36x128xf32>
    %c7_123 = arith.constant 7 : index
    %c0_124 = arith.constant 0 : index
    %137 = vector.load %arg19[%c7_123, %c0_124] : memref<50x128xf32, #tpu.memory_space<vmem>>, vector<36x128xf32>
    %c4_125 = arith.constant 4 : index
    %c0_126 = arith.constant 0 : index
    %c0_127 = arith.constant 0 : index
    %138 = vector.load %arg6[%c4_125, %c0_126, %c0_127] : memref<9x128x128xf32, #tpu.memory_space<vmem>>, vector<1x128x128xf32>
    %139 = vector.shape_cast %138 : vector<1x128x128xf32> to vector<128x128xf32>
    %cst_128 = arith.constant dense<0.000000e+00> : vector<36x128xf32>
    %140 = tpu.matmul %137, %139, %cst_128 {dimension_numbers = #tpu.dot_dimension_numbers<[1], [0], [0], [1], [0, 0, 1, 1], [], []>} : vector<36x128xf32>, vector<128x128xf32>, vector<36x128xf32> -> vector<36x128xf32>
    %141 = arith.addf %136, %140 : vector<36x128xf32>
    %c8_129 = arith.constant 8 : index
    %c0_130 = arith.constant 0 : index
    %142 = vector.load %arg19[%c8_129, %c0_130] : memref<50x128xf32, #tpu.memory_space<vmem>>, vector<36x128xf32>
    %c5_131 = arith.constant 5 : index
    %c0_132 = arith.constant 0 : index
    %c0_133 = arith.constant 0 : index
    %143 = vector.load %arg6[%c5_131, %c0_132, %c0_133] : memref<9x128x128xf32, #tpu.memory_space<vmem>>, vector<1x128x128xf32>
    %144 = vector.shape_cast %143 : vector<1x128x128xf32> to vector<128x128xf32>
    %cst_134 = arith.constant dense<0.000000e+00> : vector<36x128xf32>
    %145 = tpu.matmul %142, %144, %cst_134 {dimension_numbers = #tpu.dot_dimension_numbers<[1], [0], [0], [1], [0, 0, 1, 1], [], []>} : vector<36x128xf32>, vector<128x128xf32>, vector<36x128xf32> -> vector<36x128xf32>
    %146 = arith.addf %141, %145 : vector<36x128xf32>
    %c12_135 = arith.constant 12 : index
    %c0_136 = arith.constant 0 : index
    %147 = vector.load %arg19[%c12_135, %c0_136] : memref<50x128xf32, #tpu.memory_space<vmem>>, vector<36x128xf32>
    %c6_137 = arith.constant 6 : index
    %c0_138 = arith.constant 0 : index
    %c0_139 = arith.constant 0 : index
    %148 = vector.load %arg6[%c6_137, %c0_138, %c0_139] : memref<9x128x128xf32, #tpu.memory_space<vmem>>, vector<1x128x128xf32>
    %149 = vector.shape_cast %148 : vector<1x128x128xf32> to vector<128x128xf32>
    %cst_140 = arith.constant dense<0.000000e+00> : vector<36x128xf32>
    %150 = tpu.matmul %147, %149, %cst_140 {dimension_numbers = #tpu.dot_dimension_numbers<[1], [0], [0], [1], [0, 0, 1, 1], [], []>} : vector<36x128xf32>, vector<128x128xf32>, vector<36x128xf32> -> vector<36x128xf32>
    %151 = arith.addf %146, %150 : vector<36x128xf32>
    %c13 = arith.constant 13 : index
    %c0_141 = arith.constant 0 : index
    %152 = vector.load %arg19[%c13, %c0_141] : memref<50x128xf32, #tpu.memory_space<vmem>>, vector<36x128xf32>
    %c7_142 = arith.constant 7 : index
    %c0_143 = arith.constant 0 : index
    %c0_144 = arith.constant 0 : index
    %153 = vector.load %arg6[%c7_142, %c0_143, %c0_144] : memref<9x128x128xf32, #tpu.memory_space<vmem>>, vector<1x128x128xf32>
    %154 = vector.shape_cast %153 : vector<1x128x128xf32> to vector<128x128xf32>
    %cst_145 = arith.constant dense<0.000000e+00> : vector<36x128xf32>
    %155 = tpu.matmul %152, %154, %cst_145 {dimension_numbers = #tpu.dot_dimension_numbers<[1], [0], [0], [1], [0, 0, 1, 1], [], []>} : vector<36x128xf32>, vector<128x128xf32>, vector<36x128xf32> -> vector<36x128xf32>
    %156 = arith.addf %151, %155 : vector<36x128xf32>
    %c14_146 = arith.constant 14 : index
    %c0_147 = arith.constant 0 : index
    %157 = vector.load %arg19[%c14_146, %c0_147] : memref<50x128xf32, #tpu.memory_space<vmem>>, vector<36x128xf32>
    %c8_148 = arith.constant 8 : index
    %c0_149 = arith.constant 0 : index
    %c0_150 = arith.constant 0 : index
    %158 = vector.load %arg6[%c8_148, %c0_149, %c0_150] : memref<9x128x128xf32, #tpu.memory_space<vmem>>, vector<1x128x128xf32>
    %159 = vector.shape_cast %158 : vector<1x128x128xf32> to vector<128x128xf32>
    %cst_151 = arith.constant dense<0.000000e+00> : vector<36x128xf32>
    %160 = tpu.matmul %157, %159, %cst_151 {dimension_numbers = #tpu.dot_dimension_numbers<[1], [0], [0], [1], [0, 0, 1, 1], [], []>} : vector<36x128xf32>, vector<128x128xf32>, vector<36x128xf32> -> vector<36x128xf32>
    %161 = arith.addf %156, %160 : vector<36x128xf32>
    %c0_152 = arith.constant 0 : index
    %c0_153 = arith.constant 0 : index
    %162 = vector.load %arg7[%c0_152, %c0_153] : memref<1x128xf32, #tpu.memory_space<vmem>>, vector<1x128xf32>
    %163 = vector.broadcast %162 : vector<1x128xf32> to vector<36x128xf32>
    %164 = arith.addf %161, %163 : vector<36x128xf32>
    %cst_154 = arith.constant 0.000000e+00 : f32
    %165 = vector.broadcast %cst_154 : f32 to vector<36x128xf32>
    %166 = arith.maximumf %164, %165 : vector<36x128xf32>
    %167 = arith.mulf %166, %115 : vector<36x128xf32>
    %c7_155 = arith.constant 7 : index
    %c0_156 = arith.constant 0 : index
    %168 = vector.load %arg19[%c7_155, %c0_156] : memref<50x128xf32, #tpu.memory_space<vmem>>, vector<36x128xf32>
    tpu.vector_store %arg19[%c7_155, %c0_156], %167 {strides = array<i32>} : memref<50x128xf32, #tpu.memory_space<vmem>>, vector<36x128xf32>,
    %cst_157 = arith.constant 0.000000e+00 : f32
    %169 = vector.broadcast %cst_157 : f32 to vector<36x128xf32>
    %c0_158 = arith.constant 0 : index
    %c0_159 = arith.constant 0 : index
    %170 = vector.load %arg19[%c0_158, %c0_159] : memref<50x128xf32, #tpu.memory_space<vmem>>, vector<36x128xf32>
    %c0_160 = arith.constant 0 : index
    %c0_161 = arith.constant 0 : index
    %c0_162 = arith.constant 0 : index
    %171 = vector.load %arg8[%c0_160, %c0_161, %c0_162] : memref<9x128x128xf32, #tpu.memory_space<vmem>>, vector<1x128x128xf32>
    %172 = vector.shape_cast %171 : vector<1x128x128xf32> to vector<128x128xf32>
    %cst_163 = arith.constant dense<0.000000e+00> : vector<36x128xf32>
    %173 = tpu.matmul %170, %172, %cst_163 {dimension_numbers = #tpu.dot_dimension_numbers<[1], [0], [0], [1], [0, 0, 1, 1], [], []>} : vector<36x128xf32>, vector<128x128xf32>, vector<36x128xf32> -> vector<36x128xf32>
    %174 = arith.addf %169, %173 : vector<36x128xf32>
    %c1_164 = arith.constant 1 : index
    %c0_165 = arith.constant 0 : index
    %175 = vector.load %arg19[%c1_164, %c0_165] : memref<50x128xf32, #tpu.memory_space<vmem>>, vector<36x128xf32>
    %c1_166 = arith.constant 1 : index
    %c0_167 = arith.constant 0 : index
    %c0_168 = arith.constant 0 : index
    %176 = vector.load %arg8[%c1_166, %c0_167, %c0_168] : memref<9x128x128xf32, #tpu.memory_space<vmem>>, vector<1x128x128xf32>
    %177 = vector.shape_cast %176 : vector<1x128x128xf32> to vector<128x128xf32>
    %cst_169 = arith.constant dense<0.000000e+00> : vector<36x128xf32>
    %178 = tpu.matmul %175, %177, %cst_169 {dimension_numbers = #tpu.dot_dimension_numbers<[1], [0], [0], [1], [0, 0, 1, 1], [], []>} : vector<36x128xf32>, vector<128x128xf32>, vector<36x128xf32> -> vector<36x128xf32>
    %179 = arith.addf %174, %178 : vector<36x128xf32>
    %c2_170 = arith.constant 2 : index
    %c0_171 = arith.constant 0 : index
    %180 = vector.load %arg19[%c2_170, %c0_171] : memref<50x128xf32, #tpu.memory_space<vmem>>, vector<36x128xf32>
    %c2_172 = arith.constant 2 : index
    %c0_173 = arith.constant 0 : index
    %c0_174 = arith.constant 0 : index
    %181 = vector.load %arg8[%c2_172, %c0_173, %c0_174] : memref<9x128x128xf32, #tpu.memory_space<vmem>>, vector<1x128x128xf32>
    %182 = vector.shape_cast %181 : vector<1x128x128xf32> to vector<128x128xf32>
    %cst_175 = arith.constant dense<0.000000e+00> : vector<36x128xf32>
    %183 = tpu.matmul %180, %182, %cst_175 {dimension_numbers = #tpu.dot_dimension_numbers<[1], [0], [0], [1], [0, 0, 1, 1], [], []>} : vector<36x128xf32>, vector<128x128xf32>, vector<36x128xf32> -> vector<36x128xf32>
    %184 = arith.addf %179, %183 : vector<36x128xf32>
    %c6_176 = arith.constant 6 : index
    %c0_177 = arith.constant 0 : index
    %185 = vector.load %arg19[%c6_176, %c0_177] : memref<50x128xf32, #tpu.memory_space<vmem>>, vector<36x128xf32>
    %c3_178 = arith.constant 3 : index
    %c0_179 = arith.constant 0 : index
    %c0_180 = arith.constant 0 : index
    %186 = vector.load %arg8[%c3_178, %c0_179, %c0_180] : memref<9x128x128xf32, #tpu.memory_space<vmem>>, vector<1x128x128xf32>
    %187 = vector.shape_cast %186 : vector<1x128x128xf32> to vector<128x128xf32>
    %cst_181 = arith.constant dense<0.000000e+00> : vector<36x128xf32>
    %188 = tpu.matmul %185, %187, %cst_181 {dimension_numbers = #tpu.dot_dimension_numbers<[1], [0], [0], [1], [0, 0, 1, 1], [], []>} : vector<36x128xf32>, vector<128x128xf32>, vector<36x128xf32> -> vector<36x128xf32>
    %189 = arith.addf %184, %188 : vector<36x128xf32>
    %c7_182 = arith.constant 7 : index
    %c0_183 = arith.constant 0 : index
    %190 = vector.load %arg19[%c7_182, %c0_183] : memref<50x128xf32, #tpu.memory_space<vmem>>, vector<36x128xf32>
    %c4_184 = arith.constant 4 : index
    %c0_185 = arith.constant 0 : index
    %c0_186 = arith.constant 0 : index
    %191 = vector.load %arg8[%c4_184, %c0_185, %c0_186] : memref<9x128x128xf32, #tpu.memory_space<vmem>>, vector<1x128x128xf32>
    %192 = vector.shape_cast %191 : vector<1x128x128xf32> to vector<128x128xf32>
    %cst_187 = arith.constant dense<0.000000e+00> : vector<36x128xf32>
    %193 = tpu.matmul %190, %192, %cst_187 {dimension_numbers = #tpu.dot_dimension_numbers<[1], [0], [0], [1], [0, 0, 1, 1], [], []>} : vector<36x128xf32>, vector<128x128xf32>, vector<36x128xf32> -> vector<36x128xf32>
    %194 = arith.addf %189, %193 : vector<36x128xf32>
    %c8_188 = arith.constant 8 : index
    %c0_189 = arith.constant 0 : index
    %195 = vector.load %arg19[%c8_188, %c0_189] : memref<50x128xf32, #tpu.memory_space<vmem>>, vector<36x128xf32>
    %c5_190 = arith.constant 5 : index
    %c0_191 = arith.constant 0 : index
    %c0_192 = arith.constant 0 : index
    %196 = vector.load %arg8[%c5_190, %c0_191, %c0_192] : memref<9x128x128xf32, #tpu.memory_space<vmem>>, vector<1x128x128xf32>
    %197 = vector.shape_cast %196 : vector<1x128x128xf32> to vector<128x128xf32>
    %cst_193 = arith.constant dense<0.000000e+00> : vector<36x128xf32>
    %198 = tpu.matmul %195, %197, %cst_193 {dimension_numbers = #tpu.dot_dimension_numbers<[1], [0], [0], [1], [0, 0, 1, 1], [], []>} : vector<36x128xf32>, vector<128x128xf32>, vector<36x128xf32> -> vector<36x128xf32>
    %199 = arith.addf %194, %198 : vector<36x128xf32>
    %c12_194 = arith.constant 12 : index
    %c0_195 = arith.constant 0 : index
    %200 = vector.load %arg19[%c12_194, %c0_195] : memref<50x128xf32, #tpu.memory_space<vmem>>, vector<36x128xf32>
    %c6_196 = arith.constant 6 : index
    %c0_197 = arith.constant 0 : index
    %c0_198 = arith.constant 0 : index
    %201 = vector.load %arg8[%c6_196, %c0_197, %c0_198] : memref<9x128x128xf32, #tpu.memory_space<vmem>>, vector<1x128x128xf32>
    %202 = vector.shape_cast %201 : vector<1x128x128xf32> to vector<128x128xf32>
    %cst_199 = arith.constant dense<0.000000e+00> : vector<36x128xf32>
    %203 = tpu.matmul %200, %202, %cst_199 {dimension_numbers = #tpu.dot_dimension_numbers<[1], [0], [0], [1], [0, 0, 1, 1], [], []>} : vector<36x128xf32>, vector<128x128xf32>, vector<36x128xf32> -> vector<36x128xf32>
    %204 = arith.addf %199, %203 : vector<36x128xf32>
    %c13_200 = arith.constant 13 : index
    %c0_201 = arith.constant 0 : index
    %205 = vector.load %arg19[%c13_200, %c0_201] : memref<50x128xf32, #tpu.memory_space<vmem>>, vector<36x128xf32>
    %c7_202 = arith.constant 7 : index
    %c0_203 = arith.constant 0 : index
    %c0_204 = arith.constant 0 : index
    %206 = vector.load %arg8[%c7_202, %c0_203, %c0_204] : memref<9x128x128xf32, #tpu.memory_space<vmem>>, vector<1x128x128xf32>
    %207 = vector.shape_cast %206 : vector<1x128x128xf32> to vector<128x128xf32>
    %cst_205 = arith.constant dense<0.000000e+00> : vector<36x128xf32>
    %208 = tpu.matmul %205, %207, %cst_205 {dimension_numbers = #tpu.dot_dimension_numbers<[1], [0], [0], [1], [0, 0, 1, 1], [], []>} : vector<36x128xf32>, vector<128x128xf32>, vector<36x128xf32> -> vector<36x128xf32>
    %209 = arith.addf %204, %208 : vector<36x128xf32>
    %c14_206 = arith.constant 14 : index
    %c0_207 = arith.constant 0 : index
    %210 = vector.load %arg19[%c14_206, %c0_207] : memref<50x128xf32, #tpu.memory_space<vmem>>, vector<36x128xf32>
    %c8_208 = arith.constant 8 : index
    %c0_209 = arith.constant 0 : index
    %c0_210 = arith.constant 0 : index
    %211 = vector.load %arg8[%c8_208, %c0_209, %c0_210] : memref<9x128x128xf32, #tpu.memory_space<vmem>>, vector<1x128x128xf32>
    %212 = vector.shape_cast %211 : vector<1x128x128xf32> to vector<128x128xf32>
    %cst_211 = arith.constant dense<0.000000e+00> : vector<36x128xf32>
    %213 = tpu.matmul %210, %212, %cst_211 {dimension_numbers = #tpu.dot_dimension_numbers<[1], [0], [0], [1], [0, 0, 1, 1], [], []>} : vector<36x128xf32>, vector<128x128xf32>, vector<36x128xf32> -> vector<36x128xf32>
    %214 = arith.addf %209, %213 : vector<36x128xf32>
    %c0_212 = arith.constant 0 : index
    %c0_213 = arith.constant 0 : index
    %215 = vector.load %arg9[%c0_212, %c0_213] : memref<1x128xf32, #tpu.memory_space<vmem>>, vector<1x128xf32>
    %216 = vector.broadcast %215 : vector<1x128xf32> to vector<36x128xf32>
    %217 = arith.addf %214, %216 : vector<36x128xf32>
    %cst_214 = arith.constant 0.000000e+00 : f32
    %218 = vector.broadcast %cst_214 : f32 to vector<36x128xf32>
    %219 = arith.maximumf %217, %218 : vector<36x128xf32>
    %220 = arith.mulf %219, %115 : vector<36x128xf32>
    %c7_215 = arith.constant 7 : index
    %c0_216 = arith.constant 0 : index
    %221 = vector.load %arg19[%c7_215, %c0_216] : memref<50x128xf32, #tpu.memory_space<vmem>>, vector<36x128xf32>
    tpu.vector_store %arg19[%c7_215, %c0_216], %220 {strides = array<i32>} : memref<50x128xf32, #tpu.memory_space<vmem>>, vector<36x128xf32>,
    %cst_217 = arith.constant 0.000000e+00 : f32
    %222 = vector.broadcast %cst_217 : f32 to vector<36x128xf32>
    %c0_218 = arith.constant 0 : index
    %c0_219 = arith.constant 0 : index
    %223 = vector.load %arg19[%c0_218, %c0_219] : memref<50x128xf32, #tpu.memory_space<vmem>>, vector<36x128xf32>
    %c0_220 = arith.constant 0 : index
    %c0_221 = arith.constant 0 : index
    %c0_222 = arith.constant 0 : index
    %224 = vector.load %arg10[%c0_220, %c0_221, %c0_222] : memref<9x128x128xf32, #tpu.memory_space<vmem>>, vector<1x128x128xf32>
    %225 = vector.shape_cast %224 : vector<1x128x128xf32> to vector<128x128xf32>
    %cst_223 = arith.constant dense<0.000000e+00> : vector<36x128xf32>
    %226 = tpu.matmul %223, %225, %cst_223 {dimension_numbers = #tpu.dot_dimension_numbers<[1], [0], [0], [1], [0, 0, 1, 1], [], []>} : vector<36x128xf32>, vector<128x128xf32>, vector<36x128xf32> -> vector<36x128xf32>
    %227 = arith.addf %222, %226 : vector<36x128xf32>
    %c1_224 = arith.constant 1 : index
    %c0_225 = arith.constant 0 : index
    %228 = vector.load %arg19[%c1_224, %c0_225] : memref<50x128xf32, #tpu.memory_space<vmem>>, vector<36x128xf32>
    %c1_226 = arith.constant 1 : index
    %c0_227 = arith.constant 0 : index
    %c0_228 = arith.constant 0 : index
    %229 = vector.load %arg10[%c1_226, %c0_227, %c0_228] : memref<9x128x128xf32, #tpu.memory_space<vmem>>, vector<1x128x128xf32>
    %230 = vector.shape_cast %229 : vector<1x128x128xf32> to vector<128x128xf32>
    %cst_229 = arith.constant dense<0.000000e+00> : vector<36x128xf32>
    %231 = tpu.matmul %228, %230, %cst_229 {dimension_numbers = #tpu.dot_dimension_numbers<[1], [0], [0], [1], [0, 0, 1, 1], [], []>} : vector<36x128xf32>, vector<128x128xf32>, vector<36x128xf32> -> vector<36x128xf32>
    %232 = arith.addf %227, %231 : vector<36x128xf32>
    %c2_230 = arith.constant 2 : index
    %c0_231 = arith.constant 0 : index
    %233 = vector.load %arg19[%c2_230, %c0_231] : memref<50x128xf32, #tpu.memory_space<vmem>>, vector<36x128xf32>
    %c2_232 = arith.constant 2 : index
    %c0_233 = arith.constant 0 : index
    %c0_234 = arith.constant 0 : index
    %234 = vector.load %arg10[%c2_232, %c0_233, %c0_234] : memref<9x128x128xf32, #tpu.memory_space<vmem>>, vector<1x128x128xf32>
    %235 = vector.shape_cast %234 : vector<1x128x128xf32> to vector<128x128xf32>
    %cst_235 = arith.constant dense<0.000000e+00> : vector<36x128xf32>
    %236 = tpu.matmul %233, %235, %cst_235 {dimension_numbers = #tpu.dot_dimension_numbers<[1], [0], [0], [1], [0, 0, 1, 1], [], []>} : vector<36x128xf32>, vector<128x128xf32>, vector<36x128xf32> -> vector<36x128xf32>
    %237 = arith.addf %232, %236 : vector<36x128xf32>
    %c6_236 = arith.constant 6 : index
    %c0_237 = arith.constant 0 : index
    %238 = vector.load %arg19[%c6_236, %c0_237] : memref<50x128xf32, #tpu.memory_space<vmem>>, vector<36x128xf32>
    %c3_238 = arith.constant 3 : index
    %c0_239 = arith.constant 0 : index
    %c0_240 = arith.constant 0 : index
    %239 = vector.load %arg10[%c3_238, %c0_239, %c0_240] : memref<9x128x128xf32, #tpu.memory_space<vmem>>, vector<1x128x128xf32>
    %240 = vector.shape_cast %239 : vector<1x128x128xf32> to vector<128x128xf32>
    %cst_241 = arith.constant dense<0.000000e+00> : vector<36x128xf32>
    %241 = tpu.matmul %238, %240, %cst_241 {dimension_numbers = #tpu.dot_dimension_numbers<[1], [0], [0], [1], [0, 0, 1, 1], [], []>} : vector<36x128xf32>, vector<128x128xf32>, vector<36x128xf32> -> vector<36x128xf32>
    %242 = arith.addf %237, %241 : vector<36x128xf32>
    %c7_242 = arith.constant 7 : index
    %c0_243 = arith.constant 0 : index
    %243 = vector.load %arg19[%c7_242, %c0_243] : memref<50x128xf32, #tpu.memory_space<vmem>>, vector<36x128xf32>
    %c4_244 = arith.constant 4 : index
    %c0_245 = arith.constant 0 : index
    %c0_246 = arith.constant 0 : index
    %244 = vector.load %arg10[%c4_244, %c0_245, %c0_246] : memref<9x128x128xf32, #tpu.memory_space<vmem>>, vector<1x128x128xf32>
    %245 = vector.shape_cast %244 : vector<1x128x128xf32> to vector<128x128xf32>
    %cst_247 = arith.constant dense<0.000000e+00> : vector<36x128xf32>
    %246 = tpu.matmul %243, %245, %cst_247 {dimension_numbers = #tpu.dot_dimension_numbers<[1], [0], [0], [1], [0, 0, 1, 1], [], []>} : vector<36x128xf32>, vector<128x128xf32>, vector<36x128xf32> -> vector<36x128xf32>
    %247 = arith.addf %242, %246 : vector<36x128xf32>
    %c8_248 = arith.constant 8 : index
    %c0_249 = arith.constant 0 : index
    %248 = vector.load %arg19[%c8_248, %c0_249] : memref<50x128xf32, #tpu.memory_space<vmem>>, vector<36x128xf32>
    %c5_250 = arith.constant 5 : index
    %c0_251 = arith.constant 0 : index
    %c0_252 = arith.constant 0 : index
    %249 = vector.load %arg10[%c5_250, %c0_251, %c0_252] : memref<9x128x128xf32, #tpu.memory_space<vmem>>, vector<1x128x128xf32>
    %250 = vector.shape_cast %249 : vector<1x128x128xf32> to vector<128x128xf32>
    %cst_253 = arith.constant dense<0.000000e+00> : vector<36x128xf32>
    %251 = tpu.matmul %248, %250, %cst_253 {dimension_numbers = #tpu.dot_dimension_numbers<[1], [0], [0], [1], [0, 0, 1, 1], [], []>} : vector<36x128xf32>, vector<128x128xf32>, vector<36x128xf32> -> vector<36x128xf32>
    %252 = arith.addf %247, %251 : vector<36x128xf32>
    %c12_254 = arith.constant 12 : index
    %c0_255 = arith.constant 0 : index
    %253 = vector.load %arg19[%c12_254, %c0_255] : memref<50x128xf32, #tpu.memory_space<vmem>>, vector<36x128xf32>
    %c6_256 = arith.constant 6 : index
    %c0_257 = arith.constant 0 : index
    %c0_258 = arith.constant 0 : index
    %254 = vector.load %arg10[%c6_256, %c0_257, %c0_258] : memref<9x128x128xf32, #tpu.memory_space<vmem>>, vector<1x128x128xf32>
    %255 = vector.shape_cast %254 : vector<1x128x128xf32> to vector<128x128xf32>
    %cst_259 = arith.constant dense<0.000000e+00> : vector<36x128xf32>
    %256 = tpu.matmul %253, %255, %cst_259 {dimension_numbers = #tpu.dot_dimension_numbers<[1], [0], [0], [1], [0, 0, 1, 1], [], []>} : vector<36x128xf32>, vector<128x128xf32>, vector<36x128xf32> -> vector<36x128xf32>
    %257 = arith.addf %252, %256 : vector<36x128xf32>
    %c13_260 = arith.constant 13 : index
    %c0_261 = arith.constant 0 : index
    %258 = vector.load %arg19[%c13_260, %c0_261] : memref<50x128xf32, #tpu.memory_space<vmem>>, vector<36x128xf32>
    %c7_262 = arith.constant 7 : index
    %c0_263 = arith.constant 0 : index
    %c0_264 = arith.constant 0 : index
    %259 = vector.load %arg10[%c7_262, %c0_263, %c0_264] : memref<9x128x128xf32, #tpu.memory_space<vmem>>, vector<1x128x128xf32>
    %260 = vector.shape_cast %259 : vector<1x128x128xf32> to vector<128x128xf32>
    %cst_265 = arith.constant dense<0.000000e+00> : vector<36x128xf32>
    %261 = tpu.matmul %258, %260, %cst_265 {dimension_numbers = #tpu.dot_dimension_numbers<[1], [0], [0], [1], [0, 0, 1, 1], [], []>} : vector<36x128xf32>, vector<128x128xf32>, vector<36x128xf32> -> vector<36x128xf32>
    %262 = arith.addf %257, %261 : vector<36x128xf32>
    %c14_266 = arith.constant 14 : index
    %c0_267 = arith.constant 0 : index
    %263 = vector.load %arg19[%c14_266, %c0_267] : memref<50x128xf32, #tpu.memory_space<vmem>>, vector<36x128xf32>
    %c8_268 = arith.constant 8 : index
    %c0_269 = arith.constant 0 : index
    %c0_270 = arith.constant 0 : index
    %264 = vector.load %arg10[%c8_268, %c0_269, %c0_270] : memref<9x128x128xf32, #tpu.memory_space<vmem>>, vector<1x128x128xf32>
    %265 = vector.shape_cast %264 : vector<1x128x128xf32> to vector<128x128xf32>
    %cst_271 = arith.constant dense<0.000000e+00> : vector<36x128xf32>
    %266 = tpu.matmul %263, %265, %cst_271 {dimension_numbers = #tpu.dot_dimension_numbers<[1], [0], [0], [1], [0, 0, 1, 1], [], []>} : vector<36x128xf32>, vector<128x128xf32>, vector<36x128xf32> -> vector<36x128xf32>
    %267 = arith.addf %262, %266 : vector<36x128xf32>
    %c0_272 = arith.constant 0 : index
    %c0_273 = arith.constant 0 : index
    %268 = vector.load %arg11[%c0_272, %c0_273] : memref<1x128xf32, #tpu.memory_space<vmem>>, vector<1x128xf32>
    %269 = vector.broadcast %268 : vector<1x128xf32> to vector<36x128xf32>
    %270 = arith.addf %267, %269 : vector<36x128xf32>
    %cst_274 = arith.constant 0.000000e+00 : f32
    %271 = vector.broadcast %cst_274 : f32 to vector<36x128xf32>
    %272 = arith.maximumf %270, %271 : vector<36x128xf32>
    %273 = arith.mulf %272, %115 : vector<36x128xf32>
    %cst_275 = arith.constant dense<0.000000e+00> : vector<128xf32>
    %274 = vector.multi_reduction <add>, %273, %cst_275 [0] : vector<36x128xf32> to vector<128xf32>
    %275 = vector.shape_cast %274 : vector<128xf32> to vector<1x128xf32>
    %cst_276 = arith.constant 6.250000e-02 : f32
    %276 = vector.broadcast %cst_276 : f32 to vector<1x128xf32>
    %277 = arith.mulf %275, %276 : vector<1x128xf32>
    %c0_277 = arith.constant 0 : index
    %c0_278 = arith.constant 0 : index
    %278 = vector.load %arg12[%c0_277, %c0_278] : memref<128x128xf32, #tpu.memory_space<vmem>>, vector<128x128xf32>
    %cst_279 = arith.constant dense<0.000000e+00> : vector<1x128xf32>
    %279 = tpu.matmul %277, %278, %cst_279 {dimension_numbers = #tpu.dot_dimension_numbers<[1], [0], [0], [1], [0, 0, 1, 1], [], []>} : vector<1x128xf32>, vector<128x128xf32>, vector<1x128xf32> -> vector<1x128xf32>
    %c0_280 = arith.constant 0 : index
    %c0_281 = arith.constant 0 : index
    %280 = vector.load %arg13[%c0_280, %c0_281] : memref<1x128xf32, #tpu.memory_space<vmem>>, vector<1x128xf32>
    %281 = arith.addf %279, %280 : vector<1x128xf32>
    %c0_282 = arith.constant 0 : index
    %c0_283 = arith.constant 0 : index
    %c0_284 = arith.constant 0 : index
    %282 = vector.load %arg17[%c0_282, %c0_283, %c0_284] : memref<1x1x128xf32, #tpu.memory_space<vmem>>, vector<1x1x128xf32>
    %283 = vector.shape_cast %282 : vector<1x1x128xf32> to vector<1x128xf32>
    %284 = vector.shape_cast %281 : vector<1x128xf32> to vector<1x1x128xf32>
    tpu.vector_store %arg17[%c0_282, %c0_283, %c0_284], %284 {strides = array<i32>} : memref<1x1x128xf32, #tpu.memory_space<vmem>>, vector<1x1x128xf32>,
    return
  }
  func.func @transform_0(%arg0: i32) -> (i32, i32, i32) {
    %c0_i32 = arith.constant 0 : i32
    %c0_i32_0 = arith.constant 0 : i32
    %c0_i32_1 = arith.constant 0 : i32
    return %arg0, %c0_i32, %c0_i32_0 : i32, i32, i32
  }
  func.func @transform_1(%arg0: i32) -> (i32, i32) {
    %c0_i32 = arith.constant 0 : i32
    %c0_i32_0 = arith.constant 0 : i32
    %c0_i32_1 = arith.constant 0 : i32
    return %c0_i32, %c0_i32_0 : i32, i32
  }
  func.func @transform_2(%arg0: i32) -> (i32, i32) {
    %c0_i32 = arith.constant 0 : i32
    %c0_i32_0 = arith.constant 0 : i32
    %c0_i32_1 = arith.constant 0 : i32
    return %c0_i32, %c0_i32_0 : i32, i32
  }
  func.func @transform_3(%arg0: i32) -> (i32, i32, i32) {
    %c0_i32 = arith.constant 0 : i32
    %c0_i32_0 = arith.constant 0 : i32
    %c0_i32_1 = arith.constant 0 : i32
    %c0_i32_2 = arith.constant 0 : i32
    return %c0_i32, %c0_i32_0, %c0_i32_1 : i32, i32, i32
  }
  func.func @transform_4(%arg0: i32) -> (i32, i32) {
    %c0_i32 = arith.constant 0 : i32
    %c0_i32_0 = arith.constant 0 : i32
    %c0_i32_1 = arith.constant 0 : i32
    return %c0_i32, %c0_i32_0 : i32, i32
  }
  func.func @transform_5(%arg0: i32) -> (i32, i32, i32) {
    %c0_i32 = arith.constant 0 : i32
    %c0_i32_0 = arith.constant 0 : i32
    %c0_i32_1 = arith.constant 0 : i32
    %c0_i32_2 = arith.constant 0 : i32
    return %c0_i32, %c0_i32_0, %c0_i32_1 : i32, i32, i32
  }
  func.func @transform_6(%arg0: i32) -> (i32, i32) {
    %c0_i32 = arith.constant 0 : i32
    %c0_i32_0 = arith.constant 0 : i32
    %c0_i32_1 = arith.constant 0 : i32
    return %c0_i32, %c0_i32_0 : i32, i32
  }
  func.func @transform_7(%arg0: i32) -> (i32, i32, i32) {
    %c0_i32 = arith.constant 0 : i32
    %c0_i32_0 = arith.constant 0 : i32
    %c0_i32_1 = arith.constant 0 : i32
    %c0_i32_2 = arith.constant 0 : i32
    return %c0_i32, %c0_i32_0, %c0_i32_1 : i32, i32, i32
  }
  func.func @transform_8(%arg0: i32) -> (i32, i32) {
    %c0_i32 = arith.constant 0 : i32
    %c0_i32_0 = arith.constant 0 : i32
    %c0_i32_1 = arith.constant 0 : i32
    return %c0_i32, %c0_i32_0 : i32, i32
  }
  func.func @transform_9(%arg0: i32) -> (i32, i32, i32) {
    %c0_i32 = arith.constant 0 : i32
    %c0_i32_0 = arith.constant 0 : i32
    %c0_i32_1 = arith.constant 0 : i32
    %c0_i32_2 = arith.constant 0 : i32
    return %c0_i32, %c0_i32_0, %c0_i32_1 : i32, i32, i32
  }
  func.func @transform_10(%arg0: i32) -> (i32, i32) {
    %c0_i32 = arith.constant 0 : i32
    %c0_i32_0 = arith.constant 0 : i32
    %c0_i32_1 = arith.constant 0 : i32
    return %c0_i32, %c0_i32_0 : i32, i32
  }
  func.func @transform_11(%arg0: i32) -> (i32, i32) {
    %c0_i32 = arith.constant 0 : i32
    %c0_i32_0 = arith.constant 0 : i32
    %c0_i32_1 = arith.constant 0 : i32
    return %c0_i32, %c0_i32_0 : i32, i32
  }
  func.func @transform_12(%arg0: i32) -> (i32, i32) {
    %c0_i32 = arith.constant 0 : i32
    %c0_i32_0 = arith.constant 0 : i32
    %c0_i32_1 = arith.constant 0 : i32
    return %c0_i32, %c0_i32_0 : i32, i32
  }
  func.func @transform_13(%arg0: i32) -> (i32, i32, i32) {
    %c0_i32 = arith.constant 0 : i32
    %c0_i32_0 = arith.constant 0 : i32
    %c0_i32_1 = arith.constant 0 : i32
    %c0_i32_2 = arith.constant 0 : i32
    return %c0_i32, %c0_i32_0, %c0_i32_1 : i32, i32, i32
  }
  func.func @transform_14(%arg0: i32) -> (i32, i32, i32) {
    %c0_i32 = arith.constant 0 : i32
    %c0_i32_0 = arith.constant 0 : i32
    %c0_i32_1 = arith.constant 0 : i32
    %c0_i32_2 = arith.constant 0 : i32
    return %c0_i32, %c0_i32_0, %c0_i32_1 : i32, i32, i32
  }
  func.func @transform_15(%arg0: i32) -> (i32, i32) {
    %c0_i32 = arith.constant 0 : i32
    %c0_i32_0 = arith.constant 0 : i32
    %c0_i32_1 = arith.constant 0 : i32
    return %c0_i32, %c0_i32_0 : i32, i32
  }
  func.func @transform_16(%arg0: i32) -> (i32, i32, i32) {
    %c0_i32 = arith.constant 0 : i32
    %c0_i32_0 = arith.constant 0 : i32
    %c0_i32_1 = arith.constant 0 : i32
    return %arg0, %c0_i32, %c0_i32_0 : i32, i32, i32
  }
}

</mosaic_0001>

<llo_original>
// kernel: tpu_custom_call.1
$region0: #{tpu_custom_call.1}
  #allocation0 [shape = 'u32[]', space=smem, size = 0x4, offset = 0x4, fixed_abs, tag = 'smem constant byte address 0x4 - core index']
  #allocation1 [shape = 'u32[144,128]{1,0:T(1,128)}', space=vmem, size = 0x12000, scoped, tag = 'internal scratch']
  #allocation2 [shape = 'f32[122,128]{1,0:T(8,128)}', space=vmem, size = 0x10000, scoped, tag = 'scratch operand']
  #allocation3 [shape = 'f32[50,128]{1,0:T(8,128)}', space=vmem, size = 0x7000, scoped, tag = 'scratch operand']
  %s0 = inlined_call_operand.vmem [shape: f32[2,256,36], index: 0, kind: input, shape index: {}]
  %s1 = inlined_call_operand.vmem [shape: f32[36,128], index: 1, kind: input, shape index: {}]
  %s2 = inlined_call_operand.vmem [shape: f32[1,128], index: 2, kind: input, shape index: {}]
  %s3 = inlined_call_operand.hbm [shape: f32[9,128,128], index: 3, kind: input, shape index: {}]
  %s4 = inlined_call_operand.vmem [shape: f32[1,128], index: 4, kind: input, shape index: {}]
  %s5 = inlined_call_operand.hbm [shape: f32[9,128,128], index: 5, kind: input, shape index: {}]
  %s6 = inlined_call_operand.vmem [shape: f32[1,128], index: 6, kind: input, shape index: {}]
  %s7 = inlined_call_operand.hbm [shape: f32[9,128,128], index: 7, kind: input, shape index: {}]
  %s8 = inlined_call_operand.vmem [shape: f32[1,128], index: 8, kind: input, shape index: {}]
  %s9 = inlined_call_operand.hbm [shape: f32[9,128,128], index: 9, kind: input, shape index: {}]
  %s10 = inlined_call_operand.vmem [shape: f32[1,128], index: 10, kind: input, shape index: {}]
  %s11 = inlined_call_operand.vmem [shape: f32[128,128], index: 11, kind: input, shape index: {}]
  %s12 = inlined_call_operand.vmem [shape: f32[1,128], index: 12, kind: input, shape index: {}]
  %s13 = inlined_call_operand.vmem [shape: f32[2,64,128], index: 13, kind: input, shape index: {}]
  %s14 = inlined_call_operand.vmem [shape: f32[4,16,100], index: 14, kind: input, shape index: {}]
  %s15 = inlined_call_operand.vmem [shape: f32[36,128], index: 15, kind: input, shape index: {}]
  %s16 = inlined_call_operand.hbm [shape: f32[2,1,128], index: 16, kind: output, shape index: {}]
  %s17 = sld [smem:[#allocation0]]
  $region113: #{tpu_custom_call.1} parent=0
    _
  %s19 = ssub.s32 1, %s17
  %s20 = scalar_select 0, %s19, %s17
  $region1: #{tpu_custom_call.1} parent=0
    #allocation4 [shape = 'u8[589824]{0}', space=vmem, size = 0x90000, scoped, tag = 'input window, operand 3, single buffered']
    #allocation5 [shape = 's32[2]{0}', space=sflag, size = 0x8, scoped, tag = 'scoped memory for tpu_custom_call.1']
    #allocation6 [shape = 's32[2]{0}', space=sflag, size = 0x8, scoped, tag = 'scoped memory for tpu_custom_call.1']
    #allocation7 [shape = 'u8[589824]{0}', space=vmem, size = 0x90000, scoped, tag = 'input window, operand 5, single buffered']
    #allocation8 [shape = 's32[1]{0}', space=sflag, size = 0x4, scoped, tag = 'scoped memory for tpu_custom_call.1']
    #allocation9 [shape = 'u8[589824]{0}', space=vmem, size = 0x90000, scoped, tag = 'input window, operand 7, single buffered']
    #allocation10 [shape = 'u8[589824]{0}', space=vmem, size = 0x90000, scoped, tag = 'input window, operand 9, single buffered']
    #allocation11 [shape = 's32[1]{0}', space=sflag, size = 0x4, scoped, tag = 'scoped memory for tpu_custom_call.1']
    #allocation12 [shape = 'u8[1024]{0}', space=vmem, size = 0x400, scoped, tag = 'output window, operand 0']
    %21 = vsyncpa [#allocation5], 0
    %22 = vsyncpa [#allocation8], 0
    %23 = vsyncpa [#allocation11], 0
    %24 = vsyncpa [#allocation6], 0
    %s25 = scalar_lea.sflag [#allocation6], 1
    %26 = vsyncpa %s25, 0
    loop: start=0, step=1, limit=4
    $region2: #{tpu_custom_call.1} parent=1 // loop_pre_header
      _
    $region3: #{tpu_custom_call.1} parent=1 // loop_header
      %s28 = sphi 0, %s32
      %p29 = scmp.ge.s32.totalorder %s28, 4
      %s38 = sphi 0, %s40
      %s41 = sphi 0, %s38
      %s42 = sphi 0, %s41
      %s58 = sphi 0, %s42
      %s62 = sphi 0, %s62
      %s64 = sphi 0, %s62
      %s65 = sphi 0, %s64
      %s79 = sphi 0, %s65
      %s83 = sphi 0, %s83
      %s85 = sphi 0, %s83
      %s86 = sphi 0, %s85
      %s100 = sphi 0, %s86
      %s104 = sphi 0, %s104
      %s106 = sphi 0, %s104
      %s107 = sphi 0, %s106
      %s121 = sphi 0, %s107
      %s125 = sphi 0, %s125
      %s127 = sphi 0, %s125
      %s128 = sphi 0, %s127
      %s142 = sphi 0, %s128
      %s146 = sphi 0, %s146
      %s148 = sphi 0, %s146
      %s149 = sphi 0, %s148
      %s163 = sphi 0, %s149
      %s167 = sphi 0, %s167
      %s169 = sphi 0, %s167
      %s170 = sphi 0, %s169
      %s184 = sphi 0, %s170
      %s188 = sphi 0, %s188
      %s190 = sphi 0, %s188
      %s191 = sphi 0, %s190
      %s205 = sphi 0, %s191
      %s209 = sphi 0, %s209
      %s211 = sphi 0, %s209
      %s212 = sphi 0, %s211
      %s226 = sphi 0, %s212
      %s230 = sphi 0, %s230
      %s232 = sphi 0, %s230
      %s233 = sphi 0, %s232
      %s247 = sphi 0, %s233
      %s251 = sphi 0, %s251
      %s253 = sphi 0, %s251
      %s254 = sphi 0, %s253
      %s268 = sphi 0, %s254
      %s272 = sphi 0, %s272
      %s274 = sphi 0, %s272
      %s275 = sphi 0, %s274
      %s289 = sphi 0, %s275
      %s293 = sphi 0, %s293
      %s295 = sphi 0, %s293
      %s296 = sphi 0, %s295
      %s310 = sphi 0, %s296
      %s314 = sphi 0, %s314
      %s316 = sphi 0, %s314
      %s317 = sphi 0, %s316
      %s331 = sphi 0, %s317
      %s335 = sphi 0, %s335
      %s337 = sphi 0, %s335
      %s338 = sphi 0, %s337
      %s352 = sphi 0, %s338
      %s356 = sphi 0, %s356
      %s358 = sphi 0, %s356
      %s359 = sphi 0, %s358
      %s373 = sphi 0, %s359
      %s379 = sphi 0, %s381
      %s382 = sphi 0, %s379
      %s383 = sphi 0, %s382
      %s399 = sphi 0, %s383
    $region4: #{tpu_custom_call.1} parent=1 // loop_header_branch
      %31 = sbr.rel (%p29) target = $region8
    $region5: #{tpu_custom_call.1} parent=1 // loop_body
      %s33 = ssub.s32 %s28, 1
      %s34 = ssub.s32 %s28, 2
      %s35 = sadd.s32 %s28, 1
      %s36 = ssub.s32 %s28, %s35
      %p37 = scmp.eq.s32.totalorder %s36, 0
      %s39 = sadd.s32 %s38, 1
      %s40 = scalar_select %p37, %s38, %s39
      %p43 = pneg %p37
      %p44 = scmp.eq.s32.totalorder %s28, 1
      %p45 = por %p43, %p44
      %p46 = scmp.ne.s32.totalorder %s38, %s41
      %p47 = scmp.eq.s32.totalorder %s28, 0
      %p48 = por %p46, %p47
      %p49 = scmp.ne.s32.totalorder %s38, %s41
      %p50 = scmp.eq.s32.totalorder %s33, 1
      %p51 = por %p49, %p50
      %p52 = scmp.ne.s32.totalorder %s41, %s42
      %p53 = scmp.eq.s32.totalorder %s33, 0
      %p54 = por %p52, %p53
      %p55 = scmp.ne.s32.totalorder %s41, %s42
      %p56 = scmp.eq.s32.totalorder %s34, 1
      %p57 = por %p55, %p56
      %p59 = scmp.ne.s32.totalorder %s42, %s58
      %p60 = scmp.eq.s32.totalorder %s34, 0
      %p61 = por %p59, %p60
      %s63 = sadd.s32 %s62, 1
      %p66 = scmp.eq.s32.totalorder %s28, 1
      %p67 = scmp.ne.s32.totalorder %s62, %s64
      %p68 = scmp.eq.s32.totalorder %s28, 0
      %p69 = por %p67, %p68
      %p70 = scmp.ne.s32.totalorder %s62, %s64
      %p71 = scmp.eq.s32.totalorder %s33, 1
      %p72 = por %p70, %p71
      %p73 = scmp.ne.s32.totalorder %s64, %s65
      %p74 = scmp.eq.s32.totalorder %s33, 0
      %p75 = por %p73, %p74
      %p76 = scmp.ne.s32.totalorder %s64, %s65
      %p77 = scmp.eq.s32.totalorder %s34, 1
      %p78 = por %p76, %p77
      %p80 = scmp.ne.s32.totalorder %s65, %s79
      %p81 = scmp.eq.s32.totalorder %s34, 0
      %p82 = por %p80, %p81
      %s84 = sadd.s32 %s83, 1
      %p87 = scmp.eq.s32.totalorder %s28, 1
      %p88 = scmp.ne.s32.totalorder %s83, %s85
      %p89 = scmp.eq.s32.totalorder %s28, 0
      %p90 = por %p88, %p89
      %p91 = scmp.ne.s32.totalorder %s83, %s85
      %p92 = scmp.eq.s32.totalorder %s33, 1
      %p93 = por %p91, %p92
      %p94 = scmp.ne.s32.totalorder %s85, %s86
      %p95 = scmp.eq.s32.totalorder %s33, 0
      %p96 = por %p94, %p95
      %p97 = scmp.ne.s32.totalorder %s85, %s86
      %p98 = scmp.eq.s32.totalorder %s34, 1
      %p99 = por %p97, %p98
      %p101 = scmp.ne.s32.totalorder %s86, %s100
      %p102 = scmp.eq.s32.totalorder %s34, 0
      %p103 = por %p101, %p102
      %s105 = sadd.s32 %s104, 1
      %p108 = scmp.eq.s32.totalorder %s28, 1
      %p109 = scmp.ne.s32.totalorder %s104, %s106
      %p110 = scmp.eq.s32.totalorder %s28, 0
      %p111 = por %p109, %p110
      %p112 = scmp.ne.s32.totalorder %s104, %s106
      %p113 = scmp.eq.s32.totalorder %s33, 1
      %p114 = por %p112, %p113
      %p115 = scmp.ne.s32.totalorder %s106, %s107
      %p116 = scmp.eq.s32.totalorder %s33, 0
      %p117 = por %p115, %p116
      %p118 = scmp.ne.s32.totalorder %s106, %s107
      %p119 = scmp.eq.s32.totalorder %s34, 1
      %p120 = por %p118, %p119
      %p122 = scmp.ne.s32.totalorder %s107, %s121
      %p123 = scmp.eq.s32.totalorder %s34, 0
      %p124 = por %p122, %p123
      %s126 = sadd.s32 %s125, 1
      %p129 = scmp.eq.s32.totalorder %s28, 1
      %p130 = scmp.ne.s32.totalorder %s125, %s127
      %p131 = scmp.eq.s32.totalorder %s28, 0
      %p132 = por %p130, %p131
      %p133 = scmp.ne.s32.totalorder %s125, %s127
      %p134 = scmp.eq.s32.totalorder %s33, 1
      %p135 = por %p133, %p134
      %p136 = scmp.ne.s32.totalorder %s127, %s128
      %p137 = scmp.eq.s32.totalorder %s33, 0
      %p138 = por %p136, %p137
      %p139 = scmp.ne.s32.totalorder %s127, %s128
      %p140 = scmp.eq.s32.totalorder %s34, 1
      %p141 = por %p139, %p140
      %p143 = scmp.ne.s32.totalorder %s128, %s142
      %p144 = scmp.eq.s32.totalorder %s34, 0
      %p145 = por %p143, %p144
      %s147 = sadd.s32 %s146, 1
      %p150 = scmp.eq.s32.totalorder %s28, 1
      %p151 = scmp.ne.s32.totalorder %s146, %s148
      %p152 = scmp.eq.s32.totalorder %s28, 0
      %p153 = por %p151, %p152
      %p154 = scmp.ne.s32.totalorder %s146, %s148
      %p155 = scmp.eq.s32.totalorder %s33, 1
      %p156 = por %p154, %p155
      %p157 = scmp.ne.s32.totalorder %s148, %s149
      %p158 = scmp.eq.s32.totalorder %s33, 0
      %p159 = por %p157, %p158
      %p160 = scmp.ne.s32.totalorder %s148, %s149
      %p161 = scmp.eq.s32.totalorder %s34, 1
      %p162 = por %p160, %p161
      %p164 = scmp.ne.s32.totalorder %s149, %s163
      %p165 = scmp.eq.s32.totalorder %s34, 0
      %p166 = por %p164, %p165
      %s168 = sadd.s32 %s167, 1
      %p171 = scmp.eq.s32.totalorder %s28, 1
      %p172 = scmp.ne.s32.totalorder %s167, %s169
      %p173 = scmp.eq.s32.totalorder %s28, 0
      %p174 = por %p172, %p173
      %p175 = scmp.ne.s32.totalorder %s167, %s169
      %p176 = scmp.eq.s32.totalorder %s33, 1
      %p177 = por %p175, %p176
      %p178 = scmp.ne.s32.totalorder %s169, %s170
      %p179 = scmp.eq.s32.totalorder %s33, 0
      %p180 = por %p178, %p179
      %p181 = scmp.ne.s32.totalorder %s169, %s170
      %p182 = scmp.eq.s32.totalorder %s34, 1
      %p183 = por %p181, %p182
      %p185 = scmp.ne.s32.totalorder %s170, %s184
      %p186 = scmp.eq.s32.totalorder %s34, 0
      %p187 = por %p185, %p186
      %s189 = sadd.s32 %s188, 1
      %p192 = scmp.eq.s32.totalorder %s28, 1
      %p193 = scmp.ne.s32.totalorder %s188, %s190
      %p194 = scmp.eq.s32.totalorder %s28, 0
      %p195 = por %p193, %p194
      %p196 = scmp.ne.s32.totalorder %s188, %s190
      %p197 = scmp.eq.s32.totalorder %s33, 1
      %p198 = por %p196, %p197
      %p199 = scmp.ne.s32.totalorder %s190, %s191
      %p200 = scmp.eq.s32.totalorder %s33, 0
      %p201 = por %p199, %p200
      %p202 = scmp.ne.s32.totalorder %s190, %s191
      %p203 = scmp.eq.s32.totalorder %s34, 1
      %p204 = por %p202, %p203
      %p206 = scmp.ne.s32.totalorder %s191, %s205
      %p207 = scmp.eq.s32.totalorder %s34, 0
      %p208 = por %p206, %p207
      %s210 = sadd.s32 %s209, 1
      %p213 = scmp.eq.s32.totalorder %s28, 1
      %p214 = scmp.ne.s32.totalorder %s209, %s211
      %p215 = scmp.eq.s32.totalorder %s28, 0
      %p216 = por %p214, %p215
      %p217 = scmp.ne.s32.totalorder %s209, %s211
      %p218 = scmp.eq.s32.totalorder %s33, 1
      %p219 = por %p217, %p218
      %p220 = scmp.ne.s32.totalorder %s211, %s212
      %p221 = scmp.eq.s32.totalorder %s33, 0
      %p222 = por %p220, %p221
      %p223 = scmp.ne.s32.totalorder %s211, %s212
      %p224 = scmp.eq.s32.totalorder %s34, 1
      %p225 = por %p223, %p224
      %p227 = scmp.ne.s32.totalorder %s212, %s226
      %p228 = scmp.eq.s32.totalorder %s34, 0
      %p229 = por %p227, %p228
      %s231 = sadd.s32 %s230, 1
      %p234 = scmp.eq.s32.totalorder %s28, 1
      %p235 = scmp.ne.s32.totalorder %s230, %s232
      %p236 = scmp.eq.s32.totalorder %s28, 0
      %p237 = por %p235, %p236
      %p238 = scmp.ne.s32.totalorder %s230, %s232
      %p239 = scmp.eq.s32.totalorder %s33, 1
      %p240 = por %p238, %p239
      %p241 = scmp.ne.s32.totalorder %s232, %s233
      %p242 = scmp.eq.s32.totalorder %s33, 0
      %p243 = por %p241, %p242
      %p244 = scmp.ne.s32.totalorder %s232, %s233
      %p245 = scmp.eq.s32.totalorder %s34, 1
      %p246 = por %p244, %p245
      %p248 = scmp.ne.s32.totalorder %s233, %s247
      %p249 = scmp.eq.s32.totalorder %s34, 0
      %p250 = por %p248, %p249
      %s252 = sadd.s32 %s251, 1
      %p255 = scmp.eq.s32.totalorder %s28, 1
      %p256 = scmp.ne.s32.totalorder %s251, %s253
      %p257 = scmp.eq.s32.totalorder %s28, 0
      %p258 = por %p256, %p257
      %p259 = scmp.ne.s32.totalorder %s251, %s253
      %p260 = scmp.eq.s32.totalorder %s33, 1
      %p261 = por %p259, %p260
      %p262 = scmp.ne.s32.totalorder %s253, %s254
      %p263 = scmp.eq.s32.totalorder %s33, 0
      %p264 = por %p262, %p263
      %p265 = scmp.ne.s32.totalorder %s253, %s254
      %p266 = scmp.eq.s32.totalorder %s34, 1
      %p267 = por %p265, %p266
      %p269 = scmp.ne.s32.totalorder %s254, %s268
      %p270 = scmp.eq.s32.totalorder %s34, 0
      %p271 = por %p269, %p270
      %s273 = sadd.s32 %s272, 1
      %p276 = scmp.eq.s32.totalorder %s28, 1
      %p277 = scmp.ne.s32.totalorder %s272, %s274
      %p278 = scmp.eq.s32.totalorder %s28, 0
      %p279 = por %p277, %p278
      %p280 = scmp.ne.s32.totalorder %s272, %s274
      %p281 = scmp.eq.s32.totalorder %s33, 1
      %p282 = por %p280, %p281
      %p283 = scmp.ne.s32.totalorder %s274, %s275
      %p284 = scmp.eq.s32.totalorder %s33, 0
      %p285 = por %p283, %p284
      %p286 = scmp.ne.s32.totalorder %s274, %s275
      %p287 = scmp.eq.s32.totalorder %s34, 1
      %p288 = por %p286, %p287
      %p290 = scmp.ne.s32.totalorder %s275, %s289
      %p291 = scmp.eq.s32.totalorder %s34, 0
      %p292 = por %p290, %p291
      %s294 = sadd.s32 %s293, 1
      %p297 = scmp.eq.s32.totalorder %s28, 1
      %p298 = scmp.ne.s32.totalorder %s293, %s295
      %p299 = scmp.eq.s32.totalorder %s28, 0
      %p300 = por %p298, %p299
      %p301 = scmp.ne.s32.totalorder %s293, %s295
      %p302 = scmp.eq.s32.totalorder %s33, 1
      %p303 = por %p301, %p302
      %p304 = scmp.ne.s32.totalorder %s295, %s296
      %p305 = scmp.eq.s32.totalorder %s33, 0
      %p306 = por %p304, %p305
      %p307 = scmp.ne.s32.totalorder %s295, %s296
      %p308 = scmp.eq.s32.totalorder %s34, 1
      %p309 = por %p307, %p308
      %p311 = scmp.ne.s32.totalorder %s296, %s310
      %p312 = scmp.eq.s32.totalorder %s34, 0
      %p313 = por %p311, %p312
      %s315 = sadd.s32 %s314, 1
      %p318 = scmp.eq.s32.totalorder %s28, 1
      %p319 = scmp.ne.s32.totalorder %s314, %s316
      %p320 = scmp.eq.s32.totalorder %s28, 0
      %p321 = por %p319, %p320
      %p322 = scmp.ne.s32.totalorder %s314, %s316
      %p323 = scmp.eq.s32.totalorder %s33, 1
      %p324 = por %p322, %p323
      %p325 = scmp.ne.s32.totalorder %s316, %s317
      %p326 = scmp.eq.s32.totalorder %s33, 0
      %p327 = por %p325, %p326
      %p328 = scmp.ne.s32.totalorder %s316, %s317
      %p329 = scmp.eq.s32.totalorder %s34, 1
      %p330 = por %p328, %p329
      %p332 = scmp.ne.s32.totalorder %s317, %s331
      %p333 = scmp.eq.s32.totalorder %s34, 0
      %p334 = por %p332, %p333
      %s336 = sadd.s32 %s335, 1
      %p339 = scmp.eq.s32.totalorder %s28, 1
      %p340 = scmp.ne.s32.totalorder %s335, %s337
      %p341 = scmp.eq.s32.totalorder %s28, 0
      %p342 = por %p340, %p341
      %p343 = scmp.ne.s32.totalorder %s335, %s337
      %p344 = scmp.eq.s32.totalorder %s33, 1
      %p345 = por %p343, %p344
      %p346 = scmp.ne.s32.totalorder %s337, %s338
      %p347 = scmp.eq.s32.totalorder %s33, 0
      %p348 = por %p346, %p347
      %p349 = scmp.ne.s32.totalorder %s337, %s338
      %p350 = scmp.eq.s32.totalorder %s34, 1
      %p351 = por %p349, %p350
      %p353 = scmp.ne.s32.totalorder %s338, %s352
      %p354 = scmp.eq.s32.totalorder %s34, 0
      %p355 = por %p353, %p354
      %s357 = sadd.s32 %s356, 1
      %p360 = scmp.eq.s32.totalorder %s28, 1
      %p361 = scmp.ne.s32.totalorder %s356, %s358
      %p362 = scmp.eq.s32.totalorder %s28, 0
      %p363 = por %p361, %p362
      %p364 = scmp.ne.s32.totalorder %s356, %s358
      %p365 = scmp.eq.s32.totalorder %s33, 1
      %p366 = por %p364, %p365
      %p367 = scmp.ne.s32.totalorder %s358, %s359
      %p368 = scmp.eq.s32.totalorder %s33, 0
      %p369 = por %p367, %p368
      %p370 = scmp.ne.s32.totalorder %s358, %s359
      %p371 = scmp.eq.s32.totalorder %s34, 1
      %p372 = por %p370, %p371
      %p374 = scmp.ne.s32.totalorder %s359, %s373
      %p375 = scmp.eq.s32.totalorder %s34, 0
      %p376 = por %p374, %p375
      %s377 = ssub.s32 %s28, %s35
      %p378 = scmp.eq.s32.totalorder %s377, 0
      %s380 = sadd.s32 %s379, 1
      %s381 = scalar_select %p378, %s379, %s380
      %p384 = pneg %p378
      %p385 = scmp.eq.s32.totalorder %s28, 1
      %p386 = por %p384, %p385
      %p387 = scmp.ne.s32.totalorder %s379, %s382
      %p388 = scmp.eq.s32.totalorder %s28, 0
      %p389 = por %p387, %p388
      %p390 = scmp.ne.s32.totalorder %s379, %s382
      %p391 = scmp.eq.s32.totalorder %s33, 1
      %p392 = por %p390, %p391
      %p393 = scmp.ne.s32.totalorder %s382, %s383
      %p394 = scmp.eq.s32.totalorder %s33, 0
      %p395 = por %p393, %p394
      %p396 = scmp.ne.s32.totalorder %s382, %s383
      %p397 = scmp.eq.s32.totalorder %s34, 1
      %p398 = por %p396, %p397
      %p400 = scmp.ne.s32.totalorder %s383, %s399
      %p401 = scmp.eq.s32.totalorder %s34, 0
      %p402 = por %p400, %p401
      %p403 = scmp.le.s32.totalorder 1, %s28
      %p404 = scmp.lt.s32.totalorder %s28, 3
      %p405 = pnand %p403, %p404
      %p406 = pneg %p405
      // Predicated region
      $region9: #{tpu_custom_call.1} parent=5 // pred_check
        _
      $region10: #{tpu_custom_call.1} parent=5 // pred_check_branch
        %408 = sbr.rel (%p405) target = $region12
      $region11: #{tpu_custom_call.1} parent=5 // pred_region
        %s409 = ssub.s32 %s28, 1
        // Predicated region
        $region13: #{tpu_custom_call.1} parent=11 // pred_check
          %p410 = pneg %p75
        $region14: #{tpu_custom_call.1} parent=11 // pred_check_branch
          %412 = sbr.rel (%p410) target = $region16
        $region15: #{tpu_custom_call.1} parent=11 // pred_region
          _
        $region16: #{tpu_custom_call.1} parent=11 // pred_fallthru
          _
        // Predicated region
        $region17: #{tpu_custom_call.1} parent=11 // pred_check
          %p413 = pneg %p96
        $region18: #{tpu_custom_call.1} parent=11 // pred_check_branch
          %415 = sbr.rel (%p413) target = $region20
        $region19: #{tpu_custom_call.1} parent=11 // pred_region
          _
        $region20: #{tpu_custom_call.1} parent=11 // pred_fallthru
          _
        // Predicated region
        $region21: #{tpu_custom_call.1} parent=11 // pred_check
          %p416 = pneg %p117
        $region22: #{tpu_custom_call.1} parent=11 // pred_check_branch
          %418 = sbr.rel (%p416) target = $region24
        $region23: #{tpu_custom_call.1} parent=11 // pred_region
          %s420 = ssub.s32 18432, 18432
          %421 = vsyncadd [#allocation5], %s420
          %s422 = sshll.u32 [#allocation4], 4
          %s423 = int_to_ptr.vmem [resolvable:$true] %s422
          %428 = dma.hbm_to_vmem [thread:$0]  %s3, 18432, %s423, [#allocation5], 128, 128, 8
        $region24: #{tpu_custom_call.1} parent=11 // pred_fallthru
          _
        // Predicated region
        $region25: #{tpu_custom_call.1} parent=11 // pred_check
          %p429 = pneg %p138
        $region26: #{tpu_custom_call.1} parent=11 // pred_check_branch
          %431 = sbr.rel (%p429) target = $region28
        $region27: #{tpu_custom_call.1} parent=11 // pred_region
          _
        $region28: #{tpu_custom_call.1} parent=11 // pred_fallthru
          _
        // Predicated region
        $region29: #{tpu_custom_call.1} parent=11 // pred_check
          %p432 = pneg %p159
        $region30: #{tpu_custom_call.1} parent=11 // pred_check_branch
          %434 = sbr.rel (%p432) target = $region32
        $region31: #{tpu_custom_call.1} parent=11 // pred_region
          %s436 = ssub.s32 18432, 18432
          %437 = vsyncadd [#allocation8], %s436
          %s438 = sshll.u32 [#allocation7], 4
          %s439 = int_to_ptr.vmem [resolvable:$true] %s438
          %444 = dma.hbm_to_vmem [thread:$0]  %s5, 18432, %s439, [#allocation8], 128, 128, 8
        $region32: #{tpu_custom_call.1} parent=11 // pred_fallthru
          _
        // Predicated region
        $region33: #{tpu_custom_call.1} parent=11 // pred_check
          %p445 = pneg %p180
        $region34: #{tpu_custom_call.1} parent=11 // pred_check_branch
          %447 = sbr.rel (%p445) target = $region36
        $region35: #{tpu_custom_call.1} parent=11 // pred_region
          _
        $region36: #{tpu_custom_call.1} parent=11 // pred_fallthru
          _
        // Predicated region
        $region37: #{tpu_custom_call.1} parent=11 // pred_check
          %p448 = pneg %p201
        $region38: #{tpu_custom_call.1} parent=11 // pred_check_branch
          %450 = sbr.rel (%p448) target = $region40
        $region39: #{tpu_custom_call.1} parent=11 // pred_region
          %s452 = ssub.s32 18432, 18432
          %453 = vsyncadd [#allocation8], %s452
          %s454 = sshll.u32 [#allocation9], 4
          %s455 = int_to_ptr.vmem [resolvable:$true] %s454
          %460 = dma.hbm_to_vmem [thread:$0]  %s7, 18432, %s455, [#allocation8], 128, 128, 8
        $region40: #{tpu_custom_call.1} parent=11 // pred_fallthru
          _
        // Predicated region
        $region41: #{tpu_custom_call.1} parent=11 // pred_check
          %p461 = pneg %p222
        $region42: #{tpu_custom_call.1} parent=11 // pred_check_branch
          %463 = sbr.rel (%p461) target = $region44
        $region43: #{tpu_custom_call.1} parent=11 // pred_region
          _
        $region44: #{tpu_custom_call.1} parent=11 // pred_fallthru
          _
        // Predicated region
        $region45: #{tpu_custom_call.1} parent=11 // pred_check
          %p464 = pneg %p243
        $region46: #{tpu_custom_call.1} parent=11 // pred_check_branch
          %466 = sbr.rel (%p464) target = $region48
        $region47: #{tpu_custom_call.1} parent=11 // pred_region
          %s468 = ssub.s32 18432, 18432
          %469 = vsyncadd [#allocation11], %s468
          %s470 = sshll.u32 [#allocation10], 4
          %s471 = int_to_ptr.vmem [resolvable:$true] %s470
          %476 = dma.hbm_to_vmem [thread:$0]  %s9, 18432, %s471, [#allocation11], 128, 128, 8
        $region48: #{tpu_custom_call.1} parent=11 // pred_fallthru
          _
        // Predicated region
        $region49: #{tpu_custom_call.1} parent=11 // pred_check
          %p477 = pneg %p264
        $region50: #{tpu_custom_call.1} parent=11 // pred_check_branch
          %479 = sbr.rel (%p477) target = $region52
        $region51: #{tpu_custom_call.1} parent=11 // pred_region
          _
        $region52: #{tpu_custom_call.1} parent=11 // pred_fallthru
          _
        // Predicated region
        $region53: #{tpu_custom_call.1} parent=11 // pred_check
          %p480 = pneg %p285
        $region54: #{tpu_custom_call.1} parent=11 // pred_check_branch
          %482 = sbr.rel (%p480) target = $region56
        $region55: #{tpu_custom_call.1} parent=11 // pred_region
          _
        $region56: #{tpu_custom_call.1} parent=11 // pred_fallthru
          _
        // Predicated region
        $region57: #{tpu_custom_call.1} parent=11 // pred_check
          %p483 = pneg %p306
        $region58: #{tpu_custom_call.1} parent=11 // pred_check_branch
          %485 = sbr.rel (%p483) target = $region60
        $region59: #{tpu_custom_call.1} parent=11 // pred_region
          _
        $region60: #{tpu_custom_call.1} parent=11 // pred_fallthru
          _
        // Predicated region
        $region61: #{tpu_custom_call.1} parent=11 // pred_check
          %p486 = pneg %p327
        $region62: #{tpu_custom_call.1} parent=11 // pred_check_branch
          %488 = sbr.rel (%p486) target = $region64
        $region63: #{tpu_custom_call.1} parent=11 // pred_region
          _
        $region64: #{tpu_custom_call.1} parent=11 // pred_fallthru
          _
        // Predicated region
        $region65: #{tpu_custom_call.1} parent=11 // pred_check
          %p489 = pneg %p348
        $region66: #{tpu_custom_call.1} parent=11 // pred_check_branch
          %491 = sbr.rel (%p489) target = $region68
        $region67: #{tpu_custom_call.1} parent=11 // pred_region
          _
        $region68: #{tpu_custom_call.1} parent=11 // pred_fallthru
          _
        // Predicated region
        $region69: #{tpu_custom_call.1} parent=11 // pred_check
          %p492 = pneg %p369
        $region70: #{tpu_custom_call.1} parent=11 // pred_check_branch
          %494 = sbr.rel (%p492) target = $region72
        $region71: #{tpu_custom_call.1} parent=11 // pred_region
          _
        $region72: #{tpu_custom_call.1} parent=11 // pred_fallthru
          _
      $region12: #{tpu_custom_call.1} parent=5 // pred_fallthru
        _
      %p495 = scmp.lt.s32.totalorder %s28, 2
      // Predicated region
      $region73: #{tpu_custom_call.1} parent=5 // pred_check
        %p496 = pneg %p495
      $region74: #{tpu_custom_call.1} parent=5 // pred_check_branch
        %498 = sbr.rel (%p496) target = $region76
      $region75: #{tpu_custom_call.1} parent=5 // pred_region
        // Predicated region
        $region77: #{tpu_custom_call.1} parent=75 // pred_check
          %p499 = pneg %p48
        $region78: #{tpu_custom_call.1} parent=75 // pred_check_branch
          %501 = sbr.rel (%p499) target = $region80
        $region79: #{tpu_custom_call.1} parent=75 // pred_region
          %p502 = scmp.lt.s32.totalorder %s28, 1
          %s503 = scalar_select %p502, %s28, 1
          %s504 = smul.addr %s503, 32
          %s505 = smul.addr %s504, 8
          %s506 = scalar_lea.vmem %s0, %s505
        $region80: #{tpu_custom_call.1} parent=75 // pred_fallthru
          _
      $region76: #{tpu_custom_call.1} parent=5 // pred_fallthru
        _
      %p507 = scmp.le.s32.totalorder 1, %s28
      %p508 = scmp.lt.s32.totalorder %s28, 3
      %p509 = pnand %p507, %p508
      %p510 = pneg %p509
      // Predicated region
      $region81: #{tpu_custom_call.1} parent=5 // pred_check
        _
      $region82: #{tpu_custom_call.1} parent=5 // pred_check_branch
        %512 = sbr.rel (%p509) target = $region84
      $region83: #{tpu_custom_call.1} parent=5 // pred_region
        %s513 = ssub.s32 %s28, 1
        // Predicated region
        $region85: #{tpu_custom_call.1} parent=83 // pred_check
          %p514 = pneg %p117
        $region86: #{tpu_custom_call.1} parent=83 // pred_check_branch
          %516 = sbr.rel (%p514) target = $region88
        $region87: #{tpu_custom_call.1} parent=83 // pred_region
          %517 = dma.done [#allocation5], 18432
        $region88: #{tpu_custom_call.1} parent=83 // pred_fallthru
          _
        // Predicated region
        $region89: #{tpu_custom_call.1} parent=83 // pred_check
          %p518 = pneg %p159
        $region90: #{tpu_custom_call.1} parent=83 // pred_check_branch
          %520 = sbr.rel (%p518) target = $region92
        $region91: #{tpu_custom_call.1} parent=83 // pred_region
          %521 = dma.done [#allocation8], 18432
        $region92: #{tpu_custom_call.1} parent=83 // pred_fallthru
          _
        // Predicated region
        $region93: #{tpu_custom_call.1} parent=83 // pred_check
          %p522 = pneg %p201
        $region94: #{tpu_custom_call.1} parent=83 // pred_check_branch
          %524 = sbr.rel (%p522) target = $region96
        $region95: #{tpu_custom_call.1} parent=83 // pred_region
          %525 = dma.done [#allocation8], 18432
        $region96: #{tpu_custom_call.1} parent=83 // pred_fallthru
          _
        // Predicated region
        $region97: #{tpu_custom_call.1} parent=83 // pred_check
          %p526 = pneg %p243
        $region98: #{tpu_custom_call.1} parent=83 // pred_check_branch
          %528 = sbr.rel (%p526) target = $region100
        $region99: #{tpu_custom_call.1} parent=83 // pred_region
          %529 = dma.done [#allocation11], 18432
        $region100: #{tpu_custom_call.1} parent=83 // pred_fallthru
          _
        %p530 = scmp.lt.s32.totalorder %s33, 1
        %s531 = scalar_select %p530, %s33, 1
        %s532 = smul.addr %s531, 32
        %s533 = smul.addr %s532, 8
        %s534 = scalar_lea.vmem %s0, %s533
        %p535 = pneg %p54
        %p536 = pneg %p51
        %p537 = pneg %p75
        %p538 = pneg %p72
        %p539 = pneg %p96
        %p540 = pneg %p93
        %p541 = pneg %p117
        %p542 = pneg %p114
        %p543 = pneg %p138
        %p544 = pneg %p135
        %p545 = pneg %p159
        %p546 = pneg %p156
        %p547 = pneg %p180
        %p548 = pneg %p177
        %p549 = pneg %p201
        %p550 = pneg %p198
        %p551 = pneg %p222
        %p552 = pneg %p219
        %p553 = pneg %p243
        %p554 = pneg %p240
        %p555 = pneg %p264
        %p556 = pneg %p261
        %p557 = pneg %p285
        %p558 = pneg %p282
        %p559 = pneg %p306
        %p560 = pneg %p303
        %p561 = pneg %p327
        %p562 = pneg %p324
        %p563 = pneg %p348
        %p564 = pneg %p345
        %p565 = pneg %p369
        %p566 = pneg %p366
        %p567 = pneg %p395
        %p568 = pneg %p392
        %s569 = sand.u32 %s382, 1
        %s570 = scalar_lea.sflag [#allocation6], %s569
        %s571 = sand.u32 %s382, 1
        %s572 = scalar_lea.vmem [#allocation12], %s571
        %p573 = scmp.lt.s32.totalorder %s33, 1
        %s574 = scalar_select %p573, %s33, 1
        %s575 = smul.addr %s574, 32
        %s576 = smul.addr %s575, 8
        %s577 = scalar_lea.vmem %s0, %s576
        %v578 = vld [vmem:[%s577] sm:$0xff]
        %v579 = vld [vmem:[%s577 + $0x8] sm:$0xff]
        %v580 = vld [vmem:[%s577 + $0x10] sm:$0xff]
        %v581 = vld [vmem:[%s577 + $0x18] sm:$0xff]
        %v582 = vld [vmem:[%s577 + $0x20] sm:$0xff]
        %v583 = vld [vmem:[%s577 + $0x28] sm:$0xff]
        %v584 = vld [vmem:[%s577 + $0x30] sm:$0xff]
        %v585 = vld [vmem:[%s577 + $0x38] sm:$0xff]
        %v586 = vld [vmem:[%s577 + $0x40] sm:$0xff]
        %v587 = vld [vmem:[%s577 + $0x48] sm:$0xff]
        %v588 = vld [vmem:[%s577 + $0x50] sm:$0xff]
        %v589 = vld [vmem:[%s577 + $0x58] sm:$0xff]
        %v590 = vld [vmem:[%s577 + $0x60] sm:$0xff]
        %v591 = vld [vmem:[%s577 + $0x68] sm:$0xff]
        %v592 = vld [vmem:[%s577 + $0x70] sm:$0xff]
        %v593 = vld [vmem:[%s577 + $0x78] sm:$0xff]
        %v594 = vld [vmem:[%s577 + $0x80] sm:$0xff]
        %v595 = vld [vmem:[%s577 + $0x88] sm:$0xff]
        %v596 = vld [vmem:[%s577 + $0x90] sm:$0xff]
        %v597 = vld [vmem:[%s577 + $0x98] sm:$0xff]
        %v598 = vld [vmem:[%s577 + $0xa0] sm:$0xff]
        %v599 = vld [vmem:[%s577 + $0xa8] sm:$0xff]
        %v600 = vld [vmem:[%s577 + $0xb0] sm:$0xff]
        %v601 = vld [vmem:[%s577 + $0xb8] sm:$0xff]
        %v602 = vld [vmem:[%s577 + $0xc0] sm:$0xff]
        %v603 = vld [vmem:[%s577 + $0xc8] sm:$0xff]
        %v604 = vld [vmem:[%s577 + $0xd0] sm:$0xff]
        %v605 = vld [vmem:[%s577 + $0xd8] sm:$0xff]
        %v606 = vld [vmem:[%s577 + $0xe0] sm:$0xff]
        %v607 = vld [vmem:[%s577 + $0xe8] sm:$0xff]
        %v608 = vld [vmem:[%s577 + $0xf0] sm:$0xff]
        %v609 = vld [vmem:[%s577 + $0xf8] sm:$0xff]
        %v610 = vld [vmem:[%s1] sm:$0xff]
        %v611 = vld [vmem:[%s1 + $0x8] sm:$0xff]
        %v612 = vld [vmem:[%s1 + $0x10] sm:$0xff]
        %v613 = vld [vmem:[%s1 + $0x18] sm:$0xff]
        %v614 = vld [vmem:[%s1 + $0x20] sm:$0xf]
        %v615 = vld [vmem:[%s2] sm:$0x1]
        %v617 = vlaneseq
        %v618 = vshrl.u32 %v617, 7
        %v619 = vsub.s32 0, %v618
        %v620 = vrot.slane %v615, %v619
        %vm622 = vcmask 293888
        %v624 = vsel %vm622, %v578, 0
        %v627 = vsel %vm622, %v579, 0
        %v630 = vsel %vm622, %v580, 0
        %v633 = vsel %vm622, %v581, 0
        %v636 = vsel %vm622, %v582, 0
        %v639 = vsel %vm622, %v583, 0
        %v642 = vsel %vm622, %v584, 0
        %v645 = vsel %vm622, %v585, 0
        %v648 = vsel %vm622, %v586, 0
        %v651 = vsel %vm622, %v587, 0
        %v654 = vsel %vm622, %v588, 0
        %v657 = vsel %vm622, %v589, 0
        %v660 = vsel %vm622, %v590, 0
        %v663 = vsel %vm622, %v591, 0
        %v666 = vsel %vm622, %v592, 0
        %v669 = vsel %vm622, %v593, 0
        %v672 = vsel %vm622, %v594, 0
        %v675 = vsel %vm622, %v595, 0
        %v678 = vsel %vm622, %v596, 0
        %v681 = vsel %vm622, %v597, 0
        %v684 = vsel %vm622, %v598, 0
        %v687 = vsel %vm622, %v599, 0
        %v690 = vsel %vm622, %v600, 0
        %v693 = vsel %vm622, %v601, 0
        %v696 = vsel %vm622, %v602, 0
        %v699 = vsel %vm622, %v603, 0
        %v702 = vsel %vm622, %v604, 0
        %v705 = vsel %vm622, %v605, 0
        %v708 = vsel %vm622, %v606, 0
        %v711 = vsel %vm622, %v607, 0
        %v714 = vsel %vm622, %v608, 0
        %v717 = vsel %vm622, %v609, 0
        %vm719 = vcmask 1043456
        %v721 = vsel %vm719, %v614, 0
        %723 = vmatprep.subr.mxu0 0.0
        %724 = vmatpush1.msra.mxu0 %v610
        %725 = vmatprep.subr.mxu0 0.0
        %726 = vmatpush1.msra.mxu0 %v611
        %727 = vmatprep.subr.mxu0 0.0
        %728 = vmatpush1.msra.mxu0 %v612
        %729 = vmatprep.subr.mxu0 0.0
        %730 = vmatpush1.msra.mxu0 %v613
        %731 = vmatprep.subr.mxu0 0.0
        %732 = vmatpush1.msra.mxu0 %v721
        %733 = vmatprep.subr.mxu0 0.0
        %734 = vmatpush1.msra.mxu0 0.0
        %735 = vmatprep.subr.mxu0 0.0
        %736 = vmatpush1.msra.mxu0 0.0
        %737 = vmatprep.subr.mxu0 0.0
        %738 = vmatpush1.msra.mxu0 0.0
        %739 = vmatprep.subr.mxu0 0.0
        %740 = vmatpush1.msra.mxu0 0.0
        %741 = vmatprep.subr.mxu0 0.0
        %742 = vmatpush1.msra.mxu0 0.0
        %743 = vmatprep.subr.mxu0 0.0
        %744 = vmatpush1.msra.mxu0 0.0
        %745 = vmatprep.subr.mxu0 0.0
        %746 = vmatpush1.msra.mxu0 0.0
        %747 = vmatprep.subr.mxu0 0.0
        %748 = vmatpush1.msra.mxu0 0.0
        %749 = vmatprep.subr.mxu0 0.0
        %750 = vmatpush1.msra.mxu0 0.0
        %751 = vmatprep.subr.mxu0 0.0
        %752 = vmatpush1.msra.mxu0 0.0
        %753 = vmatprep.subr.mxu0 0.0
        %754 = vmatpush1.msra.mxu0 0.0
        %755 = vmatprep.subr.mxu0 0.0
        %756 = vmatpush1.msra.mxu0 0.0
        %757 = vmatprep.subr.mxu0 0.0
        %758 = vmatpush1.msra.mxu0 0.0
        %759 = vmatprep.subr.mxu0 0.0
        %760 = vmatpush1.msra.mxu0 0.0
        %761 = vmatprep.subr.mxu0 0.0
        %762 = vmatpush1.msra.mxu0 0.0
        %763 = vmatprep.subr.mxu0 0.0
        %764 = vmatpush1.msra.mxu0 0.0
        %765 = vmatprep.subr.mxu0 0.0
        %766 = vmatpush1.msra.mxu0 0.0
        %767 = vmatprep.subr.mxu0 0.0
        %768 = vmatpush1.msra.mxu0 0.0
        %769 = vmatprep.subr.mxu0 0.0
        %770 = vmatpush1.msra.mxu0 0.0
        %771 = vmatprep.subr.mxu0 0.0
        %772 = vmatpush1.msra.mxu0 0.0
        %773 = vmatprep.subr.mxu0 0.0
        %774 = vmatpush1.msra.mxu0 0.0
        %775 = vmatprep.subr.mxu0 0.0
        %776 = vmatpush1.msra.mxu0 0.0
        %777 = vmatprep.subr.mxu0 0.0
        %778 = vmatpush1.msra.mxu0 0.0
        %779 = vmatprep.subr.mxu0 0.0
        %780 = vmatpush1.msra.mxu0 0.0
        %781 = vmatprep.subr.mxu0 0.0
        %782 = vmatpush1.msra.mxu0 0.0
        %783 = vmatprep.subr.mxu0 0.0
        %784 = vmatpush1.msra.mxu0 0.0
        %785 = vmatprep.subr.mxu0 0.0
        %786 = vmatpush1.msra.mxu0 0.0
        %787 = vmatprep.mubr.f32.mxu0 0.0
        %788 = vmatmul.mubr.f32.gmra.mrb[0].mxu0 %v624
        %v789 = vpop.f32.mrb[0].mxu0
        %v790 = vadd.f32 %v620, %v789
        %v791 = vpop.f32.mrb[0].mxu0
        %792 = vmatprep.mubr.f32.mxu0 0.0
        %793 = vmatmul.mubr.f32.gmra.mrb[0].mxu0 %v627
        %v794 = vpop.f32.mrb[0].mxu0
        %v795 = vadd.f32 %v620, %v794
        %v796 = vpop.f32.mrb[0].mxu0
        %797 = vmatprep.mubr.f32.mxu0 0.0
        %798 = vmatmul.mubr.f32.gmra.mrb[0].mxu0 %v630
        %v799 = vpop.f32.mrb[0].mxu0
        %v800 = vadd.f32 %v620, %v799
        %v801 = vpop.f32.mrb[0].mxu0
        %802 = vmatprep.mubr.f32.mxu0 0.0
        %803 = vmatmul.mubr.f32.gmra.mrb[0].mxu0 %v633
        %v804 = vpop.f32.mrb[0].mxu0
        %v805 = vadd.f32 %v620, %v804
        %v806 = vpop.f32.mrb[0].mxu0
        %807 = vmatprep.mubr.f32.mxu0 0.0
        %808 = vmatmul.mubr.f32.gmra.mrb[0].mxu0 %v636
        %v809 = vpop.f32.mrb[0].mxu0
        %v810 = vadd.f32 %v620, %v809
        %v811 = vpop.f32.mrb[0].mxu0
        %812 = vmatprep.mubr.f32.mxu0 0.0
        %813 = vmatmul.mubr.f32.gmra.mrb[0].mxu0 %v639
        %v814 = vpop.f32.mrb[0].mxu0
        %v815 = vadd.f32 %v620, %v814
        %v816 = vpop.f32.mrb[0].mxu0
        %817 = vmatprep.mubr.f32.mxu0 0.0
        %818 = vmatmul.mubr.f32.gmra.mrb[0].mxu0 %v642
        %v819 = vpop.f32.mrb[0].mxu0
        %v820 = vadd.f32 %v620, %v819
        %v821 = vpop.f32.mrb[0].mxu0
        %822 = vmatprep.mubr.f32.mxu0 0.0
        %823 = vmatmul.mubr.f32.gmra.mrb[0].mxu0 %v645
        %v824 = vpop.f32.mrb[0].mxu0
        %v825 = vadd.f32 %v620, %v824
        %v826 = vpop.f32.mrb[0].mxu0
        %827 = vmatprep.mubr.f32.mxu0 0.0
        %828 = vmatmul.mubr.f32.gmra.mrb[0].mxu0 %v648
        %v829 = vpop.f32.mrb[0].mxu0
        %v830 = vadd.f32 %v620, %v829
        %v831 = vpop.f32.mrb[0].mxu0
        %832 = vmatprep.mubr.f32.mxu0 0.0
        %833 = vmatmul.mubr.f32.gmra.mrb[0].mxu0 %v651
        %v834 = vpop.f32.mrb[0].mxu0
        %v835 = vadd.f32 %v620, %v834
        %v836 = vpop.f32.mrb[0].mxu0
        %837 = vmatprep.mubr.f32.mxu0 0.0
        %838 = vmatmul.mubr.f32.gmra.mrb[0].mxu0 %v654
        %v839 = vpop.f32.mrb[0].mxu0
        %v840 = vadd.f32 %v620, %v839
        %v841 = vpop.f32.mrb[0].mxu0
        %842 = vmatprep.mubr.f32.mxu0 0.0
        %843 = vmatmul.mubr.f32.gmra.mrb[0].mxu0 %v657
        %v844 = vpop.f32.mrb[0].mxu0
        %v845 = vadd.f32 %v620, %v844
        %v846 = vpop.f32.mrb[0].mxu0
        %847 = vmatprep.mubr.f32.mxu0 0.0
        %848 = vmatmul.mubr.f32.gmra.mrb[0].mxu0 %v660
        %v849 = vpop.f32.mrb[0].mxu0
        %v850 = vadd.f32 %v620, %v849
        %v851 = vpop.f32.mrb[0].mxu0
        %852 = vmatprep.mubr.f32.mxu0 0.0
        %853 = vmatmul.mubr.f32.gmra.mrb[0].mxu0 %v663
        %v854 = vpop.f32.mrb[0].mxu0
        %v855 = vadd.f32 %v620, %v854
        %v856 = vpop.f32.mrb[0].mxu0
        %857 = vmatprep.mubr.f32.mxu0 0.0
        %858 = vmatmul.mubr.f32.gmra.mrb[0].mxu0 %v666
        %v859 = vpop.f32.mrb[0].mxu0
        %v860 = vadd.f32 %v620, %v859
        %v861 = vpop.f32.mrb[0].mxu0
        %862 = vmatprep.mubr.f32.mxu0 0.0
        %863 = vmatmul.mubr.f32.gmra.mrb[0].mxu0 %v669
        %v864 = vpop.f32.mrb[0].mxu0
        %v865 = vadd.f32 %v620, %v864
        %v866 = vpop.f32.mrb[0].mxu0
        %867 = vmatprep.mubr.f32.mxu0 0.0
        %868 = vmatmul.mubr.f32.gmra.mrb[0].mxu0 %v672
        %v869 = vpop.f32.mrb[0].mxu0
        %v870 = vadd.f32 %v620, %v869
        %v871 = vpop.f32.mrb[0].mxu0
        %872 = vmatprep.mubr.f32.mxu0 0.0
        %873 = vmatmul.mubr.f32.gmra.mrb[0].mxu0 %v675
        %v874 = vpop.f32.mrb[0].mxu0
        %v875 = vadd.f32 %v620, %v874
        %v876 = vpop.f32.mrb[0].mxu0
        %877 = vmatprep.mubr.f32.mxu0 0.0
        %878 = vmatmul.mubr.f32.gmra.mrb[0].mxu0 %v678
        %v879 = vpop.f32.mrb[0].mxu0
        %v880 = vadd.f32 %v620, %v879
        %v881 = vpop.f32.mrb[0].mxu0
        %882 = vmatprep.mubr.f32.mxu0 0.0
        %883 = vmatmul.mubr.f32.gmra.mrb[0].mxu0 %v681
        %v884 = vpop.f32.mrb[0].mxu0
        %v885 = vadd.f32 %v620, %v884
        %v886 = vpop.f32.mrb[0].mxu0
        %887 = vmatprep.mubr.f32.mxu0 0.0
        %888 = vmatmul.mubr.f32.gmra.mrb[0].mxu0 %v684
        %v889 = vpop.f32.mrb[0].mxu0
        %v890 = vadd.f32 %v620, %v889
        %v891 = vpop.f32.mrb[0].mxu0
        %892 = vmatprep.mubr.f32.mxu0 0.0
        %893 = vmatmul.mubr.f32.gmra.mrb[0].mxu0 %v687
        %v894 = vpop.f32.mrb[0].mxu0
        %v895 = vadd.f32 %v620, %v894
        %v896 = vpop.f32.mrb[0].mxu0
        %897 = vmatprep.mubr.f32.mxu0 0.0
        %898 = vmatmul.mubr.f32.gmra.mrb[0].mxu0 %v690
        %v899 = vpop.f32.mrb[0].mxu0
        %v900 = vadd.f32 %v620, %v899
        %v901 = vpop.f32.mrb[0].mxu0
        %902 = vmatprep.mubr.f32.mxu0 0.0
        %903 = vmatmul.mubr.f32.gmra.mrb[0].mxu0 %v693
        %v904 = vpop.f32.mrb[0].mxu0
        %v905 = vadd.f32 %v620, %v904
        %v906 = vpop.f32.mrb[0].mxu0
        %907 = vmatprep.mubr.f32.mxu0 0.0
        %908 = vmatmul.mubr.f32.gmra.mrb[0].mxu0 %v696
        %v909 = vpop.f32.mrb[0].mxu0
        %v910 = vadd.f32 %v620, %v909
        %v911 = vpop.f32.mrb[0].mxu0
        %912 = vmatprep.mubr.f32.mxu0 0.0
        %913 = vmatmul.mubr.f32.gmra.mrb[0].mxu0 %v699
        %v914 = vpop.f32.mrb[0].mxu0
        %v915 = vadd.f32 %v620, %v914
        %v916 = vpop.f32.mrb[0].mxu0
        %917 = vmatprep.mubr.f32.mxu0 0.0
        %918 = vmatmul.mubr.f32.gmra.mrb[0].mxu0 %v702
        %v919 = vpop.f32.mrb[0].mxu0
        %v920 = vadd.f32 %v620, %v919
        %v921 = vpop.f32.mrb[0].mxu0
        %922 = vmatprep.mubr.f32.mxu0 0.0
        %923 = vmatmul.mubr.f32.gmra.mrb[0].mxu0 %v705
        %v924 = vpop.f32.mrb[0].mxu0
        %v925 = vadd.f32 %v620, %v924
        %v926 = vpop.f32.mrb[0].mxu0
        %927 = vmatprep.mubr.f32.mxu0 0.0
        %928 = vmatmul.mubr.f32.gmra.mrb[0].mxu0 %v708
        %v929 = vpop.f32.mrb[0].mxu0
        %v930 = vadd.f32 %v620, %v929
        %v931 = vpop.f32.mrb[0].mxu0
        %932 = vmatprep.mubr.f32.mxu0 0.0
        %933 = vmatmul.mubr.f32.gmra.mrb[0].mxu0 %v711
        %v934 = vpop.f32.mrb[0].mxu0
        %v935 = vadd.f32 %v620, %v934
        %v936 = vpop.f32.mrb[0].mxu0
        %937 = vmatprep.mubr.f32.mxu0 0.0
        %938 = vmatmul.mubr.f32.gmra.mrb[0].mxu0 %v714
        %v939 = vpop.f32.mrb[0].mxu0
        %v940 = vadd.f32 %v620, %v939
        %v941 = vpop.f32.mrb[0].mxu0
        %942 = vmatprep.mubr.f32.mxu0 0.0
        %943 = vmatmul.mubr.f32.gmra.mrb[0].mxu0 %v717
        %v944 = vpop.f32.mrb[0].mxu0
        %v945 = vadd.f32 %v620, %v944
        %v946 = vpop.f32.mrb[0].mxu0
        %947 = vdwg.mxu0
        %v948 = vmax.f32 %v790, 0.0
        %v949 = vmax.f32 %v795, 0.0
        %v950 = vmax.f32 %v800, 0.0
        %v951 = vmax.f32 %v805, 0.0
        %v952 = vmax.f32 %v810, 0.0
        %v953 = vmax.f32 %v815, 0.0
        %v954 = vmax.f32 %v820, 0.0
        %v955 = vmax.f32 %v825, 0.0
        %v956 = vmax.f32 %v830, 0.0
        %v957 = vmax.f32 %v835, 0.0
        %v958 = vmax.f32 %v840, 0.0
        %v959 = vmax.f32 %v845, 0.0
        %v960 = vmax.f32 %v850, 0.0
        %v961 = vmax.f32 %v855, 0.0
        %v962 = vmax.f32 %v860, 0.0
        %v963 = vmax.f32 %v865, 0.0
        %v964 = vmax.f32 %v870, 0.0
        %v965 = vmax.f32 %v875, 0.0
        %v966 = vmax.f32 %v880, 0.0
        %v967 = vmax.f32 %v885, 0.0
        %v968 = vmax.f32 %v890, 0.0
        %v969 = vmax.f32 %v895, 0.0
        %v970 = vmax.f32 %v900, 0.0
        %v971 = vmax.f32 %v905, 0.0
        %v972 = vmax.f32 %v910, 0.0
        %v973 = vmax.f32 %v915, 0.0
        %v974 = vmax.f32 %v920, 0.0
        %v975 = vmax.f32 %v925, 0.0
        %v976 = vmax.f32 %v930, 0.0
        %v977 = vmax.f32 %v935, 0.0
        %v978 = vmax.f32 %v940, 0.0
        %v979 = vmax.f32 %v945, 0.0
        %v980 = vmax.f32 %v948, %v950
        %v981 = vmax.f32 %v949, %v951
        %v982 = vmax.f32 %v952, %v954
        %v983 = vmax.f32 %v953, %v955
        %v984 = vmax.f32 %v956, %v958
        %v985 = vmax.f32 %v957, %v959
        %v986 = vmax.f32 %v960, %v962
        %v987 = vmax.f32 %v961, %v963
        %v988 = vmax.f32 %v964, %v966
        %v989 = vmax.f32 %v965, %v967
        %v990 = vmax.f32 %v968, %v970
        %v991 = vmax.f32 %v969, %v971
        %v992 = vmax.f32 %v972, %v974
        %v993 = vmax.f32 %v973, %v975
        %v994 = vmax.f32 %v976, %v978
        %v995 = vmax.f32 %v977, %v979
        %v996 = vld [vmem:[%s13] sm:$0xff]
        %v997 = vld [vmem:[%s13 + $0x8] sm:$0xff]
        %v998 = vld [vmem:[%s13 + $0x10] sm:$0xff]
        %v999 = vld [vmem:[%s13 + $0x18] sm:$0xff]
        %v1000 = vld [vmem:[%s13 + $0x20] sm:$0xff]
        %v1001 = vld [vmem:[%s13 + $0x28] sm:$0xff]
        %v1002 = vld [vmem:[%s13 + $0x30] sm:$0xff]
        %v1003 = vld [vmem:[%s13 + $0x38] sm:$0xff]
        %1004 = vmatprep.subr.mxu0 0.0
        %1005 = vmatpush1.msra.mxu0 %v980
        %1006 = vmatprep.subr.mxu0 0.0
        %1007 = vmatpush1.msra.mxu0 %v981
        %1008 = vmatprep.subr.mxu0 0.0
        %1009 = vmatpush1.msra.mxu0 %v982
        %1010 = vmatprep.subr.mxu0 0.0
        %1011 = vmatpush1.msra.mxu0 %v983
        %1012 = vmatprep.subr.mxu0 0.0
        %1013 = vmatpush1.msra.mxu0 %v984
        %1014 = vmatprep.subr.mxu0 0.0
        %1015 = vmatpush1.msra.mxu0 %v985
        %1016 = vmatprep.subr.mxu0 0.0
        %1017 = vmatpush1.msra.mxu0 %v986
        %1018 = vmatprep.subr.mxu0 0.0
        %1019 = vmatpush1.msra.mxu0 %v987
        %1020 = vmatprep.subr.mxu0 0.0
        %1021 = vmatpush1.msra.mxu0 %v988
        %1022 = vmatprep.subr.mxu0 0.0
        %1023 = vmatpush1.msra.mxu0 %v989
        %1024 = vmatprep.subr.mxu0 0.0
        %1025 = vmatpush1.msra.mxu0 %v990
        %1026 = vmatprep.subr.mxu0 0.0
        %1027 = vmatpush1.msra.mxu0 %v991
        %1028 = vmatprep.subr.mxu0 0.0
        %1029 = vmatpush1.msra.mxu0 %v992
        %1030 = vmatprep.subr.mxu0 0.0
        %1031 = vmatpush1.msra.mxu0 %v993
        %1032 = vmatprep.subr.mxu0 0.0
        %1033 = vmatpush1.msra.mxu0 %v994
        %1034 = vmatprep.subr.mxu0 0.0
        %1035 = vmatpush1.msra.mxu0 %v995
        %1036 = vmatprep.subr.mxu0 0.0
        %1037 = vmatpush1.msra.mxu0 0.0
        %1038 = vmatprep.subr.mxu0 0.0
        %1039 = vmatpush1.msra.mxu0 0.0
        %1040 = vmatprep.subr.mxu0 0.0
        %1041 = vmatpush1.msra.mxu0 0.0
        %1042 = vmatprep.subr.mxu0 0.0
        %1043 = vmatpush1.msra.mxu0 0.0
        %1044 = vmatprep.subr.mxu0 0.0
        %1045 = vmatpush1.msra.mxu0 0.0
        %1046 = vmatprep.subr.mxu0 0.0
        %1047 = vmatpush1.msra.mxu0 0.0
        %1048 = vmatprep.subr.mxu0 0.0
        %1049 = vmatpush1.msra.mxu0 0.0
        %1050 = vmatprep.subr.mxu0 0.0
        %1051 = vmatpush1.msra.mxu0 0.0
        %1052 = vmatprep.subr.mxu0 0.0
        %1053 = vmatpush1.msra.mxu0 0.0
        %1054 = vmatprep.subr.mxu0 0.0
        %1055 = vmatpush1.msra.mxu0 0.0
        %1056 = vmatprep.subr.mxu0 0.0
        %1057 = vmatpush1.msra.mxu0 0.0
        %1058 = vmatprep.subr.mxu0 0.0
        %1059 = vmatpush1.msra.mxu0 0.0
        %1060 = vmatprep.subr.mxu0 0.0
        %1061 = vmatpush1.msra.mxu0 0.0
        %1062 = vmatprep.subr.mxu0 0.0
        %1063 = vmatpush1.msra.mxu0 0.0
        %1064 = vmatprep.subr.mxu0 0.0
        %1065 = vmatpush1.msra.mxu0 0.0
        %1066 = vmatprep.subr.mxu0 0.0
        %1067 = vmatpush1.msra.mxu0 0.0
        %1068 = vmatprep.mubr.f32.mxu0 0.0
        %1069 = vmatmul.mubr.f32.gmra.mrb[0].mxu0 %v996
        %v1070 = vpop.f32.mrb[0].mxu0
        %v1071 = vadd.f32 0.0, %v1070
        %v1072 = vpop.f32.mrb[0].mxu0
        %1073 = vmatprep.mubr.f32.mxu0 0.0
        %1074 = vmatmul.mubr.f32.gmra.mrb[0].mxu0 %v997
        %v1075 = vpop.f32.mrb[0].mxu0
        %v1076 = vadd.f32 0.0, %v1075
        %v1077 = vpop.f32.mrb[0].mxu0
        %1078 = vmatprep.mubr.f32.mxu0 0.0
        %1079 = vmatmul.mubr.f32.gmra.mrb[0].mxu0 %v998
        %v1080 = vpop.f32.mrb[0].mxu0
        %v1081 = vadd.f32 0.0, %v1080
        %v1082 = vpop.f32.mrb[0].mxu0
        %1083 = vmatprep.mubr.f32.mxu0 0.0
        %1084 = vmatmul.mubr.f32.gmra.mrb[0].mxu0 %v999
        %v1085 = vpop.f32.mrb[0].mxu0
        %v1086 = vadd.f32 0.0, %v1085
        %v1087 = vpop.f32.mrb[0].mxu0
        %1088 = vmatprep.mubr.f32.mxu0 0.0
        %1089 = vmatmul.mubr.f32.gmra.mrb[0].mxu0 %v1000
        %v1090 = vpop.f32.mrb[0].mxu0
        %v1091 = vadd.f32 0.0, %v1090
        %v1092 = vpop.f32.mrb[0].mxu0
        %1093 = vmatprep.mubr.f32.mxu0 0.0
        %1094 = vmatmul.mubr.f32.gmra.mrb[0].mxu0 %v1001
        %v1095 = vpop.f32.mrb[0].mxu0
        %v1096 = vadd.f32 0.0, %v1095
        %v1097 = vpop.f32.mrb[0].mxu0
        %1098 = vmatprep.mubr.f32.mxu0 0.0
        %1099 = vmatmul.mubr.f32.gmra.mrb[0].mxu0 %v1002
        %v1100 = vpop.f32.mrb[0].mxu0
        %v1101 = vadd.f32 0.0, %v1100
        %v1102 = vpop.f32.mrb[0].mxu0
        %1103 = vmatprep.mubr.f32.mxu0 0.0
        %1104 = vmatmul.mubr.f32.gmra.mrb[0].mxu0 %v1003
        %v1105 = vpop.f32.mrb[0].mxu0
        %v1106 = vadd.f32 0.0, %v1105
        %v1107 = vpop.f32.mrb[0].mxu0
        %1108 = vdwg.mxu0
        %s1109 = scalar_lea.vmem %s13, 64
        %v1110 = vld [vmem:[%s1109] sm:$0xff]
        %v1111 = vld [vmem:[%s1109 + $0x8] sm:$0xff]
        %v1112 = vld [vmem:[%s1109 + $0x10] sm:$0xff]
        %v1113 = vld [vmem:[%s1109 + $0x18] sm:$0xff]
        %v1114 = vld [vmem:[%s1109 + $0x20] sm:$0xff]
        %v1115 = vld [vmem:[%s1109 + $0x28] sm:$0xff]
        %v1116 = vld [vmem:[%s1109 + $0x30] sm:$0xff]
        %v1117 = vld [vmem:[%s1109 + $0x38] sm:$0xff]
        %1118 = vmatprep.subr.mxu0 0.0
        %1119 = vmatpush1.msra.mxu0 %v980
        %1120 = vmatprep.subr.mxu0 0.0
        %1121 = vmatpush1.msra.mxu0 %v981
        %1122 = vmatprep.subr.mxu0 0.0
        %1123 = vmatpush1.msra.mxu0 %v982
        %1124 = vmatprep.subr.mxu0 0.0
        %1125 = vmatpush1.msra.mxu0 %v983
        %1126 = vmatprep.subr.mxu0 0.0
        %1127 = vmatpush1.msra.mxu0 %v984
        %1128 = vmatprep.subr.mxu0 0.0
        %1129 = vmatpush1.msra.mxu0 %v985
        %1130 = vmatprep.subr.mxu0 0.0
        %1131 = vmatpush1.msra.mxu0 %v986
        %1132 = vmatprep.subr.mxu0 0.0
        %1133 = vmatpush1.msra.mxu0 %v987
        %1134 = vmatprep.subr.mxu0 0.0
        %1135 = vmatpush1.msra.mxu0 %v988
        %1136 = vmatprep.subr.mxu0 0.0
        %1137 = vmatpush1.msra.mxu0 %v989
        %1138 = vmatprep.subr.mxu0 0.0
        %1139 = vmatpush1.msra.mxu0 %v990
        %1140 = vmatprep.subr.mxu0 0.0
        %1141 = vmatpush1.msra.mxu0 %v991
        %1142 = vmatprep.subr.mxu0 0.0
        %1143 = vmatpush1.msra.mxu0 %v992
        %1144 = vmatprep.subr.mxu0 0.0
        %1145 = vmatpush1.msra.mxu0 %v993
        %1146 = vmatprep.subr.mxu0 0.0
        %1147 = vmatpush1.msra.mxu0 %v994
        %1148 = vmatprep.subr.mxu0 0.0
        %1149 = vmatpush1.msra.mxu0 %v995
        %1150 = vmatprep.subr.mxu0 0.0
        %1151 = vmatpush1.msra.mxu0 0.0
        %1152 = vmatprep.subr.mxu0 0.0
        %1153 = vmatpush1.msra.mxu0 0.0
        %1154 = vmatprep.subr.mxu0 0.0
        %1155 = vmatpush1.msra.mxu0 0.0
        %1156 = vmatprep.subr.mxu0 0.0
        %1157 = vmatpush1.msra.mxu0 0.0
        %1158 = vmatprep.subr.mxu0 0.0
        %1159 = vmatpush1.msra.mxu0 0.0
        %1160 = vmatprep.subr.mxu0 0.0
        %1161 = vmatpush1.msra.mxu0 0.0
        %1162 = vmatprep.subr.mxu0 0.0
        %1163 = vmatpush1.msra.mxu0 0.0
        %1164 = vmatprep.subr.mxu0 0.0
        %1165 = vmatpush1.msra.mxu0 0.0
        %1166 = vmatprep.subr.mxu0 0.0
        %1167 = vmatpush1.msra.mxu0 0.0
        %1168 = vmatprep.subr.mxu0 0.0
        %1169 = vmatpush1.msra.mxu0 0.0
        %1170 = vmatprep.subr.mxu0 0.0
        %1171 = vmatpush1.msra.mxu0 0.0
        %1172 = vmatprep.subr.mxu0 0.0
        %1173 = vmatpush1.msra.mxu0 0.0
        %1174 = vmatprep.subr.mxu0 0.0
        %1175 = vmatpush1.msra.mxu0 0.0
        %1176 = vmatprep.subr.mxu0 0.0
        %1177 = vmatpush1.msra.mxu0 0.0
        %1178 = vmatprep.subr.mxu0 0.0
        %1179 = vmatpush1.msra.mxu0 0.0
        %1180 = vmatprep.subr.mxu0 0.0
        %1181 = vmatpush1.msra.mxu0 0.0
        %1182 = vmatprep.mubr.f32.mxu0 0.0
        %1183 = vmatmul.mubr.f32.gmra.mrb[0].mxu0 %v1110
        %v1184 = vpop.f32.mrb[0].mxu0
        %v1185 = vadd.f32 0.0, %v1184
        %v1186 = vpop.f32.mrb[0].mxu0
        %1187 = vmatprep.mubr.f32.mxu0 0.0
        %1188 = vmatmul.mubr.f32.gmra.mrb[0].mxu0 %v1111
        %v1189 = vpop.f32.mrb[0].mxu0
        %v1190 = vadd.f32 0.0, %v1189
        %v1191 = vpop.f32.mrb[0].mxu0
        %1192 = vmatprep.mubr.f32.mxu0 0.0
        %1193 = vmatmul.mubr.f32.gmra.mrb[0].mxu0 %v1112
        %v1194 = vpop.f32.mrb[0].mxu0
        %v1195 = vadd.f32 0.0, %v1194
        %v1196 = vpop.f32.mrb[0].mxu0
        %1197 = vmatprep.mubr.f32.mxu0 0.0
        %1198 = vmatmul.mubr.f32.gmra.mrb[0].mxu0 %v1113
        %v1199 = vpop.f32.mrb[0].mxu0
        %v1200 = vadd.f32 0.0, %v1199
        %v1201 = vpop.f32.mrb[0].mxu0
        %1202 = vmatprep.mubr.f32.mxu0 0.0
        %1203 = vmatmul.mubr.f32.gmra.mrb[0].mxu0 %v1114
        %v1204 = vpop.f32.mrb[0].mxu0
        %v1205 = vadd.f32 0.0, %v1204
        %v1206 = vpop.f32.mrb[0].mxu0
        %1207 = vmatprep.mubr.f32.mxu0 0.0
        %1208 = vmatmul.mubr.f32.gmra.mrb[0].mxu0 %v1115
        %v1209 = vpop.f32.mrb[0].mxu0
        %v1210 = vadd.f32 0.0, %v1209
        %v1211 = vpop.f32.mrb[0].mxu0
        %1212 = vmatprep.mubr.f32.mxu0 0.0
        %1213 = vmatmul.mubr.f32.gmra.mrb[0].mxu0 %v1116
        %v1214 = vpop.f32.mrb[0].mxu0
        %v1215 = vadd.f32 0.0, %v1214
        %v1216 = vpop.f32.mrb[0].mxu0
        %1217 = vmatprep.mubr.f32.mxu0 0.0
        %1218 = vmatmul.mubr.f32.gmra.mrb[0].mxu0 %v1117
        %v1219 = vpop.f32.mrb[0].mxu0
        %v1220 = vadd.f32 0.0, %v1219
        %v1221 = vpop.f32.mrb[0].mxu0
        %1222 = vdwg.mxu0
        %v1223 = vmax.f32 %v1071, %v1185
        %v1224 = vmax.f32 %v1076, %v1190
        %v1225 = vmax.f32 %v1081, %v1195
        %v1226 = vmax.f32 %v1086, %v1200
        %v1227 = vmax.f32 %v1091, %v1205
        %v1228 = vmax.f32 %v1096, %v1210
        %v1229 = vmax.f32 %v1101, %v1215
        %v1230 = vmax.f32 %v1106, %v1220
        %1231 = vst [vmem:[#allocation2] sm:$0xff] 0.0
        %1232 = vst [vmem:[#allocation2 + $0x8] sm:$0xff] 0.0
        %1233 = vst [vmem:[#allocation2 + $0x10] sm:$0xff] 0.0
        %1234 = vst [vmem:[#allocation2 + $0x18] sm:$0xff] 0.0
        %1235 = vst [vmem:[#allocation2 + $0x20] sm:$0xff] 0.0
        %1236 = vst [vmem:[#allocation2 + $0x28] sm:$0xff] 0.0
        %1237 = vst [vmem:[#allocation2 + $0x30] sm:$0xff] 0.0
        %1238 = vst [vmem:[#allocation2 + $0x38] sm:$0xff] 0.0
        %1239 = vst [vmem:[#allocation2 + $0x40] sm:$0xff] 0.0
        %1240 = vst [vmem:[#allocation2 + $0x48] sm:$0xff] 0.0
        %1241 = vst [vmem:[#allocation2 + $0x50] sm:$0xff] 0.0
        %1242 = vst [vmem:[#allocation2 + $0x58] sm:$0xff] 0.0
        %1243 = vst [vmem:[#allocation2 + $0x60] sm:$0xff] 0.0
        %1244 = vst [vmem:[#allocation2 + $0x68] sm:$0xff] 0.0
        %1245 = vst [vmem:[#allocation2 + $0x70] sm:$0xff] 0.0
        %1246 = vst [vmem:[#allocation2 + $0x78] sm:$0x3] 0.0
        %1247 = vst [vmem:[#allocation2 + $0x16] sm:$0xff] %v1223
        %1248 = vst [vmem:[#allocation2 + $0x20] sm:$0xff] %v1224
        %1249 = vst [vmem:[#allocation2 + $0x2a] sm:$0xff] %v1225
        %1250 = vst [vmem:[#allocation2 + $0x34] sm:$0xff] %v1226
        %1251 = vst [vmem:[#allocation2 + $0x3e] sm:$0xff] %v1227
        %1252 = vst [vmem:[#allocation2 + $0x48] sm:$0xff] %v1228
        %1253 = vst [vmem:[#allocation2 + $0x52] sm:$0xff] %v1229
        %1254 = vst [vmem:[#allocation2 + $0x5c] sm:$0xff] %v1230
        %v1255 = vld [vmem:[#allocation2] sm:$0xff]
        %v1256 = vld [vmem:[#allocation2 + $0x8] sm:$0xff]
        %v1257 = vld [vmem:[#allocation2 + $0x10] sm:$0xff]
        %v1258 = vld [vmem:[#allocation2 + $0x18] sm:$0xff]
        %v1259 = vld [vmem:[#allocation2 + $0x20] sm:$0xff]
        %v1260 = vld [vmem:[#allocation2 + $0x28] sm:$0xff]
        %v1261 = vld [vmem:[#allocation2 + $0x30] sm:$0xff]
        %v1262 = vld [vmem:[#allocation2 + $0x38] sm:$0xff]
        %v1263 = vld [vmem:[#allocation2 + $0x40] sm:$0xff]
        %v1264 = vld [vmem:[#allocation2 + $0x48] sm:$0xff]
        %v1265 = vld [vmem:[#allocation2 + $0x50] sm:$0xff]
        %v1266 = vld [vmem:[#allocation2 + $0x58] sm:$0xff]
        %v1267 = vld [vmem:[#allocation2 + $0x60] sm:$0xf]
        %v1268 = vld [vmem:[#allocation4] sm:$0xff]
        %v1269 = vld [vmem:[#allocation4 + $0x8] sm:$0xff]
        %v1270 = vld [vmem:[#allocation4 + $0x10] sm:$0xff]
        %v1271 = vld [vmem:[#allocation4 + $0x18] sm:$0xff]
        %v1272 = vld [vmem:[#allocation4 + $0x20] sm:$0xff]
        %v1273 = vld [vmem:[#allocation4 + $0x28] sm:$0xff]
        %v1274 = vld [vmem:[#allocation4 + $0x30] sm:$0xff]
        %v1275 = vld [vmem:[#allocation4 + $0x38] sm:$0xff]
        %v1276 = vld [vmem:[#allocation4 + $0x40] sm:$0xff]
        %v1277 = vld [vmem:[#allocation4 + $0x48] sm:$0xff]
        %v1278 = vld [vmem:[#allocation4 + $0x50] sm:$0xff]
        %v1279 = vld [vmem:[#allocation4 + $0x58] sm:$0xff]
        %v1280 = vld [vmem:[#allocation4 + $0x60] sm:$0xff]
        %v1281 = vld [vmem:[#allocation4 + $0x68] sm:$0xff]
        %v1282 = vld [vmem:[#allocation4 + $0x70] sm:$0xff]
        %v1283 = vld [vmem:[#allocation4 + $0x78] sm:$0xff]
        %v1284 = vld [vmem:[#allocation2 + $0x1] sm:$0xff]
        %v1285 = vld [vmem:[#allocation2 + $0x9] sm:$0xff]
        %v1286 = vld [vmem:[#allocation2 + $0x11] sm:$0xff]
        %v1287 = vld [vmem:[#allocation2 + $0x19] sm:$0xff]
        %v1288 = vld [vmem:[#allocation2 + $0x21] sm:$0xff]
        %v1289 = vld [vmem:[#allocation2 + $0x29] sm:$0xff]
        %v1290 = vld [vmem:[#allocation2 + $0x31] sm:$0xff]
        %v1291 = vld [vmem:[#allocation2 + $0x39] sm:$0xff]
        %v1292 = vld [vmem:[#allocation2 + $0x41] sm:$0xff]
        %v1293 = vld [vmem:[#allocation2 + $0x49] sm:$0xff]
        %v1294 = vld [vmem:[#allocation2 + $0x51] sm:$0xff]
        %v1295 = vld [vmem:[#allocation2 + $0x59] sm:$0xff]
        %v1296 = vld [vmem:[#allocation2 + $0x61] sm:$0xf]
        %s1297 = scalar_lea.vmem [#allocation4], 128
        %v1298 = vld [vmem:[%s1297] sm:$0xff]
        %v1299 = vld [vmem:[%s1297 + $0x8] sm:$0xff]
        %v1300 = vld [vmem:[%s1297 + $0x10] sm:$0xff]
        %v1301 = vld [vmem:[%s1297 + $0x18] sm:$0xff]
        %v1302 = vld [vmem:[%s1297 + $0x20] sm:$0xff]
        %v1303 = vld [vmem:[%s1297 + $0x28] sm:$0xff]
        %v1304 = vld [vmem:[%s1297 + $0x30] sm:$0xff]
        %v1305 = vld [vmem:[%s1297 + $0x38] sm:$0xff]
        %v1306 = vld [vmem:[%s1297 + $0x40] sm:$0xff]
        %v1307 = vld [vmem:[%s1297 + $0x48] sm:$0xff]
        %v1308 = vld [vmem:[%s1297 + $0x50] sm:$0xff]
        %v1309 = vld [vmem:[%s1297 + $0x58] sm:$0xff]
        %v1310 = vld [vmem:[%s1297 + $0x60] sm:$0xff]
        %v1311 = vld [vmem:[%s1297 + $0x68] sm:$0xff]
        %v1312 = vld [vmem:[%s1297 + $0x70] sm:$0xff]
        %v1313 = vld [vmem:[%s1297 + $0x78] sm:$0xff]
        %1314 = vmatprep.subr.mxu0 0.0
        %1315 = vmatpush1.msra.mxu0 %v1298
        %1316 = vmatprep.subr.mxu0 0.0
        %1317 = vmatpush1.msra.mxu0 %v1299
        %1318 = vmatprep.subr.mxu0 0.0
        %1319 = vmatpush1.msra.mxu0 %v1300
        %1320 = vmatprep.subr.mxu0 0.0
        %1321 = vmatpush1.msra.mxu0 %v1301
        %1322 = vmatprep.subr.mxu0 0.0
        %1323 = vmatpush1.msra.mxu0 %v1302
        %1324 = vmatprep.subr.mxu0 0.0
        %1325 = vmatpush1.msra.mxu0 %v1303
        %1326 = vmatprep.subr.mxu0 0.0
        %1327 = vmatpush1.msra.mxu0 %v1304
        %1328 = vmatprep.subr.mxu0 0.0
        %1329 = vmatpush1.msra.mxu0 %v1305
        %1330 = vmatprep.subr.mxu0 0.0
        %1331 = vmatpush1.msra.mxu0 %v1306
        %1332 = vmatprep.subr.mxu0 0.0
        %1333 = vmatpush1.msra.mxu0 %v1307
        %1334 = vmatprep.subr.mxu0 0.0
        %1335 = vmatpush1.msra.mxu0 %v1308
        %1336 = vmatprep.subr.mxu0 0.0
        %1337 = vmatpush1.msra.mxu0 %v1309
        %1338 = vmatprep.subr.mxu0 0.0
        %1339 = vmatpush1.msra.mxu0 %v1310
        %1340 = vmatprep.subr.mxu0 0.0
        %1341 = vmatpush1.msra.mxu0 %v1311
        %1342 = vmatprep.subr.mxu0 0.0
        %1343 = vmatpush1.msra.mxu0 %v1312
        %1344 = vmatprep.subr.mxu0 0.0
        %1345 = vmatpush1.msra.mxu0 %v1313
        %1346 = vmatprep.subr.mxu0 0.0
        %1347 = vmatpush1.msra.mxu0 0.0
        %1348 = vmatprep.subr.mxu0 0.0
        %1349 = vmatpush1.msra.mxu0 0.0
        %1350 = vmatprep.subr.mxu0 0.0
        %1351 = vmatpush1.msra.mxu0 0.0
        %1352 = vmatprep.subr.mxu0 0.0
        %1353 = vmatpush1.msra.mxu0 0.0
        %1354 = vmatprep.subr.mxu0 0.0
        %1355 = vmatpush1.msra.mxu0 0.0
        %1356 = vmatprep.subr.mxu0 0.0
        %1357 = vmatpush1.msra.mxu0 0.0
        %1358 = vmatprep.subr.mxu0 0.0
        %1359 = vmatpush1.msra.mxu0 0.0
        %1360 = vmatprep.subr.mxu0 0.0
        %1361 = vmatpush1.msra.mxu0 0.0
        %1362 = vmatprep.subr.mxu0 0.0
        %1363 = vmatpush1.msra.mxu0 0.0
        %1364 = vmatprep.subr.mxu0 0.0
        %1365 = vmatpush1.msra.mxu0 0.0
        %1366 = vmatprep.subr.mxu0 0.0
        %1367 = vmatpush1.msra.mxu0 0.0
        %1368 = vmatprep.subr.mxu0 0.0
        %1369 = vmatpush1.msra.mxu0 0.0
        %1370 = vmatprep.subr.mxu0 0.0
        %1371 = vmatpush1.msra.mxu0 0.0
        %1372 = vmatprep.subr.mxu0 0.0
        %1373 = vmatpush1.msra.mxu0 0.0
        %1374 = vmatprep.subr.mxu0 0.0
        %1375 = vmatpush1.msra.mxu0 0.0
        %1376 = vmatprep.subr.mxu0 0.0
        %1377 = vmatpush1.msra.mxu0 0.0
        %1378 = vmatprep.mubr.f32.mxu0 0.0
        %1379 = vmatmul.mubr.f32.gmra.mrb[0].mxu0 %v1284
        %v1380 = vpop.f32.mrb[0].mxu0
        %v1381 = vadd.f32 0.0, %v1380
        %v1382 = vpop.f32.mrb[0].mxu0
        %1383 = vmatprep.mubr.f32.mxu0 0.0
        %1384 = vmatmul.mubr.f32.gmra.mrb[0].mxu0 %v1285
        %v1385 = vpop.f32.mrb[0].mxu0
        %v1386 = vadd.f32 0.0, %v1385
        %v1387 = vpop.f32.mrb[0].mxu0
        %1388 = vmatprep.mubr.f32.mxu0 0.0
        %1389 = vmatmul.mubr.f32.gmra.mrb[0].mxu0 %v1286
        %v1390 = vpop.f32.mrb[0].mxu0
        %v1391 = vadd.f32 0.0, %v1390
        %v1392 = vpop.f32.mrb[0].mxu0
        %1393 = vmatprep.mubr.f32.mxu0 0.0
        %1394 = vmatmul.mubr.f32.gmra.mrb[0].mxu0 %v1287
        %v1395 = vpop.f32.mrb[0].mxu0
        %v1396 = vadd.f32 0.0, %v1395
        %v1397 = vpop.f32.mrb[0].mxu0
        %1398 = vmatprep.mubr.f32.mxu0 0.0
        %1399 = vmatmul.mubr.f32.gmra.mrb[0].mxu0 %v1288
        %v1400 = vpop.f32.mrb[0].mxu0
        %v1401 = vadd.f32 0.0, %v1400
        %v1402 = vpop.f32.mrb[0].mxu0
        %1403 = vmatprep.mubr.f32.mxu0 0.0
        %1404 = vmatmul.mubr.f32.gmra.mrb[0].mxu0 %v1289
        %v1405 = vpop.f32.mrb[0].mxu0
        %v1406 = vadd.f32 0.0, %v1405
        %v1407 = vpop.f32.mrb[0].mxu0
        %1408 = vmatprep.mubr.f32.mxu0 0.0
        %1409 = vmatmul.mubr.f32.gmra.mrb[0].mxu0 %v1290
        %v1410 = vpop.f32.mrb[0].mxu0
        %v1411 = vadd.f32 0.0, %v1410
        %v1412 = vpop.f32.mrb[0].mxu0
        %1413 = vmatprep.mubr.f32.mxu0 0.0
        %1414 = vmatmul.mubr.f32.gmra.mrb[0].mxu0 %v1291
        %v1415 = vpop.f32.mrb[0].mxu0
        %v1416 = vadd.f32 0.0, %v1415
        %v1417 = vpop.f32.mrb[0].mxu0
        %1418 = vmatprep.mubr.f32.mxu0 0.0
        %1419 = vmatmul.mubr.f32.gmra.mrb[0].mxu0 %v1292
        %v1420 = vpop.f32.mrb[0].mxu0
        %v1421 = vadd.f32 0.0, %v1420
        %v1422 = vpop.f32.mrb[0].mxu0
        %1423 = vmatprep.mubr.f32.mxu0 0.0
        %1424 = vmatmul.mubr.f32.gmra.mrb[0].mxu0 %v1293
        %v1425 = vpop.f32.mrb[0].mxu0
        %v1426 = vadd.f32 0.0, %v1425
        %v1427 = vpop.f32.mrb[0].mxu0
        %1428 = vmatprep.mubr.f32.mxu0 0.0
        %1429 = vmatmul.mubr.f32.gmra.mrb[0].mxu0 %v1294
        %v1430 = vpop.f32.mrb[0].mxu0
        %v1431 = vadd.f32 0.0, %v1430
        %v1432 = vpop.f32.mrb[0].mxu0
        %1433 = vmatprep.mubr.f32.mxu0 0.0
        %1434 = vmatmul.mubr.f32.gmra.mrb[0].mxu0 %v1295
        %v1435 = vpop.f32.mrb[0].mxu0
        %v1436 = vadd.f32 0.0, %v1435
        %v1437 = vpop.f32.mrb[0].mxu0
        %1438 = vmatprep.mubr.f32.mxu0 0.0
        %1439 = vmatmul.mubr.f32.gmra.mrb[0].mxu0 %v1296
        %v1440 = vpop.f32.mrb[0].mxu0
        %v1441 = vadd.f32 0.0, %v1440
        %v1442 = vpop.f32.mrb[0].mxu0
        %1443 = vdwg.mxu0
        %1444 = vmatprep.subr.mxu0 0.0
        %1445 = vmatpush1.msra.mxu0 %v1268
        %1446 = vmatprep.subr.mxu0 0.0
        %1447 = vmatpush1.msra.mxu0 %v1269
        %1448 = vmatprep.subr.mxu0 0.0
        %1449 = vmatpush1.msra.mxu0 %v1270
        %1450 = vmatprep.subr.mxu0 0.0
        %1451 = vmatpush1.msra.mxu0 %v1271
        %1452 = vmatprep.subr.mxu0 0.0
        %1453 = vmatpush1.msra.mxu0 %v1272
        %1454 = vmatprep.subr.mxu0 0.0
        %1455 = vmatpush1.msra.mxu0 %v1273
        %1456 = vmatprep.subr.mxu0 0.0
        %1457 = vmatpush1.msra.mxu0 %v1274
        %1458 = vmatprep.subr.mxu0 0.0
        %1459 = vmatpush1.msra.mxu0 %v1275
        %1460 = vmatprep.subr.mxu0 0.0
        %1461 = vmatpush1.msra.mxu0 %v1276
        %1462 = vmatprep.subr.mxu0 0.0
        %1463 = vmatpush1.msra.mxu0 %v1277
        %1464 = vmatprep.subr.mxu0 0.0
        %1465 = vmatpush1.msra.mxu0 %v1278
        %1466 = vmatprep.subr.mxu0 0.0
        %1467 = vmatpush1.msra.mxu0 %v1279
        %1468 = vmatprep.subr.mxu0 0.0
        %1469 = vmatpush1.msra.mxu0 %v1280
        %1470 = vmatprep.subr.mxu0 0.0
        %1471 = vmatpush1.msra.mxu0 %v1281
        %1472 = vmatprep.subr.mxu0 0.0
        %1473 = vmatpush1.msra.mxu0 %v1282
        %1474 = vmatprep.subr.mxu0 0.0
        %1475 = vmatpush1.msra.mxu0 %v1283
        %1476 = vmatprep.subr.mxu0 0.0
        %1477 = vmatpush1.msra.mxu0 0.0
        %1478 = vmatprep.subr.mxu0 0.0
        %1479 = vmatpush1.msra.mxu0 0.0
        %1480 = vmatprep.subr.mxu0 0.0
        %1481 = vmatpush1.msra.mxu0 0.0
        %1482 = vmatprep.subr.mxu0 0.0
        %1483 = vmatpush1.msra.mxu0 0.0
        %1484 = vmatprep.subr.mxu0 0.0
        %1485 = vmatpush1.msra.mxu0 0.0
        %1486 = vmatprep.subr.mxu0 0.0
        %1487 = vmatpush1.msra.mxu0 0.0
        %1488 = vmatprep.subr.mxu0 0.0
        %1489 = vmatpush1.msra.mxu0 0.0
        %1490 = vmatprep.subr.mxu0 0.0
        %1491 = vmatpush1.msra.mxu0 0.0
        %1492 = vmatprep.subr.mxu0 0.0
        %1493 = vmatpush1.msra.mxu0 0.0
        %1494 = vmatprep.subr.mxu0 0.0
        %1495 = vmatpush1.msra.mxu0 0.0
        %1496 = vmatprep.subr.mxu0 0.0
        %1497 = vmatpush1.msra.mxu0 0.0
        %1498 = vmatprep.subr.mxu0 0.0
        %1499 = vmatpush1.msra.mxu0 0.0
        %1500 = vmatprep.subr.mxu0 0.0
        %1501 = vmatpush1.msra.mxu0 0.0
        %1502 = vmatprep.subr.mxu0 0.0
        %1503 = vmatpush1.msra.mxu0 0.0
        %1504 = vmatprep.subr.mxu0 0.0
        %1505 = vmatpush1.msra.mxu0 0.0
        %1506 = vmatprep.subr.mxu0 0.0
        %1507 = vmatpush1.msra.mxu0 0.0
        %1508 = vmatprep.mubr.f32.mxu0 0.0
        %1509 = vmatmul.mubr.f32.gmra.mrb[0].mxu0 %v1255
        %v1510 = vpop.f32.mrb[0].mxu0
        %v1511 = vadd.f32 %v1381, %v1510
        %v1512 = vpop.f32.mrb[0].mxu0
        %1513 = vmatprep.mubr.f32.mxu0 0.0
        %1514 = vmatmul.mubr.f32.gmra.mrb[0].mxu0 %v1256
        %v1515 = vpop.f32.mrb[0].mxu0
        %v1516 = vadd.f32 %v1386, %v1515
        %v1517 = vpop.f32.mrb[0].mxu0
        %1518 = vmatprep.mubr.f32.mxu0 0.0
        %1519 = vmatmul.mubr.f32.gmra.mrb[0].mxu0 %v1257
        %v1520 = vpop.f32.mrb[0].mxu0
        %v1521 = vadd.f32 %v1391, %v1520
        %v1522 = vpop.f32.mrb[0].mxu0
        %1523 = vmatprep.mubr.f32.mxu0 0.0
        %1524 = vmatmul.mubr.f32.gmra.mrb[0].mxu0 %v1258
        %v1525 = vpop.f32.mrb[0].mxu0
        %v1526 = vadd.f32 %v1396, %v1525
        %v1527 = vpop.f32.mrb[0].mxu0
        %1528 = vmatprep.mubr.f32.mxu0 0.0
        %1529 = vmatmul.mubr.f32.gmra.mrb[0].mxu0 %v1259
        %v1530 = vpop.f32.mrb[0].mxu0
        %v1531 = vadd.f32 %v1401, %v1530
        %v1532 = vpop.f32.mrb[0].mxu0
        %1533 = vmatprep.mubr.f32.mxu0 0.0
        %1534 = vmatmul.mubr.f32.gmra.mrb[0].mxu0 %v1260
        %v1535 = vpop.f32.mrb[0].mxu0
        %v1536 = vadd.f32 %v1406, %v1535
        %v1537 = vpop.f32.mrb[0].mxu0
        %1538 = vmatprep.mubr.f32.mxu0 0.0
        %1539 = vmatmul.mubr.f32.gmra.mrb[0].mxu0 %v1261
        %v1540 = vpop.f32.mrb[0].mxu0
        %v1541 = vadd.f32 %v1411, %v1540
        %v1542 = vpop.f32.mrb[0].mxu0
        %1543 = vmatprep.mubr.f32.mxu0 0.0
        %1544 = vmatmul.mubr.f32.gmra.mrb[0].mxu0 %v1262
        %v1545 = vpop.f32.mrb[0].mxu0
        %v1546 = vadd.f32 %v1416, %v1545
        %v1547 = vpop.f32.mrb[0].mxu0
        %1548 = vmatprep.mubr.f32.mxu0 0.0
        %1549 = vmatmul.mubr.f32.gmra.mrb[0].mxu0 %v1263
        %v1550 = vpop.f32.mrb[0].mxu0
        %v1551 = vadd.f32 %v1421, %v1550
        %v1552 = vpop.f32.mrb[0].mxu0
        %1553 = vmatprep.mubr.f32.mxu0 0.0
        %1554 = vmatmul.mubr.f32.gmra.mrb[0].mxu0 %v1264
        %v1555 = vpop.f32.mrb[0].mxu0
        %v1556 = vadd.f32 %v1426, %v1555
        %v1557 = vpop.f32.mrb[0].mxu0
        %1558 = vmatprep.mubr.f32.mxu0 0.0
        %1559 = vmatmul.mubr.f32.gmra.mrb[0].mxu0 %v1265
        %v1560 = vpop.f32.mrb[0].mxu0
        %v1561 = vadd.f32 %v1431, %v1560
        %v1562 = vpop.f32.mrb[0].mxu0
        %1563 = vmatprep.mubr.f32.mxu0 0.0
        %1564 = vmatmul.mubr.f32.gmra.mrb[0].mxu0 %v1266
        %v1565 = vpop.f32.mrb[0].mxu0
        %v1566 = vadd.f32 %v1436, %v1565
        %v1567 = vpop.f32.mrb[0].mxu0
        %1568 = vmatprep.mubr.f32.mxu0 0.0
        %1569 = vmatmul.mubr.f32.gmra.mrb[0].mxu0 %v1267
        %v1570 = vpop.f32.mrb[0].mxu0
        %v1571 = vadd.f32 %v1441, %v1570
        %v1572 = vpop.f32.mrb[0].mxu0
        %1573 = vdwg.mxu0
        %v1574 = vld [vmem:[#allocation2 + $0x2] sm:$0xff]
        %v1575 = vld [vmem:[#allocation2 + $0xa] sm:$0xff]
        %v1576 = vld [vmem:[#allocation2 + $0x12] sm:$0xff]
        %v1577 = vld [vmem:[#allocation2 + $0x1a] sm:$0xff]
        %v1578 = vld [vmem:[#allocation2 + $0x22] sm:$0xff]
        %v1579 = vld [vmem:[#allocation2 + $0x2a] sm:$0xff]
        %v1580 = vld [vmem:[#allocation2 + $0x32] sm:$0xff]
        %v1581 = vld [vmem:[#allocation2 + $0x3a] sm:$0xff]
        %v1582 = vld [vmem:[#allocation2 + $0x42] sm:$0xff]
        %v1583 = vld [vmem:[#allocation2 + $0x4a] sm:$0xff]
        %v1584 = vld [vmem:[#allocation2 + $0x52] sm:$0xff]
        %v1585 = vld [vmem:[#allocation2 + $0x5a] sm:$0xff]
        %v1586 = vld [vmem:[#allocation2 + $0x62] sm:$0xf]
        %s1587 = scalar_lea.vmem [#allocation4], 256
        %v1588 = vld [vmem:[%s1587] sm:$0xff]
        %v1589 = vld [vmem:[%s1587 + $0x8] sm:$0xff]
        %v1590 = vld [vmem:[%s1587 + $0x10] sm:$0xff]
        %v1591 = vld [vmem:[%s1587 + $0x18] sm:$0xff]
        %v1592 = vld [vmem:[%s1587 + $0x20] sm:$0xff]
        %v1593 = vld [vmem:[%s1587 + $0x28] sm:$0xff]
        %v1594 = vld [vmem:[%s1587 + $0x30] sm:$0xff]
        %v1595 = vld [vmem:[%s1587 + $0x38] sm:$0xff]
        %v1596 = vld [vmem:[%s1587 + $0x40] sm:$0xff]
        %v1597 = vld [vmem:[%s1587 + $0x48] sm:$0xff]
        %v1598 = vld [vmem:[%s1587 + $0x50] sm:$0xff]
        %v1599 = vld [vmem:[%s1587 + $0x58] sm:$0xff]
        %v1600 = vld [vmem:[%s1587 + $0x60] sm:$0xff]
        %v1601 = vld [vmem:[%s1587 + $0x68] sm:$0xff]
        %v1602 = vld [vmem:[%s1587 + $0x70] sm:$0xff]
        %v1603 = vld [vmem:[%s1587 + $0x78] sm:$0xff]
        %1604 = vmatprep.subr.mxu0 0.0
        %1605 = vmatpush1.msra.mxu0 %v1588
        %1606 = vmatprep.subr.mxu0 0.0
        %1607 = vmatpush1.msra.mxu0 %v1589
        %1608 = vmatprep.subr.mxu0 0.0
        %1609 = vmatpush1.msra.mxu0 %v1590
        %1610 = vmatprep.subr.mxu0 0.0
        %1611 = vmatpush1.msra.mxu0 %v1591
        %1612 = vmatprep.subr.mxu0 0.0
        %1613 = vmatpush1.msra.mxu0 %v1592
        %1614 = vmatprep.subr.mxu0 0.0
        %1615 = vmatpush1.msra.mxu0 %v1593
        %1616 = vmatprep.subr.mxu0 0.0
        %1617 = vmatpush1.msra.mxu0 %v1594
        %1618 = vmatprep.subr.mxu0 0.0
        %1619 = vmatpush1.msra.mxu0 %v1595
        %1620 = vmatprep.subr.mxu0 0.0
        %1621 = vmatpush1.msra.mxu0 %v1596
        %1622 = vmatprep.subr.mxu0 0.0
        %1623 = vmatpush1.msra.mxu0 %v1597
        %1624 = vmatprep.subr.mxu0 0.0
        %1625 = vmatpush1.msra.mxu0 %v1598
        %1626 = vmatprep.subr.mxu0 0.0
        %1627 = vmatpush1.msra.mxu0 %v1599
        %1628 = vmatprep.subr.mxu0 0.0
        %1629 = vmatpush1.msra.mxu0 %v1600
        %1630 = vmatprep.subr.mxu0 0.0
        %1631 = vmatpush1.msra.mxu0 %v1601
        %1632 = vmatprep.subr.mxu0 0.0
        %1633 = vmatpush1.msra.mxu0 %v1602
        %1634 = vmatprep.subr.mxu0 0.0
        %1635 = vmatpush1.msra.mxu0 %v1603
        %1636 = vmatprep.subr.mxu0 0.0
        %1637 = vmatpush1.msra.mxu0 0.0
        %1638 = vmatprep.subr.mxu0 0.0
        %1639 = vmatpush1.msra.mxu0 0.0
        %1640 = vmatprep.subr.mxu0 0.0
        %1641 = vmatpush1.msra.mxu0 0.0
        %1642 = vmatprep.subr.mxu0 0.0
        %1643 = vmatpush1.msra.mxu0 0.0
        %1644 = vmatprep.subr.mxu0 0.0
        %1645 = vmatpush1.msra.mxu0 0.0
        %1646 = vmatprep.subr.mxu0 0.0
        %1647 = vmatpush1.msra.mxu0 0.0
        %1648 = vmatprep.subr.mxu0 0.0
        %1649 = vmatpush1.msra.mxu0 0.0
        %1650 = vmatprep.subr.mxu0 0.0
        %1651 = vmatpush1.msra.mxu0 0.0
        %1652 = vmatprep.subr.mxu0 0.0
        %1653 = vmatpush1.msra.mxu0 0.0
        %1654 = vmatprep.subr.mxu0 0.0
        %1655 = vmatpush1.msra.mxu0 0.0
        %1656 = vmatprep.subr.mxu0 0.0
        %1657 = vmatpush1.msra.mxu0 0.0
        %1658 = vmatprep.subr.mxu0 0.0
        %1659 = vmatpush1.msra.mxu0 0.0
        %1660 = vmatprep.subr.mxu0 0.0
        %1661 = vmatpush1.msra.mxu0 0.0
        %1662 = vmatprep.subr.mxu0 0.0
        %1663 = vmatpush1.msra.mxu0 0.0
        %1664 = vmatprep.subr.mxu0 0.0
        %1665 = vmatpush1.msra.mxu0 0.0
        %1666 = vmatprep.subr.mxu0 0.0
        %1667 = vmatpush1.msra.mxu0 0.0
        %1668 = vmatprep.mubr.f32.mxu0 0.0
        %1669 = vmatmul.mubr.f32.gmra.mrb[0].mxu0 %v1574
        %v1670 = vpop.f32.mrb[0].mxu0
        %v1671 = vadd.f32 0.0, %v1670
        %v1672 = vpop.f32.mrb[0].mxu0
        %1673 = vmatprep.mubr.f32.mxu0 0.0
        %1674 = vmatmul.mubr.f32.gmra.mrb[0].mxu0 %v1575
        %v1675 = vpop.f32.mrb[0].mxu0
        %v1676 = vadd.f32 0.0, %v1675
        %v1677 = vpop.f32.mrb[0].mxu0
        %1678 = vmatprep.mubr.f32.mxu0 0.0
        %1679 = vmatmul.mubr.f32.gmra.mrb[0].mxu0 %v1576
        %v1680 = vpop.f32.mrb[0].mxu0
        %v1681 = vadd.f32 0.0, %v1680
        %v1682 = vpop.f32.mrb[0].mxu0
        %1683 = vmatprep.mubr.f32.mxu0 0.0
        %1684 = vmatmul.mubr.f32.gmra.mrb[0].mxu0 %v1577
        %v1685 = vpop.f32.mrb[0].mxu0
        %v1686 = vadd.f32 0.0, %v1685
        %v1687 = vpop.f32.mrb[0].mxu0
        %1688 = vmatprep.mubr.f32.mxu0 0.0
        %1689 = vmatmul.mubr.f32.gmra.mrb[0].mxu0 %v1578
        %v1690 = vpop.f32.mrb[0].mxu0
        %v1691 = vadd.f32 0.0, %v1690
        %v1692 = vpop.f32.mrb[0].mxu0
        %1693 = vmatprep.mubr.f32.mxu0 0.0
        %1694 = vmatmul.mubr.f32.gmra.mrb[0].mxu0 %v1579
        %v1695 = vpop.f32.mrb[0].mxu0
        %v1696 = vadd.f32 0.0, %v1695
        %v1697 = vpop.f32.mrb[0].mxu0
        %1698 = vmatprep.mubr.f32.mxu0 0.0
        %1699 = vmatmul.mubr.f32.gmra.mrb[0].mxu0 %v1580
        %v1700 = vpop.f32.mrb[0].mxu0
        %v1701 = vadd.f32 0.0, %v1700
        %v1702 = vpop.f32.mrb[0].mxu0
        %1703 = vmatprep.mubr.f32.mxu0 0.0
        %1704 = vmatmul.mubr.f32.gmra.mrb[0].mxu0 %v1581
        %v1705 = vpop.f32.mrb[0].mxu0
        %v1706 = vadd.f32 0.0, %v1705
        %v1707 = vpop.f32.mrb[0].mxu0
        %1708 = vmatprep.mubr.f32.mxu0 0.0
        %1709 = vmatmul.mubr.f32.gmra.mrb[0].mxu0 %v1582
        %v1710 = vpop.f32.mrb[0].mxu0
        %v1711 = vadd.f32 0.0, %v1710
        %v1712 = vpop.f32.mrb[0].mxu0
        %1713 = vmatprep.mubr.f32.mxu0 0.0
        %1714 = vmatmul.mubr.f32.gmra.mrb[0].mxu0 %v1583
        %v1715 = vpop.f32.mrb[0].mxu0
        %v1716 = vadd.f32 0.0, %v1715
        %v1717 = vpop.f32.mrb[0].mxu0
        %1718 = vmatprep.mubr.f32.mxu0 0.0
        %1719 = vmatmul.mubr.f32.gmra.mrb[0].mxu0 %v1584
        %v1720 = vpop.f32.mrb[0].mxu0
        %v1721 = vadd.f32 0.0, %v1720
        %v1722 = vpop.f32.mrb[0].mxu0
        %1723 = vmatprep.mubr.f32.mxu0 0.0
        %1724 = vmatmul.mubr.f32.gmra.mrb[0].mxu0 %v1585
        %v1725 = vpop.f32.mrb[0].mxu0
        %v1726 = vadd.f32 0.0, %v1725
        %v1727 = vpop.f32.mrb[0].mxu0
        %1728 = vmatprep.mubr.f32.mxu0 0.0
        %1729 = vmatmul.mubr.f32.gmra.mrb[0].mxu0 %v1586
        %v1730 = vpop.f32.mrb[0].mxu0
        %v1731 = vadd.f32 0.0, %v1730
        %v1732 = vpop.f32.mrb[0].mxu0
        %1733 = vdwg.mxu0
        %v1734 = vadd.f32 %v1511, %v1671
        %v1735 = vadd.f32 %v1516, %v1676
        %v1736 = vadd.f32 %v1521, %v1681
        %v1737 = vadd.f32 %v1526, %v1686
        %v1738 = vadd.f32 %v1531, %v1691
        %v1739 = vadd.f32 %v1536, %v1696
        %v1740 = vadd.f32 %v1541, %v1701
        %v1741 = vadd.f32 %v1546, %v1706
        %v1742 = vadd.f32 %v1551, %v1711
        %v1743 = vadd.f32 %v1556, %v1716
        %v1744 = vadd.f32 %v1561, %v1721
        %v1745 = vadd.f32 %v1566, %v1726
        %v1746 = vadd.f32 %v1571, %v1731
        %v1747 = vld [vmem:[#allocation2 + $0xa] sm:$0xff]
        %v1748 = vld [vmem:[#allocation2 + $0x12] sm:$0xff]
        %v1749 = vld [vmem:[#allocation2 + $0x1a] sm:$0xff]
        %v1750 = vld [vmem:[#allocation2 + $0x22] sm:$0xff]
        %v1751 = vld [vmem:[#allocation2 + $0x2a] sm:$0xff]
        %v1752 = vld [vmem:[#allocation2 + $0x32] sm:$0xff]
        %v1753 = vld [vmem:[#allocation2 + $0x3a] sm:$0xff]
        %v1754 = vld [vmem:[#allocation2 + $0x42] sm:$0xff]
        %v1755 = vld [vmem:[#allocation2 + $0x4a] sm:$0xff]
        %v1756 = vld [vmem:[#allocation2 + $0x52] sm:$0xff]
        %v1757 = vld [vmem:[#allocation2 + $0x5a] sm:$0xff]
        %v1758 = vld [vmem:[#allocation2 + $0x62] sm:$0xff]
        %v1759 = vld [vmem:[#allocation2 + $0x6a] sm:$0xf]
        %s1760 = scalar_lea.vmem [#allocation4], 384
        %v1761 = vld [vmem:[%s1760] sm:$0xff]
        %v1762 = vld [vmem:[%s1760 + $0x8] sm:$0xff]
        %v1763 = vld [vmem:[%s1760 + $0x10] sm:$0xff]
        %v1764 = vld [vmem:[%s1760 + $0x18] sm:$0xff]
        %v1765 = vld [vmem:[%s1760 + $0x20] sm:$0xff]
        %v1766 = vld [vmem:[%s1760 + $0x28] sm:$0xff]
        %v1767 = vld [vmem:[%s1760 + $0x30] sm:$0xff]
        %v1768 = vld [vmem:[%s1760 + $0x38] sm:$0xff]
        %v1769 = vld [vmem:[%s1760 + $0x40] sm:$0xff]
        %v1770 = vld [vmem:[%s1760 + $0x48] sm:$0xff]
        %v1771 = vld [vmem:[%s1760 + $0x50] sm:$0xff]
        %v1772 = vld [vmem:[%s1760 + $0x58] sm:$0xff]
        %v1773 = vld [vmem:[%s1760 + $0x60] sm:$0xff]
        %v1774 = vld [vmem:[%s1760 + $0x68] sm:$0xff]
        %v1775 = vld [vmem:[%s1760 + $0x70] sm:$0xff]
        %v1776 = vld [vmem:[%s1760 + $0x78] sm:$0xff]
        %1777 = vmatprep.subr.mxu0 0.0
        %1778 = vmatpush1.msra.mxu0 %v1761
        %1779 = vmatprep.subr.mxu0 0.0
        %1780 = vmatpush1.msra.mxu0 %v1762
        %1781 = vmatprep.subr.mxu0 0.0
        %1782 = vmatpush1.msra.mxu0 %v1763
        %1783 = vmatprep.subr.mxu0 0.0
        %1784 = vmatpush1.msra.mxu0 %v1764
        %1785 = vmatprep.subr.mxu0 0.0
        %1786 = vmatpush1.msra.mxu0 %v1765
        %1787 = vmatprep.subr.mxu0 0.0
        %1788 = vmatpush1.msra.mxu0 %v1766
        %1789 = vmatprep.subr.mxu0 0.0
        %1790 = vmatpush1.msra.mxu0 %v1767
        %1791 = vmatprep.subr.mxu0 0.0
        %1792 = vmatpush1.msra.mxu0 %v1768
        %1793 = vmatprep.subr.mxu0 0.0
        %1794 = vmatpush1.msra.mxu0 %v1769
        %1795 = vmatprep.subr.mxu0 0.0
        %1796 = vmatpush1.msra.mxu0 %v1770
        %1797 = vmatprep.subr.mxu0 0.0
        %1798 = vmatpush1.msra.mxu0 %v1771
        %1799 = vmatprep.subr.mxu0 0.0
        %1800 = vmatpush1.msra.mxu0 %v1772
        %1801 = vmatprep.subr.mxu0 0.0
        %1802 = vmatpush1.msra.mxu0 %v1773
        %1803 = vmatprep.subr.mxu0 0.0
        %1804 = vmatpush1.msra.mxu0 %v1774
        %1805 = vmatprep.subr.mxu0 0.0
        %1806 = vmatpush1.msra.mxu0 %v1775
        %1807 = vmatprep.subr.mxu0 0.0
        %1808 = vmatpush1.msra.mxu0 %v1776
        %1809 = vmatprep.subr.mxu0 0.0
        %1810 = vmatpush1.msra.mxu0 0.0
        %1811 = vmatprep.subr.mxu0 0.0
        %1812 = vmatpush1.msra.mxu0 0.0
        %1813 = vmatprep.subr.mxu0 0.0
        %1814 = vmatpush1.msra.mxu0 0.0
        %1815 = vmatprep.subr.mxu0 0.0
        %1816 = vmatpush1.msra.mxu0 0.0
        %1817 = vmatprep.subr.mxu0 0.0
        %1818 = vmatpush1.msra.mxu0 0.0
        %1819 = vmatprep.subr.mxu0 0.0
        %1820 = vmatpush1.msra.mxu0 0.0
        %1821 = vmatprep.subr.mxu0 0.0
        %1822 = vmatpush1.msra.mxu0 0.0
        %1823 = vmatprep.subr.mxu0 0.0
        %1824 = vmatpush1.msra.mxu0 0.0
        %1825 = vmatprep.subr.mxu0 0.0
        %1826 = vmatpush1.msra.mxu0 0.0
        %1827 = vmatprep.subr.mxu0 0.0
        %1828 = vmatpush1.msra.mxu0 0.0
        %1829 = vmatprep.subr.mxu0 0.0
        %1830 = vmatpush1.msra.mxu0 0.0
        %1831 = vmatprep.subr.mxu0 0.0
        %1832 = vmatpush1.msra.mxu0 0.0
        %1833 = vmatprep.subr.mxu0 0.0
        %1834 = vmatpush1.msra.mxu0 0.0
        %1835 = vmatprep.subr.mxu0 0.0
        %1836 = vmatpush1.msra.mxu0 0.0
        %1837 = vmatprep.subr.mxu0 0.0
        %1838 = vmatpush1.msra.mxu0 0.0
        %1839 = vmatprep.subr.mxu0 0.0
        %1840 = vmatpush1.msra.mxu0 0.0
        %1841 = vmatprep.mubr.f32.mxu0 0.0
        %1842 = vmatmul.mubr.f32.gmra.mrb[0].mxu0 %v1747
        %v1843 = vpop.f32.mrb[0].mxu0
        %v1844 = vadd.f32 0.0, %v1843
        %v1845 = vpop.f32.mrb[0].mxu0
        %1846 = vmatprep.mubr.f32.mxu0 0.0
        %1847 = vmatmul.mubr.f32.gmra.mrb[0].mxu0 %v1748
        %v1848 = vpop.f32.mrb[0].mxu0
        %v1849 = vadd.f32 0.0, %v1848
        %v1850 = vpop.f32.mrb[0].mxu0
        %1851 = vmatprep.mubr.f32.mxu0 0.0
        %1852 = vmatmul.mubr.f32.gmra.mrb[0].mxu0 %v1749
        %v1853 = vpop.f32.mrb[0].mxu0
        %v1854 = vadd.f32 0.0, %v1853
        %v1855 = vpop.f32.mrb[0].mxu0
        %1856 = vmatprep.mubr.f32.mxu0 0.0
        %1857 = vmatmul.mubr.f32.gmra.mrb[0].mxu0 %v1750
        %v1858 = vpop.f32.mrb[0].mxu0
        %v1859 = vadd.f32 0.0, %v1858
        %v1860 = vpop.f32.mrb[0].mxu0
        %1861 = vmatprep.mubr.f32.mxu0 0.0
        %1862 = vmatmul.mubr.f32.gmra.mrb[0].mxu0 %v1751
        %v1863 = vpop.f32.mrb[0].mxu0
        %v1864 = vadd.f32 0.0, %v1863
        %v1865 = vpop.f32.mrb[0].mxu0
        %1866 = vmatprep.mubr.f32.mxu0 0.0
        %1867 = vmatmul.mubr.f32.gmra.mrb[0].mxu0 %v1752
        %v1868 = vpop.f32.mrb[0].mxu0
        %v1869 = vadd.f32 0.0, %v1868
        %v1870 = vpop.f32.mrb[0].mxu0
        %1871 = vmatprep.mubr.f32.mxu0 0.0
        %1872 = vmatmul.mubr.f32.gmra.mrb[0].mxu0 %v1753
        %v1873 = vpop.f32.mrb[0].mxu0
        %v1874 = vadd.f32 0.0, %v1873
        %v1875 = vpop.f32.mrb[0].mxu0
        %1876 = vmatprep.mubr.f32.mxu0 0.0
        %1877 = vmatmul.mubr.f32.gmra.mrb[0].mxu0 %v1754
        %v1878 = vpop.f32.mrb[0].mxu0
        %v1879 = vadd.f32 0.0, %v1878
        %v1880 = vpop.f32.mrb[0].mxu0
        %1881 = vmatprep.mubr.f32.mxu0 0.0
        %1882 = vmatmul.mubr.f32.gmra.mrb[0].mxu0 %v1755
        %v1883 = vpop.f32.mrb[0].mxu0
        %v1884 = vadd.f32 0.0, %v1883
        %v1885 = vpop.f32.mrb[0].mxu0
        %1886 = vmatprep.mubr.f32.mxu0 0.0
        %1887 = vmatmul.mubr.f32.gmra.mrb[0].mxu0 %v1756
        %v1888 = vpop.f32.mrb[0].mxu0
        %v1889 = vadd.f32 0.0, %v1888
        %v1890 = vpop.f32.mrb[0].mxu0
        %1891 = vmatprep.mubr.f32.mxu0 0.0
        %1892 = vmatmul.mubr.f32.gmra.mrb[0].mxu0 %v1757
        %v1893 = vpop.f32.mrb[0].mxu0
        %v1894 = vadd.f32 0.0, %v1893
        %v1895 = vpop.f32.mrb[0].mxu0
        %1896 = vmatprep.mubr.f32.mxu0 0.0
        %1897 = vmatmul.mubr.f32.gmra.mrb[0].mxu0 %v1758
        %v1898 = vpop.f32.mrb[0].mxu0
        %v1899 = vadd.f32 0.0, %v1898
        %v1900 = vpop.f32.mrb[0].mxu0
        %1901 = vmatprep.mubr.f32.mxu0 0.0
        %1902 = vmatmul.mubr.f32.gmra.mrb[0].mxu0 %v1759
        %v1903 = vpop.f32.mrb[0].mxu0
        %v1904 = vadd.f32 0.0, %v1903
        %v1905 = vpop.f32.mrb[0].mxu0
        %1906 = vdwg.mxu0
        %v1907 = vadd.f32 %v1734, %v1844
        %v1908 = vadd.f32 %v1735, %v1849
        %v1909 = vadd.f32 %v1736, %v1854
        %v1910 = vadd.f32 %v1737, %v1859
        %v1911 = vadd.f32 %v1738, %v1864
        %v1912 = vadd.f32 %v1739, %v1869
        %v1913 = vadd.f32 %v1740, %v1874
        %v1914 = vadd.f32 %v1741, %v1879
        %v1915 = vadd.f32 %v1742, %v1884
        %v1916 = vadd.f32 %v1743, %v1889
        %v1917 = vadd.f32 %v1744, %v1894
        %v1918 = vadd.f32 %v1745, %v1899
        %v1919 = vadd.f32 %v1746, %v1904
        %v1920 = vld [vmem:[#allocation2 + $0xb] sm:$0xff]
        %v1921 = vld [vmem:[#allocation2 + $0x13] sm:$0xff]
        %v1922 = vld [vmem:[#allocation2 + $0x1b] sm:$0xff]
        %v1923 = vld [vmem:[#allocation2 + $0x23] sm:$0xff]
        %v1924 = vld [vmem:[#allocation2 + $0x2b] sm:$0xff]
        %v1925 = vld [vmem:[#allocation2 + $0x33] sm:$0xff]
        %v1926 = vld [vmem:[#allocation2 + $0x3b] sm:$0xff]
        %v1927 = vld [vmem:[#allocation2 + $0x43] sm:$0xff]
        %v1928 = vld [vmem:[#allocation2 + $0x4b] sm:$0xff]
        %v1929 = vld [vmem:[#allocation2 + $0x53] sm:$0xff]
        %v1930 = vld [vmem:[#allocation2 + $0x5b] sm:$0xff]
        %v1931 = vld [vmem:[#allocation2 + $0x63] sm:$0xff]
        %v1932 = vld [vmem:[#allocation2 + $0x6b] sm:$0xf]
        %s1933 = scalar_lea.vmem [#allocation4], 512
        %v1934 = vld [vmem:[%s1933] sm:$0xff]
        %v1935 = vld [vmem:[%s1933 + $0x8] sm:$0xff]
        %v1936 = vld [vmem:[%s1933 + $0x10] sm:$0xff]
        %v1937 = vld [vmem:[%s1933 + $0x18] sm:$0xff]
        %v1938 = vld [vmem:[%s1933 + $0x20] sm:$0xff]
        %v1939 = vld [vmem:[%s1933 + $0x28] sm:$0xff]
        %v1940 = vld [vmem:[%s1933 + $0x30] sm:$0xff]
        %v1941 = vld [vmem:[%s1933 + $0x38] sm:$0xff]
        %v1942 = vld [vmem:[%s1933 + $0x40] sm:$0xff]
        %v1943 = vld [vmem:[%s1933 + $0x48] sm:$0xff]
        %v1944 = vld [vmem:[%s1933 + $0x50] sm:$0xff]
        %v1945 = vld [vmem:[%s1933 + $0x58] sm:$0xff]
        %v1946 = vld [vmem:[%s1933 + $0x60] sm:$0xff]
        %v1947 = vld [vmem:[%s1933 + $0x68] sm:$0xff]
        %v1948 = vld [vmem:[%s1933 + $0x70] sm:$0xff]
        %v1949 = vld [vmem:[%s1933 + $0x78] sm:$0xff]
        %1950 = vmatprep.subr.mxu0 0.0
        %1951 = vmatpush1.msra.mxu0 %v1934
        %1952 = vmatprep.subr.mxu0 0.0
        %1953 = vmatpush1.msra.mxu0 %v1935
        %1954 = vmatprep.subr.mxu0 0.0
        %1955 = vmatpush1.msra.mxu0 %v1936
        %1956 = vmatprep.subr.mxu0 0.0
        %1957 = vmatpush1.msra.mxu0 %v1937
        %1958 = vmatprep.subr.mxu0 0.0
        %1959 = vmatpush1.msra.mxu0 %v1938
        %1960 = vmatprep.subr.mxu0 0.0
        %1961 = vmatpush1.msra.mxu0 %v1939
        %1962 = vmatprep.subr.mxu0 0.0
        %1963 = vmatpush1.msra.mxu0 %v1940
        %1964 = vmatprep.subr.mxu0 0.0
        %1965 = vmatpush1.msra.mxu0 %v1941
        %1966 = vmatprep.subr.mxu0 0.0
        %1967 = vmatpush1.msra.mxu0 %v1942
        %1968 = vmatprep.subr.mxu0 0.0
        %1969 = vmatpush1.msra.mxu0 %v1943
        %1970 = vmatprep.subr.mxu0 0.0
        %1971 = vmatpush1.msra.mxu0 %v1944
        %1972 = vmatprep.subr.mxu0 0.0
        %1973 = vmatpush1.msra.mxu0 %v1945
        %1974 = vmatprep.subr.mxu0 0.0
        %1975 = vmatpush1.msra.mxu0 %v1946
        %1976 = vmatprep.subr.mxu0 0.0
        %1977 = vmatpush1.msra.mxu0 %v1947
        %1978 = vmatprep.subr.mxu0 0.0
        %1979 = vmatpush1.msra.mxu0 %v1948
        %1980 = vmatprep.subr.mxu0 0.0
        %1981 = vmatpush1.msra.mxu0 %v1949
        %1982 = vmatprep.subr.mxu0 0.0
        %1983 = vmatpush1.msra.mxu0 0.0
        %1984 = vmatprep.subr.mxu0 0.0
        %1985 = vmatpush1.msra.mxu0 0.0
        %1986 = vmatprep.subr.mxu0 0.0
        %1987 = vmatpush1.msra.mxu0 0.0
        %1988 = vmatprep.subr.mxu0 0.0
        %1989 = vmatpush1.msra.mxu0 0.0
        %1990 = vmatprep.subr.mxu0 0.0
        %1991 = vmatpush1.msra.mxu0 0.0
        %1992 = vmatprep.subr.mxu0 0.0
        %1993 = vmatpush1.msra.mxu0 0.0
        %1994 = vmatprep.subr.mxu0 0.0
        %1995 = vmatpush1.msra.mxu0 0.0
        %1996 = vmatprep.subr.mxu0 0.0
        %1997 = vmatpush1.msra.mxu0 0.0
        %1998 = vmatprep.subr.mxu0 0.0
        %1999 = vmatpush1.msra.mxu0 0.0
        %2000 = vmatprep.subr.mxu0 0.0
        %2001 = vmatpush1.msra.mxu0 0.0
        %2002 = vmatprep.subr.mxu0 0.0
        %2003 = vmatpush1.msra.mxu0 0.0
        %2004 = vmatprep.subr.mxu0 0.0
        %2005 = vmatpush1.msra.mxu0 0.0
        %2006 = vmatprep.subr.mxu0 0.0
        %2007 = vmatpush1.msra.mxu0 0.0
        %2008 = vmatprep.subr.mxu0 0.0
        %2009 = vmatpush1.msra.mxu0 0.0
        %2010 = vmatprep.subr.mxu0 0.0
        %2011 = vmatpush1.msra.mxu0 0.0
        %2012 = vmatprep.subr.mxu0 0.0
        %2013 = vmatpush1.msra.mxu0 0.0
        %2014 = vmatprep.mubr.f32.mxu0 0.0
        %2015 = vmatmul.mubr.f32.gmra.mrb[0].mxu0 %v1920
        %v2016 = vpop.f32.mrb[0].mxu0
        %v2017 = vadd.f32 0.0, %v2016
        %v2018 = vpop.f32.mrb[0].mxu0
        %2019 = vmatprep.mubr.f32.mxu0 0.0
        %2020 = vmatmul.mubr.f32.gmra.mrb[0].mxu0 %v1921
        %v2021 = vpop.f32.mrb[0].mxu0
        %v2022 = vadd.f32 0.0, %v2021
        %v2023 = vpop.f32.mrb[0].mxu0
        %2024 = vmatprep.mubr.f32.mxu0 0.0
        %2025 = vmatmul.mubr.f32.gmra.mrb[0].mxu0 %v1922
        %v2026 = vpop.f32.mrb[0].mxu0
        %v2027 = vadd.f32 0.0, %v2026
        %v2028 = vpop.f32.mrb[0].mxu0
        %2029 = vmatprep.mubr.f32.mxu0 0.0
        %2030 = vmatmul.mubr.f32.gmra.mrb[0].mxu0 %v1923
        %v2031 = vpop.f32.mrb[0].mxu0
        %v2032 = vadd.f32 0.0, %v2031
        %v2033 = vpop.f32.mrb[0].mxu0
        %2034 = vmatprep.mubr.f32.mxu0 0.0
        %2035 = vmatmul.mubr.f32.gmra.mrb[0].mxu0 %v1924
        %v2036 = vpop.f32.mrb[0].mxu0
        %v2037 = vadd.f32 0.0, %v2036
        %v2038 = vpop.f32.mrb[0].mxu0
        %2039 = vmatprep.mubr.f32.mxu0 0.0
        %2040 = vmatmul.mubr.f32.gmra.mrb[0].mxu0 %v1925
        %v2041 = vpop.f32.mrb[0].mxu0
        %v2042 = vadd.f32 0.0, %v2041
        %v2043 = vpop.f32.mrb[0].mxu0
        %2044 = vmatprep.mubr.f32.mxu0 0.0
        %2045 = vmatmul.mubr.f32.gmra.mrb[0].mxu0 %v1926
        %v2046 = vpop.f32.mrb[0].mxu0
        %v2047 = vadd.f32 0.0, %v2046
        %v2048 = vpop.f32.mrb[0].mxu0
        %2049 = vmatprep.mubr.f32.mxu0 0.0
        %2050 = vmatmul.mubr.f32.gmra.mrb[0].mxu0 %v1927
        %v2051 = vpop.f32.mrb[0].mxu0
        %v2052 = vadd.f32 0.0, %v2051
        %v2053 = vpop.f32.mrb[0].mxu0
        %2054 = vmatprep.mubr.f32.mxu0 0.0
        %2055 = vmatmul.mubr.f32.gmra.mrb[0].mxu0 %v1928
        %v2056 = vpop.f32.mrb[0].mxu0
        %v2057 = vadd.f32 0.0, %v2056
        %v2058 = vpop.f32.mrb[0].mxu0
        %2059 = vmatprep.mubr.f32.mxu0 0.0
        %2060 = vmatmul.mubr.f32.gmra.mrb[0].mxu0 %v1929
        %v2061 = vpop.f32.mrb[0].mxu0
        %v2062 = vadd.f32 0.0, %v2061
        %v2063 = vpop.f32.mrb[0].mxu0
        %2064 = vmatprep.mubr.f32.mxu0 0.0
        %2065 = vmatmul.mubr.f32.gmra.mrb[0].mxu0 %v1930
        %v2066 = vpop.f32.mrb[0].mxu0
        %v2067 = vadd.f32 0.0, %v2066
        %v2068 = vpop.f32.mrb[0].mxu0
        %2069 = vmatprep.mubr.f32.mxu0 0.0
        %2070 = vmatmul.mubr.f32.gmra.mrb[0].mxu0 %v1931
        %v2071 = vpop.f32.mrb[0].mxu0
        %v2072 = vadd.f32 0.0, %v2071
        %v2073 = vpop.f32.mrb[0].mxu0
        %2074 = vmatprep.mubr.f32.mxu0 0.0
        %2075 = vmatmul.mubr.f32.gmra.mrb[0].mxu0 %v1932
        %v2076 = vpop.f32.mrb[0].mxu0
        %v2077 = vadd.f32 0.0, %v2076
        %v2078 = vpop.f32.mrb[0].mxu0
        %2079 = vdwg.mxu0
        %v2080 = vadd.f32 %v1907, %v2017
        %v2081 = vadd.f32 %v1908, %v2022
        %v2082 = vadd.f32 %v1909, %v2027
        %v2083 = vadd.f32 %v1910, %v2032
        %v2084 = vadd.f32 %v1911, %v2037
        %v2085 = vadd.f32 %v1912, %v2042
        %v2086 = vadd.f32 %v1913, %v2047
        %v2087 = vadd.f32 %v1914, %v2052
        %v2088 = vadd.f32 %v1915, %v2057
        %v2089 = vadd.f32 %v1916, %v2062
        %v2090 = vadd.f32 %v1917, %v2067
        %v2091 = vadd.f32 %v1918, %v2072
        %v2092 = vadd.f32 %v1919, %v2077
        %v2093 = vld [vmem:[#allocation2 + $0xc] sm:$0xff]
        %v2094 = vld [vmem:[#allocation2 + $0x14] sm:$0xff]
        %v2095 = vld [vmem:[#allocation2 + $0x1c] sm:$0xff]
        %v2096 = vld [vmem:[#allocation2 + $0x24] sm:$0xff]
        %v2097 = vld [vmem:[#allocation2 + $0x2c] sm:$0xff]
        %v2098 = vld [vmem:[#allocation2 + $0x34] sm:$0xff]
        %v2099 = vld [vmem:[#allocation2 + $0x3c] sm:$0xff]
        %v2100 = vld [vmem:[#allocation2 + $0x44] sm:$0xff]
        %v2101 = vld [vmem:[#allocation2 + $0x4c] sm:$0xff]
        %v2102 = vld [vmem:[#allocation2 + $0x54] sm:$0xff]
        %v2103 = vld [vmem:[#allocation2 + $0x5c] sm:$0xff]
        %v2104 = vld [vmem:[#allocation2 + $0x64] sm:$0xff]
        %v2105 = vld [vmem:[#allocation2 + $0x6c] sm:$0xf]
        %s2106 = scalar_lea.vmem [#allocation4], 640
        %v2107 = vld [vmem:[%s2106] sm:$0xff]
        %v2108 = vld [vmem:[%s2106 + $0x8] sm:$0xff]
        %v2109 = vld [vmem:[%s2106 + $0x10] sm:$0xff]
        %v2110 = vld [vmem:[%s2106 + $0x18] sm:$0xff]
        %v2111 = vld [vmem:[%s2106 + $0x20] sm:$0xff]
        %v2112 = vld [vmem:[%s2106 + $0x28] sm:$0xff]
        %v2113 = vld [vmem:[%s2106 + $0x30] sm:$0xff]
        %v2114 = vld [vmem:[%s2106 + $0x38] sm:$0xff]
        %v2115 = vld [vmem:[%s2106 + $0x40] sm:$0xff]
        %v2116 = vld [vmem:[%s2106 + $0x48] sm:$0xff]
        %v2117 = vld [vmem:[%s2106 + $0x50] sm:$0xff]
        %v2118 = vld [vmem:[%s2106 + $0x58] sm:$0xff]
        %v2119 = vld [vmem:[%s2106 + $0x60] sm:$0xff]
        %v2120 = vld [vmem:[%s2106 + $0x68] sm:$0xff]
        %v2121 = vld [vmem:[%s2106 + $0x70] sm:$0xff]
        %v2122 = vld [vmem:[%s2106 + $0x78] sm:$0xff]
        %2123 = vmatprep.subr.mxu0 0.0
        %2124 = vmatpush1.msra.mxu0 %v2107
        %2125 = vmatprep.subr.mxu0 0.0
        %2126 = vmatpush1.msra.mxu0 %v2108
        %2127 = vmatprep.subr.mxu0 0.0
        %2128 = vmatpush1.msra.mxu0 %v2109
        %2129 = vmatprep.subr.mxu0 0.0
        %2130 = vmatpush1.msra.mxu0 %v2110
        %2131 = vmatprep.subr.mxu0 0.0
        %2132 = vmatpush1.msra.mxu0 %v2111
        %2133 = vmatprep.subr.mxu0 0.0
        %2134 = vmatpush1.msra.mxu0 %v2112
        %2135 = vmatprep.subr.mxu0 0.0
        %2136 = vmatpush1.msra.mxu0 %v2113
        %2137 = vmatprep.subr.mxu0 0.0
        %2138 = vmatpush1.msra.mxu0 %v2114
        %2139 = vmatprep.subr.mxu0 0.0
        %2140 = vmatpush1.msra.mxu0 %v2115
        %2141 = vmatprep.subr.mxu0 0.0
        %2142 = vmatpush1.msra.mxu0 %v2116
        %2143 = vmatprep.subr.mxu0 0.0
        %2144 = vmatpush1.msra.mxu0 %v2117
        %2145 = vmatprep.subr.mxu0 0.0
        %2146 = vmatpush1.msra.mxu0 %v2118
        %2147 = vmatprep.subr.mxu0 0.0
        %2148 = vmatpush1.msra.mxu0 %v2119
        %2149 = vmatprep.subr.mxu0 0.0
        %2150 = vmatpush1.msra.mxu0 %v2120
        %2151 = vmatprep.subr.mxu0 0.0
        %2152 = vmatpush1.msra.mxu0 %v2121
        %2153 = vmatprep.subr.mxu0 0.0
        %2154 = vmatpush1.msra.mxu0 %v2122
        %2155 = vmatprep.subr.mxu0 0.0
        %2156 = vmatpush1.msra.mxu0 0.0
        %2157 = vmatprep.subr.mxu0 0.0
        %2158 = vmatpush1.msra.mxu0 0.0
        %2159 = vmatprep.subr.mxu0 0.0
        %2160 = vmatpush1.msra.mxu0 0.0
        %2161 = vmatprep.subr.mxu0 0.0
        %2162 = vmatpush1.msra.mxu0 0.0
        %2163 = vmatprep.subr.mxu0 0.0
        %2164 = vmatpush1.msra.mxu0 0.0
        %2165 = vmatprep.subr.mxu0 0.0
        %2166 = vmatpush1.msra.mxu0 0.0
        %2167 = vmatprep.subr.mxu0 0.0
        %2168 = vmatpush1.msra.mxu0 0.0
        %2169 = vmatprep.subr.mxu0 0.0
        %2170 = vmatpush1.msra.mxu0 0.0
        %2171 = vmatprep.subr.mxu0 0.0
        %2172 = vmatpush1.msra.mxu0 0.0
        %2173 = vmatprep.subr.mxu0 0.0
        %2174 = vmatpush1.msra.mxu0 0.0
        %2175 = vmatprep.subr.mxu0 0.0
        %2176 = vmatpush1.msra.mxu0 0.0
        %2177 = vmatprep.subr.mxu0 0.0
        %2178 = vmatpush1.msra.mxu0 0.0
        %2179 = vmatprep.subr.mxu0 0.0
        %2180 = vmatpush1.msra.mxu0 0.0
        %2181 = vmatprep.subr.mxu0 0.0
        %2182 = vmatpush1.msra.mxu0 0.0
        %2183 = vmatprep.subr.mxu0 0.0
        %2184 = vmatpush1.msra.mxu0 0.0
        %2185 = vmatprep.subr.mxu0 0.0
        %2186 = vmatpush1.msra.mxu0 0.0
        %2187 = vmatprep.mubr.f32.mxu0 0.0
        %2188 = vmatmul.mubr.f32.gmra.mrb[0].mxu0 %v2093
        %v2189 = vpop.f32.mrb[0].mxu0
        %v2190 = vadd.f32 0.0, %v2189
        %v2191 = vpop.f32.mrb[0].mxu0
        %2192 = vmatprep.mubr.f32.mxu0 0.0
        %2193 = vmatmul.mubr.f32.gmra.mrb[0].mxu0 %v2094
        %v2194 = vpop.f32.mrb[0].mxu0
        %v2195 = vadd.f32 0.0, %v2194
        %v2196 = vpop.f32.mrb[0].mxu0
        %2197 = vmatprep.mubr.f32.mxu0 0.0
        %2198 = vmatmul.mubr.f32.gmra.mrb[0].mxu0 %v2095
        %v2199 = vpop.f32.mrb[0].mxu0
        %v2200 = vadd.f32 0.0, %v2199
        %v2201 = vpop.f32.mrb[0].mxu0
        %2202 = vmatprep.mubr.f32.mxu0 0.0
        %2203 = vmatmul.mubr.f32.gmra.mrb[0].mxu0 %v2096
        %v2204 = vpop.f32.mrb[0].mxu0
        %v2205 = vadd.f32 0.0, %v2204
        %v2206 = vpop.f32.mrb[0].mxu0
        %2207 = vmatprep.mubr.f32.mxu0 0.0
        %2208 = vmatmul.mubr.f32.gmra.mrb[0].mxu0 %v2097
        %v2209 = vpop.f32.mrb[0].mxu0
        %v2210 = vadd.f32 0.0, %v2209
        %v2211 = vpop.f32.mrb[0].mxu0
        %2212 = vmatprep.mubr.f32.mxu0 0.0
        %2213 = vmatmul.mubr.f32.gmra.mrb[0].mxu0 %v2098
        %v2214 = vpop.f32.mrb[0].mxu0
        %v2215 = vadd.f32 0.0, %v2214
        %v2216 = vpop.f32.mrb[0].mxu0
        %2217 = vmatprep.mubr.f32.mxu0 0.0
        %2218 = vmatmul.mubr.f32.gmra.mrb[0].mxu0 %v2099
        %v2219 = vpop.f32.mrb[0].mxu0
        %v2220 = vadd.f32 0.0, %v2219
        %v2221 = vpop.f32.mrb[0].mxu0
        %2222 = vmatprep.mubr.f32.mxu0 0.0
        %2223 = vmatmul.mubr.f32.gmra.mrb[0].mxu0 %v2100
        %v2224 = vpop.f32.mrb[0].mxu0
        %v2225 = vadd.f32 0.0, %v2224
        %v2226 = vpop.f32.mrb[0].mxu0
        %2227 = vmatprep.mubr.f32.mxu0 0.0
        %2228 = vmatmul.mubr.f32.gmra.mrb[0].mxu0 %v2101
        %v2229 = vpop.f32.mrb[0].mxu0
        %v2230 = vadd.f32 0.0, %v2229
        %v2231 = vpop.f32.mrb[0].mxu0
        %2232 = vmatprep.mubr.f32.mxu0 0.0
        %2233 = vmatmul.mubr.f32.gmra.mrb[0].mxu0 %v2102
        %v2234 = vpop.f32.mrb[0].mxu0
        %v2235 = vadd.f32 0.0, %v2234
        %v2236 = vpop.f32.mrb[0].mxu0
        %2237 = vmatprep.mubr.f32.mxu0 0.0
        %2238 = vmatmul.mubr.f32.gmra.mrb[0].mxu0 %v2103
        %v2239 = vpop.f32.mrb[0].mxu0
        %v2240 = vadd.f32 0.0, %v2239
        %v2241 = vpop.f32.mrb[0].mxu0
        %2242 = vmatprep.mubr.f32.mxu0 0.0
        %2243 = vmatmul.mubr.f32.gmra.mrb[0].mxu0 %v2104
        %v2244 = vpop.f32.mrb[0].mxu0
        %v2245 = vadd.f32 0.0, %v2244
        %v2246 = vpop.f32.mrb[0].mxu0
        %2247 = vmatprep.mubr.f32.mxu0 0.0
        %2248 = vmatmul.mubr.f32.gmra.mrb[0].mxu0 %v2105
        %v2249 = vpop.f32.mrb[0].mxu0
        %v2250 = vadd.f32 0.0, %v2249
        %v2251 = vpop.f32.mrb[0].mxu0
        %2252 = vdwg.mxu0
        %v2253 = vadd.f32 %v2080, %v2190
        %v2254 = vadd.f32 %v2081, %v2195
        %v2255 = vadd.f32 %v2082, %v2200
        %v2256 = vadd.f32 %v2083, %v2205
        %v2257 = vadd.f32 %v2084, %v2210
        %v2258 = vadd.f32 %v2085, %v2215
        %v2259 = vadd.f32 %v2086, %v2220
        %v2260 = vadd.f32 %v2087, %v2225
        %v2261 = vadd.f32 %v2088, %v2230
        %v2262 = vadd.f32 %v2089, %v2235
        %v2263 = vadd.f32 %v2090, %v2240
        %v2264 = vadd.f32 %v2091, %v2245
        %v2265 = vadd.f32 %v2092, %v2250
        %v2266 = vld [vmem:[#allocation2 + $0x14] sm:$0xff]
        %v2267 = vld [vmem:[#allocation2 + $0x1c] sm:$0xff]
        %v2268 = vld [vmem:[#allocation2 + $0x24] sm:$0xff]
        %v2269 = vld [vmem:[#allocation2 + $0x2c] sm:$0xff]
        %v2270 = vld [vmem:[#allocation2 + $0x34] sm:$0xff]
        %v2271 = vld [vmem:[#allocation2 + $0x3c] sm:$0xff]
        %v2272 = vld [vmem:[#allocation2 + $0x44] sm:$0xff]
        %v2273 = vld [vmem:[#allocation2 + $0x4c] sm:$0xff]
        %v2274 = vld [vmem:[#allocation2 + $0x54] sm:$0xff]
        %v2275 = vld [vmem:[#allocation2 + $0x5c] sm:$0xff]
        %v2276 = vld [vmem:[#allocation2 + $0x64] sm:$0xff]
        %v2277 = vld [vmem:[#allocation2 + $0x6c] sm:$0xff]
        %v2278 = vld [vmem:[#allocation2 + $0x74] sm:$0xf]
        %s2279 = scalar_lea.vmem [#allocation4], 768
        %v2280 = vld [vmem:[%s2279] sm:$0xff]
        %v2281 = vld [vmem:[%s2279 + $0x8] sm:$0xff]
        %v2282 = vld [vmem:[%s2279 + $0x10] sm:$0xff]
        %v2283 = vld [vmem:[%s2279 + $0x18] sm:$0xff]
        %v2284 = vld [vmem:[%s2279 + $0x20] sm:$0xff]
        %v2285 = vld [vmem:[%s2279 + $0x28] sm:$0xff]
        %v2286 = vld [vmem:[%s2279 + $0x30] sm:$0xff]
        %v2287 = vld [vmem:[%s2279 + $0x38] sm:$0xff]
        %v2288 = vld [vmem:[%s2279 + $0x40] sm:$0xff]
        %v2289 = vld [vmem:[%s2279 + $0x48] sm:$0xff]
        %v2290 = vld [vmem:[%s2279 + $0x50] sm:$0xff]
        %v2291 = vld [vmem:[%s2279 + $0x58] sm:$0xff]
        %v2292 = vld [vmem:[%s2279 + $0x60] sm:$0xff]
        %v2293 = vld [vmem:[%s2279 + $0x68] sm:$0xff]
        %v2294 = vld [vmem:[%s2279 + $0x70] sm:$0xff]
        %v2295 = vld [vmem:[%s2279 + $0x78] sm:$0xff]
        %2296 = vmatprep.subr.mxu0 0.0
        %2297 = vmatpush1.msra.mxu0 %v2280
        %2298 = vmatprep.subr.mxu0 0.0
        %2299 = vmatpush1.msra.mxu0 %v2281
        %2300 = vmatprep.subr.mxu0 0.0
        %2301 = vmatpush1.msra.mxu0 %v2282
        %2302 = vmatprep.subr.mxu0 0.0
        %2303 = vmatpush1.msra.mxu0 %v2283
        %2304 = vmatprep.subr.mxu0 0.0
        %2305 = vmatpush1.msra.mxu0 %v2284
        %2306 = vmatprep.subr.mxu0 0.0
        %2307 = vmatpush1.msra.mxu0 %v2285
        %2308 = vmatprep.subr.mxu0 0.0
        %2309 = vmatpush1.msra.mxu0 %v2286
        %2310 = vmatprep.subr.mxu0 0.0
        %2311 = vmatpush1.msra.mxu0 %v2287
        %2312 = vmatprep.subr.mxu0 0.0
        %2313 = vmatpush1.msra.mxu0 %v2288
        %2314 = vmatprep.subr.mxu0 0.0
        %2315 = vmatpush1.msra.mxu0 %v2289
        %2316 = vmatprep.subr.mxu0 0.0
        %2317 = vmatpush1.msra.mxu0 %v2290
        %2318 = vmatprep.subr.mxu0 0.0
        %2319 = vmatpush1.msra.mxu0 %v2291
        %2320 = vmatprep.subr.mxu0 0.0
        %2321 = vmatpush1.msra.mxu0 %v2292
        %2322 = vmatprep.subr.mxu0 0.0
        %2323 = vmatpush1.msra.mxu0 %v2293
        %2324 = vmatprep.subr.mxu0 0.0
        %2325 = vmatpush1.msra.mxu0 %v2294
        %2326 = vmatprep.subr.mxu0 0.0
        %2327 = vmatpush1.msra.mxu0 %v2295
        %2328 = vmatprep.subr.mxu0 0.0
        %2329 = vmatpush1.msra.mxu0 0.0
        %2330 = vmatprep.subr.mxu0 0.0
        %2331 = vmatpush1.msra.mxu0 0.0
        %2332 = vmatprep.subr.mxu0 0.0
        %2333 = vmatpush1.msra.mxu0 0.0
        %2334 = vmatprep.subr.mxu0 0.0
        %2335 = vmatpush1.msra.mxu0 0.0
        %2336 = vmatprep.subr.mxu0 0.0
        %2337 = vmatpush1.msra.mxu0 0.0
        %2338 = vmatprep.subr.mxu0 0.0
        %2339 = vmatpush1.msra.mxu0 0.0
        %2340 = vmatprep.subr.mxu0 0.0
        %2341 = vmatpush1.msra.mxu0 0.0
        %2342 = vmatprep.subr.mxu0 0.0
        %2343 = vmatpush1.msra.mxu0 0.0
        %2344 = vmatprep.subr.mxu0 0.0
        %2345 = vmatpush1.msra.mxu0 0.0
        %2346 = vmatprep.subr.mxu0 0.0
        %2347 = vmatpush1.msra.mxu0 0.0
        %2348 = vmatprep.subr.mxu0 0.0
        %2349 = vmatpush1.msra.mxu0 0.0
        %2350 = vmatprep.subr.mxu0 0.0
        %2351 = vmatpush1.msra.mxu0 0.0
        %2352 = vmatprep.subr.mxu0 0.0
        %2353 = vmatpush1.msra.mxu0 0.0
        %2354 = vmatprep.subr.mxu0 0.0
        %2355 = vmatpush1.msra.mxu0 0.0
        %2356 = vmatprep.subr.mxu0 0.0
        %2357 = vmatpush1.msra.mxu0 0.0
        %2358 = vmatprep.subr.mxu0 0.0
        %2359 = vmatpush1.msra.mxu0 0.0
        %2360 = vmatprep.mubr.f32.mxu0 0.0
        %2361 = vmatmul.mubr.f32.gmra.mrb[0].mxu0 %v2266
        %v2362 = vpop.f32.mrb[0].mxu0
        %v2363 = vadd.f32 0.0, %v2362
        %v2364 = vpop.f32.mrb[0].mxu0
        %2365 = vmatprep.mubr.f32.mxu0 0.0
        %2366 = vmatmul.mubr.f32.gmra.mrb[0].mxu0 %v2267
        %v2367 = vpop.f32.mrb[0].mxu0
        %v2368 = vadd.f32 0.0, %v2367
        %v2369 = vpop.f32.mrb[0].mxu0
        %2370 = vmatprep.mubr.f32.mxu0 0.0
        %2371 = vmatmul.mubr.f32.gmra.mrb[0].mxu0 %v2268
        %v2372 = vpop.f32.mrb[0].mxu0
        %v2373 = vadd.f32 0.0, %v2372
        %v2374 = vpop.f32.mrb[0].mxu0
        %2375 = vmatprep.mubr.f32.mxu0 0.0
        %2376 = vmatmul.mubr.f32.gmra.mrb[0].mxu0 %v2269
        %v2377 = vpop.f32.mrb[0].mxu0
        %v2378 = vadd.f32 0.0, %v2377
        %v2379 = vpop.f32.mrb[0].mxu0
        %2380 = vmatprep.mubr.f32.mxu0 0.0
        %2381 = vmatmul.mubr.f32.gmra.mrb[0].mxu0 %v2270
        %v2382 = vpop.f32.mrb[0].mxu0
        %v2383 = vadd.f32 0.0, %v2382
        %v2384 = vpop.f32.mrb[0].mxu0
        %2385 = vmatprep.mubr.f32.mxu0 0.0
        %2386 = vmatmul.mubr.f32.gmra.mrb[0].mxu0 %v2271
        %v2387 = vpop.f32.mrb[0].mxu0
        %v2388 = vadd.f32 0.0, %v2387
        %v2389 = vpop.f32.mrb[0].mxu0
        %2390 = vmatprep.mubr.f32.mxu0 0.0
        %2391 = vmatmul.mubr.f32.gmra.mrb[0].mxu0 %v2272
        %v2392 = vpop.f32.mrb[0].mxu0
        %v2393 = vadd.f32 0.0, %v2392
        %v2394 = vpop.f32.mrb[0].mxu0
        %2395 = vmatprep.mubr.f32.mxu0 0.0
        %2396 = vmatmul.mubr.f32.gmra.mrb[0].mxu0 %v2273
        %v2397 = vpop.f32.mrb[0].mxu0
        %v2398 = vadd.f32 0.0, %v2397
        %v2399 = vpop.f32.mrb[0].mxu0
        %2400 = vmatprep.mubr.f32.mxu0 0.0
        %2401 = vmatmul.mubr.f32.gmra.mrb[0].mxu0 %v2274
        %v2402 = vpop.f32.mrb[0].mxu0
        %v2403 = vadd.f32 0.0, %v2402
        %v2404 = vpop.f32.mrb[0].mxu0
        %2405 = vmatprep.mubr.f32.mxu0 0.0
        %2406 = vmatmul.mubr.f32.gmra.mrb[0].mxu0 %v2275
        %v2407 = vpop.f32.mrb[0].mxu0
        %v2408 = vadd.f32 0.0, %v2407
        %v2409 = vpop.f32.mrb[0].mxu0
        %2410 = vmatprep.mubr.f32.mxu0 0.0
        %2411 = vmatmul.mubr.f32.gmra.mrb[0].mxu0 %v2276
        %v2412 = vpop.f32.mrb[0].mxu0
        %v2413 = vadd.f32 0.0, %v2412
        %v2414 = vpop.f32.mrb[0].mxu0
        %2415 = vmatprep.mubr.f32.mxu0 0.0
        %2416 = vmatmul.mubr.f32.gmra.mrb[0].mxu0 %v2277
        %v2417 = vpop.f32.mrb[0].mxu0
        %v2418 = vadd.f32 0.0, %v2417
        %v2419 = vpop.f32.mrb[0].mxu0
        %2420 = vmatprep.mubr.f32.mxu0 0.0
        %2421 = vmatmul.mubr.f32.gmra.mrb[0].mxu0 %v2278
        %v2422 = vpop.f32.mrb[0].mxu0
        %v2423 = vadd.f32 0.0, %v2422
        %v2424 = vpop.f32.mrb[0].mxu0
        %2425 = vdwg.mxu0
        %v2426 = vadd.f32 %v2253, %v2363
        %v2427 = vadd.f32 %v2254, %v2368
        %v2428 = vadd.f32 %v2255, %v2373
        %v2429 = vadd.f32 %v2256, %v2378
        %v2430 = vadd.f32 %v2257, %v2383
        %v2431 = vadd.f32 %v2258, %v2388
        %v2432 = vadd.f32 %v2259, %v2393
        %v2433 = vadd.f32 %v2260, %v2398
        %v2434 = vadd.f32 %v2261, %v2403
        %v2435 = vadd.f32 %v2262, %v2408
        %v2436 = vadd.f32 %v2263, %v2413
        %v2437 = vadd.f32 %v2264, %v2418
        %v2438 = vadd.f32 %v2265, %v2423
        %v2439 = vld [vmem:[#allocation2 + $0x15] sm:$0xff]
        %v2440 = vld [vmem:[#allocation2 + $0x1d] sm:$0xff]
        %v2441 = vld [vmem:[#allocation2 + $0x25] sm:$0xff]
        %v2442 = vld [vmem:[#allocation2 + $0x2d] sm:$0xff]
        %v2443 = vld [vmem:[#allocation2 + $0x35] sm:$0xff]
        %v2444 = vld [vmem:[#allocation2 + $0x3d] sm:$0xff]
        %v2445 = vld [vmem:[#allocation2 + $0x45] sm:$0xff]
        %v2446 = vld [vmem:[#allocation2 + $0x4d] sm:$0xff]
        %v2447 = vld [vmem:[#allocation2 + $0x55] sm:$0xff]
        %v2448 = vld [vmem:[#allocation2 + $0x5d] sm:$0xff]
        %v2449 = vld [vmem:[#allocation2 + $0x65] sm:$0xff]
        %v2450 = vld [vmem:[#allocation2 + $0x6d] sm:$0xff]
        %v2451 = vld [vmem:[#allocation2 + $0x75] sm:$0xf]
        %s2452 = scalar_lea.vmem [#allocation4], 896
        %v2453 = vld [vmem:[%s2452] sm:$0xff]
        %v2454 = vld [vmem:[%s2452 + $0x8] sm:$0xff]
        %v2455 = vld [vmem:[%s2452 + $0x10] sm:$0xff]
        %v2456 = vld [vmem:[%s2452 + $0x18] sm:$0xff]
        %v2457 = vld [vmem:[%s2452 + $0x20] sm:$0xff]
        %v2458 = vld [vmem:[%s2452 + $0x28] sm:$0xff]
        %v2459 = vld [vmem:[%s2452 + $0x30] sm:$0xff]
        %v2460 = vld [vmem:[%s2452 + $0x38] sm:$0xff]
        %v2461 = vld [vmem:[%s2452 + $0x40] sm:$0xff]
        %v2462 = vld [vmem:[%s2452 + $0x48] sm:$0xff]
        %v2463 = vld [vmem:[%s2452 + $0x50] sm:$0xff]
        %v2464 = vld [vmem:[%s2452 + $0x58] sm:$0xff]
        %v2465 = vld [vmem:[%s2452 + $0x60] sm:$0xff]
        %v2466 = vld [vmem:[%s2452 + $0x68] sm:$0xff]
        %v2467 = vld [vmem:[%s2452 + $0x70] sm:$0xff]
        %v2468 = vld [vmem:[%s2452 + $0x78] sm:$0xff]
        %2469 = vmatprep.subr.mxu0 0.0
        %2470 = vmatpush1.msra.mxu0 %v2453
        %2471 = vmatprep.subr.mxu0 0.0
        %2472 = vmatpush1.msra.mxu0 %v2454
        %2473 = vmatprep.subr.mxu0 0.0
        %2474 = vmatpush1.msra.mxu0 %v2455
        %2475 = vmatprep.subr.mxu0 0.0
        %2476 = vmatpush1.msra.mxu0 %v2456
        %2477 = vmatprep.subr.mxu0 0.0
        %2478 = vmatpush1.msra.mxu0 %v2457
        %2479 = vmatprep.subr.mxu0 0.0
        %2480 = vmatpush1.msra.mxu0 %v2458
        %2481 = vmatprep.subr.mxu0 0.0
        %2482 = vmatpush1.msra.mxu0 %v2459
        %2483 = vmatprep.subr.mxu0 0.0
        %2484 = vmatpush1.msra.mxu0 %v2460
        %2485 = vmatprep.subr.mxu0 0.0
        %2486 = vmatpush1.msra.mxu0 %v2461
        %2487 = vmatprep.subr.mxu0 0.0
        %2488 = vmatpush1.msra.mxu0 %v2462
        %2489 = vmatprep.subr.mxu0 0.0
        %2490 = vmatpush1.msra.mxu0 %v2463
        %2491 = vmatprep.subr.mxu0 0.0
        %2492 = vmatpush1.msra.mxu0 %v2464
        %2493 = vmatprep.subr.mxu0 0.0
        %2494 = vmatpush1.msra.mxu0 %v2465
        %2495 = vmatprep.subr.mxu0 0.0
        %2496 = vmatpush1.msra.mxu0 %v2466
        %2497 = vmatprep.subr.mxu0 0.0
        %2498 = vmatpush1.msra.mxu0 %v2467
        %2499 = vmatprep.subr.mxu0 0.0
        %2500 = vmatpush1.msra.mxu0 %v2468
        %2501 = vmatprep.subr.mxu0 0.0
        %2502 = vmatpush1.msra.mxu0 0.0
        %2503 = vmatprep.subr.mxu0 0.0
        %2504 = vmatpush1.msra.mxu0 0.0
        %2505 = vmatprep.subr.mxu0 0.0
        %2506 = vmatpush1.msra.mxu0 0.0
        %2507 = vmatprep.subr.mxu0 0.0
        %2508 = vmatpush1.msra.mxu0 0.0
        %2509 = vmatprep.subr.mxu0 0.0
        %2510 = vmatpush1.msra.mxu0 0.0
        %2511 = vmatprep.subr.mxu0 0.0
        %2512 = vmatpush1.msra.mxu0 0.0
        %2513 = vmatprep.subr.mxu0 0.0
        %2514 = vmatpush1.msra.mxu0 0.0
        %2515 = vmatprep.subr.mxu0 0.0
        %2516 = vmatpush1.msra.mxu0 0.0
        %2517 = vmatprep.subr.mxu0 0.0
        %2518 = vmatpush1.msra.mxu0 0.0
        %2519 = vmatprep.subr.mxu0 0.0
        %2520 = vmatpush1.msra.mxu0 0.0
        %2521 = vmatprep.subr.mxu0 0.0
        %2522 = vmatpush1.msra.mxu0 0.0
        %2523 = vmatprep.subr.mxu0 0.0
        %2524 = vmatpush1.msra.mxu0 0.0
        %2525 = vmatprep.subr.mxu0 0.0
        %2526 = vmatpush1.msra.mxu0 0.0
        %2527 = vmatprep.subr.mxu0 0.0
        %2528 = vmatpush1.msra.mxu0 0.0
        %2529 = vmatprep.subr.mxu0 0.0
        %2530 = vmatpush1.msra.mxu0 0.0
        %2531 = vmatprep.subr.mxu0 0.0
        %2532 = vmatpush1.msra.mxu0 0.0
        %2533 = vmatprep.mubr.f32.mxu0 0.0
        %2534 = vmatmul.mubr.f32.gmra.mrb[0].mxu0 %v2439
        %v2535 = vpop.f32.mrb[0].mxu0
        %v2536 = vadd.f32 0.0, %v2535
        %v2537 = vpop.f32.mrb[0].mxu0
        %2538 = vmatprep.mubr.f32.mxu0 0.0
        %2539 = vmatmul.mubr.f32.gmra.mrb[0].mxu0 %v2440
        %v2540 = vpop.f32.mrb[0].mxu0
        %v2541 = vadd.f32 0.0, %v2540
        %v2542 = vpop.f32.mrb[0].mxu0
        %2543 = vmatprep.mubr.f32.mxu0 0.0
        %2544 = vmatmul.mubr.f32.gmra.mrb[0].mxu0 %v2441
        %v2545 = vpop.f32.mrb[0].mxu0
        %v2546 = vadd.f32 0.0, %v2545
        %v2547 = vpop.f32.mrb[0].mxu0
        %2548 = vmatprep.mubr.f32.mxu0 0.0
        %2549 = vmatmul.mubr.f32.gmra.mrb[0].mxu0 %v2442
        %v2550 = vpop.f32.mrb[0].mxu0
        %v2551 = vadd.f32 0.0, %v2550
        %v2552 = vpop.f32.mrb[0].mxu0
        %2553 = vmatprep.mubr.f32.mxu0 0.0
        %2554 = vmatmul.mubr.f32.gmra.mrb[0].mxu0 %v2443
        %v2555 = vpop.f32.mrb[0].mxu0
        %v2556 = vadd.f32 0.0, %v2555
        %v2557 = vpop.f32.mrb[0].mxu0
        %2558 = vmatprep.mubr.f32.mxu0 0.0
        %2559 = vmatmul.mubr.f32.gmra.mrb[0].mxu0 %v2444
        %v2560 = vpop.f32.mrb[0].mxu0
        %v2561 = vadd.f32 0.0, %v2560
        %v2562 = vpop.f32.mrb[0].mxu0
        %2563 = vmatprep.mubr.f32.mxu0 0.0
        %2564 = vmatmul.mubr.f32.gmra.mrb[0].mxu0 %v2445
        %v2565 = vpop.f32.mrb[0].mxu0
        %v2566 = vadd.f32 0.0, %v2565
        %v2567 = vpop.f32.mrb[0].mxu0
        %2568 = vmatprep.mubr.f32.mxu0 0.0
        %2569 = vmatmul.mubr.f32.gmra.mrb[0].mxu0 %v2446
        %v2570 = vpop.f32.mrb[0].mxu0
        %v2571 = vadd.f32 0.0, %v2570
        %v2572 = vpop.f32.mrb[0].mxu0
        %2573 = vmatprep.mubr.f32.mxu0 0.0
        %2574 = vmatmul.mubr.f32.gmra.mrb[0].mxu0 %v2447
        %v2575 = vpop.f32.mrb[0].mxu0
        %v2576 = vadd.f32 0.0, %v2575
        %v2577 = vpop.f32.mrb[0].mxu0
        %2578 = vmatprep.mubr.f32.mxu0 0.0
        %2579 = vmatmul.mubr.f32.gmra.mrb[0].mxu0 %v2448
        %v2580 = vpop.f32.mrb[0].mxu0
        %v2581 = vadd.f32 0.0, %v2580
        %v2582 = vpop.f32.mrb[0].mxu0
        %2583 = vmatprep.mubr.f32.mxu0 0.0
        %2584 = vmatmul.mubr.f32.gmra.mrb[0].mxu0 %v2449
        %v2585 = vpop.f32.mrb[0].mxu0
        %v2586 = vadd.f32 0.0, %v2585
        %v2587 = vpop.f32.mrb[0].mxu0
        %2588 = vmatprep.mubr.f32.mxu0 0.0
        %2589 = vmatmul.mubr.f32.gmra.mrb[0].mxu0 %v2450
        %v2590 = vpop.f32.mrb[0].mxu0
        %v2591 = vadd.f32 0.0, %v2590
        %v2592 = vpop.f32.mrb[0].mxu0
        %2593 = vmatprep.mubr.f32.mxu0 0.0
        %2594 = vmatmul.mubr.f32.gmra.mrb[0].mxu0 %v2451
        %v2595 = vpop.f32.mrb[0].mxu0
        %v2596 = vadd.f32 0.0, %v2595
        %v2597 = vpop.f32.mrb[0].mxu0
        %2598 = vdwg.mxu0
        %v2599 = vadd.f32 %v2426, %v2536
        %v2600 = vadd.f32 %v2427, %v2541
        %v2601 = vadd.f32 %v2428, %v2546
        %v2602 = vadd.f32 %v2429, %v2551
        %v2603 = vadd.f32 %v2430, %v2556
        %v2604 = vadd.f32 %v2431, %v2561
        %v2605 = vadd.f32 %v2432, %v2566
        %v2606 = vadd.f32 %v2433, %v2571
        %v2607 = vadd.f32 %v2434, %v2576
        %v2608 = vadd.f32 %v2435, %v2581
        %v2609 = vadd.f32 %v2436, %v2586
        %v2610 = vadd.f32 %v2437, %v2591
        %v2611 = vadd.f32 %v2438, %v2596
        %v2612 = vld [vmem:[#allocation2 + $0x16] sm:$0xff]
        %v2613 = vld [vmem:[#allocation2 + $0x1e] sm:$0xff]
        %v2614 = vld [vmem:[#allocation2 + $0x26] sm:$0xff]
        %v2615 = vld [vmem:[#allocation2 + $0x2e] sm:$0xff]
        %v2616 = vld [vmem:[#allocation2 + $0x36] sm:$0xff]
        %v2617 = vld [vmem:[#allocation2 + $0x3e] sm:$0xff]
        %v2618 = vld [vmem:[#allocation2 + $0x46] sm:$0xff]
        %v2619 = vld [vmem:[#allocation2 + $0x4e] sm:$0xff]
        %v2620 = vld [vmem:[#allocation2 + $0x56] sm:$0xff]
        %v2621 = vld [vmem:[#allocation2 + $0x5e] sm:$0xff]
        %v2622 = vld [vmem:[#allocation2 + $0x66] sm:$0xff]
        %v2623 = vld [vmem:[#allocation2 + $0x6e] sm:$0xff]
        %v2624 = vld [vmem:[#allocation2 + $0x76] sm:$0xf]
        %s2625 = scalar_lea.vmem [#allocation4], 1024
        %v2626 = vld [vmem:[%s2625] sm:$0xff]
        %v2627 = vld [vmem:[%s2625 + $0x8] sm:$0xff]
        %v2628 = vld [vmem:[%s2625 + $0x10] sm:$0xff]
        %v2629 = vld [vmem:[%s2625 + $0x18] sm:$0xff]
        %v2630 = vld [vmem:[%s2625 + $0x20] sm:$0xff]
        %v2631 = vld [vmem:[%s2625 + $0x28] sm:$0xff]
        %v2632 = vld [vmem:[%s2625 + $0x30] sm:$0xff]
        %v2633 = vld [vmem:[%s2625 + $0x38] sm:$0xff]
        %v2634 = vld [vmem:[%s2625 + $0x40] sm:$0xff]
        %v2635 = vld [vmem:[%s2625 + $0x48] sm:$0xff]
        %v2636 = vld [vmem:[%s2625 + $0x50] sm:$0xff]
        %v2637 = vld [vmem:[%s2625 + $0x58] sm:$0xff]
        %v2638 = vld [vmem:[%s2625 + $0x60] sm:$0xff]
        %v2639 = vld [vmem:[%s2625 + $0x68] sm:$0xff]
        %v2640 = vld [vmem:[%s2625 + $0x70] sm:$0xff]
        %v2641 = vld [vmem:[%s2625 + $0x78] sm:$0xff]
        %2642 = vmatprep.subr.mxu0 0.0
        %2643 = vmatpush1.msra.mxu0 %v2626
        %2644 = vmatprep.subr.mxu0 0.0
        %2645 = vmatpush1.msra.mxu0 %v2627
        %2646 = vmatprep.subr.mxu0 0.0
        %2647 = vmatpush1.msra.mxu0 %v2628
        %2648 = vmatprep.subr.mxu0 0.0
        %2649 = vmatpush1.msra.mxu0 %v2629
        %2650 = vmatprep.subr.mxu0 0.0
        %2651 = vmatpush1.msra.mxu0 %v2630
        %2652 = vmatprep.subr.mxu0 0.0
        %2653 = vmatpush1.msra.mxu0 %v2631
        %2654 = vmatprep.subr.mxu0 0.0
        %2655 = vmatpush1.msra.mxu0 %v2632
        %2656 = vmatprep.subr.mxu0 0.0
        %2657 = vmatpush1.msra.mxu0 %v2633
        %2658 = vmatprep.subr.mxu0 0.0
        %2659 = vmatpush1.msra.mxu0 %v2634
        %2660 = vmatprep.subr.mxu0 0.0
        %2661 = vmatpush1.msra.mxu0 %v2635
        %2662 = vmatprep.subr.mxu0 0.0
        %2663 = vmatpush1.msra.mxu0 %v2636
        %2664 = vmatprep.subr.mxu0 0.0
        %2665 = vmatpush1.msra.mxu0 %v2637
        %2666 = vmatprep.subr.mxu0 0.0
        %2667 = vmatpush1.msra.mxu0 %v2638
        %2668 = vmatprep.subr.mxu0 0.0
        %2669 = vmatpush1.msra.mxu0 %v2639
        %2670 = vmatprep.subr.mxu0 0.0
        %2671 = vmatpush1.msra.mxu0 %v2640
        %2672 = vmatprep.subr.mxu0 0.0
        %2673 = vmatpush1.msra.mxu0 %v2641
        %2674 = vmatprep.subr.mxu0 0.0
        %2675 = vmatpush1.msra.mxu0 0.0
        %2676 = vmatprep.subr.mxu0 0.0
        %2677 = vmatpush1.msra.mxu0 0.0
        %2678 = vmatprep.subr.mxu0 0.0
        %2679 = vmatpush1.msra.mxu0 0.0
        %2680 = vmatprep.subr.mxu0 0.0
        %2681 = vmatpush1.msra.mxu0 0.0
        %2682 = vmatprep.subr.mxu0 0.0
        %2683 = vmatpush1.msra.mxu0 0.0
        %2684 = vmatprep.subr.mxu0 0.0
        %2685 = vmatpush1.msra.mxu0 0.0
        %2686 = vmatprep.subr.mxu0 0.0
        %2687 = vmatpush1.msra.mxu0 0.0
        %2688 = vmatprep.subr.mxu0 0.0
        %2689 = vmatpush1.msra.mxu0 0.0
        %2690 = vmatprep.subr.mxu0 0.0
        %2691 = vmatpush1.msra.mxu0 0.0
        %2692 = vmatprep.subr.mxu0 0.0
        %2693 = vmatpush1.msra.mxu0 0.0
        %2694 = vmatprep.subr.mxu0 0.0
        %2695 = vmatpush1.msra.mxu0 0.0
        %2696 = vmatprep.subr.mxu0 0.0
        %2697 = vmatpush1.msra.mxu0 0.0
        %2698 = vmatprep.subr.mxu0 0.0
        %2699 = vmatpush1.msra.mxu0 0.0
        %2700 = vmatprep.subr.mxu0 0.0
        %2701 = vmatpush1.msra.mxu0 0.0
        %2702 = vmatprep.subr.mxu0 0.0
        %2703 = vmatpush1.msra.mxu0 0.0
        %2704 = vmatprep.subr.mxu0 0.0
        %2705 = vmatpush1.msra.mxu0 0.0
        %2706 = vmatprep.mubr.f32.mxu0 0.0
        %2707 = vmatmul.mubr.f32.gmra.mrb[0].mxu0 %v2612
        %v2708 = vpop.f32.mrb[0].mxu0
        %v2709 = vadd.f32 0.0, %v2708
        %v2710 = vpop.f32.mrb[0].mxu0
        %2711 = vmatprep.mubr.f32.mxu0 0.0
        %2712 = vmatmul.mubr.f32.gmra.mrb[0].mxu0 %v2613
        %v2713 = vpop.f32.mrb[0].mxu0
        %v2714 = vadd.f32 0.0, %v2713
        %v2715 = vpop.f32.mrb[0].mxu0
        %2716 = vmatprep.mubr.f32.mxu0 0.0
        %2717 = vmatmul.mubr.f32.gmra.mrb[0].mxu0 %v2614
        %v2718 = vpop.f32.mrb[0].mxu0
        %v2719 = vadd.f32 0.0, %v2718
        %v2720 = vpop.f32.mrb[0].mxu0
        %2721 = vmatprep.mubr.f32.mxu0 0.0
        %2722 = vmatmul.mubr.f32.gmra.mrb[0].mxu0 %v2615
        %v2723 = vpop.f32.mrb[0].mxu0
        %v2724 = vadd.f32 0.0, %v2723
        %v2725 = vpop.f32.mrb[0].mxu0
        %2726 = vmatprep.mubr.f32.mxu0 0.0
        %2727 = vmatmul.mubr.f32.gmra.mrb[0].mxu0 %v2616
        %v2728 = vpop.f32.mrb[0].mxu0
        %v2729 = vadd.f32 0.0, %v2728
        %v2730 = vpop.f32.mrb[0].mxu0
        %2731 = vmatprep.mubr.f32.mxu0 0.0
        %2732 = vmatmul.mubr.f32.gmra.mrb[0].mxu0 %v2617
        %v2733 = vpop.f32.mrb[0].mxu0
        %v2734 = vadd.f32 0.0, %v2733
        %v2735 = vpop.f32.mrb[0].mxu0
        %2736 = vmatprep.mubr.f32.mxu0 0.0
        %2737 = vmatmul.mubr.f32.gmra.mrb[0].mxu0 %v2618
        %v2738 = vpop.f32.mrb[0].mxu0
        %v2739 = vadd.f32 0.0, %v2738
        %v2740 = vpop.f32.mrb[0].mxu0
        %2741 = vmatprep.mubr.f32.mxu0 0.0
        %2742 = vmatmul.mubr.f32.gmra.mrb[0].mxu0 %v2619
        %v2743 = vpop.f32.mrb[0].mxu0
        %v2744 = vadd.f32 0.0, %v2743
        %v2745 = vpop.f32.mrb[0].mxu0
        %2746 = vmatprep.mubr.f32.mxu0 0.0
        %2747 = vmatmul.mubr.f32.gmra.mrb[0].mxu0 %v2620
        %v2748 = vpop.f32.mrb[0].mxu0
        %v2749 = vadd.f32 0.0, %v2748
        %v2750 = vpop.f32.mrb[0].mxu0
        %2751 = vmatprep.mubr.f32.mxu0 0.0
        %2752 = vmatmul.mubr.f32.gmra.mrb[0].mxu0 %v2621
        %v2753 = vpop.f32.mrb[0].mxu0
        %v2754 = vadd.f32 0.0, %v2753
        %v2755 = vpop.f32.mrb[0].mxu0
        %2756 = vmatprep.mubr.f32.mxu0 0.0
        %2757 = vmatmul.mubr.f32.gmra.mrb[0].mxu0 %v2622
        %v2758 = vpop.f32.mrb[0].mxu0
        %v2759 = vadd.f32 0.0, %v2758
        %v2760 = vpop.f32.mrb[0].mxu0
        %2761 = vmatprep.mubr.f32.mxu0 0.0
        %2762 = vmatmul.mubr.f32.gmra.mrb[0].mxu0 %v2623
        %v2763 = vpop.f32.mrb[0].mxu0
        %v2764 = vadd.f32 0.0, %v2763
        %v2765 = vpop.f32.mrb[0].mxu0
        %2766 = vmatprep.mubr.f32.mxu0 0.0
        %2767 = vmatmul.mubr.f32.gmra.mrb[0].mxu0 %v2624
        %v2768 = vpop.f32.mrb[0].mxu0
        %v2769 = vadd.f32 0.0, %v2768
        %v2770 = vpop.f32.mrb[0].mxu0
        %2771 = vdwg.mxu0
        %v2772 = vadd.f32 %v2599, %v2709
        %v2773 = vadd.f32 %v2600, %v2714
        %v2774 = vadd.f32 %v2601, %v2719
        %v2775 = vadd.f32 %v2602, %v2724
        %v2776 = vadd.f32 %v2603, %v2729
        %v2777 = vadd.f32 %v2604, %v2734
        %v2778 = vadd.f32 %v2605, %v2739
        %v2779 = vadd.f32 %v2606, %v2744
        %v2780 = vadd.f32 %v2607, %v2749
        %v2781 = vadd.f32 %v2608, %v2754
        %v2782 = vadd.f32 %v2609, %v2759
        %v2783 = vadd.f32 %v2610, %v2764
        %v2784 = vadd.f32 %v2611, %v2769
        %v2785 = vld [vmem:[%s4] sm:$0x1]
        %v2787 = vlaneseq
        %v2788 = vshrl.u32 %v2787, 7
        %v2789 = vsub.s32 0, %v2788
        %v2790 = vrot.slane %v2785, %v2789
        %v2792 = vadd.f32 %v2772, %v2790
        %v2793 = vadd.f32 %v2773, %v2790
        %v2794 = vadd.f32 %v2774, %v2790
        %v2795 = vadd.f32 %v2775, %v2790
        %v2796 = vadd.f32 %v2776, %v2790
        %v2797 = vadd.f32 %v2777, %v2790
        %v2798 = vadd.f32 %v2778, %v2790
        %v2799 = vadd.f32 %v2779, %v2790
        %v2800 = vadd.f32 %v2780, %v2790
        %v2801 = vadd.f32 %v2781, %v2790
        %v2802 = vadd.f32 %v2782, %v2790
        %v2803 = vadd.f32 %v2783, %v2790
        %v2804 = vadd.f32 %v2784, %v2790
        %v2805 = vmax.f32 %v2792, 0.0
        %v2806 = vmax.f32 %v2793, 0.0
        %v2807 = vmax.f32 %v2794, 0.0
        %v2808 = vmax.f32 %v2795, 0.0
        %v2809 = vmax.f32 %v2796, 0.0
        %v2810 = vmax.f32 %v2797, 0.0
        %v2811 = vmax.f32 %v2798, 0.0
        %v2812 = vmax.f32 %v2799, 0.0
        %v2813 = vmax.f32 %v2800, 0.0
        %v2814 = vmax.f32 %v2801, 0.0
        %v2815 = vmax.f32 %v2802, 0.0
        %v2816 = vmax.f32 %v2803, 0.0
        %v2817 = vmax.f32 %v2804, 0.0
        %v2818 = vld [vmem:[%s14] sm:$0xff]
        %v2819 = vld [vmem:[%s14 + $0x8] sm:$0xff]
        %vm2820 = vcmask 818176
        %v2822 = vsel %vm2820, %v2818, 0
        %v2825 = vsel %vm2820, %v2819, 0
        %v2828 = vsel %vm719, %v2817, 0
        %2830 = vmatprep.subr.mxu0 0.0
        %2831 = vmatpush1.msra.mxu0 %v2805
        %2832 = vmatprep.subr.mxu0 0.0
        %2833 = vmatpush1.msra.mxu0 %v2806
        %2834 = vmatprep.subr.mxu0 0.0
        %2835 = vmatpush1.msra.mxu0 %v2807
        %2836 = vmatprep.subr.mxu0 0.0
        %2837 = vmatpush1.msra.mxu0 %v2808
        %2838 = vmatprep.subr.mxu0 0.0
        %2839 = vmatpush1.msra.mxu0 %v2809
        %2840 = vmatprep.subr.mxu0 0.0
        %2841 = vmatpush1.msra.mxu0 %v2810
        %2842 = vmatprep.subr.mxu0 0.0
        %2843 = vmatpush1.msra.mxu0 %v2811
        %2844 = vmatprep.subr.mxu0 0.0
        %2845 = vmatpush1.msra.mxu0 %v2812
        %2846 = vmatprep.subr.mxu0 0.0
        %2847 = vmatpush1.msra.mxu0 %v2813
        %2848 = vmatprep.subr.mxu0 0.0
        %2849 = vmatpush1.msra.mxu0 %v2814
        %2850 = vmatprep.subr.mxu0 0.0
        %2851 = vmatpush1.msra.mxu0 %v2815
        %2852 = vmatprep.subr.mxu0 0.0
        %2853 = vmatpush1.msra.mxu0 %v2816
        %2854 = vmatprep.subr.mxu0 0.0
        %2855 = vmatpush1.msra.mxu0 %v2828
        %2856 = vmatprep.subr.mxu0 0.0
        %2857 = vmatpush1.msra.mxu0 0.0
        %2858 = vmatprep.subr.mxu0 0.0
        %2859 = vmatpush1.msra.mxu0 0.0
        %2860 = vmatprep.subr.mxu0 0.0
        %2861 = vmatpush1.msra.mxu0 0.0
        %2862 = vmatprep.subr.mxu0 0.0
        %2863 = vmatpush1.msra.mxu0 0.0
        %2864 = vmatprep.subr.mxu0 0.0
        %2865 = vmatpush1.msra.mxu0 0.0
        %2866 = vmatprep.subr.mxu0 0.0
        %2867 = vmatpush1.msra.mxu0 0.0
        %2868 = vmatprep.subr.mxu0 0.0
        %2869 = vmatpush1.msra.mxu0 0.0
        %2870 = vmatprep.subr.mxu0 0.0
        %2871 = vmatpush1.msra.mxu0 0.0
        %2872 = vmatprep.subr.mxu0 0.0
        %2873 = vmatpush1.msra.mxu0 0.0
        %2874 = vmatprep.subr.mxu0 0.0
        %2875 = vmatpush1.msra.mxu0 0.0
        %2876 = vmatprep.subr.mxu0 0.0
        %2877 = vmatpush1.msra.mxu0 0.0
        %2878 = vmatprep.subr.mxu0 0.0
        %2879 = vmatpush1.msra.mxu0 0.0
        %2880 = vmatprep.subr.mxu0 0.0
        %2881 = vmatpush1.msra.mxu0 0.0
        %2882 = vmatprep.subr.mxu0 0.0
        %2883 = vmatpush1.msra.mxu0 0.0
        %2884 = vmatprep.subr.mxu0 0.0
        %2885 = vmatpush1.msra.mxu0 0.0
        %2886 = vmatprep.subr.mxu0 0.0
        %2887 = vmatpush1.msra.mxu0 0.0
        %2888 = vmatprep.subr.mxu0 0.0
        %2889 = vmatpush1.msra.mxu0 0.0
        %2890 = vmatprep.subr.mxu0 0.0
        %2891 = vmatpush1.msra.mxu0 0.0
        %2892 = vmatprep.subr.mxu0 0.0
        %2893 = vmatpush1.msra.mxu0 0.0
        %2894 = vmatprep.mubr.f32.mxu0 0.0
        %2895 = vmatmul.mubr.f32.gmra.mrb[0].mxu0 %v2822
        %v2896 = vpop.f32.mrb[0].mxu0
        %v2897 = vadd.f32 0.0, %v2896
        %v2898 = vpop.f32.mrb[0].mxu0
        %2899 = vmatprep.mubr.f32.mxu0 0.0
        %2900 = vmatmul.mubr.f32.gmra.mrb[0].mxu0 %v2825
        %v2901 = vpop.f32.mrb[0].mxu0
        %v2902 = vadd.f32 0.0, %v2901
        %v2903 = vpop.f32.mrb[0].mxu0
        %2904 = vdwg.mxu0
        %s2905 = scalar_lea.vmem %s14, 16
        %v2906 = vld [vmem:[%s2905] sm:$0xff]
        %v2907 = vld [vmem:[%s2905 + $0x8] sm:$0xff]
        %v2909 = vsel %vm2820, %v2906, 0
        %v2912 = vsel %vm2820, %v2907, 0
        %2914 = vmatprep.subr.mxu0 0.0
        %2915 = vmatpush1.msra.mxu0 %v2805
        %2916 = vmatprep.subr.mxu0 0.0
        %2917 = vmatpush1.msra.mxu0 %v2806
        %2918 = vmatprep.subr.mxu0 0.0
        %2919 = vmatpush1.msra.mxu0 %v2807
        %2920 = vmatprep.subr.mxu0 0.0
        %2921 = vmatpush1.msra.mxu0 %v2808
        %2922 = vmatprep.subr.mxu0 0.0
        %2923 = vmatpush1.msra.mxu0 %v2809
        %2924 = vmatprep.subr.mxu0 0.0
        %2925 = vmatpush1.msra.mxu0 %v2810
        %2926 = vmatprep.subr.mxu0 0.0
        %2927 = vmatpush1.msra.mxu0 %v2811
        %2928 = vmatprep.subr.mxu0 0.0
        %2929 = vmatpush1.msra.mxu0 %v2812
        %2930 = vmatprep.subr.mxu0 0.0
        %2931 = vmatpush1.msra.mxu0 %v2813
        %2932 = vmatprep.subr.mxu0 0.0
        %2933 = vmatpush1.msra.mxu0 %v2814
        %2934 = vmatprep.subr.mxu0 0.0
        %2935 = vmatpush1.msra.mxu0 %v2815
        %2936 = vmatprep.subr.mxu0 0.0
        %2937 = vmatpush1.msra.mxu0 %v2816
        %2938 = vmatprep.subr.mxu0 0.0
        %2939 = vmatpush1.msra.mxu0 %v2828
        %2940 = vmatprep.subr.mxu0 0.0
        %2941 = vmatpush1.msra.mxu0 0.0
        %2942 = vmatprep.subr.mxu0 0.0
        %2943 = vmatpush1.msra.mxu0 0.0
        %2944 = vmatprep.subr.mxu0 0.0
        %2945 = vmatpush1.msra.mxu0 0.0
        %2946 = vmatprep.subr.mxu0 0.0
        %2947 = vmatpush1.msra.mxu0 0.0
        %2948 = vmatprep.subr.mxu0 0.0
        %2949 = vmatpush1.msra.mxu0 0.0
        %2950 = vmatprep.subr.mxu0 0.0
        %2951 = vmatpush1.msra.mxu0 0.0
        %2952 = vmatprep.subr.mxu0 0.0
        %2953 = vmatpush1.msra.mxu0 0.0
        %2954 = vmatprep.subr.mxu0 0.0
        %2955 = vmatpush1.msra.mxu0 0.0
        %2956 = vmatprep.subr.mxu0 0.0
        %2957 = vmatpush1.msra.mxu0 0.0
        %2958 = vmatprep.subr.mxu0 0.0
        %2959 = vmatpush1.msra.mxu0 0.0
        %2960 = vmatprep.subr.mxu0 0.0
        %2961 = vmatpush1.msra.mxu0 0.0
        %2962 = vmatprep.subr.mxu0 0.0
        %2963 = vmatpush1.msra.mxu0 0.0
        %2964 = vmatprep.subr.mxu0 0.0
        %2965 = vmatpush1.msra.mxu0 0.0
        %2966 = vmatprep.subr.mxu0 0.0
        %2967 = vmatpush1.msra.mxu0 0.0
        %2968 = vmatprep.subr.mxu0 0.0
        %2969 = vmatpush1.msra.mxu0 0.0
        %2970 = vmatprep.subr.mxu0 0.0
        %2971 = vmatpush1.msra.mxu0 0.0
        %2972 = vmatprep.subr.mxu0 0.0
        %2973 = vmatpush1.msra.mxu0 0.0
        %2974 = vmatprep.subr.mxu0 0.0
        %2975 = vmatpush1.msra.mxu0 0.0
        %2976 = vmatprep.subr.mxu0 0.0
        %2977 = vmatpush1.msra.mxu0 0.0
        %2978 = vmatprep.mubr.f32.mxu0 0.0
        %2979 = vmatmul.mubr.f32.gmra.mrb[0].mxu0 %v2909
        %v2980 = vpop.f32.mrb[0].mxu0
        %v2981 = vadd.f32 0.0, %v2980
        %v2982 = vpop.f32.mrb[0].mxu0
        %2983 = vmatprep.mubr.f32.mxu0 0.0
        %2984 = vmatmul.mubr.f32.gmra.mrb[0].mxu0 %v2912
        %v2985 = vpop.f32.mrb[0].mxu0
        %v2986 = vadd.f32 0.0, %v2985
        %v2987 = vpop.f32.mrb[0].mxu0
        %2988 = vdwg.mxu0
        %v2989 = vmax.f32 %v2897, %v2981
        %v2990 = vmax.f32 %v2902, %v2986
        %s2991 = scalar_lea.vmem %s14, 32
        %v2992 = vld [vmem:[%s2991] sm:$0xff]
        %v2993 = vld [vmem:[%s2991 + $0x8] sm:$0xff]
        %v2995 = vsel %vm2820, %v2992, 0
        %v2998 = vsel %vm2820, %v2993, 0
        %3000 = vmatprep.subr.mxu0 0.0
        %3001 = vmatpush1.msra.mxu0 %v2805
        %3002 = vmatprep.subr.mxu0 0.0
        %3003 = vmatpush1.msra.mxu0 %v2806
        %3004 = vmatprep.subr.mxu0 0.0
        %3005 = vmatpush1.msra.mxu0 %v2807
        %3006 = vmatprep.subr.mxu0 0.0
        %3007 = vmatpush1.msra.mxu0 %v2808
        %3008 = vmatprep.subr.mxu0 0.0
        %3009 = vmatpush1.msra.mxu0 %v2809
        %3010 = vmatprep.subr.mxu0 0.0
        %3011 = vmatpush1.msra.mxu0 %v2810
        %3012 = vmatprep.subr.mxu0 0.0
        %3013 = vmatpush1.msra.mxu0 %v2811
        %3014 = vmatprep.subr.mxu0 0.0
        %3015 = vmatpush1.msra.mxu0 %v2812
        %3016 = vmatprep.subr.mxu0 0.0
        %3017 = vmatpush1.msra.mxu0 %v2813
        %3018 = vmatprep.subr.mxu0 0.0
        %3019 = vmatpush1.msra.mxu0 %v2814
        %3020 = vmatprep.subr.mxu0 0.0
        %3021 = vmatpush1.msra.mxu0 %v2815
        %3022 = vmatprep.subr.mxu0 0.0
        %3023 = vmatpush1.msra.mxu0 %v2816
        %3024 = vmatprep.subr.mxu0 0.0
        %3025 = vmatpush1.msra.mxu0 %v2828
        %3026 = vmatprep.subr.mxu0 0.0
        %3027 = vmatpush1.msra.mxu0 0.0
        %3028 = vmatprep.subr.mxu0 0.0
        %3029 = vmatpush1.msra.mxu0 0.0
        %3030 = vmatprep.subr.mxu0 0.0
        %3031 = vmatpush1.msra.mxu0 0.0
        %3032 = vmatprep.subr.mxu0 0.0
        %3033 = vmatpush1.msra.mxu0 0.0
        %3034 = vmatprep.subr.mxu0 0.0
        %3035 = vmatpush1.msra.mxu0 0.0
        %3036 = vmatprep.subr.mxu0 0.0
        %3037 = vmatpush1.msra.mxu0 0.0
        %3038 = vmatprep.subr.mxu0 0.0
        %3039 = vmatpush1.msra.mxu0 0.0
        %3040 = vmatprep.subr.mxu0 0.0
        %3041 = vmatpush1.msra.mxu0 0.0
        %3042 = vmatprep.subr.mxu0 0.0
        %3043 = vmatpush1.msra.mxu0 0.0
        %3044 = vmatprep.subr.mxu0 0.0
        %3045 = vmatpush1.msra.mxu0 0.0
        %3046 = vmatprep.subr.mxu0 0.0
        %3047 = vmatpush1.msra.mxu0 0.0
        %3048 = vmatprep.subr.mxu0 0.0
        %3049 = vmatpush1.msra.mxu0 0.0
        %3050 = vmatprep.subr.mxu0 0.0
        %3051 = vmatpush1.msra.mxu0 0.0
        %3052 = vmatprep.subr.mxu0 0.0
        %3053 = vmatpush1.msra.mxu0 0.0
        %3054 = vmatprep.subr.mxu0 0.0
        %3055 = vmatpush1.msra.mxu0 0.0
        %3056 = vmatprep.subr.mxu0 0.0
        %3057 = vmatpush1.msra.mxu0 0.0
        %3058 = vmatprep.subr.mxu0 0.0
        %3059 = vmatpush1.msra.mxu0 0.0
        %3060 = vmatprep.subr.mxu0 0.0
        %3061 = vmatpush1.msra.mxu0 0.0
        %3062 = vmatprep.subr.mxu0 0.0
        %3063 = vmatpush1.msra.mxu0 0.0
        %3064 = vmatprep.mubr.f32.mxu0 0.0
        %3065 = vmatmul.mubr.f32.gmra.mrb[0].mxu0 %v2995
        %v3066 = vpop.f32.mrb[0].mxu0
        %v3067 = vadd.f32 0.0, %v3066
        %v3068 = vpop.f32.mrb[0].mxu0
        %3069 = vmatprep.mubr.f32.mxu0 0.0
        %3070 = vmatmul.mubr.f32.gmra.mrb[0].mxu0 %v2998
        %v3071 = vpop.f32.mrb[0].mxu0
        %v3072 = vadd.f32 0.0, %v3071
        %v3073 = vpop.f32.mrb[0].mxu0
        %3074 = vdwg.mxu0
        %v3075 = vmax.f32 %v2989, %v3067
        %v3076 = vmax.f32 %v2990, %v3072
        %s3077 = scalar_lea.vmem %s14, 48
        %v3078 = vld [vmem:[%s3077] sm:$0xff]
        %v3079 = vld [vmem:[%s3077 + $0x8] sm:$0xff]
        %v3081 = vsel %vm2820, %v3078, 0
        %v3084 = vsel %vm2820, %v3079, 0
        %3086 = vmatprep.subr.mxu0 0.0
        %3087 = vmatpush1.msra.mxu0 %v2805
        %3088 = vmatprep.subr.mxu0 0.0
        %3089 = vmatpush1.msra.mxu0 %v2806
        %3090 = vmatprep.subr.mxu0 0.0
        %3091 = vmatpush1.msra.mxu0 %v2807
        %3092 = vmatprep.subr.mxu0 0.0
        %3093 = vmatpush1.msra.mxu0 %v2808
        %3094 = vmatprep.subr.mxu0 0.0
        %3095 = vmatpush1.msra.mxu0 %v2809
        %3096 = vmatprep.subr.mxu0 0.0
        %3097 = vmatpush1.msra.mxu0 %v2810
        %3098 = vmatprep.subr.mxu0 0.0
        %3099 = vmatpush1.msra.mxu0 %v2811
        %3100 = vmatprep.subr.mxu0 0.0
        %3101 = vmatpush1.msra.mxu0 %v2812
        %3102 = vmatprep.subr.mxu0 0.0
        %3103 = vmatpush1.msra.mxu0 %v2813
        %3104 = vmatprep.subr.mxu0 0.0
        %3105 = vmatpush1.msra.mxu0 %v2814
        %3106 = vmatprep.subr.mxu0 0.0
        %3107 = vmatpush1.msra.mxu0 %v2815
        %3108 = vmatprep.subr.mxu0 0.0
        %3109 = vmatpush1.msra.mxu0 %v2816
        %3110 = vmatprep.subr.mxu0 0.0
        %3111 = vmatpush1.msra.mxu0 %v2828
        %3112 = vmatprep.subr.mxu0 0.0
        %3113 = vmatpush1.msra.mxu0 0.0
        %3114 = vmatprep.subr.mxu0 0.0
        %3115 = vmatpush1.msra.mxu0 0.0
        %3116 = vmatprep.subr.mxu0 0.0
        %3117 = vmatpush1.msra.mxu0 0.0
        %3118 = vmatprep.subr.mxu0 0.0
        %3119 = vmatpush1.msra.mxu0 0.0
        %3120 = vmatprep.subr.mxu0 0.0
        %3121 = vmatpush1.msra.mxu0 0.0
        %3122 = vmatprep.subr.mxu0 0.0
        %3123 = vmatpush1.msra.mxu0 0.0
        %3124 = vmatprep.subr.mxu0 0.0
        %3125 = vmatpush1.msra.mxu0 0.0
        %3126 = vmatprep.subr.mxu0 0.0
        %3127 = vmatpush1.msra.mxu0 0.0
        %3128 = vmatprep.subr.mxu0 0.0
        %3129 = vmatpush1.msra.mxu0 0.0
        %3130 = vmatprep.subr.mxu0 0.0
        %3131 = vmatpush1.msra.mxu0 0.0
        %3132 = vmatprep.subr.mxu0 0.0
        %3133 = vmatpush1.msra.mxu0 0.0
        %3134 = vmatprep.subr.mxu0 0.0
        %3135 = vmatpush1.msra.mxu0 0.0
        %3136 = vmatprep.subr.mxu0 0.0
        %3137 = vmatpush1.msra.mxu0 0.0
        %3138 = vmatprep.subr.mxu0 0.0
        %3139 = vmatpush1.msra.mxu0 0.0
        %3140 = vmatprep.subr.mxu0 0.0
        %3141 = vmatpush1.msra.mxu0 0.0
        %3142 = vmatprep.subr.mxu0 0.0
        %3143 = vmatpush1.msra.mxu0 0.0
        %3144 = vmatprep.subr.mxu0 0.0
        %3145 = vmatpush1.msra.mxu0 0.0
        %3146 = vmatprep.subr.mxu0 0.0
        %3147 = vmatpush1.msra.mxu0 0.0
        %3148 = vmatprep.subr.mxu0 0.0
        %3149 = vmatpush1.msra.mxu0 0.0
        %3150 = vmatprep.mubr.f32.mxu0 0.0
        %3151 = vmatmul.mubr.f32.gmra.mrb[0].mxu0 %v3081
        %v3152 = vpop.f32.mrb[0].mxu0
        %v3153 = vadd.f32 0.0, %v3152
        %v3154 = vpop.f32.mrb[0].mxu0
        %3155 = vmatprep.mubr.f32.mxu0 0.0
        %3156 = vmatmul.mubr.f32.gmra.mrb[0].mxu0 %v3084
        %v3157 = vpop.f32.mrb[0].mxu0
        %v3158 = vadd.f32 0.0, %v3157
        %v3159 = vpop.f32.mrb[0].mxu0
        %3160 = vdwg.mxu0
        %v3161 = vmax.f32 %v3075, %v3153
        %v3162 = vmax.f32 %v3076, %v3158
        %3163 = vst [vmem:[#allocation3] sm:$0xff] 0.0
        %3164 = vst [vmem:[#allocation3 + $0x8] sm:$0xff] 0.0
        %3165 = vst [vmem:[#allocation3 + $0x10] sm:$0xff] 0.0
        %3166 = vst [vmem:[#allocation3 + $0x18] sm:$0xff] 0.0
        %3167 = vst [vmem:[#allocation3 + $0x20] sm:$0xff] 0.0
        %3168 = vst [vmem:[#allocation3 + $0x28] sm:$0xff] 0.0
        %3169 = vst [vmem:[#allocation3 + $0x30] sm:$0x3] 0.0
        %3170 = vst [vmem:[#allocation3 + $0xe] sm:$0xf] %v3161
        %3171 = vst [vmem:[#allocation3 + $0x10] sm:$0xf0] %v3161
        %3172 = vst [vmem:[#allocation3 + $0x1a] sm:$0xf] %v3162
        %3173 = vst [vmem:[#allocation3 + $0x1c] sm:$0xf0] %v3162
        %v3174 = vld [vmem:[%s15] sm:$0xff]
        %v3175 = vld [vmem:[%s15 + $0x8] sm:$0xff]
        %v3176 = vld [vmem:[%s15 + $0x10] sm:$0xff]
        %v3177 = vld [vmem:[%s15 + $0x18] sm:$0xff]
        %v3178 = vld [vmem:[%s15 + $0x20] sm:$0xf]
        %v3179 = vld [vmem:[#allocation3] sm:$0xff]
        %v3180 = vld [vmem:[#allocation3 + $0x8] sm:$0xff]
        %v3181 = vld [vmem:[#allocation3 + $0x10] sm:$0xff]
        %v3182 = vld [vmem:[#allocation3 + $0x18] sm:$0xff]
        %v3183 = vld [vmem:[#allocation3 + $0x20] sm:$0xf]
        %v3184 = vld [vmem:[#allocation7] sm:$0xff]
        %v3185 = vld [vmem:[#allocation7 + $0x8] sm:$0xff]
        %v3186 = vld [vmem:[#allocation7 + $0x10] sm:$0xff]
        %v3187 = vld [vmem:[#allocation7 + $0x18] sm:$0xff]
        %v3188 = vld [vmem:[#allocation7 + $0x20] sm:$0xff]
        %v3189 = vld [vmem:[#allocation7 + $0x28] sm:$0xff]
        %v3190 = vld [vmem:[#allocation7 + $0x30] sm:$0xff]
        %v3191 = vld [vmem:[#allocation7 + $0x38] sm:$0xff]
        %v3192 = vld [vmem:[#allocation7 + $0x40] sm:$0xff]
        %v3193 = vld [vmem:[#allocation7 + $0x48] sm:$0xff]
        %v3194 = vld [vmem:[#allocation7 + $0x50] sm:$0xff]
        %v3195 = vld [vmem:[#allocation7 + $0x58] sm:$0xff]
        %v3196 = vld [vmem:[#allocation7 + $0x60] sm:$0xff]
        %v3197 = vld [vmem:[#allocation7 + $0x68] sm:$0xff]
        %v3198 = vld [vmem:[#allocation7 + $0x70] sm:$0xff]
        %v3199 = vld [vmem:[#allocation7 + $0x78] sm:$0xff]
        %v3200 = vld [vmem:[#allocation3 + $0x1] sm:$0xff]
        %v3201 = vld [vmem:[#allocation3 + $0x9] sm:$0xff]
        %v3202 = vld [vmem:[#allocation3 + $0x11] sm:$0xff]
        %v3203 = vld [vmem:[#allocation3 + $0x19] sm:$0xff]
        %v3204 = vld [vmem:[#allocation3 + $0x21] sm:$0xf]
        %s3205 = scalar_lea.vmem [#allocation7], 128
        %v3206 = vld [vmem:[%s3205] sm:$0xff]
        %v3207 = vld [vmem:[%s3205 + $0x8] sm:$0xff]
        %v3208 = vld [vmem:[%s3205 + $0x10] sm:$0xff]
        %v3209 = vld [vmem:[%s3205 + $0x18] sm:$0xff]
        %v3210 = vld [vmem:[%s3205 + $0x20] sm:$0xff]
        %v3211 = vld [vmem:[%s3205 + $0x28] sm:$0xff]
        %v3212 = vld [vmem:[%s3205 + $0x30] sm:$0xff]
        %v3213 = vld [vmem:[%s3205 + $0x38] sm:$0xff]
        %v3214 = vld [vmem:[%s3205 + $0x40] sm:$0xff]
        %v3215 = vld [vmem:[%s3205 + $0x48] sm:$0xff]
        %v3216 = vld [vmem:[%s3205 + $0x50] sm:$0xff]
        %v3217 = vld [vmem:[%s3205 + $0x58] sm:$0xff]
        %v3218 = vld [vmem:[%s3205 + $0x60] sm:$0xff]
        %v3219 = vld [vmem:[%s3205 + $0x68] sm:$0xff]
        %v3220 = vld [vmem:[%s3205 + $0x70] sm:$0xff]
        %v3221 = vld [vmem:[%s3205 + $0x78] sm:$0xff]
        %3222 = vmatprep.subr.mxu0 0.0
        %3223 = vmatpush1.msra.mxu0 %v3206
        %3224 = vmatprep.subr.mxu0 0.0
        %3225 = vmatpush1.msra.mxu0 %v3207
        %3226 = vmatprep.subr.mxu0 0.0
        %3227 = vmatpush1.msra.mxu0 %v3208
        %3228 = vmatprep.subr.mxu0 0.0
        %3229 = vmatpush1.msra.mxu0 %v3209
        %3230 = vmatprep.subr.mxu0 0.0
        %3231 = vmatpush1.msra.mxu0 %v3210
        %3232 = vmatprep.subr.mxu0 0.0
        %3233 = vmatpush1.msra.mxu0 %v3211
        %3234 = vmatprep.subr.mxu0 0.0
        %3235 = vmatpush1.msra.mxu0 %v3212
        %3236 = vmatprep.subr.mxu0 0.0
        %3237 = vmatpush1.msra.mxu0 %v3213
        %3238 = vmatprep.subr.mxu0 0.0
        %3239 = vmatpush1.msra.mxu0 %v3214
        %3240 = vmatprep.subr.mxu0 0.0
        %3241 = vmatpush1.msra.mxu0 %v3215
        %3242 = vmatprep.subr.mxu0 0.0
        %3243 = vmatpush1.msra.mxu0 %v3216
        %3244 = vmatprep.subr.mxu0 0.0
        %3245 = vmatpush1.msra.mxu0 %v3217
        %3246 = vmatprep.subr.mxu0 0.0
        %3247 = vmatpush1.msra.mxu0 %v3218
        %3248 = vmatprep.subr.mxu0 0.0
        %3249 = vmatpush1.msra.mxu0 %v3219
        %3250 = vmatprep.subr.mxu0 0.0
        %3251 = vmatpush1.msra.mxu0 %v3220
        %3252 = vmatprep.subr.mxu0 0.0
        %3253 = vmatpush1.msra.mxu0 %v3221
        %3254 = vmatprep.subr.mxu0 0.0
        %3255 = vmatpush1.msra.mxu0 0.0
        %3256 = vmatprep.subr.mxu0 0.0
        %3257 = vmatpush1.msra.mxu0 0.0
        %3258 = vmatprep.subr.mxu0 0.0
        %3259 = vmatpush1.msra.mxu0 0.0
        %3260 = vmatprep.subr.mxu0 0.0
        %3261 = vmatpush1.msra.mxu0 0.0
        %3262 = vmatprep.subr.mxu0 0.0
        %3263 = vmatpush1.msra.mxu0 0.0
        %3264 = vmatprep.subr.mxu0 0.0
        %3265 = vmatpush1.msra.mxu0 0.0
        %3266 = vmatprep.subr.mxu0 0.0
        %3267 = vmatpush1.msra.mxu0 0.0
        %3268 = vmatprep.subr.mxu0 0.0
        %3269 = vmatpush1.msra.mxu0 0.0
        %3270 = vmatprep.subr.mxu0 0.0
        %3271 = vmatpush1.msra.mxu0 0.0
        %3272 = vmatprep.subr.mxu0 0.0
        %3273 = vmatpush1.msra.mxu0 0.0
        %3274 = vmatprep.subr.mxu0 0.0
        %3275 = vmatpush1.msra.mxu0 0.0
        %3276 = vmatprep.subr.mxu0 0.0
        %3277 = vmatpush1.msra.mxu0 0.0
        %3278 = vmatprep.subr.mxu0 0.0
        %3279 = vmatpush1.msra.mxu0 0.0
        %3280 = vmatprep.subr.mxu0 0.0
        %3281 = vmatpush1.msra.mxu0 0.0
        %3282 = vmatprep.subr.mxu0 0.0
        %3283 = vmatpush1.msra.mxu0 0.0
        %3284 = vmatprep.subr.mxu0 0.0
        %3285 = vmatpush1.msra.mxu0 0.0
        %3286 = vmatprep.mubr.f32.mxu0 0.0
        %3287 = vmatmul.mubr.f32.gmra.mrb[0].mxu0 %v3200
        %v3288 = vpop.f32.mrb[0].mxu0
        %v3289 = vadd.f32 0.0, %v3288
        %v3290 = vpop.f32.mrb[0].mxu0
        %3291 = vmatprep.mubr.f32.mxu0 0.0
        %3292 = vmatmul.mubr.f32.gmra.mrb[0].mxu0 %v3201
        %v3293 = vpop.f32.mrb[0].mxu0
        %v3294 = vadd.f32 0.0, %v3293
        %v3295 = vpop.f32.mrb[0].mxu0
        %3296 = vmatprep.mubr.f32.mxu0 0.0
        %3297 = vmatmul.mubr.f32.gmra.mrb[0].mxu0 %v3202
        %v3298 = vpop.f32.mrb[0].mxu0
        %v3299 = vadd.f32 0.0, %v3298
        %v3300 = vpop.f32.mrb[0].mxu0
        %3301 = vmatprep.mubr.f32.mxu0 0.0
        %3302 = vmatmul.mubr.f32.gmra.mrb[0].mxu0 %v3203
        %v3303 = vpop.f32.mrb[0].mxu0
        %v3304 = vadd.f32 0.0, %v3303
        %v3305 = vpop.f32.mrb[0].mxu0
        %3306 = vmatprep.mubr.f32.mxu0 0.0
        %3307 = vmatmul.mubr.f32.gmra.mrb[0].mxu0 %v3204
        %v3308 = vpop.f32.mrb[0].mxu0
        %v3309 = vadd.f32 0.0, %v3308
        %v3310 = vpop.f32.mrb[0].mxu0
        %3311 = vdwg.mxu0
        %3312 = vmatprep.subr.mxu0 0.0
        %3313 = vmatpush1.msra.mxu0 %v3184
        %3314 = vmatprep.subr.mxu0 0.0
        %3315 = vmatpush1.msra.mxu0 %v3185
        %3316 = vmatprep.subr.mxu0 0.0
        %3317 = vmatpush1.msra.mxu0 %v3186
        %3318 = vmatprep.subr.mxu0 0.0
        %3319 = vmatpush1.msra.mxu0 %v3187
        %3320 = vmatprep.subr.mxu0 0.0
        %3321 = vmatpush1.msra.mxu0 %v3188
        %3322 = vmatprep.subr.mxu0 0.0
        %3323 = vmatpush1.msra.mxu0 %v3189
        %3324 = vmatprep.subr.mxu0 0.0
        %3325 = vmatpush1.msra.mxu0 %v3190
        %3326 = vmatprep.subr.mxu0 0.0
        %3327 = vmatpush1.msra.mxu0 %v3191
        %3328 = vmatprep.subr.mxu0 0.0
        %3329 = vmatpush1.msra.mxu0 %v3192
        %3330 = vmatprep.subr.mxu0 0.0
        %3331 = vmatpush1.msra.mxu0 %v3193
        %3332 = vmatprep.subr.mxu0 0.0
        %3333 = vmatpush1.msra.mxu0 %v3194
        %3334 = vmatprep.subr.mxu0 0.0
        %3335 = vmatpush1.msra.mxu0 %v3195
        %3336 = vmatprep.subr.mxu0 0.0
        %3337 = vmatpush1.msra.mxu0 %v3196
        %3338 = vmatprep.subr.mxu0 0.0
        %3339 = vmatpush1.msra.mxu0 %v3197
        %3340 = vmatprep.subr.mxu0 0.0
        %3341 = vmatpush1.msra.mxu0 %v3198
        %3342 = vmatprep.subr.mxu0 0.0
        %3343 = vmatpush1.msra.mxu0 %v3199
        %3344 = vmatprep.subr.mxu0 0.0
        %3345 = vmatpush1.msra.mxu0 0.0
        %3346 = vmatprep.subr.mxu0 0.0
        %3347 = vmatpush1.msra.mxu0 0.0
        %3348 = vmatprep.subr.mxu0 0.0
        %3349 = vmatpush1.msra.mxu0 0.0
        %3350 = vmatprep.subr.mxu0 0.0
        %3351 = vmatpush1.msra.mxu0 0.0
        %3352 = vmatprep.subr.mxu0 0.0
        %3353 = vmatpush1.msra.mxu0 0.0
        %3354 = vmatprep.subr.mxu0 0.0
        %3355 = vmatpush1.msra.mxu0 0.0
        %3356 = vmatprep.subr.mxu0 0.0
        %3357 = vmatpush1.msra.mxu0 0.0
        %3358 = vmatprep.subr.mxu0 0.0
        %3359 = vmatpush1.msra.mxu0 0.0
        %3360 = vmatprep.subr.mxu0 0.0
        %3361 = vmatpush1.msra.mxu0 0.0
        %3362 = vmatprep.subr.mxu0 0.0
        %3363 = vmatpush1.msra.mxu0 0.0
        %3364 = vmatprep.subr.mxu0 0.0
        %3365 = vmatpush1.msra.mxu0 0.0
        %3366 = vmatprep.subr.mxu0 0.0
        %3367 = vmatpush1.msra.mxu0 0.0
        %3368 = vmatprep.subr.mxu0 0.0
        %3369 = vmatpush1.msra.mxu0 0.0
        %3370 = vmatprep.subr.mxu0 0.0
        %3371 = vmatpush1.msra.mxu0 0.0
        %3372 = vmatprep.subr.mxu0 0.0
        %3373 = vmatpush1.msra.mxu0 0.0
        %3374 = vmatprep.subr.mxu0 0.0
        %3375 = vmatpush1.msra.mxu0 0.0
        %3376 = vmatprep.mubr.f32.mxu0 0.0
        %3377 = vmatmul.mubr.f32.gmra.mrb[0].mxu0 %v3179
        %v3378 = vpop.f32.mrb[0].mxu0
        %v3379 = vadd.f32 %v3289, %v3378
        %v3380 = vpop.f32.mrb[0].mxu0
        %3381 = vmatprep.mubr.f32.mxu0 0.0
        %3382 = vmatmul.mubr.f32.gmra.mrb[0].mxu0 %v3180
        %v3383 = vpop.f32.mrb[0].mxu0
        %v3384 = vadd.f32 %v3294, %v3383
        %v3385 = vpop.f32.mrb[0].mxu0
        %3386 = vmatprep.mubr.f32.mxu0 0.0
        %3387 = vmatmul.mubr.f32.gmra.mrb[0].mxu0 %v3181
        %v3388 = vpop.f32.mrb[0].mxu0
        %v3389 = vadd.f32 %v3299, %v3388
        %v3390 = vpop.f32.mrb[0].mxu0
        %3391 = vmatprep.mubr.f32.mxu0 0.0
        %3392 = vmatmul.mubr.f32.gmra.mrb[0].mxu0 %v3182
        %v3393 = vpop.f32.mrb[0].mxu0
        %v3394 = vadd.f32 %v3304, %v3393
        %v3395 = vpop.f32.mrb[0].mxu0
        %3396 = vmatprep.mubr.f32.mxu0 0.0
        %3397 = vmatmul.mubr.f32.gmra.mrb[0].mxu0 %v3183
        %v3398 = vpop.f32.mrb[0].mxu0
        %v3399 = vadd.f32 %v3309, %v3398
        %v3400 = vpop.f32.mrb[0].mxu0
        %3401 = vdwg.mxu0
        %v3402 = vld [vmem:[#allocation3 + $0x2] sm:$0xff]
        %v3403 = vld [vmem:[#allocation3 + $0xa] sm:$0xff]
        %v3404 = vld [vmem:[#allocation3 + $0x12] sm:$0xff]
        %v3405 = vld [vmem:[#allocation3 + $0x1a] sm:$0xff]
        %v3406 = vld [vmem:[#allocation3 + $0x22] sm:$0xf]
        %s3407 = scalar_lea.vmem [#allocation7], 256
        %v3408 = vld [vmem:[%s3407] sm:$0xff]
        %v3409 = vld [vmem:[%s3407 + $0x8] sm:$0xff]
        %v3410 = vld [vmem:[%s3407 + $0x10] sm:$0xff]
        %v3411 = vld [vmem:[%s3407 + $0x18] sm:$0xff]
        %v3412 = vld [vmem:[%s3407 + $0x20] sm:$0xff]
        %v3413 = vld [vmem:[%s3407 + $0x28] sm:$0xff]
        %v3414 = vld [vmem:[%s3407 + $0x30] sm:$0xff]
        %v3415 = vld [vmem:[%s3407 + $0x38] sm:$0xff]
        %v3416 = vld [vmem:[%s3407 + $0x40] sm:$0xff]
        %v3417 = vld [vmem:[%s3407 + $0x48] sm:$0xff]
        %v3418 = vld [vmem:[%s3407 + $0x50] sm:$0xff]
        %v3419 = vld [vmem:[%s3407 + $0x58] sm:$0xff]
        %v3420 = vld [vmem:[%s3407 + $0x60] sm:$0xff]
        %v3421 = vld [vmem:[%s3407 + $0x68] sm:$0xff]
        %v3422 = vld [vmem:[%s3407 + $0x70] sm:$0xff]
        %v3423 = vld [vmem:[%s3407 + $0x78] sm:$0xff]
        %3424 = vmatprep.subr.mxu0 0.0
        %3425 = vmatpush1.msra.mxu0 %v3408
        %3426 = vmatprep.subr.mxu0 0.0
        %3427 = vmatpush1.msra.mxu0 %v3409
        %3428 = vmatprep.subr.mxu0 0.0
        %3429 = vmatpush1.msra.mxu0 %v3410
        %3430 = vmatprep.subr.mxu0 0.0
        %3431 = vmatpush1.msra.mxu0 %v3411
        %3432 = vmatprep.subr.mxu0 0.0
        %3433 = vmatpush1.msra.mxu0 %v3412
        %3434 = vmatprep.subr.mxu0 0.0
        %3435 = vmatpush1.msra.mxu0 %v3413
        %3436 = vmatprep.subr.mxu0 0.0
        %3437 = vmatpush1.msra.mxu0 %v3414
        %3438 = vmatprep.subr.mxu0 0.0
        %3439 = vmatpush1.msra.mxu0 %v3415
        %3440 = vmatprep.subr.mxu0 0.0
        %3441 = vmatpush1.msra.mxu0 %v3416
        %3442 = vmatprep.subr.mxu0 0.0
        %3443 = vmatpush1.msra.mxu0 %v3417
        %3444 = vmatprep.subr.mxu0 0.0
        %3445 = vmatpush1.msra.mxu0 %v3418
        %3446 = vmatprep.subr.mxu0 0.0
        %3447 = vmatpush1.msra.mxu0 %v3419
        %3448 = vmatprep.subr.mxu0 0.0
        %3449 = vmatpush1.msra.mxu0 %v3420
        %3450 = vmatprep.subr.mxu0 0.0
        %3451 = vmatpush1.msra.mxu0 %v3421
        %3452 = vmatprep.subr.mxu0 0.0
        %3453 = vmatpush1.msra.mxu0 %v3422
        %3454 = vmatprep.subr.mxu0 0.0
        %3455 = vmatpush1.msra.mxu0 %v3423
        %3456 = vmatprep.subr.mxu0 0.0
        %3457 = vmatpush1.msra.mxu0 0.0
        %3458 = vmatprep.subr.mxu0 0.0
        %3459 = vmatpush1.msra.mxu0 0.0
        %3460 = vmatprep.subr.mxu0 0.0
        %3461 = vmatpush1.msra.mxu0 0.0
        %3462 = vmatprep.subr.mxu0 0.0
        %3463 = vmatpush1.msra.mxu0 0.0
        %3464 = vmatprep.subr.mxu0 0.0
        %3465 = vmatpush1.msra.mxu0 0.0
        %3466 = vmatprep.subr.mxu0 0.0
        %3467 = vmatpush1.msra.mxu0 0.0
        %3468 = vmatprep.subr.mxu0 0.0
        %3469 = vmatpush1.msra.mxu0 0.0
        %3470 = vmatprep.subr.mxu0 0.0
        %3471 = vmatpush1.msra.mxu0 0.0
        %3472 = vmatprep.subr.mxu0 0.0
        %3473 = vmatpush1.msra.mxu0 0.0
        %3474 = vmatprep.subr.mxu0 0.0
        %3475 = vmatpush1.msra.mxu0 0.0
        %3476 = vmatprep.subr.mxu0 0.0
        %3477 = vmatpush1.msra.mxu0 0.0
        %3478 = vmatprep.subr.mxu0 0.0
        %3479 = vmatpush1.msra.mxu0 0.0
        %3480 = vmatprep.subr.mxu0 0.0
        %3481 = vmatpush1.msra.mxu0 0.0
        %3482 = vmatprep.subr.mxu0 0.0
        %3483 = vmatpush1.msra.mxu0 0.0
        %3484 = vmatprep.subr.mxu0 0.0
        %3485 = vmatpush1.msra.mxu0 0.0
        %3486 = vmatprep.subr.mxu0 0.0
        %3487 = vmatpush1.msra.mxu0 0.0
        %3488 = vmatprep.mubr.f32.mxu0 0.0
        %3489 = vmatmul.mubr.f32.gmra.mrb[0].mxu0 %v3402
        %v3490 = vpop.f32.mrb[0].mxu0
        %v3491 = vadd.f32 0.0, %v3490
        %v3492 = vpop.f32.mrb[0].mxu0
        %3493 = vmatprep.mubr.f32.mxu0 0.0
        %3494 = vmatmul.mubr.f32.gmra.mrb[0].mxu0 %v3403
        %v3495 = vpop.f32.mrb[0].mxu0
        %v3496 = vadd.f32 0.0, %v3495
        %v3497 = vpop.f32.mrb[0].mxu0
        %3498 = vmatprep.mubr.f32.mxu0 0.0
        %3499 = vmatmul.mubr.f32.gmra.mrb[0].mxu0 %v3404
        %v3500 = vpop.f32.mrb[0].mxu0
        %v3501 = vadd.f32 0.0, %v3500
        %v3502 = vpop.f32.mrb[0].mxu0
        %3503 = vmatprep.mubr.f32.mxu0 0.0
        %3504 = vmatmul.mubr.f32.gmra.mrb[0].mxu0 %v3405
        %v3505 = vpop.f32.mrb[0].mxu0
        %v3506 = vadd.f32 0.0, %v3505
        %v3507 = vpop.f32.mrb[0].mxu0
        %3508 = vmatprep.mubr.f32.mxu0 0.0
        %3509 = vmatmul.mubr.f32.gmra.mrb[0].mxu0 %v3406
        %v3510 = vpop.f32.mrb[0].mxu0
        %v3511 = vadd.f32 0.0, %v3510
        %v3512 = vpop.f32.mrb[0].mxu0
        %3513 = vdwg.mxu0
        %v3514 = vadd.f32 %v3379, %v3491
        %v3515 = vadd.f32 %v3384, %v3496
        %v3516 = vadd.f32 %v3389, %v3501
        %v3517 = vadd.f32 %v3394, %v3506
        %v3518 = vadd.f32 %v3399, %v3511
        %v3519 = vld [vmem:[#allocation3 + $0x6] sm:$0xff]
        %v3520 = vld [vmem:[#allocation3 + $0xe] sm:$0xff]
        %v3521 = vld [vmem:[#allocation3 + $0x16] sm:$0xff]
        %v3522 = vld [vmem:[#allocation3 + $0x1e] sm:$0xff]
        %v3523 = vld [vmem:[#allocation3 + $0x26] sm:$0xf]
        %s3524 = scalar_lea.vmem [#allocation7], 384
        %v3525 = vld [vmem:[%s3524] sm:$0xff]
        %v3526 = vld [vmem:[%s3524 + $0x8] sm:$0xff]
        %v3527 = vld [vmem:[%s3524 + $0x10] sm:$0xff]
        %v3528 = vld [vmem:[%s3524 + $0x18] sm:$0xff]
        %v3529 = vld [vmem:[%s3524 + $0x20] sm:$0xff]
        %v3530 = vld [vmem:[%s3524 + $0x28] sm:$0xff]
        %v3531 = vld [vmem:[%s3524 + $0x30] sm:$0xff]
        %v3532 = vld [vmem:[%s3524 + $0x38] sm:$0xff]
        %v3533 = vld [vmem:[%s3524 + $0x40] sm:$0xff]
        %v3534 = vld [vmem:[%s3524 + $0x48] sm:$0xff]
        %v3535 = vld [vmem:[%s3524 + $0x50] sm:$0xff]
        %v3536 = vld [vmem:[%s3524 + $0x58] sm:$0xff]
        %v3537 = vld [vmem:[%s3524 + $0x60] sm:$0xff]
        %v3538 = vld [vmem:[%s3524 + $0x68] sm:$0xff]
        %v3539 = vld [vmem:[%s3524 + $0x70] sm:$0xff]
        %v3540 = vld [vmem:[%s3524 + $0x78] sm:$0xff]
        %3541 = vmatprep.subr.mxu0 0.0
        %3542 = vmatpush1.msra.mxu0 %v3525
        %3543 = vmatprep.subr.mxu0 0.0
        %3544 = vmatpush1.msra.mxu0 %v3526
        %3545 = vmatprep.subr.mxu0 0.0
        %3546 = vmatpush1.msra.mxu0 %v3527
        %3547 = vmatprep.subr.mxu0 0.0
        %3548 = vmatpush1.msra.mxu0 %v3528
        %3549 = vmatprep.subr.mxu0 0.0
        %3550 = vmatpush1.msra.mxu0 %v3529
        %3551 = vmatprep.subr.mxu0 0.0
        %3552 = vmatpush1.msra.mxu0 %v3530
        %3553 = vmatprep.subr.mxu0 0.0
        %3554 = vmatpush1.msra.mxu0 %v3531
        %3555 = vmatprep.subr.mxu0 0.0
        %3556 = vmatpush1.msra.mxu0 %v3532
        %3557 = vmatprep.subr.mxu0 0.0
        %3558 = vmatpush1.msra.mxu0 %v3533
        %3559 = vmatprep.subr.mxu0 0.0
        %3560 = vmatpush1.msra.mxu0 %v3534
        %3561 = vmatprep.subr.mxu0 0.0
        %3562 = vmatpush1.msra.mxu0 %v3535
        %3563 = vmatprep.subr.mxu0 0.0
        %3564 = vmatpush1.msra.mxu0 %v3536
        %3565 = vmatprep.subr.mxu0 0.0
        %3566 = vmatpush1.msra.mxu0 %v3537
        %3567 = vmatprep.subr.mxu0 0.0
        %3568 = vmatpush1.msra.mxu0 %v3538
        %3569 = vmatprep.subr.mxu0 0.0
        %3570 = vmatpush1.msra.mxu0 %v3539
        %3571 = vmatprep.subr.mxu0 0.0
        %3572 = vmatpush1.msra.mxu0 %v3540
        %3573 = vmatprep.subr.mxu0 0.0
        %3574 = vmatpush1.msra.mxu0 0.0
        %3575 = vmatprep.subr.mxu0 0.0
        %3576 = vmatpush1.msra.mxu0 0.0
        %3577 = vmatprep.subr.mxu0 0.0
        %3578 = vmatpush1.msra.mxu0 0.0
        %3579 = vmatprep.subr.mxu0 0.0
        %3580 = vmatpush1.msra.mxu0 0.0
        %3581 = vmatprep.subr.mxu0 0.0
        %3582 = vmatpush1.msra.mxu0 0.0
        %3583 = vmatprep.subr.mxu0 0.0
        %3584 = vmatpush1.msra.mxu0 0.0
        %3585 = vmatprep.subr.mxu0 0.0
        %3586 = vmatpush1.msra.mxu0 0.0
        %3587 = vmatprep.subr.mxu0 0.0
        %3588 = vmatpush1.msra.mxu0 0.0
        %3589 = vmatprep.subr.mxu0 0.0
        %3590 = vmatpush1.msra.mxu0 0.0
        %3591 = vmatprep.subr.mxu0 0.0
        %3592 = vmatpush1.msra.mxu0 0.0
        %3593 = vmatprep.subr.mxu0 0.0
        %3594 = vmatpush1.msra.mxu0 0.0
        %3595 = vmatprep.subr.mxu0 0.0
        %3596 = vmatpush1.msra.mxu0 0.0
        %3597 = vmatprep.subr.mxu0 0.0
        %3598 = vmatpush1.msra.mxu0 0.0
        %3599 = vmatprep.subr.mxu0 0.0
        %3600 = vmatpush1.msra.mxu0 0.0
        %3601 = vmatprep.subr.mxu0 0.0
        %3602 = vmatpush1.msra.mxu0 0.0
        %3603 = vmatprep.subr.mxu0 0.0
        %3604 = vmatpush1.msra.mxu0 0.0
        %3605 = vmatprep.mubr.f32.mxu0 0.0
        %3606 = vmatmul.mubr.f32.gmra.mrb[0].mxu0 %v3519
        %v3607 = vpop.f32.mrb[0].mxu0
        %v3608 = vadd.f32 0.0, %v3607
        %v3609 = vpop.f32.mrb[0].mxu0
        %3610 = vmatprep.mubr.f32.mxu0 0.0
        %3611 = vmatmul.mubr.f32.gmra.mrb[0].mxu0 %v3520
        %v3612 = vpop.f32.mrb[0].mxu0
        %v3613 = vadd.f32 0.0, %v3612
        %v3614 = vpop.f32.mrb[0].mxu0
        %3615 = vmatprep.mubr.f32.mxu0 0.0
        %3616 = vmatmul.mubr.f32.gmra.mrb[0].mxu0 %v3521
        %v3617 = vpop.f32.mrb[0].mxu0
        %v3618 = vadd.f32 0.0, %v3617
        %v3619 = vpop.f32.mrb[0].mxu0
        %3620 = vmatprep.mubr.f32.mxu0 0.0
        %3621 = vmatmul.mubr.f32.gmra.mrb[0].mxu0 %v3522
        %v3622 = vpop.f32.mrb[0].mxu0
        %v3623 = vadd.f32 0.0, %v3622
        %v3624 = vpop.f32.mrb[0].mxu0
        %3625 = vmatprep.mubr.f32.mxu0 0.0
        %3626 = vmatmul.mubr.f32.gmra.mrb[0].mxu0 %v3523
        %v3627 = vpop.f32.mrb[0].mxu0
        %v3628 = vadd.f32 0.0, %v3627
        %v3629 = vpop.f32.mrb[0].mxu0
        %3630 = vdwg.mxu0
        %v3631 = vadd.f32 %v3514, %v3608
        %v3632 = vadd.f32 %v3515, %v3613
        %v3633 = vadd.f32 %v3516, %v3618
        %v3634 = vadd.f32 %v3517, %v3623
        %v3635 = vadd.f32 %v3518, %v3628
        %v3636 = vld [vmem:[#allocation3 + $0x7] sm:$0xff]
        %v3637 = vld [vmem:[#allocation3 + $0xf] sm:$0xff]
        %v3638 = vld [vmem:[#allocation3 + $0x17] sm:$0xff]
        %v3639 = vld [vmem:[#allocation3 + $0x1f] sm:$0xff]
        %v3640 = vld [vmem:[#allocation3 + $0x27] sm:$0xf]
        %s3641 = scalar_lea.vmem [#allocation7], 512
        %v3642 = vld [vmem:[%s3641] sm:$0xff]
        %v3643 = vld [vmem:[%s3641 + $0x8] sm:$0xff]
        %v3644 = vld [vmem:[%s3641 + $0x10] sm:$0xff]
        %v3645 = vld [vmem:[%s3641 + $0x18] sm:$0xff]
        %v3646 = vld [vmem:[%s3641 + $0x20] sm:$0xff]
        %v3647 = vld [vmem:[%s3641 + $0x28] sm:$0xff]
        %v3648 = vld [vmem:[%s3641 + $0x30] sm:$0xff]
        %v3649 = vld [vmem:[%s3641 + $0x38] sm:$0xff]
        %v3650 = vld [vmem:[%s3641 + $0x40] sm:$0xff]
        %v3651 = vld [vmem:[%s3641 + $0x48] sm:$0xff]
        %v3652 = vld [vmem:[%s3641 + $0x50] sm:$0xff]
        %v3653 = vld [vmem:[%s3641 + $0x58] sm:$0xff]
        %v3654 = vld [vmem:[%s3641 + $0x60] sm:$0xff]
        %v3655 = vld [vmem:[%s3641 + $0x68] sm:$0xff]
        %v3656 = vld [vmem:[%s3641 + $0x70] sm:$0xff]
        %v3657 = vld [vmem:[%s3641 + $0x78] sm:$0xff]
        %3658 = vmatprep.subr.mxu0 0.0
        %3659 = vmatpush1.msra.mxu0 %v3642
        %3660 = vmatprep.subr.mxu0 0.0
        %3661 = vmatpush1.msra.mxu0 %v3643
        %3662 = vmatprep.subr.mxu0 0.0
        %3663 = vmatpush1.msra.mxu0 %v3644
        %3664 = vmatprep.subr.mxu0 0.0
        %3665 = vmatpush1.msra.mxu0 %v3645
        %3666 = vmatprep.subr.mxu0 0.0
        %3667 = vmatpush1.msra.mxu0 %v3646
        %3668 = vmatprep.subr.mxu0 0.0
        %3669 = vmatpush1.msra.mxu0 %v3647
        %3670 = vmatprep.subr.mxu0 0.0
        %3671 = vmatpush1.msra.mxu0 %v3648
        %3672 = vmatprep.subr.mxu0 0.0
        %3673 = vmatpush1.msra.mxu0 %v3649
        %3674 = vmatprep.subr.mxu0 0.0
        %3675 = vmatpush1.msra.mxu0 %v3650
        %3676 = vmatprep.subr.mxu0 0.0
        %3677 = vmatpush1.msra.mxu0 %v3651
        %3678 = vmatprep.subr.mxu0 0.0
        %3679 = vmatpush1.msra.mxu0 %v3652
        %3680 = vmatprep.subr.mxu0 0.0
        %3681 = vmatpush1.msra.mxu0 %v3653
        %3682 = vmatprep.subr.mxu0 0.0
        %3683 = vmatpush1.msra.mxu0 %v3654
        %3684 = vmatprep.subr.mxu0 0.0
        %3685 = vmatpush1.msra.mxu0 %v3655
        %3686 = vmatprep.subr.mxu0 0.0
        %3687 = vmatpush1.msra.mxu0 %v3656
        %3688 = vmatprep.subr.mxu0 0.0
        %3689 = vmatpush1.msra.mxu0 %v3657
        %3690 = vmatprep.subr.mxu0 0.0
        %3691 = vmatpush1.msra.mxu0 0.0
        %3692 = vmatprep.subr.mxu0 0.0
        %3693 = vmatpush1.msra.mxu0 0.0
        %3694 = vmatprep.subr.mxu0 0.0
        %3695 = vmatpush1.msra.mxu0 0.0
        %3696 = vmatprep.subr.mxu0 0.0
        %3697 = vmatpush1.msra.mxu0 0.0
        %3698 = vmatprep.subr.mxu0 0.0
        %3699 = vmatpush1.msra.mxu0 0.0
        %3700 = vmatprep.subr.mxu0 0.0
        %3701 = vmatpush1.msra.mxu0 0.0
        %3702 = vmatprep.subr.mxu0 0.0
        %3703 = vmatpush1.msra.mxu0 0.0
        %3704 = vmatprep.subr.mxu0 0.0
        %3705 = vmatpush1.msra.mxu0 0.0
        %3706 = vmatprep.subr.mxu0 0.0
        %3707 = vmatpush1.msra.mxu0 0.0
        %3708 = vmatprep.subr.mxu0 0.0
        %3709 = vmatpush1.msra.mxu0 0.0
        %3710 = vmatprep.subr.mxu0 0.0
        %3711 = vmatpush1.msra.mxu0 0.0
        %3712 = vmatprep.subr.mxu0 0.0
        %3713 = vmatpush1.msra.mxu0 0.0
        %3714 = vmatprep.subr.mxu0 0.0
        %3715 = vmatpush1.msra.mxu0 0.0
        %3716 = vmatprep.subr.mxu0 0.0
        %3717 = vmatpush1.msra.mxu0 0.0
        %3718 = vmatprep.subr.mxu0 0.0
        %3719 = vmatpush1.msra.mxu0 0.0
        %3720 = vmatprep.subr.mxu0 0.0
        %3721 = vmatpush1.msra.mxu0 0.0
        %3722 = vmatprep.mubr.f32.mxu0 0.0
        %3723 = vmatmul.mubr.f32.gmra.mrb[0].mxu0 %v3636
        %v3724 = vpop.f32.mrb[0].mxu0
        %v3725 = vadd.f32 0.0, %v3724
        %v3726 = vpop.f32.mrb[0].mxu0
        %3727 = vmatprep.mubr.f32.mxu0 0.0
        %3728 = vmatmul.mubr.f32.gmra.mrb[0].mxu0 %v3637
        %v3729 = vpop.f32.mrb[0].mxu0
        %v3730 = vadd.f32 0.0, %v3729
        %v3731 = vpop.f32.mrb[0].mxu0
        %3732 = vmatprep.mubr.f32.mxu0 0.0
        %3733 = vmatmul.mubr.f32.gmra.mrb[0].mxu0 %v3638
        %v3734 = vpop.f32.mrb[0].mxu0
        %v3735 = vadd.f32 0.0, %v3734
        %v3736 = vpop.f32.mrb[0].mxu0
        %3737 = vmatprep.mubr.f32.mxu0 0.0
        %3738 = vmatmul.mubr.f32.gmra.mrb[0].mxu0 %v3639
        %v3739 = vpop.f32.mrb[0].mxu0
        %v3740 = vadd.f32 0.0, %v3739
        %v3741 = vpop.f32.mrb[0].mxu0
        %3742 = vmatprep.mubr.f32.mxu0 0.0
        %3743 = vmatmul.mubr.f32.gmra.mrb[0].mxu0 %v3640
        %v3744 = vpop.f32.mrb[0].mxu0
        %v3745 = vadd.f32 0.0, %v3744
        %v3746 = vpop.f32.mrb[0].mxu0
        %3747 = vdwg.mxu0
        %v3748 = vadd.f32 %v3631, %v3725
        %v3749 = vadd.f32 %v3632, %v3730
        %v3750 = vadd.f32 %v3633, %v3735
        %v3751 = vadd.f32 %v3634, %v3740
        %v3752 = vadd.f32 %v3635, %v3745
        %v3753 = vld [vmem:[#allocation3 + $0x8] sm:$0xff]
        %v3754 = vld [vmem:[#allocation3 + $0x10] sm:$0xff]
        %v3755 = vld [vmem:[#allocation3 + $0x18] sm:$0xff]
        %v3756 = vld [vmem:[#allocation3 + $0x20] sm:$0xff]
        %v3757 = vld [vmem:[#allocation3 + $0x28] sm:$0xf]
        %s3758 = scalar_lea.vmem [#allocation7], 640
        %v3759 = vld [vmem:[%s3758] sm:$0xff]
        %v3760 = vld [vmem:[%s3758 + $0x8] sm:$0xff]
        %v3761 = vld [vmem:[%s3758 + $0x10] sm:$0xff]
        %v3762 = vld [vmem:[%s3758 + $0x18] sm:$0xff]
        %v3763 = vld [vmem:[%s3758 + $0x20] sm:$0xff]
        %v3764 = vld [vmem:[%s3758 + $0x28] sm:$0xff]
        %v3765 = vld [vmem:[%s3758 + $0x30] sm:$0xff]
        %v3766 = vld [vmem:[%s3758 + $0x38] sm:$0xff]
        %v3767 = vld [vmem:[%s3758 + $0x40] sm:$0xff]
        %v3768 = vld [vmem:[%s3758 + $0x48] sm:$0xff]
        %v3769 = vld [vmem:[%s3758 + $0x50] sm:$0xff]
        %v3770 = vld [vmem:[%s3758 + $0x58] sm:$0xff]
        %v3771 = vld [vmem:[%s3758 + $0x60] sm:$0xff]
        %v3772 = vld [vmem:[%s3758 + $0x68] sm:$0xff]
        %v3773 = vld [vmem:[%s3758 + $0x70] sm:$0xff]
        %v3774 = vld [vmem:[%s3758 + $0x78] sm:$0xff]
        %3775 = vmatprep.subr.mxu0 0.0
        %3776 = vmatpush1.msra.mxu0 %v3759
        %3777 = vmatprep.subr.mxu0 0.0
        %3778 = vmatpush1.msra.mxu0 %v3760
        %3779 = vmatprep.subr.mxu0 0.0
        %3780 = vmatpush1.msra.mxu0 %v3761
        %3781 = vmatprep.subr.mxu0 0.0
        %3782 = vmatpush1.msra.mxu0 %v3762
        %3783 = vmatprep.subr.mxu0 0.0
        %3784 = vmatpush1.msra.mxu0 %v3763
        %3785 = vmatprep.subr.mxu0 0.0
        %3786 = vmatpush1.msra.mxu0 %v3764
        %3787 = vmatprep.subr.mxu0 0.0
        %3788 = vmatpush1.msra.mxu0 %v3765
        %3789 = vmatprep.subr.mxu0 0.0
        %3790 = vmatpush1.msra.mxu0 %v3766
        %3791 = vmatprep.subr.mxu0 0.0
        %3792 = vmatpush1.msra.mxu0 %v3767
        %3793 = vmatprep.subr.mxu0 0.0
        %3794 = vmatpush1.msra.mxu0 %v3768
        %3795 = vmatprep.subr.mxu0 0.0
        %3796 = vmatpush1.msra.mxu0 %v3769
        %3797 = vmatprep.subr.mxu0 0.0
        %3798 = vmatpush1.msra.mxu0 %v3770
        %3799 = vmatprep.subr.mxu0 0.0
        %3800 = vmatpush1.msra.mxu0 %v3771
        %3801 = vmatprep.subr.mxu0 0.0
        %3802 = vmatpush1.msra.mxu0 %v3772
        %3803 = vmatprep.subr.mxu0 0.0
        %3804 = vmatpush1.msra.mxu0 %v3773
        %3805 = vmatprep.subr.mxu0 0.0
        %3806 = vmatpush1.msra.mxu0 %v3774
        %3807 = vmatprep.subr.mxu0 0.0
        %3808 = vmatpush1.msra.mxu0 0.0
        %3809 = vmatprep.subr.mxu0 0.0
        %3810 = vmatpush1.msra.mxu0 0.0
        %3811 = vmatprep.subr.mxu0 0.0
        %3812 = vmatpush1.msra.mxu0 0.0
        %3813 = vmatprep.subr.mxu0 0.0
        %3814 = vmatpush1.msra.mxu0 0.0
        %3815 = vmatprep.subr.mxu0 0.0
        %3816 = vmatpush1.msra.mxu0 0.0
        %3817 = vmatprep.subr.mxu0 0.0
        %3818 = vmatpush1.msra.mxu0 0.0
        %3819 = vmatprep.subr.mxu0 0.0
        %3820 = vmatpush1.msra.mxu0 0.0
        %3821 = vmatprep.subr.mxu0 0.0
        %3822 = vmatpush1.msra.mxu0 0.0
        %3823 = vmatprep.subr.mxu0 0.0
        %3824 = vmatpush1.msra.mxu0 0.0
        %3825 = vmatprep.subr.mxu0 0.0
        %3826 = vmatpush1.msra.mxu0 0.0
        %3827 = vmatprep.subr.mxu0 0.0
        %3828 = vmatpush1.msra.mxu0 0.0
        %3829 = vmatprep.subr.mxu0 0.0
        %3830 = vmatpush1.msra.mxu0 0.0
        %3831 = vmatprep.subr.mxu0 0.0
        %3832 = vmatpush1.msra.mxu0 0.0
        %3833 = vmatprep.subr.mxu0 0.0
        %3834 = vmatpush1.msra.mxu0 0.0
        %3835 = vmatprep.subr.mxu0 0.0
        %3836 = vmatpush1.msra.mxu0 0.0
        %3837 = vmatprep.subr.mxu0 0.0
        %3838 = vmatpush1.msra.mxu0 0.0
        %3839 = vmatprep.mubr.f32.mxu0 0.0
        %3840 = vmatmul.mubr.f32.gmra.mrb[0].mxu0 %v3753
        %v3841 = vpop.f32.mrb[0].mxu0
        %v3842 = vadd.f32 0.0, %v3841
        %v3843 = vpop.f32.mrb[0].mxu0
        %3844 = vmatprep.mubr.f32.mxu0 0.0
        %3845 = vmatmul.mubr.f32.gmra.mrb[0].mxu0 %v3754
        %v3846 = vpop.f32.mrb[0].mxu0
        %v3847 = vadd.f32 0.0, %v3846
        %v3848 = vpop.f32.mrb[0].mxu0
        %3849 = vmatprep.mubr.f32.mxu0 0.0
        %3850 = vmatmul.mubr.f32.gmra.mrb[0].mxu0 %v3755
        %v3851 = vpop.f32.mrb[0].mxu0
        %v3852 = vadd.f32 0.0, %v3851
        %v3853 = vpop.f32.mrb[0].mxu0
        %3854 = vmatprep.mubr.f32.mxu0 0.0
        %3855 = vmatmul.mubr.f32.gmra.mrb[0].mxu0 %v3756
        %v3856 = vpop.f32.mrb[0].mxu0
        %v3857 = vadd.f32 0.0, %v3856
        %v3858 = vpop.f32.mrb[0].mxu0
        %3859 = vmatprep.mubr.f32.mxu0 0.0
        %3860 = vmatmul.mubr.f32.gmra.mrb[0].mxu0 %v3757
        %v3861 = vpop.f32.mrb[0].mxu0
        %v3862 = vadd.f32 0.0, %v3861
        %v3863 = vpop.f32.mrb[0].mxu0
        %3864 = vdwg.mxu0
        %v3865 = vadd.f32 %v3748, %v3842
        %v3866 = vadd.f32 %v3749, %v3847
        %v3867 = vadd.f32 %v3750, %v3852
        %v3868 = vadd.f32 %v3751, %v3857
        %v3869 = vadd.f32 %v3752, %v3862
        %v3870 = vld [vmem:[#allocation3 + $0xc] sm:$0xff]
        %v3871 = vld [vmem:[#allocation3 + $0x14] sm:$0xff]
        %v3872 = vld [vmem:[#allocation3 + $0x1c] sm:$0xff]
        %v3873 = vld [vmem:[#allocation3 + $0x24] sm:$0xff]
        %v3874 = vld [vmem:[#allocation3 + $0x2c] sm:$0xf]
        %s3875 = scalar_lea.vmem [#allocation7], 768
        %v3876 = vld [vmem:[%s3875] sm:$0xff]
        %v3877 = vld [vmem:[%s3875 + $0x8] sm:$0xff]
        %v3878 = vld [vmem:[%s3875 + $0x10] sm:$0xff]
        %v3879 = vld [vmem:[%s3875 + $0x18] sm:$0xff]
        %v3880 = vld [vmem:[%s3875 + $0x20] sm:$0xff]
        %v3881 = vld [vmem:[%s3875 + $0x28] sm:$0xff]
        %v3882 = vld [vmem:[%s3875 + $0x30] sm:$0xff]
        %v3883 = vld [vmem:[%s3875 + $0x38] sm:$0xff]
        %v3884 = vld [vmem:[%s3875 + $0x40] sm:$0xff]
        %v3885 = vld [vmem:[%s3875 + $0x48] sm:$0xff]
        %v3886 = vld [vmem:[%s3875 + $0x50] sm:$0xff]
        %v3887 = vld [vmem:[%s3875 + $0x58] sm:$0xff]
        %v3888 = vld [vmem:[%s3875 + $0x60] sm:$0xff]
        %v3889 = vld [vmem:[%s3875 + $0x68] sm:$0xff]
        %v3890 = vld [vmem:[%s3875 + $0x70] sm:$0xff]
        %v3891 = vld [vmem:[%s3875 + $0x78] sm:$0xff]
        %3892 = vmatprep.subr.mxu0 0.0
        %3893 = vmatpush1.msra.mxu0 %v3876
        %3894 = vmatprep.subr.mxu0 0.0
        %3895 = vmatpush1.msra.mxu0 %v3877
        %3896 = vmatprep.subr.mxu0 0.0
        %3897 = vmatpush1.msra.mxu0 %v3878
        %3898 = vmatprep.subr.mxu0 0.0
        %3899 = vmatpush1.msra.mxu0 %v3879
        %3900 = vmatprep.subr.mxu0 0.0
        %3901 = vmatpush1.msra.mxu0 %v3880
        %3902 = vmatprep.subr.mxu0 0.0
        %3903 = vmatpush1.msra.mxu0 %v3881
        %3904 = vmatprep.subr.mxu0 0.0
        %3905 = vmatpush1.msra.mxu0 %v3882
        %3906 = vmatprep.subr.mxu0 0.0
        %3907 = vmatpush1.msra.mxu0 %v3883
        %3908 = vmatprep.subr.mxu0 0.0
        %3909 = vmatpush1.msra.mxu0 %v3884
        %3910 = vmatprep.subr.mxu0 0.0
        %3911 = vmatpush1.msra.mxu0 %v3885
        %3912 = vmatprep.subr.mxu0 0.0
        %3913 = vmatpush1.msra.mxu0 %v3886
        %3914 = vmatprep.subr.mxu0 0.0
        %3915 = vmatpush1.msra.mxu0 %v3887
        %3916 = vmatprep.subr.mxu0 0.0
        %3917 = vmatpush1.msra.mxu0 %v3888
        %3918 = vmatprep.subr.mxu0 0.0
        %3919 = vmatpush1.msra.mxu0 %v3889
        %3920 = vmatprep.subr.mxu0 0.0
        %3921 = vmatpush1.msra.mxu0 %v3890
        %3922 = vmatprep.subr.mxu0 0.0
        %3923 = vmatpush1.msra.mxu0 %v3891
        %3924 = vmatprep.subr.mxu0 0.0
        %3925 = vmatpush1.msra.mxu0 0.0
        %3926 = vmatprep.subr.mxu0 0.0
        %3927 = vmatpush1.msra.mxu0 0.0
        %3928 = vmatprep.subr.mxu0 0.0
        %3929 = vmatpush1.msra.mxu0 0.0
        %3930 = vmatprep.subr.mxu0 0.0
        %3931 = vmatpush1.msra.mxu0 0.0
        %3932 = vmatprep.subr.mxu0 0.0
        %3933 = vmatpush1.msra.mxu0 0.0
        %3934 = vmatprep.subr.mxu0 0.0
        %3935 = vmatpush1.msra.mxu0 0.0
        %3936 = vmatprep.subr.mxu0 0.0
        %3937 = vmatpush1.msra.mxu0 0.0
        %3938 = vmatprep.subr.mxu0 0.0
        %3939 = vmatpush1.msra.mxu0 0.0
        %3940 = vmatprep.subr.mxu0 0.0
        %3941 = vmatpush1.msra.mxu0 0.0
        %3942 = vmatprep.subr.mxu0 0.0
        %3943 = vmatpush1.msra.mxu0 0.0
        %3944 = vmatprep.subr.mxu0 0.0
        %3945 = vmatpush1.msra.mxu0 0.0
        %3946 = vmatprep.subr.mxu0 0.0
        %3947 = vmatpush1.msra.mxu0 0.0
        %3948 = vmatprep.subr.mxu0 0.0
        %3949 = vmatpush1.msra.mxu0 0.0
        %3950 = vmatprep.subr.mxu0 0.0
        %3951 = vmatpush1.msra.mxu0 0.0
        %3952 = vmatprep.subr.mxu0 0.0
        %3953 = vmatpush1.msra.mxu0 0.0
        %3954 = vmatprep.subr.mxu0 0.0
        %3955 = vmatpush1.msra.mxu0 0.0
        %3956 = vmatprep.mubr.f32.mxu0 0.0
        %3957 = vmatmul.mubr.f32.gmra.mrb[0].mxu0 %v3870
        %v3958 = vpop.f32.mrb[0].mxu0
        %v3959 = vadd.f32 0.0, %v3958
        %v3960 = vpop.f32.mrb[0].mxu0
        %3961 = vmatprep.mubr.f32.mxu0 0.0
        %3962 = vmatmul.mubr.f32.gmra.mrb[0].mxu0 %v3871
        %v3963 = vpop.f32.mrb[0].mxu0
        %v3964 = vadd.f32 0.0, %v3963
        %v3965 = vpop.f32.mrb[0].mxu0
        %3966 = vmatprep.mubr.f32.mxu0 0.0
        %3967 = vmatmul.mubr.f32.gmra.mrb[0].mxu0 %v3872
        %v3968 = vpop.f32.mrb[0].mxu0
        %v3969 = vadd.f32 0.0, %v3968
        %v3970 = vpop.f32.mrb[0].mxu0
        %3971 = vmatprep.mubr.f32.mxu0 0.0
        %3972 = vmatmul.mubr.f32.gmra.mrb[0].mxu0 %v3873
        %v3973 = vpop.f32.mrb[0].mxu0
        %v3974 = vadd.f32 0.0, %v3973
        %v3975 = vpop.f32.mrb[0].mxu0
        %3976 = vmatprep.mubr.f32.mxu0 0.0
        %3977 = vmatmul.mubr.f32.gmra.mrb[0].mxu0 %v3874
        %v3978 = vpop.f32.mrb[0].mxu0
        %v3979 = vadd.f32 0.0, %v3978
        %v3980 = vpop.f32.mrb[0].mxu0
        %3981 = vdwg.mxu0
        %v3982 = vadd.f32 %v3865, %v3959
        %v3983 = vadd.f32 %v3866, %v3964
        %v3984 = vadd.f32 %v3867, %v3969
        %v3985 = vadd.f32 %v3868, %v3974
        %v3986 = vadd.f32 %v3869, %v3979
        %v3987 = vld [vmem:[#allocation3 + $0xd] sm:$0xff]
        %v3988 = vld [vmem:[#allocation3 + $0x15] sm:$0xff]
        %v3989 = vld [vmem:[#allocation3 + $0x1d] sm:$0xff]
        %v3990 = vld [vmem:[#allocation3 + $0x25] sm:$0xff]
        %v3991 = vld [vmem:[#allocation3 + $0x2d] sm:$0xf]
        %s3992 = scalar_lea.vmem [#allocation7], 896
        %v3993 = vld [vmem:[%s3992] sm:$0xff]
        %v3994 = vld [vmem:[%s3992 + $0x8] sm:$0xff]
        %v3995 = vld [vmem:[%s3992 + $0x10] sm:$0xff]
        %v3996 = vld [vmem:[%s3992 + $0x18] sm:$0xff]
        %v3997 = vld [vmem:[%s3992 + $0x20] sm:$0xff]
        %v3998 = vld [vmem:[%s3992 + $0x28] sm:$0xff]
        %v3999 = vld [vmem:[%s3992 + $0x30] sm:$0xff]
        %v4000 = vld [vmem:[%s3992 + $0x38] sm:$0xff]
        %v4001 = vld [vmem:[%s3992 + $0x40] sm:$0xff]
        %v4002 = vld [vmem:[%s3992 + $0x48] sm:$0xff]
        %v4003 = vld [vmem:[%s3992 + $0x50] sm:$0xff]
        %v4004 = vld [vmem:[%s3992 + $0x58] sm:$0xff]
        %v4005 = vld [vmem:[%s3992 + $0x60] sm:$0xff]
        %v4006 = vld [vmem:[%s3992 + $0x68] sm:$0xff]
        %v4007 = vld [vmem:[%s3992 + $0x70] sm:$0xff]
        %v4008 = vld [vmem:[%s3992 + $0x78] sm:$0xff]
        %4009 = vmatprep.subr.mxu0 0.0
        %4010 = vmatpush1.msra.mxu0 %v3993
        %4011 = vmatprep.subr.mxu0 0.0
        %4012 = vmatpush1.msra.mxu0 %v3994
        %4013 = vmatprep.subr.mxu0 0.0
        %4014 = vmatpush1.msra.mxu0 %v3995
        %4015 = vmatprep.subr.mxu0 0.0
        %4016 = vmatpush1.msra.mxu0 %v3996
        %4017 = vmatprep.subr.mxu0 0.0
        %4018 = vmatpush1.msra.mxu0 %v3997
        %4019 = vmatprep.subr.mxu0 0.0
        %4020 = vmatpush1.msra.mxu0 %v3998
        %4021 = vmatprep.subr.mxu0 0.0
        %4022 = vmatpush1.msra.mxu0 %v3999
        %4023 = vmatprep.subr.mxu0 0.0
        %4024 = vmatpush1.msra.mxu0 %v4000
        %4025 = vmatprep.subr.mxu0 0.0
        %4026 = vmatpush1.msra.mxu0 %v4001
        %4027 = vmatprep.subr.mxu0 0.0
        %4028 = vmatpush1.msra.mxu0 %v4002
        %4029 = vmatprep.subr.mxu0 0.0
        %4030 = vmatpush1.msra.mxu0 %v4003
        %4031 = vmatprep.subr.mxu0 0.0
        %4032 = vmatpush1.msra.mxu0 %v4004
        %4033 = vmatprep.subr.mxu0 0.0
        %4034 = vmatpush1.msra.mxu0 %v4005
        %4035 = vmatprep.subr.mxu0 0.0
        %4036 = vmatpush1.msra.mxu0 %v4006
        %4037 = vmatprep.subr.mxu0 0.0
        %4038 = vmatpush1.msra.mxu0 %v4007
        %4039 = vmatprep.subr.mxu0 0.0
        %4040 = vmatpush1.msra.mxu0 %v4008
        %4041 = vmatprep.subr.mxu0 0.0
        %4042 = vmatpush1.msra.mxu0 0.0
        %4043 = vmatprep.subr.mxu0 0.0
        %4044 = vmatpush1.msra.mxu0 0.0
        %4045 = vmatprep.subr.mxu0 0.0
        %4046 = vmatpush1.msra.mxu0 0.0
        %4047 = vmatprep.subr.mxu0 0.0
        %4048 = vmatpush1.msra.mxu0 0.0
        %4049 = vmatprep.subr.mxu0 0.0
        %4050 = vmatpush1.msra.mxu0 0.0
        %4051 = vmatprep.subr.mxu0 0.0
        %4052 = vmatpush1.msra.mxu0 0.0
        %4053 = vmatprep.subr.mxu0 0.0
        %4054 = vmatpush1.msra.mxu0 0.0
        %4055 = vmatprep.subr.mxu0 0.0
        %4056 = vmatpush1.msra.mxu0 0.0
        %4057 = vmatprep.subr.mxu0 0.0
        %4058 = vmatpush1.msra.mxu0 0.0
        %4059 = vmatprep.subr.mxu0 0.0
        %4060 = vmatpush1.msra.mxu0 0.0
        %4061 = vmatprep.subr.mxu0 0.0
        %4062 = vmatpush1.msra.mxu0 0.0
        %4063 = vmatprep.subr.mxu0 0.0
        %4064 = vmatpush1.msra.mxu0 0.0
        %4065 = vmatprep.subr.mxu0 0.0
        %4066 = vmatpush1.msra.mxu0 0.0
        %4067 = vmatprep.subr.mxu0 0.0
        %4068 = vmatpush1.msra.mxu0 0.0
        %4069 = vmatprep.subr.mxu0 0.0
        %4070 = vmatpush1.msra.mxu0 0.0
        %4071 = vmatprep.subr.mxu0 0.0
        %4072 = vmatpush1.msra.mxu0 0.0
        %4073 = vmatprep.mubr.f32.mxu0 0.0
        %4074 = vmatmul.mubr.f32.gmra.mrb[0].mxu0 %v3987
        %v4075 = vpop.f32.mrb[0].mxu0
        %v4076 = vadd.f32 0.0, %v4075
        %v4077 = vpop.f32.mrb[0].mxu0
        %4078 = vmatprep.mubr.f32.mxu0 0.0
        %4079 = vmatmul.mubr.f32.gmra.mrb[0].mxu0 %v3988
        %v4080 = vpop.f32.mrb[0].mxu0
        %v4081 = vadd.f32 0.0, %v4080
        %v4082 = vpop.f32.mrb[0].mxu0
        %4083 = vmatprep.mubr.f32.mxu0 0.0
        %4084 = vmatmul.mubr.f32.gmra.mrb[0].mxu0 %v3989
        %v4085 = vpop.f32.mrb[0].mxu0
        %v4086 = vadd.f32 0.0, %v4085
        %v4087 = vpop.f32.mrb[0].mxu0
        %4088 = vmatprep.mubr.f32.mxu0 0.0
        %4089 = vmatmul.mubr.f32.gmra.mrb[0].mxu0 %v3990
        %v4090 = vpop.f32.mrb[0].mxu0
        %v4091 = vadd.f32 0.0, %v4090
        %v4092 = vpop.f32.mrb[0].mxu0
        %4093 = vmatprep.mubr.f32.mxu0 0.0
        %4094 = vmatmul.mubr.f32.gmra.mrb[0].mxu0 %v3991
        %v4095 = vpop.f32.mrb[0].mxu0
        %v4096 = vadd.f32 0.0, %v4095
        %v4097 = vpop.f32.mrb[0].mxu0
        %4098 = vdwg.mxu0
        %v4099 = vadd.f32 %v3982, %v4076
        %v4100 = vadd.f32 %v3983, %v4081
        %v4101 = vadd.f32 %v3984, %v4086
        %v4102 = vadd.f32 %v3985, %v4091
        %v4103 = vadd.f32 %v3986, %v4096
        %v4104 = vld [vmem:[#allocation3 + $0xe] sm:$0xff]
        %v4105 = vld [vmem:[#allocation3 + $0x16] sm:$0xff]
        %v4106 = vld [vmem:[#allocation3 + $0x1e] sm:$0xff]
        %v4107 = vld [vmem:[#allocation3 + $0x26] sm:$0xff]
        %v4108 = vld [vmem:[#allocation3 + $0x2e] sm:$0xf]
        %s4109 = scalar_lea.vmem [#allocation7], 1024
        %v4110 = vld [vmem:[%s4109] sm:$0xff]
        %v4111 = vld [vmem:[%s4109 + $0x8] sm:$0xff]
        %v4112 = vld [vmem:[%s4109 + $0x10] sm:$0xff]
        %v4113 = vld [vmem:[%s4109 + $0x18] sm:$0xff]
        %v4114 = vld [vmem:[%s4109 + $0x20] sm:$0xff]
        %v4115 = vld [vmem:[%s4109 + $0x28] sm:$0xff]
        %v4116 = vld [vmem:[%s4109 + $0x30] sm:$0xff]
        %v4117 = vld [vmem:[%s4109 + $0x38] sm:$0xff]
        %v4118 = vld [vmem:[%s4109 + $0x40] sm:$0xff]
        %v4119 = vld [vmem:[%s4109 + $0x48] sm:$0xff]
        %v4120 = vld [vmem:[%s4109 + $0x50] sm:$0xff]
        %v4121 = vld [vmem:[%s4109 + $0x58] sm:$0xff]
        %v4122 = vld [vmem:[%s4109 + $0x60] sm:$0xff]
        %v4123 = vld [vmem:[%s4109 + $0x68] sm:$0xff]
        %v4124 = vld [vmem:[%s4109 + $0x70] sm:$0xff]
        %v4125 = vld [vmem:[%s4109 + $0x78] sm:$0xff]
        %4126 = vmatprep.subr.mxu0 0.0
        %4127 = vmatpush1.msra.mxu0 %v4110
        %4128 = vmatprep.subr.mxu0 0.0
        %4129 = vmatpush1.msra.mxu0 %v4111
        %4130 = vmatprep.subr.mxu0 0.0
        %4131 = vmatpush1.msra.mxu0 %v4112
        %4132 = vmatprep.subr.mxu0 0.0
        %4133 = vmatpush1.msra.mxu0 %v4113
        %4134 = vmatprep.subr.mxu0 0.0
        %4135 = vmatpush1.msra.mxu0 %v4114
        %4136 = vmatprep.subr.mxu0 0.0
        %4137 = vmatpush1.msra.mxu0 %v4115
        %4138 = vmatprep.subr.mxu0 0.0
        %4139 = vmatpush1.msra.mxu0 %v4116
        %4140 = vmatprep.subr.mxu0 0.0
        %4141 = vmatpush1.msra.mxu0 %v4117
        %4142 = vmatprep.subr.mxu0 0.0
        %4143 = vmatpush1.msra.mxu0 %v4118
        %4144 = vmatprep.subr.mxu0 0.0
        %4145 = vmatpush1.msra.mxu0 %v4119
        %4146 = vmatprep.subr.mxu0 0.0
        %4147 = vmatpush1.msra.mxu0 %v4120
        %4148 = vmatprep.subr.mxu0 0.0
        %4149 = vmatpush1.msra.mxu0 %v4121
        %4150 = vmatprep.subr.mxu0 0.0
        %4151 = vmatpush1.msra.mxu0 %v4122
        %4152 = vmatprep.subr.mxu0 0.0
        %4153 = vmatpush1.msra.mxu0 %v4123
        %4154 = vmatprep.subr.mxu0 0.0
        %4155 = vmatpush1.msra.mxu0 %v4124
        %4156 = vmatprep.subr.mxu0 0.0
        %4157 = vmatpush1.msra.mxu0 %v4125
        %4158 = vmatprep.subr.mxu0 0.0
        %4159 = vmatpush1.msra.mxu0 0.0
        %4160 = vmatprep.subr.mxu0 0.0
        %4161 = vmatpush1.msra.mxu0 0.0
        %4162 = vmatprep.subr.mxu0 0.0
        %4163 = vmatpush1.msra.mxu0 0.0
        %4164 = vmatprep.subr.mxu0 0.0
        %4165 = vmatpush1.msra.mxu0 0.0
        %4166 = vmatprep.subr.mxu0 0.0
        %4167 = vmatpush1.msra.mxu0 0.0
        %4168 = vmatprep.subr.mxu0 0.0
        %4169 = vmatpush1.msra.mxu0 0.0
        %4170 = vmatprep.subr.mxu0 0.0
        %4171 = vmatpush1.msra.mxu0 0.0
        %4172 = vmatprep.subr.mxu0 0.0
        %4173 = vmatpush1.msra.mxu0 0.0
        %4174 = vmatprep.subr.mxu0 0.0
        %4175 = vmatpush1.msra.mxu0 0.0
        %4176 = vmatprep.subr.mxu0 0.0
        %4177 = vmatpush1.msra.mxu0 0.0
        %4178 = vmatprep.subr.mxu0 0.0
        %4179 = vmatpush1.msra.mxu0 0.0
        %4180 = vmatprep.subr.mxu0 0.0
        %4181 = vmatpush1.msra.mxu0 0.0
        %4182 = vmatprep.subr.mxu0 0.0
        %4183 = vmatpush1.msra.mxu0 0.0
        %4184 = vmatprep.subr.mxu0 0.0
        %4185 = vmatpush1.msra.mxu0 0.0
        %4186 = vmatprep.subr.mxu0 0.0
        %4187 = vmatpush1.msra.mxu0 0.0
        %4188 = vmatprep.subr.mxu0 0.0
        %4189 = vmatpush1.msra.mxu0 0.0
        %4190 = vmatprep.mubr.f32.mxu0 0.0
        %4191 = vmatmul.mubr.f32.gmra.mrb[0].mxu0 %v4104
        %v4192 = vpop.f32.mrb[0].mxu0
        %v4193 = vadd.f32 0.0, %v4192
        %v4194 = vpop.f32.mrb[0].mxu0
        %4195 = vmatprep.mubr.f32.mxu0 0.0
        %4196 = vmatmul.mubr.f32.gmra.mrb[0].mxu0 %v4105
        %v4197 = vpop.f32.mrb[0].mxu0
        %v4198 = vadd.f32 0.0, %v4197
        %v4199 = vpop.f32.mrb[0].mxu0
        %4200 = vmatprep.mubr.f32.mxu0 0.0
        %4201 = vmatmul.mubr.f32.gmra.mrb[0].mxu0 %v4106
        %v4202 = vpop.f32.mrb[0].mxu0
        %v4203 = vadd.f32 0.0, %v4202
        %v4204 = vpop.f32.mrb[0].mxu0
        %4205 = vmatprep.mubr.f32.mxu0 0.0
        %4206 = vmatmul.mubr.f32.gmra.mrb[0].mxu0 %v4107
        %v4207 = vpop.f32.mrb[0].mxu0
        %v4208 = vadd.f32 0.0, %v4207
        %v4209 = vpop.f32.mrb[0].mxu0
        %4210 = vmatprep.mubr.f32.mxu0 0.0
        %4211 = vmatmul.mubr.f32.gmra.mrb[0].mxu0 %v4108
        %v4212 = vpop.f32.mrb[0].mxu0
        %v4213 = vadd.f32 0.0, %v4212
        %v4214 = vpop.f32.mrb[0].mxu0
        %4215 = vdwg.mxu0
        %v4216 = vadd.f32 %v4099, %v4193
        %v4217 = vadd.f32 %v4100, %v4198
        %v4218 = vadd.f32 %v4101, %v4203
        %v4219 = vadd.f32 %v4102, %v4208
        %v4220 = vadd.f32 %v4103, %v4213
        %v4221 = vld [vmem:[%s6] sm:$0x1]
        %v4223 = vlaneseq
        %v4224 = vshrl.u32 %v4223, 7
        %v4225 = vsub.s32 0, %v4224
        %v4226 = vrot.slane %v4221, %v4225
        %v4228 = vadd.f32 %v4216, %v4226
        %v4229 = vadd.f32 %v4217, %v4226
        %v4230 = vadd.f32 %v4218, %v4226
        %v4231 = vadd.f32 %v4219, %v4226
        %v4232 = vadd.f32 %v4220, %v4226
        %v4233 = vmax.f32 %v4228, 0.0
        %v4234 = vmax.f32 %v4229, 0.0
        %v4235 = vmax.f32 %v4230, 0.0
        %v4236 = vmax.f32 %v4231, 0.0
        %v4237 = vmax.f32 %v4232, 0.0
        %v4238 = vmul.f32 %v4233, %v3174
        %v4239 = vmul.f32 %v4234, %v3175
        %v4240 = vmul.f32 %v4235, %v3176
        %v4241 = vmul.f32 %v4236, %v3177
        %v4242 = vmul.f32 %v4237, %v3178
        %4243 = vst [vmem:[#allocation3 + $0x7] sm:$0xff] %v4238
        %4244 = vst [vmem:[#allocation3 + $0xf] sm:$0xff] %v4239
        %4245 = vst [vmem:[#allocation3 + $0x17] sm:$0xff] %v4240
        %4246 = vst [vmem:[#allocation3 + $0x1f] sm:$0xff] %v4241
        %4247 = vst [vmem:[#allocation3 + $0x27] sm:$0xf] %v4242
        %v4248 = vld [vmem:[#allocation3] sm:$0xff]
        %v4249 = vld [vmem:[#allocation3 + $0x8] sm:$0xff]
        %v4250 = vld [vmem:[#allocation3 + $0x10] sm:$0xff]
        %v4251 = vld [vmem:[#allocation3 + $0x18] sm:$0xff]
        %v4252 = vld [vmem:[#allocation3 + $0x20] sm:$0xf]
        %v4253 = vld [vmem:[#allocation9] sm:$0xff]
        %v4254 = vld [vmem:[#allocation9 + $0x8] sm:$0xff]
        %v4255 = vld [vmem:[#allocation9 + $0x10] sm:$0xff]
        %v4256 = vld [vmem:[#allocation9 + $0x18] sm:$0xff]
        %v4257 = vld [vmem:[#allocation9 + $0x20] sm:$0xff]
        %v4258 = vld [vmem:[#allocation9 + $0x28] sm:$0xff]
        %v4259 = vld [vmem:[#allocation9 + $0x30] sm:$0xff]
        %v4260 = vld [vmem:[#allocation9 + $0x38] sm:$0xff]
        %v4261 = vld [vmem:[#allocation9 + $0x40] sm:$0xff]
        %v4262 = vld [vmem:[#allocation9 + $0x48] sm:$0xff]
        %v4263 = vld [vmem:[#allocation9 + $0x50] sm:$0xff]
        %v4264 = vld [vmem:[#allocation9 + $0x58] sm:$0xff]
        %v4265 = vld [vmem:[#allocation9 + $0x60] sm:$0xff]
        %v4266 = vld [vmem:[#allocation9 + $0x68] sm:$0xff]
        %v4267 = vld [vmem:[#allocation9 + $0x70] sm:$0xff]
        %v4268 = vld [vmem:[#allocation9 + $0x78] sm:$0xff]
        %v4269 = vld [vmem:[#allocation3 + $0x1] sm:$0xff]
        %v4270 = vld [vmem:[#allocation3 + $0x9] sm:$0xff]
        %v4271 = vld [vmem:[#allocation3 + $0x11] sm:$0xff]
        %v4272 = vld [vmem:[#allocation3 + $0x19] sm:$0xff]
        %v4273 = vld [vmem:[#allocation3 + $0x21] sm:$0xf]
        %s4274 = scalar_lea.vmem [#allocation9], 128
        %v4275 = vld [vmem:[%s4274] sm:$0xff]
        %v4276 = vld [vmem:[%s4274 + $0x8] sm:$0xff]
        %v4277 = vld [vmem:[%s4274 + $0x10] sm:$0xff]
        %v4278 = vld [vmem:[%s4274 + $0x18] sm:$0xff]
        %v4279 = vld [vmem:[%s4274 + $0x20] sm:$0xff]
        %v4280 = vld [vmem:[%s4274 + $0x28] sm:$0xff]
        %v4281 = vld [vmem:[%s4274 + $0x30] sm:$0xff]
        %v4282 = vld [vmem:[%s4274 + $0x38] sm:$0xff]
        %v4283 = vld [vmem:[%s4274 + $0x40] sm:$0xff]
        %v4284 = vld [vmem:[%s4274 + $0x48] sm:$0xff]
        %v4285 = vld [vmem:[%s4274 + $0x50] sm:$0xff]
        %v4286 = vld [vmem:[%s4274 + $0x58] sm:$0xff]
        %v4287 = vld [vmem:[%s4274 + $0x60] sm:$0xff]
        %v4288 = vld [vmem:[%s4274 + $0x68] sm:$0xff]
        %v4289 = vld [vmem:[%s4274 + $0x70] sm:$0xff]
        %v4290 = vld [vmem:[%s4274 + $0x78] sm:$0xff]
        %4291 = vmatprep.subr.mxu0 0.0
        %4292 = vmatpush1.msra.mxu0 %v4275
        %4293 = vmatprep.subr.mxu0 0.0
        %4294 = vmatpush1.msra.mxu0 %v4276
        %4295 = vmatprep.subr.mxu0 0.0
        %4296 = vmatpush1.msra.mxu0 %v4277
        %4297 = vmatprep.subr.mxu0 0.0
        %4298 = vmatpush1.msra.mxu0 %v4278
        %4299 = vmatprep.subr.mxu0 0.0
        %4300 = vmatpush1.msra.mxu0 %v4279
        %4301 = vmatprep.subr.mxu0 0.0
        %4302 = vmatpush1.msra.mxu0 %v4280
        %4303 = vmatprep.subr.mxu0 0.0
        %4304 = vmatpush1.msra.mxu0 %v4281
        %4305 = vmatprep.subr.mxu0 0.0
        %4306 = vmatpush1.msra.mxu0 %v4282
        %4307 = vmatprep.subr.mxu0 0.0
        %4308 = vmatpush1.msra.mxu0 %v4283
        %4309 = vmatprep.subr.mxu0 0.0
        %4310 = vmatpush1.msra.mxu0 %v4284
        %4311 = vmatprep.subr.mxu0 0.0
        %4312 = vmatpush1.msra.mxu0 %v4285
        %4313 = vmatprep.subr.mxu0 0.0
        %4314 = vmatpush1.msra.mxu0 %v4286
        %4315 = vmatprep.subr.mxu0 0.0
        %4316 = vmatpush1.msra.mxu0 %v4287
        %4317 = vmatprep.subr.mxu0 0.0
        %4318 = vmatpush1.msra.mxu0 %v4288
        %4319 = vmatprep.subr.mxu0 0.0
        %4320 = vmatpush1.msra.mxu0 %v4289
        %4321 = vmatprep.subr.mxu0 0.0
        %4322 = vmatpush1.msra.mxu0 %v4290
        %4323 = vmatprep.subr.mxu0 0.0
        %4324 = vmatpush1.msra.mxu0 0.0
        %4325 = vmatprep.subr.mxu0 0.0
        %4326 = vmatpush1.msra.mxu0 0.0
        %4327 = vmatprep.subr.mxu0 0.0
        %4328 = vmatpush1.msra.mxu0 0.0
        %4329 = vmatprep.subr.mxu0 0.0
        %4330 = vmatpush1.msra.mxu0 0.0
        %4331 = vmatprep.subr.mxu0 0.0
        %4332 = vmatpush1.msra.mxu0 0.0
        %4333 = vmatprep.subr.mxu0 0.0
        %4334 = vmatpush1.msra.mxu0 0.0
        %4335 = vmatprep.subr.mxu0 0.0
        %4336 = vmatpush1.msra.mxu0 0.0
        %4337 = vmatprep.subr.mxu0 0.0
        %4338 = vmatpush1.msra.mxu0 0.0
        %4339 = vmatprep.subr.mxu0 0.0
        %4340 = vmatpush1.msra.mxu0 0.0
        %4341 = vmatprep.subr.mxu0 0.0
        %4342 = vmatpush1.msra.mxu0 0.0
        %4343 = vmatprep.subr.mxu0 0.0
        %4344 = vmatpush1.msra.mxu0 0.0
        %4345 = vmatprep.subr.mxu0 0.0
        %4346 = vmatpush1.msra.mxu0 0.0
        %4347 = vmatprep.subr.mxu0 0.0
        %4348 = vmatpush1.msra.mxu0 0.0
        %4349 = vmatprep.subr.mxu0 0.0
        %4350 = vmatpush1.msra.mxu0 0.0
        %4351 = vmatprep.subr.mxu0 0.0
        %4352 = vmatpush1.msra.mxu0 0.0
        %4353 = vmatprep.subr.mxu0 0.0
        %4354 = vmatpush1.msra.mxu0 0.0
        %4355 = vmatprep.mubr.f32.mxu0 0.0
        %4356 = vmatmul.mubr.f32.gmra.mrb[0].mxu0 %v4269
        %v4357 = vpop.f32.mrb[0].mxu0
        %v4358 = vadd.f32 0.0, %v4357
        %v4359 = vpop.f32.mrb[0].mxu0
        %4360 = vmatprep.mubr.f32.mxu0 0.0
        %4361 = vmatmul.mubr.f32.gmra.mrb[0].mxu0 %v4270
        %v4362 = vpop.f32.mrb[0].mxu0
        %v4363 = vadd.f32 0.0, %v4362
        %v4364 = vpop.f32.mrb[0].mxu0
        %4365 = vmatprep.mubr.f32.mxu0 0.0
        %4366 = vmatmul.mubr.f32.gmra.mrb[0].mxu0 %v4271
        %v4367 = vpop.f32.mrb[0].mxu0
        %v4368 = vadd.f32 0.0, %v4367
        %v4369 = vpop.f32.mrb[0].mxu0
        %4370 = vmatprep.mubr.f32.mxu0 0.0
        %4371 = vmatmul.mubr.f32.gmra.mrb[0].mxu0 %v4272
        %v4372 = vpop.f32.mrb[0].mxu0
        %v4373 = vadd.f32 0.0, %v4372
        %v4374 = vpop.f32.mrb[0].mxu0
        %4375 = vmatprep.mubr.f32.mxu0 0.0
        %4376 = vmatmul.mubr.f32.gmra.mrb[0].mxu0 %v4273
        %v4377 = vpop.f32.mrb[0].mxu0
        %v4378 = vadd.f32 0.0, %v4377
        %v4379 = vpop.f32.mrb[0].mxu0
        %4380 = vdwg.mxu0
        %4381 = vmatprep.subr.mxu0 0.0
        %4382 = vmatpush1.msra.mxu0 %v4253
        %4383 = vmatprep.subr.mxu0 0.0
        %4384 = vmatpush1.msra.mxu0 %v4254
        %4385 = vmatprep.subr.mxu0 0.0
        %4386 = vmatpush1.msra.mxu0 %v4255
        %4387 = vmatprep.subr.mxu0 0.0
        %4388 = vmatpush1.msra.mxu0 %v4256
        %4389 = vmatprep.subr.mxu0 0.0
        %4390 = vmatpush1.msra.mxu0 %v4257
        %4391 = vmatprep.subr.mxu0 0.0
        %4392 = vmatpush1.msra.mxu0 %v4258
        %4393 = vmatprep.subr.mxu0 0.0
        %4394 = vmatpush1.msra.mxu0 %v4259
        %4395 = vmatprep.subr.mxu0 0.0
        %4396 = vmatpush1.msra.mxu0 %v4260
        %4397 = vmatprep.subr.mxu0 0.0
        %4398 = vmatpush1.msra.mxu0 %v4261
        %4399 = vmatprep.subr.mxu0 0.0
        %4400 = vmatpush1.msra.mxu0 %v4262
        %4401 = vmatprep.subr.mxu0 0.0
        %4402 = vmatpush1.msra.mxu0 %v4263
        %4403 = vmatprep.subr.mxu0 0.0
        %4404 = vmatpush1.msra.mxu0 %v4264
        %4405 = vmatprep.subr.mxu0 0.0
        %4406 = vmatpush1.msra.mxu0 %v4265
        %4407 = vmatprep.subr.mxu0 0.0
        %4408 = vmatpush1.msra.mxu0 %v4266
        %4409 = vmatprep.subr.mxu0 0.0
        %4410 = vmatpush1.msra.mxu0 %v4267
        %4411 = vmatprep.subr.mxu0 0.0
        %4412 = vmatpush1.msra.mxu0 %v4268
        %4413 = vmatprep.subr.mxu0 0.0
        %4414 = vmatpush1.msra.mxu0 0.0
        %4415 = vmatprep.subr.mxu0 0.0
        %4416 = vmatpush1.msra.mxu0 0.0
        %4417 = vmatprep.subr.mxu0 0.0
        %4418 = vmatpush1.msra.mxu0 0.0
        %4419 = vmatprep.subr.mxu0 0.0
        %4420 = vmatpush1.msra.mxu0 0.0
        %4421 = vmatprep.subr.mxu0 0.0
        %4422 = vmatpush1.msra.mxu0 0.0
        %4423 = vmatprep.subr.mxu0 0.0
        %4424 = vmatpush1.msra.mxu0 0.0
        %4425 = vmatprep.subr.mxu0 0.0
        %4426 = vmatpush1.msra.mxu0 0.0
        %4427 = vmatprep.subr.mxu0 0.0
        %4428 = vmatpush1.msra.mxu0 0.0
        %4429 = vmatprep.subr.mxu0 0.0
        %4430 = vmatpush1.msra.mxu0 0.0
        %4431 = vmatprep.subr.mxu0 0.0
        %4432 = vmatpush1.msra.mxu0 0.0
        %4433 = vmatprep.subr.mxu0 0.0
        %4434 = vmatpush1.msra.mxu0 0.0
        %4435 = vmatprep.subr.mxu0 0.0
        %4436 = vmatpush1.msra.mxu0 0.0
        %4437 = vmatprep.subr.mxu0 0.0
        %4438 = vmatpush1.msra.mxu0 0.0
        %4439 = vmatprep.subr.mxu0 0.0
        %4440 = vmatpush1.msra.mxu0 0.0
        %4441 = vmatprep.subr.mxu0 0.0
        %4442 = vmatpush1.msra.mxu0 0.0
        %4443 = vmatprep.subr.mxu0 0.0
        %4444 = vmatpush1.msra.mxu0 0.0
        %4445 = vmatprep.mubr.f32.mxu0 0.0
        %4446 = vmatmul.mubr.f32.gmra.mrb[0].mxu0 %v4248
        %v4447 = vpop.f32.mrb[0].mxu0
        %v4448 = vadd.f32 %v4358, %v4447
        %v4449 = vpop.f32.mrb[0].mxu0
        %4450 = vmatprep.mubr.f32.mxu0 0.0
        %4451 = vmatmul.mubr.f32.gmra.mrb[0].mxu0 %v4249
        %v4452 = vpop.f32.mrb[0].mxu0
        %v4453 = vadd.f32 %v4363, %v4452
        %v4454 = vpop.f32.mrb[0].mxu0
        %4455 = vmatprep.mubr.f32.mxu0 0.0
        %4456 = vmatmul.mubr.f32.gmra.mrb[0].mxu0 %v4250
        %v4457 = vpop.f32.mrb[0].mxu0
        %v4458 = vadd.f32 %v4368, %v4457
        %v4459 = vpop.f32.mrb[0].mxu0
        %4460 = vmatprep.mubr.f32.mxu0 0.0
        %4461 = vmatmul.mubr.f32.gmra.mrb[0].mxu0 %v4251
        %v4462 = vpop.f32.mrb[0].mxu0
        %v4463 = vadd.f32 %v4373, %v4462
        %v4464 = vpop.f32.mrb[0].mxu0
        %4465 = vmatprep.mubr.f32.mxu0 0.0
        %4466 = vmatmul.mubr.f32.gmra.mrb[0].mxu0 %v4252
        %v4467 = vpop.f32.mrb[0].mxu0
        %v4468 = vadd.f32 %v4378, %v4467
        %v4469 = vpop.f32.mrb[0].mxu0
        %4470 = vdwg.mxu0
        %v4471 = vld [vmem:[#allocation3 + $0x2] sm:$0xff]
        %v4472 = vld [vmem:[#allocation3 + $0xa] sm:$0xff]
        %v4473 = vld [vmem:[#allocation3 + $0x12] sm:$0xff]
        %v4474 = vld [vmem:[#allocation3 + $0x1a] sm:$0xff]
        %v4475 = vld [vmem:[#allocation3 + $0x22] sm:$0xf]
        %s4476 = scalar_lea.vmem [#allocation9], 256
        %v4477 = vld [vmem:[%s4476] sm:$0xff]
        %v4478 = vld [vmem:[%s4476 + $0x8] sm:$0xff]
        %v4479 = vld [vmem:[%s4476 + $0x10] sm:$0xff]
        %v4480 = vld [vmem:[%s4476 + $0x18] sm:$0xff]
        %v4481 = vld [vmem:[%s4476 + $0x20] sm:$0xff]
        %v4482 = vld [vmem:[%s4476 + $0x28] sm:$0xff]
        %v4483 = vld [vmem:[%s4476 + $0x30] sm:$0xff]
        %v4484 = vld [vmem:[%s4476 + $0x38] sm:$0xff]
        %v4485 = vld [vmem:[%s4476 + $0x40] sm:$0xff]
        %v4486 = vld [vmem:[%s4476 + $0x48] sm:$0xff]
        %v4487 = vld [vmem:[%s4476 + $0x50] sm:$0xff]
        %v4488 = vld [vmem:[%s4476 + $0x58] sm:$0xff]
        %v4489 = vld [vmem:[%s4476 + $0x60] sm:$0xff]
        %v4490 = vld [vmem:[%s4476 + $0x68] sm:$0xff]
        %v4491 = vld [vmem:[%s4476 + $0x70] sm:$0xff]
        %v4492 = vld [vmem:[%s4476 + $0x78] sm:$0xff]
        %4493 = vmatprep.subr.mxu0 0.0
        %4494 = vmatpush1.msra.mxu0 %v4477
        %4495 = vmatprep.subr.mxu0 0.0
        %4496 = vmatpush1.msra.mxu0 %v4478
        %4497 = vmatprep.subr.mxu0 0.0
        %4498 = vmatpush1.msra.mxu0 %v4479
        %4499 = vmatprep.subr.mxu0 0.0
        %4500 = vmatpush1.msra.mxu0 %v4480
        %4501 = vmatprep.subr.mxu0 0.0
        %4502 = vmatpush1.msra.mxu0 %v4481
        %4503 = vmatprep.subr.mxu0 0.0
        %4504 = vmatpush1.msra.mxu0 %v4482
        %4505 = vmatprep.subr.mxu0 0.0
        %4506 = vmatpush1.msra.mxu0 %v4483
        %4507 = vmatprep.subr.mxu0 0.0
        %4508 = vmatpush1.msra.mxu0 %v4484
        %4509 = vmatprep.subr.mxu0 0.0
        %4510 = vmatpush1.msra.mxu0 %v4485
        %4511 = vmatprep.subr.mxu0 0.0
        %4512 = vmatpush1.msra.mxu0 %v4486
        %4513 = vmatprep.subr.mxu0 0.0
        %4514 = vmatpush1.msra.mxu0 %v4487
        %4515 = vmatprep.subr.mxu0 0.0
        %4516 = vmatpush1.msra.mxu0 %v4488
        %4517 = vmatprep.subr.mxu0 0.0
        %4518 = vmatpush1.msra.mxu0 %v4489
        %4519 = vmatprep.subr.mxu0 0.0
        %4520 = vmatpush1.msra.mxu0 %v4490
        %4521 = vmatprep.subr.mxu0 0.0
        %4522 = vmatpush1.msra.mxu0 %v4491
        %4523 = vmatprep.subr.mxu0 0.0
        %4524 = vmatpush1.msra.mxu0 %v4492
        %4525 = vmatprep.subr.mxu0 0.0
        %4526 = vmatpush1.msra.mxu0 0.0
        %4527 = vmatprep.subr.mxu0 0.0
        %4528 = vmatpush1.msra.mxu0 0.0
        %4529 = vmatprep.subr.mxu0 0.0
        %4530 = vmatpush1.msra.mxu0 0.0
        %4531 = vmatprep.subr.mxu0 0.0
        %4532 = vmatpush1.msra.mxu0 0.0
        %4533 = vmatprep.subr.mxu0 0.0
        %4534 = vmatpush1.msra.mxu0 0.0
        %4535 = vmatprep.subr.mxu0 0.0
        %4536 = vmatpush1.msra.mxu0 0.0
        %4537 = vmatprep.subr.mxu0 0.0
        %4538 = vmatpush1.msra.mxu0 0.0
        %4539 = vmatprep.subr.mxu0 0.0
        %4540 = vmatpush1.msra.mxu0 0.0
        %4541 = vmatprep.subr.mxu0 0.0
        %4542 = vmatpush1.msra.mxu0 0.0
        %4543 = vmatprep.subr.mxu0 0.0
        %4544 = vmatpush1.msra.mxu0 0.0
        %4545 = vmatprep.subr.mxu0 0.0
        %4546 = vmatpush1.msra.mxu0 0.0
        %4547 = vmatprep.subr.mxu0 0.0
        %4548 = vmatpush1.msra.mxu0 0.0
        %4549 = vmatprep.subr.mxu0 0.0
        %4550 = vmatpush1.msra.mxu0 0.0
        %4551 = vmatprep.subr.mxu0 0.0
        %4552 = vmatpush1.msra.mxu0 0.0
        %4553 = vmatprep.subr.mxu0 0.0
        %4554 = vmatpush1.msra.mxu0 0.0
        %4555 = vmatprep.subr.mxu0 0.0
        %4556 = vmatpush1.msra.mxu0 0.0
        %4557 = vmatprep.mubr.f32.mxu0 0.0
        %4558 = vmatmul.mubr.f32.gmra.mrb[0].mxu0 %v4471
        %v4559 = vpop.f32.mrb[0].mxu0
        %v4560 = vadd.f32 0.0, %v4559
        %v4561 = vpop.f32.mrb[0].mxu0
        %4562 = vmatprep.mubr.f32.mxu0 0.0
        %4563 = vmatmul.mubr.f32.gmra.mrb[0].mxu0 %v4472
        %v4564 = vpop.f32.mrb[0].mxu0
        %v4565 = vadd.f32 0.0, %v4564
        %v4566 = vpop.f32.mrb[0].mxu0
        %4567 = vmatprep.mubr.f32.mxu0 0.0
        %4568 = vmatmul.mubr.f32.gmra.mrb[0].mxu0 %v4473
        %v4569 = vpop.f32.mrb[0].mxu0
        %v4570 = vadd.f32 0.0, %v4569
        %v4571 = vpop.f32.mrb[0].mxu0
        %4572 = vmatprep.mubr.f32.mxu0 0.0
        %4573 = vmatmul.mubr.f32.gmra.mrb[0].mxu0 %v4474
        %v4574 = vpop.f32.mrb[0].mxu0
        %v4575 = vadd.f32 0.0, %v4574
        %v4576 = vpop.f32.mrb[0].mxu0
        %4577 = vmatprep.mubr.f32.mxu0 0.0
        %4578 = vmatmul.mubr.f32.gmra.mrb[0].mxu0 %v4475
        %v4579 = vpop.f32.mrb[0].mxu0
        %v4580 = vadd.f32 0.0, %v4579
        %v4581 = vpop.f32.mrb[0].mxu0
        %4582 = vdwg.mxu0
        %v4583 = vadd.f32 %v4448, %v4560
        %v4584 = vadd.f32 %v4453, %v4565
        %v4585 = vadd.f32 %v4458, %v4570
        %v4586 = vadd.f32 %v4463, %v4575
        %v4587 = vadd.f32 %v4468, %v4580
        %v4588 = vld [vmem:[#allocation3 + $0x6] sm:$0xff]
        %v4589 = vld [vmem:[#allocation3 + $0xe] sm:$0xff]
        %v4590 = vld [vmem:[#allocation3 + $0x16] sm:$0xff]
        %v4591 = vld [vmem:[#allocation3 + $0x1e] sm:$0xff]
        %v4592 = vld [vmem:[#allocation3 + $0x26] sm:$0xf]
        %s4593 = scalar_lea.vmem [#allocation9], 384
        %v4594 = vld [vmem:[%s4593] sm:$0xff]
        %v4595 = vld [vmem:[%s4593 + $0x8] sm:$0xff]
        %v4596 = vld [vmem:[%s4593 + $0x10] sm:$0xff]
        %v4597 = vld [vmem:[%s4593 + $0x18] sm:$0xff]
        %v4598 = vld [vmem:[%s4593 + $0x20] sm:$0xff]
        %v4599 = vld [vmem:[%s4593 + $0x28] sm:$0xff]
        %v4600 = vld [vmem:[%s4593 + $0x30] sm:$0xff]
        %v4601 = vld [vmem:[%s4593 + $0x38] sm:$0xff]
        %v4602 = vld [vmem:[%s4593 + $0x40] sm:$0xff]
        %v4603 = vld [vmem:[%s4593 + $0x48] sm:$0xff]
        %v4604 = vld [vmem:[%s4593 + $0x50] sm:$0xff]
        %v4605 = vld [vmem:[%s4593 + $0x58] sm:$0xff]
        %v4606 = vld [vmem:[%s4593 + $0x60] sm:$0xff]
        %v4607 = vld [vmem:[%s4593 + $0x68] sm:$0xff]
        %v4608 = vld [vmem:[%s4593 + $0x70] sm:$0xff]
        %v4609 = vld [vmem:[%s4593 + $0x78] sm:$0xff]
        %4610 = vmatprep.subr.mxu0 0.0
        %4611 = vmatpush1.msra.mxu0 %v4594
        %4612 = vmatprep.subr.mxu0 0.0
        %4613 = vmatpush1.msra.mxu0 %v4595
        %4614 = vmatprep.subr.mxu0 0.0
        %4615 = vmatpush1.msra.mxu0 %v4596
        %4616 = vmatprep.subr.mxu0 0.0
        %4617 = vmatpush1.msra.mxu0 %v4597
        %4618 = vmatprep.subr.mxu0 0.0
        %4619 = vmatpush1.msra.mxu0 %v4598
        %4620 = vmatprep.subr.mxu0 0.0
        %4621 = vmatpush1.msra.mxu0 %v4599
        %4622 = vmatprep.subr.mxu0 0.0
        %4623 = vmatpush1.msra.mxu0 %v4600
        %4624 = vmatprep.subr.mxu0 0.0
        %4625 = vmatpush1.msra.mxu0 %v4601
        %4626 = vmatprep.subr.mxu0 0.0
        %4627 = vmatpush1.msra.mxu0 %v4602
        %4628 = vmatprep.subr.mxu0 0.0
        %4629 = vmatpush1.msra.mxu0 %v4603
        %4630 = vmatprep.subr.mxu0 0.0
        %4631 = vmatpush1.msra.mxu0 %v4604
        %4632 = vmatprep.subr.mxu0 0.0
        %4633 = vmatpush1.msra.mxu0 %v4605
        %4634 = vmatprep.subr.mxu0 0.0
        %4635 = vmatpush1.msra.mxu0 %v4606
        %4636 = vmatprep.subr.mxu0 0.0
        %4637 = vmatpush1.msra.mxu0 %v4607
        %4638 = vmatprep.subr.mxu0 0.0
        %4639 = vmatpush1.msra.mxu0 %v4608
        %4640 = vmatprep.subr.mxu0 0.0
        %4641 = vmatpush1.msra.mxu0 %v4609
        %4642 = vmatprep.subr.mxu0 0.0
        %4643 = vmatpush1.msra.mxu0 0.0
        %4644 = vmatprep.subr.mxu0 0.0
        %4645 = vmatpush1.msra.mxu0 0.0
        %4646 = vmatprep.subr.mxu0 0.0
        %4647 = vmatpush1.msra.mxu0 0.0
        %4648 = vmatprep.subr.mxu0 0.0
        %4649 = vmatpush1.msra.mxu0 0.0
        %4650 = vmatprep.subr.mxu0 0.0
        %4651 = vmatpush1.msra.mxu0 0.0
        %4652 = vmatprep.subr.mxu0 0.0
        %4653 = vmatpush1.msra.mxu0 0.0
        %4654 = vmatprep.subr.mxu0 0.0
        %4655 = vmatpush1.msra.mxu0 0.0
        %4656 = vmatprep.subr.mxu0 0.0
        %4657 = vmatpush1.msra.mxu0 0.0
        %4658 = vmatprep.subr.mxu0 0.0
        %4659 = vmatpush1.msra.mxu0 0.0
        %4660 = vmatprep.subr.mxu0 0.0
        %4661 = vmatpush1.msra.mxu0 0.0
        %4662 = vmatprep.subr.mxu0 0.0
        %4663 = vmatpush1.msra.mxu0 0.0
        %4664 = vmatprep.subr.mxu0 0.0
        %4665 = vmatpush1.msra.mxu0 0.0
        %4666 = vmatprep.subr.mxu0 0.0
        %4667 = vmatpush1.msra.mxu0 0.0
        %4668 = vmatprep.subr.mxu0 0.0
        %4669 = vmatpush1.msra.mxu0 0.0
        %4670 = vmatprep.subr.mxu0 0.0
        %4671 = vmatpush1.msra.mxu0 0.0
        %4672 = vmatprep.subr.mxu0 0.0
        %4673 = vmatpush1.msra.mxu0 0.0
        %4674 = vmatprep.mubr.f32.mxu0 0.0
        %4675 = vmatmul.mubr.f32.gmra.mrb[0].mxu0 %v4588
        %v4676 = vpop.f32.mrb[0].mxu0
        %v4677 = vadd.f32 0.0, %v4676
        %v4678 = vpop.f32.mrb[0].mxu0
        %4679 = vmatprep.mubr.f32.mxu0 0.0
        %4680 = vmatmul.mubr.f32.gmra.mrb[0].mxu0 %v4589
        %v4681 = vpop.f32.mrb[0].mxu0
        %v4682 = vadd.f32 0.0, %v4681
        %v4683 = vpop.f32.mrb[0].mxu0
        %4684 = vmatprep.mubr.f32.mxu0 0.0
        %4685 = vmatmul.mubr.f32.gmra.mrb[0].mxu0 %v4590
        %v4686 = vpop.f32.mrb[0].mxu0
        %v4687 = vadd.f32 0.0, %v4686
        %v4688 = vpop.f32.mrb[0].mxu0
        %4689 = vmatprep.mubr.f32.mxu0 0.0
        %4690 = vmatmul.mubr.f32.gmra.mrb[0].mxu0 %v4591
        %v4691 = vpop.f32.mrb[0].mxu0
        %v4692 = vadd.f32 0.0, %v4691
        %v4693 = vpop.f32.mrb[0].mxu0
        %4694 = vmatprep.mubr.f32.mxu0 0.0
        %4695 = vmatmul.mubr.f32.gmra.mrb[0].mxu0 %v4592
        %v4696 = vpop.f32.mrb[0].mxu0
        %v4697 = vadd.f32 0.0, %v4696
        %v4698 = vpop.f32.mrb[0].mxu0
        %4699 = vdwg.mxu0
        %v4700 = vadd.f32 %v4583, %v4677
        %v4701 = vadd.f32 %v4584, %v4682
        %v4702 = vadd.f32 %v4585, %v4687
        %v4703 = vadd.f32 %v4586, %v4692
        %v4704 = vadd.f32 %v4587, %v4697
        %v4705 = vld [vmem:[#allocation3 + $0x7] sm:$0xff]
        %v4706 = vld [vmem:[#allocation3 + $0xf] sm:$0xff]
        %v4707 = vld [vmem:[#allocation3 + $0x17] sm:$0xff]
        %v4708 = vld [vmem:[#allocation3 + $0x1f] sm:$0xff]
        %v4709 = vld [vmem:[#allocation3 + $0x27] sm:$0xf]
        %s4710 = scalar_lea.vmem [#allocation9], 512
        %v4711 = vld [vmem:[%s4710] sm:$0xff]
        %v4712 = vld [vmem:[%s4710 + $0x8] sm:$0xff]
        %v4713 = vld [vmem:[%s4710 + $0x10] sm:$0xff]
        %v4714 = vld [vmem:[%s4710 + $0x18] sm:$0xff]
        %v4715 = vld [vmem:[%s4710 + $0x20] sm:$0xff]
        %v4716 = vld [vmem:[%s4710 + $0x28] sm:$0xff]
        %v4717 = vld [vmem:[%s4710 + $0x30] sm:$0xff]
        %v4718 = vld [vmem:[%s4710 + $0x38] sm:$0xff]
        %v4719 = vld [vmem:[%s4710 + $0x40] sm:$0xff]
        %v4720 = vld [vmem:[%s4710 + $0x48] sm:$0xff]
        %v4721 = vld [vmem:[%s4710 + $0x50] sm:$0xff]
        %v4722 = vld [vmem:[%s4710 + $0x58] sm:$0xff]
        %v4723 = vld [vmem:[%s4710 + $0x60] sm:$0xff]
        %v4724 = vld [vmem:[%s4710 + $0x68] sm:$0xff]
        %v4725 = vld [vmem:[%s4710 + $0x70] sm:$0xff]
        %v4726 = vld [vmem:[%s4710 + $0x78] sm:$0xff]
        %4727 = vmatprep.subr.mxu0 0.0
        %4728 = vmatpush1.msra.mxu0 %v4711
        %4729 = vmatprep.subr.mxu0 0.0
        %4730 = vmatpush1.msra.mxu0 %v4712
        %4731 = vmatprep.subr.mxu0 0.0
        %4732 = vmatpush1.msra.mxu0 %v4713
        %4733 = vmatprep.subr.mxu0 0.0
        %4734 = vmatpush1.msra.mxu0 %v4714
        %4735 = vmatprep.subr.mxu0 0.0
        %4736 = vmatpush1.msra.mxu0 %v4715
        %4737 = vmatprep.subr.mxu0 0.0
        %4738 = vmatpush1.msra.mxu0 %v4716
        %4739 = vmatprep.subr.mxu0 0.0
        %4740 = vmatpush1.msra.mxu0 %v4717
        %4741 = vmatprep.subr.mxu0 0.0
        %4742 = vmatpush1.msra.mxu0 %v4718
        %4743 = vmatprep.subr.mxu0 0.0
        %4744 = vmatpush1.msra.mxu0 %v4719
        %4745 = vmatprep.subr.mxu0 0.0
        %4746 = vmatpush1.msra.mxu0 %v4720
        %4747 = vmatprep.subr.mxu0 0.0
        %4748 = vmatpush1.msra.mxu0 %v4721
        %4749 = vmatprep.subr.mxu0 0.0
        %4750 = vmatpush1.msra.mxu0 %v4722
        %4751 = vmatprep.subr.mxu0 0.0
        %4752 = vmatpush1.msra.mxu0 %v4723
        %4753 = vmatprep.subr.mxu0 0.0
        %4754 = vmatpush1.msra.mxu0 %v4724
        %4755 = vmatprep.subr.mxu0 0.0
        %4756 = vmatpush1.msra.mxu0 %v4725
        %4757 = vmatprep.subr.mxu0 0.0
        %4758 = vmatpush1.msra.mxu0 %v4726
        %4759 = vmatprep.subr.mxu0 0.0
        %4760 = vmatpush1.msra.mxu0 0.0
        %4761 = vmatprep.subr.mxu0 0.0
        %4762 = vmatpush1.msra.mxu0 0.0
        %4763 = vmatprep.subr.mxu0 0.0
        %4764 = vmatpush1.msra.mxu0 0.0
        %4765 = vmatprep.subr.mxu0 0.0
        %4766 = vmatpush1.msra.mxu0 0.0
        %4767 = vmatprep.subr.mxu0 0.0
        %4768 = vmatpush1.msra.mxu0 0.0
        %4769 = vmatprep.subr.mxu0 0.0
        %4770 = vmatpush1.msra.mxu0 0.0
        %4771 = vmatprep.subr.mxu0 0.0
        %4772 = vmatpush1.msra.mxu0 0.0
        %4773 = vmatprep.subr.mxu0 0.0
        %4774 = vmatpush1.msra.mxu0 0.0
        %4775 = vmatprep.subr.mxu0 0.0
        %4776 = vmatpush1.msra.mxu0 0.0
        %4777 = vmatprep.subr.mxu0 0.0
        %4778 = vmatpush1.msra.mxu0 0.0
        %4779 = vmatprep.subr.mxu0 0.0
        %4780 = vmatpush1.msra.mxu0 0.0
        %4781 = vmatprep.subr.mxu0 0.0
        %4782 = vmatpush1.msra.mxu0 0.0
        %4783 = vmatprep.subr.mxu0 0.0
        %4784 = vmatpush1.msra.mxu0 0.0
        %4785 = vmatprep.subr.mxu0 0.0
        %4786 = vmatpush1.msra.mxu0 0.0
        %4787 = vmatprep.subr.mxu0 0.0
        %4788 = vmatpush1.msra.mxu0 0.0
        %4789 = vmatprep.subr.mxu0 0.0
        %4790 = vmatpush1.msra.mxu0 0.0
        %4791 = vmatprep.mubr.f32.mxu0 0.0
        %4792 = vmatmul.mubr.f32.gmra.mrb[0].mxu0 %v4705
        %v4793 = vpop.f32.mrb[0].mxu0
        %v4794 = vadd.f32 0.0, %v4793
        %v4795 = vpop.f32.mrb[0].mxu0
        %4796 = vmatprep.mubr.f32.mxu0 0.0
        %4797 = vmatmul.mubr.f32.gmra.mrb[0].mxu0 %v4706
        %v4798 = vpop.f32.mrb[0].mxu0
        %v4799 = vadd.f32 0.0, %v4798
        %v4800 = vpop.f32.mrb[0].mxu0
        %4801 = vmatprep.mubr.f32.mxu0 0.0
        %4802 = vmatmul.mubr.f32.gmra.mrb[0].mxu0 %v4707
        %v4803 = vpop.f32.mrb[0].mxu0
        %v4804 = vadd.f32 0.0, %v4803
        %v4805 = vpop.f32.mrb[0].mxu0
        %4806 = vmatprep.mubr.f32.mxu0 0.0
        %4807 = vmatmul.mubr.f32.gmra.mrb[0].mxu0 %v4708
        %v4808 = vpop.f32.mrb[0].mxu0
        %v4809 = vadd.f32 0.0, %v4808
        %v4810 = vpop.f32.mrb[0].mxu0
        %4811 = vmatprep.mubr.f32.mxu0 0.0
        %4812 = vmatmul.mubr.f32.gmra.mrb[0].mxu0 %v4709
        %v4813 = vpop.f32.mrb[0].mxu0
        %v4814 = vadd.f32 0.0, %v4813
        %v4815 = vpop.f32.mrb[0].mxu0
        %4816 = vdwg.mxu0
        %v4817 = vadd.f32 %v4700, %v4794
        %v4818 = vadd.f32 %v4701, %v4799
        %v4819 = vadd.f32 %v4702, %v4804
        %v4820 = vadd.f32 %v4703, %v4809
        %v4821 = vadd.f32 %v4704, %v4814
        %v4822 = vld [vmem:[#allocation3 + $0x8] sm:$0xff]
        %v4823 = vld [vmem:[#allocation3 + $0x10] sm:$0xff]
        %v4824 = vld [vmem:[#allocation3 + $0x18] sm:$0xff]
        %v4825 = vld [vmem:[#allocation3 + $0x20] sm:$0xff]
        %v4826 = vld [vmem:[#allocation3 + $0x28] sm:$0xf]
        %s4827 = scalar_lea.vmem [#allocation9], 640
        %v4828 = vld [vmem:[%s4827] sm:$0xff]
        %v4829 = vld [vmem:[%s4827 + $0x8] sm:$0xff]
        %v4830 = vld [vmem:[%s4827 + $0x10] sm:$0xff]
        %v4831 = vld [vmem:[%s4827 + $0x18] sm:$0xff]
        %v4832 = vld [vmem:[%s4827 + $0x20] sm:$0xff]
        %v4833 = vld [vmem:[%s4827 + $0x28] sm:$0xff]
        %v4834 = vld [vmem:[%s4827 + $0x30] sm:$0xff]
        %v4835 = vld [vmem:[%s4827 + $0x38] sm:$0xff]
        %v4836 = vld [vmem:[%s4827 + $0x40] sm:$0xff]
        %v4837 = vld [vmem:[%s4827 + $0x48] sm:$0xff]
        %v4838 = vld [vmem:[%s4827 + $0x50] sm:$0xff]
        %v4839 = vld [vmem:[%s4827 + $0x58] sm:$0xff]
        %v4840 = vld [vmem:[%s4827 + $0x60] sm:$0xff]
        %v4841 = vld [vmem:[%s4827 + $0x68] sm:$0xff]
        %v4842 = vld [vmem:[%s4827 + $0x70] sm:$0xff]
        %v4843 = vld [vmem:[%s4827 + $0x78] sm:$0xff]
        %4844 = vmatprep.subr.mxu0 0.0
        %4845 = vmatpush1.msra.mxu0 %v4828
        %4846 = vmatprep.subr.mxu0 0.0
        %4847 = vmatpush1.msra.mxu0 %v4829
        %4848 = vmatprep.subr.mxu0 0.0
        %4849 = vmatpush1.msra.mxu0 %v4830
        %4850 = vmatprep.subr.mxu0 0.0
        %4851 = vmatpush1.msra.mxu0 %v4831
        %4852 = vmatprep.subr.mxu0 0.0
        %4853 = vmatpush1.msra.mxu0 %v4832
        %4854 = vmatprep.subr.mxu0 0.0
        %4855 = vmatpush1.msra.mxu0 %v4833
        %4856 = vmatprep.subr.mxu0 0.0
        %4857 = vmatpush1.msra.mxu0 %v4834
        %4858 = vmatprep.subr.mxu0 0.0
        %4859 = vmatpush1.msra.mxu0 %v4835
        %4860 = vmatprep.subr.mxu0 0.0
        %4861 = vmatpush1.msra.mxu0 %v4836
        %4862 = vmatprep.subr.mxu0 0.0
        %4863 = vmatpush1.msra.mxu0 %v4837
        %4864 = vmatprep.subr.mxu0 0.0
        %4865 = vmatpush1.msra.mxu0 %v4838
        %4866 = vmatprep.subr.mxu0 0.0
        %4867 = vmatpush1.msra.mxu0 %v4839
        %4868 = vmatprep.subr.mxu0 0.0
        %4869 = vmatpush1.msra.mxu0 %v4840
        %4870 = vmatprep.subr.mxu0 0.0
        %4871 = vmatpush1.msra.mxu0 %v4841
        %4872 = vmatprep.subr.mxu0 0.0
        %4873 = vmatpush1.msra.mxu0 %v4842
        %4874 = vmatprep.subr.mxu0 0.0
        %4875 = vmatpush1.msra.mxu0 %v4843
        %4876 = vmatprep.subr.mxu0 0.0
        %4877 = vmatpush1.msra.mxu0 0.0
        %4878 = vmatprep.subr.mxu0 0.0
        %4879 = vmatpush1.msra.mxu0 0.0
        %4880 = vmatprep.subr.mxu0 0.0
        %4881 = vmatpush1.msra.mxu0 0.0
        %4882 = vmatprep.subr.mxu0 0.0
        %4883 = vmatpush1.msra.mxu0 0.0
        %4884 = vmatprep.subr.mxu0 0.0
        %4885 = vmatpush1.msra.mxu0 0.0
        %4886 = vmatprep.subr.mxu0 0.0
        %4887 = vmatpush1.msra.mxu0 0.0
        %4888 = vmatprep.subr.mxu0 0.0
        %4889 = vmatpush1.msra.mxu0 0.0
        %4890 = vmatprep.subr.mxu0 0.0
        %4891 = vmatpush1.msra.mxu0 0.0
        %4892 = vmatprep.subr.mxu0 0.0
        %4893 = vmatpush1.msra.mxu0 0.0
        %4894 = vmatprep.subr.mxu0 0.0
        %4895 = vmatpush1.msra.mxu0 0.0
        %4896 = vmatprep.subr.mxu0 0.0
        %4897 = vmatpush1.msra.mxu0 0.0
        %4898 = vmatprep.subr.mxu0 0.0
        %4899 = vmatpush1.msra.mxu0 0.0
        %4900 = vmatprep.subr.mxu0 0.0
        %4901 = vmatpush1.msra.mxu0 0.0
        %4902 = vmatprep.subr.mxu0 0.0
        %4903 = vmatpush1.msra.mxu0 0.0
        %4904 = vmatprep.subr.mxu0 0.0
        %4905 = vmatpush1.msra.mxu0 0.0
        %4906 = vmatprep.subr.mxu0 0.0
        %4907 = vmatpush1.msra.mxu0 0.0
        %4908 = vmatprep.mubr.f32.mxu0 0.0
        %4909 = vmatmul.mubr.f32.gmra.mrb[0].mxu0 %v4822
        %v4910 = vpop.f32.mrb[0].mxu0
        %v4911 = vadd.f32 0.0, %v4910
        %v4912 = vpop.f32.mrb[0].mxu0
        %4913 = vmatprep.mubr.f32.mxu0 0.0
        %4914 = vmatmul.mubr.f32.gmra.mrb[0].mxu0 %v4823
        %v4915 = vpop.f32.mrb[0].mxu0
        %v4916 = vadd.f32 0.0, %v4915
        %v4917 = vpop.f32.mrb[0].mxu0
        %4918 = vmatprep.mubr.f32.mxu0 0.0
        %4919 = vmatmul.mubr.f32.gmra.mrb[0].mxu0 %v4824
        %v4920 = vpop.f32.mrb[0].mxu0
        %v4921 = vadd.f32 0.0, %v4920
        %v4922 = vpop.f32.mrb[0].mxu0
        %4923 = vmatprep.mubr.f32.mxu0 0.0
        %4924 = vmatmul.mubr.f32.gmra.mrb[0].mxu0 %v4825
        %v4925 = vpop.f32.mrb[0].mxu0
        %v4926 = vadd.f32 0.0, %v4925
        %v4927 = vpop.f32.mrb[0].mxu0
        %4928 = vmatprep.mubr.f32.mxu0 0.0
        %4929 = vmatmul.mubr.f32.gmra.mrb[0].mxu0 %v4826
        %v4930 = vpop.f32.mrb[0].mxu0
        %v4931 = vadd.f32 0.0, %v4930
        %v4932 = vpop.f32.mrb[0].mxu0
        %4933 = vdwg.mxu0
        %v4934 = vadd.f32 %v4817, %v4911
        %v4935 = vadd.f32 %v4818, %v4916
        %v4936 = vadd.f32 %v4819, %v4921
        %v4937 = vadd.f32 %v4820, %v4926
        %v4938 = vadd.f32 %v4821, %v4931
        %v4939 = vld [vmem:[#allocation3 + $0xc] sm:$0xff]
        %v4940 = vld [vmem:[#allocation3 + $0x14] sm:$0xff]
        %v4941 = vld [vmem:[#allocation3 + $0x1c] sm:$0xff]
        %v4942 = vld [vmem:[#allocation3 + $0x24] sm:$0xff]
        %v4943 = vld [vmem:[#allocation3 + $0x2c] sm:$0xf]
        %s4944 = scalar_lea.vmem [#allocation9], 768
        %v4945 = vld [vmem:[%s4944] sm:$0xff]
        %v4946 = vld [vmem:[%s4944 + $0x8] sm:$0xff]
        %v4947 = vld [vmem:[%s4944 + $0x10] sm:$0xff]
        %v4948 = vld [vmem:[%s4944 + $0x18] sm:$0xff]
        %v4949 = vld [vmem:[%s4944 + $0x20] sm:$0xff]
        %v4950 = vld [vmem:[%s4944 + $0x28] sm:$0xff]
        %v4951 = vld [vmem:[%s4944 + $0x30] sm:$0xff]
        %v4952 = vld [vmem:[%s4944 + $0x38] sm:$0xff]
        %v4953 = vld [vmem:[%s4944 + $0x40] sm:$0xff]
        %v4954 = vld [vmem:[%s4944 + $0x48] sm:$0xff]
        %v4955 = vld [vmem:[%s4944 + $0x50] sm:$0xff]
        %v4956 = vld [vmem:[%s4944 + $0x58] sm:$0xff]
        %v4957 = vld [vmem:[%s4944 + $0x60] sm:$0xff]
        %v4958 = vld [vmem:[%s4944 + $0x68] sm:$0xff]
        %v4959 = vld [vmem:[%s4944 + $0x70] sm:$0xff]
        %v4960 = vld [vmem:[%s4944 + $0x78] sm:$0xff]
        %4961 = vmatprep.subr.mxu0 0.0
        %4962 = vmatpush1.msra.mxu0 %v4945
        %4963 = vmatprep.subr.mxu0 0.0
        %4964 = vmatpush1.msra.mxu0 %v4946
        %4965 = vmatprep.subr.mxu0 0.0
        %4966 = vmatpush1.msra.mxu0 %v4947
        %4967 = vmatprep.subr.mxu0 0.0
        %4968 = vmatpush1.msra.mxu0 %v4948
        %4969 = vmatprep.subr.mxu0 0.0
        %4970 = vmatpush1.msra.mxu0 %v4949
        %4971 = vmatprep.subr.mxu0 0.0
        %4972 = vmatpush1.msra.mxu0 %v4950
        %4973 = vmatprep.subr.mxu0 0.0
        %4974 = vmatpush1.msra.mxu0 %v4951
        %4975 = vmatprep.subr.mxu0 0.0
        %4976 = vmatpush1.msra.mxu0 %v4952
        %4977 = vmatprep.subr.mxu0 0.0
        %4978 = vmatpush1.msra.mxu0 %v4953
        %4979 = vmatprep.subr.mxu0 0.0
        %4980 = vmatpush1.msra.mxu0 %v4954
        %4981 = vmatprep.subr.mxu0 0.0
        %4982 = vmatpush1.msra.mxu0 %v4955
        %4983 = vmatprep.subr.mxu0 0.0
        %4984 = vmatpush1.msra.mxu0 %v4956
        %4985 = vmatprep.subr.mxu0 0.0
        %4986 = vmatpush1.msra.mxu0 %v4957
        %4987 = vmatprep.subr.mxu0 0.0
        %4988 = vmatpush1.msra.mxu0 %v4958
        %4989 = vmatprep.subr.mxu0 0.0
        %4990 = vmatpush1.msra.mxu0 %v4959
        %4991 = vmatprep.subr.mxu0 0.0
        %4992 = vmatpush1.msra.mxu0 %v4960
        %4993 = vmatprep.subr.mxu0 0.0
        %4994 = vmatpush1.msra.mxu0 0.0
        %4995 = vmatprep.subr.mxu0 0.0
        %4996 = vmatpush1.msra.mxu0 0.0
        %4997 = vmatprep.subr.mxu0 0.0
        %4998 = vmatpush1.msra.mxu0 0.0
        %4999 = vmatprep.subr.mxu0 0.0
        %5000 = vmatpush1.msra.mxu0 0.0
        %5001 = vmatprep.subr.mxu0 0.0
        %5002 = vmatpush1.msra.mxu0 0.0
        %5003 = vmatprep.subr.mxu0 0.0
        %5004 = vmatpush1.msra.mxu0 0.0
        %5005 = vmatprep.subr.mxu0 0.0
        %5006 = vmatpush1.msra.mxu0 0.0
        %5007 = vmatprep.subr.mxu0 0.0
        %5008 = vmatpush1.msra.mxu0 0.0
        %5009 = vmatprep.subr.mxu0 0.0
        %5010 = vmatpush1.msra.mxu0 0.0
        %5011 = vmatprep.subr.mxu0 0.0
        %5012 = vmatpush1.msra.mxu0 0.0
        %5013 = vmatprep.subr.mxu0 0.0
        %5014 = vmatpush1.msra.mxu0 0.0
        %5015 = vmatprep.subr.mxu0 0.0
        %5016 = vmatpush1.msra.mxu0 0.0
        %5017 = vmatprep.subr.mxu0 0.0
        %5018 = vmatpush1.msra.mxu0 0.0
        %5019 = vmatprep.subr.mxu0 0.0
        %5020 = vmatpush1.msra.mxu0 0.0
        %5021 = vmatprep.subr.mxu0 0.0
        %5022 = vmatpush1.msra.mxu0 0.0
        %5023 = vmatprep.subr.mxu0 0.0
        %5024 = vmatpush1.msra.mxu0 0.0
        %5025 = vmatprep.mubr.f32.mxu0 0.0
        %5026 = vmatmul.mubr.f32.gmra.mrb[0].mxu0 %v4939
        %v5027 = vpop.f32.mrb[0].mxu0
        %v5028 = vadd.f32 0.0, %v5027
        %v5029 = vpop.f32.mrb[0].mxu0
        %5030 = vmatprep.mubr.f32.mxu0 0.0
        %5031 = vmatmul.mubr.f32.gmra.mrb[0].mxu0 %v4940
        %v5032 = vpop.f32.mrb[0].mxu0
        %v5033 = vadd.f32 0.0, %v5032
        %v5034 = vpop.f32.mrb[0].mxu0
        %5035 = vmatprep.mubr.f32.mxu0 0.0
        %5036 = vmatmul.mubr.f32.gmra.mrb[0].mxu0 %v4941
        %v5037 = vpop.f32.mrb[0].mxu0
        %v5038 = vadd.f32 0.0, %v5037
        %v5039 = vpop.f32.mrb[0].mxu0
        %5040 = vmatprep.mubr.f32.mxu0 0.0
        %5041 = vmatmul.mubr.f32.gmra.mrb[0].mxu0 %v4942
        %v5042 = vpop.f32.mrb[0].mxu0
        %v5043 = vadd.f32 0.0, %v5042
        %v5044 = vpop.f32.mrb[0].mxu0
        %5045 = vmatprep.mubr.f32.mxu0 0.0
        %5046 = vmatmul.mubr.f32.gmra.mrb[0].mxu0 %v4943
        %v5047 = vpop.f32.mrb[0].mxu0
        %v5048 = vadd.f32 0.0, %v5047
        %v5049 = vpop.f32.mrb[0].mxu0
        %5050 = vdwg.mxu0
        %v5051 = vadd.f32 %v4934, %v5028
        %v5052 = vadd.f32 %v4935, %v5033
        %v5053 = vadd.f32 %v4936, %v5038
        %v5054 = vadd.f32 %v4937, %v5043
        %v5055 = vadd.f32 %v4938, %v5048
        %v5056 = vld [vmem:[#allocation3 + $0xd] sm:$0xff]
        %v5057 = vld [vmem:[#allocation3 + $0x15] sm:$0xff]
        %v5058 = vld [vmem:[#allocation3 + $0x1d] sm:$0xff]
        %v5059 = vld [vmem:[#allocation3 + $0x25] sm:$0xff]
        %v5060 = vld [vmem:[#allocation3 + $0x2d] sm:$0xf]
        %s5061 = scalar_lea.vmem [#allocation9], 896
        %v5062 = vld [vmem:[%s5061] sm:$0xff]
        %v5063 = vld [vmem:[%s5061 + $0x8] sm:$0xff]
        %v5064 = vld [vmem:[%s5061 + $0x10] sm:$0xff]
        %v5065 = vld [vmem:[%s5061 + $0x18] sm:$0xff]
        %v5066 = vld [vmem:[%s5061 + $0x20] sm:$0xff]
        %v5067 = vld [vmem:[%s5061 + $0x28] sm:$0xff]
        %v5068 = vld [vmem:[%s5061 + $0x30] sm:$0xff]
        %v5069 = vld [vmem:[%s5061 + $0x38] sm:$0xff]
        %v5070 = vld [vmem:[%s5061 + $0x40] sm:$0xff]
        %v5071 = vld [vmem:[%s5061 + $0x48] sm:$0xff]
        %v5072 = vld [vmem:[%s5061 + $0x50] sm:$0xff]
        %v5073 = vld [vmem:[%s5061 + $0x58] sm:$0xff]
        %v5074 = vld [vmem:[%s5061 + $0x60] sm:$0xff]
        %v5075 = vld [vmem:[%s5061 + $0x68] sm:$0xff]
        %v5076 = vld [vmem:[%s5061 + $0x70] sm:$0xff]
        %v5077 = vld [vmem:[%s5061 + $0x78] sm:$0xff]
        %5078 = vmatprep.subr.mxu0 0.0
        %5079 = vmatpush1.msra.mxu0 %v5062
        %5080 = vmatprep.subr.mxu0 0.0
        %5081 = vmatpush1.msra.mxu0 %v5063
        %5082 = vmatprep.subr.mxu0 0.0
        %5083 = vmatpush1.msra.mxu0 %v5064
        %5084 = vmatprep.subr.mxu0 0.0
        %5085 = vmatpush1.msra.mxu0 %v5065
        %5086 = vmatprep.subr.mxu0 0.0
        %5087 = vmatpush1.msra.mxu0 %v5066
        %5088 = vmatprep.subr.mxu0 0.0
        %5089 = vmatpush1.msra.mxu0 %v5067
        %5090 = vmatprep.subr.mxu0 0.0
        %5091 = vmatpush1.msra.mxu0 %v5068
        %5092 = vmatprep.subr.mxu0 0.0
        %5093 = vmatpush1.msra.mxu0 %v5069
        %5094 = vmatprep.subr.mxu0 0.0
        %5095 = vmatpush1.msra.mxu0 %v5070
        %5096 = vmatprep.subr.mxu0 0.0
        %5097 = vmatpush1.msra.mxu0 %v5071
        %5098 = vmatprep.subr.mxu0 0.0
        %5099 = vmatpush1.msra.mxu0 %v5072
        %5100 = vmatprep.subr.mxu0 0.0
        %5101 = vmatpush1.msra.mxu0 %v5073
        %5102 = vmatprep.subr.mxu0 0.0
        %5103 = vmatpush1.msra.mxu0 %v5074
        %5104 = vmatprep.subr.mxu0 0.0
        %5105 = vmatpush1.msra.mxu0 %v5075
        %5106 = vmatprep.subr.mxu0 0.0
        %5107 = vmatpush1.msra.mxu0 %v5076
        %5108 = vmatprep.subr.mxu0 0.0
        %5109 = vmatpush1.msra.mxu0 %v5077
        %5110 = vmatprep.subr.mxu0 0.0
        %5111 = vmatpush1.msra.mxu0 0.0
        %5112 = vmatprep.subr.mxu0 0.0
        %5113 = vmatpush1.msra.mxu0 0.0
        %5114 = vmatprep.subr.mxu0 0.0
        %5115 = vmatpush1.msra.mxu0 0.0
        %5116 = vmatprep.subr.mxu0 0.0
        %5117 = vmatpush1.msra.mxu0 0.0
        %5118 = vmatprep.subr.mxu0 0.0
        %5119 = vmatpush1.msra.mxu0 0.0
        %5120 = vmatprep.subr.mxu0 0.0
        %5121 = vmatpush1.msra.mxu0 0.0
        %5122 = vmatprep.subr.mxu0 0.0
        %5123 = vmatpush1.msra.mxu0 0.0
        %5124 = vmatprep.subr.mxu0 0.0
        %5125 = vmatpush1.msra.mxu0 0.0
        %5126 = vmatprep.subr.mxu0 0.0
        %5127 = vmatpush1.msra.mxu0 0.0
        %5128 = vmatprep.subr.mxu0 0.0
        %5129 = vmatpush1.msra.mxu0 0.0
        %5130 = vmatprep.subr.mxu0 0.0
        %5131 = vmatpush1.msra.mxu0 0.0
        %5132 = vmatprep.subr.mxu0 0.0
        %5133 = vmatpush1.msra.mxu0 0.0
        %5134 = vmatprep.subr.mxu0 0.0
        %5135 = vmatpush1.msra.mxu0 0.0
        %5136 = vmatprep.subr.mxu0 0.0
        %5137 = vmatpush1.msra.mxu0 0.0
        %5138 = vmatprep.subr.mxu0 0.0
        %5139 = vmatpush1.msra.mxu0 0.0
        %5140 = vmatprep.subr.mxu0 0.0
        %5141 = vmatpush1.msra.mxu0 0.0
        %5142 = vmatprep.mubr.f32.mxu0 0.0
        %5143 = vmatmul.mubr.f32.gmra.mrb[0].mxu0 %v5056
        %v5144 = vpop.f32.mrb[0].mxu0
        %v5145 = vadd.f32 0.0, %v5144
        %v5146 = vpop.f32.mrb[0].mxu0
        %5147 = vmatprep.mubr.f32.mxu0 0.0
        %5148 = vmatmul.mubr.f32.gmra.mrb[0].mxu0 %v5057
        %v5149 = vpop.f32.mrb[0].mxu0
        %v5150 = vadd.f32 0.0, %v5149
        %v5151 = vpop.f32.mrb[0].mxu0
        %5152 = vmatprep.mubr.f32.mxu0 0.0
        %5153 = vmatmul.mubr.f32.gmra.mrb[0].mxu0 %v5058
        %v5154 = vpop.f32.mrb[0].mxu0
        %v5155 = vadd.f32 0.0, %v5154
        %v5156 = vpop.f32.mrb[0].mxu0
        %5157 = vmatprep.mubr.f32.mxu0 0.0
        %5158 = vmatmul.mubr.f32.gmra.mrb[0].mxu0 %v5059
        %v5159 = vpop.f32.mrb[0].mxu0
        %v5160 = vadd.f32 0.0, %v5159
        %v5161 = vpop.f32.mrb[0].mxu0
        %5162 = vmatprep.mubr.f32.mxu0 0.0
        %5163 = vmatmul.mubr.f32.gmra.mrb[0].mxu0 %v5060
        %v5164 = vpop.f32.mrb[0].mxu0
        %v5165 = vadd.f32 0.0, %v5164
        %v5166 = vpop.f32.mrb[0].mxu0
        %5167 = vdwg.mxu0
        %v5168 = vadd.f32 %v5051, %v5145
        %v5169 = vadd.f32 %v5052, %v5150
        %v5170 = vadd.f32 %v5053, %v5155
        %v5171 = vadd.f32 %v5054, %v5160
        %v5172 = vadd.f32 %v5055, %v5165
        %v5173 = vld [vmem:[#allocation3 + $0xe] sm:$0xff]
        %v5174 = vld [vmem:[#allocation3 + $0x16] sm:$0xff]
        %v5175 = vld [vmem:[#allocation3 + $0x1e] sm:$0xff]
        %v5176 = vld [vmem:[#allocation3 + $0x26] sm:$0xff]
        %v5177 = vld [vmem:[#allocation3 + $0x2e] sm:$0xf]
        %s5178 = scalar_lea.vmem [#allocation9], 1024
        %v5179 = vld [vmem:[%s5178] sm:$0xff]
        %v5180 = vld [vmem:[%s5178 + $0x8] sm:$0xff]
        %v5181 = vld [vmem:[%s5178 + $0x10] sm:$0xff]
        %v5182 = vld [vmem:[%s5178 + $0x18] sm:$0xff]
        %v5183 = vld [vmem:[%s5178 + $0x20] sm:$0xff]
        %v5184 = vld [vmem:[%s5178 + $0x28] sm:$0xff]
        %v5185 = vld [vmem:[%s5178 + $0x30] sm:$0xff]
        %v5186 = vld [vmem:[%s5178 + $0x38] sm:$0xff]
        %v5187 = vld [vmem:[%s5178 + $0x40] sm:$0xff]
        %v5188 = vld [vmem:[%s5178 + $0x48] sm:$0xff]
        %v5189 = vld [vmem:[%s5178 + $0x50] sm:$0xff]
        %v5190 = vld [vmem:[%s5178 + $0x58] sm:$0xff]
        %v5191 = vld [vmem:[%s5178 + $0x60] sm:$0xff]
        %v5192 = vld [vmem:[%s5178 + $0x68] sm:$0xff]
        %v5193 = vld [vmem:[%s5178 + $0x70] sm:$0xff]
        %v5194 = vld [vmem:[%s5178 + $0x78] sm:$0xff]
        %5195 = vmatprep.subr.mxu0 0.0
        %5196 = vmatpush1.msra.mxu0 %v5179
        %5197 = vmatprep.subr.mxu0 0.0
        %5198 = vmatpush1.msra.mxu0 %v5180
        %5199 = vmatprep.subr.mxu0 0.0
        %5200 = vmatpush1.msra.mxu0 %v5181
        %5201 = vmatprep.subr.mxu0 0.0
        %5202 = vmatpush1.msra.mxu0 %v5182
        %5203 = vmatprep.subr.mxu0 0.0
        %5204 = vmatpush1.msra.mxu0 %v5183
        %5205 = vmatprep.subr.mxu0 0.0
        %5206 = vmatpush1.msra.mxu0 %v5184
        %5207 = vmatprep.subr.mxu0 0.0
        %5208 = vmatpush1.msra.mxu0 %v5185
        %5209 = vmatprep.subr.mxu0 0.0
        %5210 = vmatpush1.msra.mxu0 %v5186
        %5211 = vmatprep.subr.mxu0 0.0
        %5212 = vmatpush1.msra.mxu0 %v5187
        %5213 = vmatprep.subr.mxu0 0.0
        %5214 = vmatpush1.msra.mxu0 %v5188
        %5215 = vmatprep.subr.mxu0 0.0
        %5216 = vmatpush1.msra.mxu0 %v5189
        %5217 = vmatprep.subr.mxu0 0.0
        %5218 = vmatpush1.msra.mxu0 %v5190
        %5219 = vmatprep.subr.mxu0 0.0
        %5220 = vmatpush1.msra.mxu0 %v5191
        %5221 = vmatprep.subr.mxu0 0.0
        %5222 = vmatpush1.msra.mxu0 %v5192
        %5223 = vmatprep.subr.mxu0 0.0
        %5224 = vmatpush1.msra.mxu0 %v5193
        %5225 = vmatprep.subr.mxu0 0.0
        %5226 = vmatpush1.msra.mxu0 %v5194
        %5227 = vmatprep.subr.mxu0 0.0
        %5228 = vmatpush1.msra.mxu0 0.0
        %5229 = vmatprep.subr.mxu0 0.0
        %5230 = vmatpush1.msra.mxu0 0.0
        %5231 = vmatprep.subr.mxu0 0.0
        %5232 = vmatpush1.msra.mxu0 0.0
        %5233 = vmatprep.subr.mxu0 0.0
        %5234 = vmatpush1.msra.mxu0 0.0
        %5235 = vmatprep.subr.mxu0 0.0
        %5236 = vmatpush1.msra.mxu0 0.0
        %5237 = vmatprep.subr.mxu0 0.0
        %5238 = vmatpush1.msra.mxu0 0.0
        %5239 = vmatprep.subr.mxu0 0.0
        %5240 = vmatpush1.msra.mxu0 0.0
        %5241 = vmatprep.subr.mxu0 0.0
        %5242 = vmatpush1.msra.mxu0 0.0
        %5243 = vmatprep.subr.mxu0 0.0
        %5244 = vmatpush1.msra.mxu0 0.0
        %5245 = vmatprep.subr.mxu0 0.0
        %5246 = vmatpush1.msra.mxu0 0.0
        %5247 = vmatprep.subr.mxu0 0.0
        %5248 = vmatpush1.msra.mxu0 0.0
        %5249 = vmatprep.subr.mxu0 0.0
        %5250 = vmatpush1.msra.mxu0 0.0
        %5251 = vmatprep.subr.mxu0 0.0
        %5252 = vmatpush1.msra.mxu0 0.0
        %5253 = vmatprep.subr.mxu0 0.0
        %5254 = vmatpush1.msra.mxu0 0.0
        %5255 = vmatprep.subr.mxu0 0.0
        %5256 = vmatpush1.msra.mxu0 0.0
        %5257 = vmatprep.subr.mxu0 0.0
        %5258 = vmatpush1.msra.mxu0 0.0
        %5259 = vmatprep.mubr.f32.mxu0 0.0
        %5260 = vmatmul.mubr.f32.gmra.mrb[0].mxu0 %v5173
        %v5261 = vpop.f32.mrb[0].mxu0
        %v5262 = vadd.f32 0.0, %v5261
        %v5263 = vpop.f32.mrb[0].mxu0
        %5264 = vmatprep.mubr.f32.mxu0 0.0
        %5265 = vmatmul.mubr.f32.gmra.mrb[0].mxu0 %v5174
        %v5266 = vpop.f32.mrb[0].mxu0
        %v5267 = vadd.f32 0.0, %v5266
        %v5268 = vpop.f32.mrb[0].mxu0
        %5269 = vmatprep.mubr.f32.mxu0 0.0
        %5270 = vmatmul.mubr.f32.gmra.mrb[0].mxu0 %v5175
        %v5271 = vpop.f32.mrb[0].mxu0
        %v5272 = vadd.f32 0.0, %v5271
        %v5273 = vpop.f32.mrb[0].mxu0
        %5274 = vmatprep.mubr.f32.mxu0 0.0
        %5275 = vmatmul.mubr.f32.gmra.mrb[0].mxu0 %v5176
        %v5276 = vpop.f32.mrb[0].mxu0
        %v5277 = vadd.f32 0.0, %v5276
        %v5278 = vpop.f32.mrb[0].mxu0
        %5279 = vmatprep.mubr.f32.mxu0 0.0
        %5280 = vmatmul.mubr.f32.gmra.mrb[0].mxu0 %v5177
        %v5281 = vpop.f32.mrb[0].mxu0
        %v5282 = vadd.f32 0.0, %v5281
        %v5283 = vpop.f32.mrb[0].mxu0
        %5284 = vdwg.mxu0
        %v5285 = vadd.f32 %v5168, %v5262
        %v5286 = vadd.f32 %v5169, %v5267
        %v5287 = vadd.f32 %v5170, %v5272
        %v5288 = vadd.f32 %v5171, %v5277
        %v5289 = vadd.f32 %v5172, %v5282
        %v5290 = vld [vmem:[%s8] sm:$0x1]
        %v5292 = vlaneseq
        %v5293 = vshrl.u32 %v5292, 7
        %v5294 = vsub.s32 0, %v5293
        %v5295 = vrot.slane %v5290, %v5294
        %v5297 = vadd.f32 %v5285, %v5295
        %v5298 = vadd.f32 %v5286, %v5295
        %v5299 = vadd.f32 %v5287, %v5295
        %v5300 = vadd.f32 %v5288, %v5295
        %v5301 = vadd.f32 %v5289, %v5295
        %v5302 = vmax.f32 %v5297, 0.0
        %v5303 = vmax.f32 %v5298, 0.0
        %v5304 = vmax.f32 %v5299, 0.0
        %v5305 = vmax.f32 %v5300, 0.0
        %v5306 = vmax.f32 %v5301, 0.0
        %v5307 = vmul.f32 %v5302, %v3174
        %v5308 = vmul.f32 %v5303, %v3175
        %v5309 = vmul.f32 %v5304, %v3176
        %v5310 = vmul.f32 %v5305, %v3177
        %v5311 = vmul.f32 %v5306, %v3178
        %5312 = vst [vmem:[#allocation3 + $0x7] sm:$0xff] %v5307
        %5313 = vst [vmem:[#allocation3 + $0xf] sm:$0xff] %v5308
        %5314 = vst [vmem:[#allocation3 + $0x17] sm:$0xff] %v5309
        %5315 = vst [vmem:[#allocation3 + $0x1f] sm:$0xff] %v5310
        %5316 = vst [vmem:[#allocation3 + $0x27] sm:$0xf] %v5311
        %v5317 = vld [vmem:[#allocation3] sm:$0xff]
        %v5318 = vld [vmem:[#allocation3 + $0x8] sm:$0xff]
        %v5319 = vld [vmem:[#allocation3 + $0x10] sm:$0xff]
        %v5320 = vld [vmem:[#allocation3 + $0x18] sm:$0xff]
        %v5321 = vld [vmem:[#allocation3 + $0x20] sm:$0xf]
        %v5322 = vld [vmem:[#allocation10] sm:$0xff]
        %v5323 = vld [vmem:[#allocation10 + $0x8] sm:$0xff]
        %v5324 = vld [vmem:[#allocation10 + $0x10] sm:$0xff]
        %v5325 = vld [vmem:[#allocation10 + $0x18] sm:$0xff]
        %v5326 = vld [vmem:[#allocation10 + $0x20] sm:$0xff]
        %v5327 = vld [vmem:[#allocation10 + $0x28] sm:$0xff]
        %v5328 = vld [vmem:[#allocation10 + $0x30] sm:$0xff]
        %v5329 = vld [vmem:[#allocation10 + $0x38] sm:$0xff]
        %v5330 = vld [vmem:[#allocation10 + $0x40] sm:$0xff]
        %v5331 = vld [vmem:[#allocation10 + $0x48] sm:$0xff]
        %v5332 = vld [vmem:[#allocation10 + $0x50] sm:$0xff]
        %v5333 = vld [vmem:[#allocation10 + $0x58] sm:$0xff]
        %v5334 = vld [vmem:[#allocation10 + $0x60] sm:$0xff]
        %v5335 = vld [vmem:[#allocation10 + $0x68] sm:$0xff]
        %v5336 = vld [vmem:[#allocation10 + $0x70] sm:$0xff]
        %v5337 = vld [vmem:[#allocation10 + $0x78] sm:$0xff]
        %v5338 = vld [vmem:[#allocation3 + $0x1] sm:$0xff]
        %v5339 = vld [vmem:[#allocation3 + $0x9] sm:$0xff]
        %v5340 = vld [vmem:[#allocation3 + $0x11] sm:$0xff]
        %v5341 = vld [vmem:[#allocation3 + $0x19] sm:$0xff]
        %v5342 = vld [vmem:[#allocation3 + $0x21] sm:$0xf]
        %s5343 = scalar_lea.vmem [#allocation10], 128
        %v5344 = vld [vmem:[%s5343] sm:$0xff]
        %v5345 = vld [vmem:[%s5343 + $0x8] sm:$0xff]
        %v5346 = vld [vmem:[%s5343 + $0x10] sm:$0xff]
        %v5347 = vld [vmem:[%s5343 + $0x18] sm:$0xff]
        %v5348 = vld [vmem:[%s5343 + $0x20] sm:$0xff]
        %v5349 = vld [vmem:[%s5343 + $0x28] sm:$0xff]
        %v5350 = vld [vmem:[%s5343 + $0x30] sm:$0xff]
        %v5351 = vld [vmem:[%s5343 + $0x38] sm:$0xff]
        %v5352 = vld [vmem:[%s5343 + $0x40] sm:$0xff]
        %v5353 = vld [vmem:[%s5343 + $0x48] sm:$0xff]
        %v5354 = vld [vmem:[%s5343 + $0x50] sm:$0xff]
        %v5355 = vld [vmem:[%s5343 + $0x58] sm:$0xff]
        %v5356 = vld [vmem:[%s5343 + $0x60] sm:$0xff]
        %v5357 = vld [vmem:[%s5343 + $0x68] sm:$0xff]
        %v5358 = vld [vmem:[%s5343 + $0x70] sm:$0xff]
        %v5359 = vld [vmem:[%s5343 + $0x78] sm:$0xff]
        %5360 = vmatprep.subr.mxu0 0.0
        %5361 = vmatpush1.msra.mxu0 %v5344
        %5362 = vmatprep.subr.mxu0 0.0
        %5363 = vmatpush1.msra.mxu0 %v5345
        %5364 = vmatprep.subr.mxu0 0.0
        %5365 = vmatpush1.msra.mxu0 %v5346
        %5366 = vmatprep.subr.mxu0 0.0
        %5367 = vmatpush1.msra.mxu0 %v5347
        %5368 = vmatprep.subr.mxu0 0.0
        %5369 = vmatpush1.msra.mxu0 %v5348
        %5370 = vmatprep.subr.mxu0 0.0
        %5371 = vmatpush1.msra.mxu0 %v5349
        %5372 = vmatprep.subr.mxu0 0.0
        %5373 = vmatpush1.msra.mxu0 %v5350
        %5374 = vmatprep.subr.mxu0 0.0
        %5375 = vmatpush1.msra.mxu0 %v5351
        %5376 = vmatprep.subr.mxu0 0.0
        %5377 = vmatpush1.msra.mxu0 %v5352
        %5378 = vmatprep.subr.mxu0 0.0
        %5379 = vmatpush1.msra.mxu0 %v5353
        %5380 = vmatprep.subr.mxu0 0.0
        %5381 = vmatpush1.msra.mxu0 %v5354
        %5382 = vmatprep.subr.mxu0 0.0
        %5383 = vmatpush1.msra.mxu0 %v5355
        %5384 = vmatprep.subr.mxu0 0.0
        %5385 = vmatpush1.msra.mxu0 %v5356
        %5386 = vmatprep.subr.mxu0 0.0
        %5387 = vmatpush1.msra.mxu0 %v5357
        %5388 = vmatprep.subr.mxu0 0.0
        %5389 = vmatpush1.msra.mxu0 %v5358
        %5390 = vmatprep.subr.mxu0 0.0
        %5391 = vmatpush1.msra.mxu0 %v5359
        %5392 = vmatprep.subr.mxu0 0.0
        %5393 = vmatpush1.msra.mxu0 0.0
        %5394 = vmatprep.subr.mxu0 0.0
        %5395 = vmatpush1.msra.mxu0 0.0
        %5396 = vmatprep.subr.mxu0 0.0
        %5397 = vmatpush1.msra.mxu0 0.0
        %5398 = vmatprep.subr.mxu0 0.0
        %5399 = vmatpush1.msra.mxu0 0.0
        %5400 = vmatprep.subr.mxu0 0.0
        %5401 = vmatpush1.msra.mxu0 0.0
        %5402 = vmatprep.subr.mxu0 0.0
        %5403 = vmatpush1.msra.mxu0 0.0
        %5404 = vmatprep.subr.mxu0 0.0
        %5405 = vmatpush1.msra.mxu0 0.0
        %5406 = vmatprep.subr.mxu0 0.0
        %5407 = vmatpush1.msra.mxu0 0.0
        %5408 = vmatprep.subr.mxu0 0.0
        %5409 = vmatpush1.msra.mxu0 0.0
        %5410 = vmatprep.subr.mxu0 0.0
        %5411 = vmatpush1.msra.mxu0 0.0
        %5412 = vmatprep.subr.mxu0 0.0
        %5413 = vmatpush1.msra.mxu0 0.0
        %5414 = vmatprep.subr.mxu0 0.0
        %5415 = vmatpush1.msra.mxu0 0.0
        %5416 = vmatprep.subr.mxu0 0.0
        %5417 = vmatpush1.msra.mxu0 0.0
        %5418 = vmatprep.subr.mxu0 0.0
        %5419 = vmatpush1.msra.mxu0 0.0
        %5420 = vmatprep.subr.mxu0 0.0
        %5421 = vmatpush1.msra.mxu0 0.0
        %5422 = vmatprep.subr.mxu0 0.0
        %5423 = vmatpush1.msra.mxu0 0.0
        %5424 = vmatprep.mubr.f32.mxu0 0.0
        %5425 = vmatmul.mubr.f32.gmra.mrb[0].mxu0 %v5338
        %v5426 = vpop.f32.mrb[0].mxu0
        %v5427 = vadd.f32 0.0, %v5426
        %v5428 = vpop.f32.mrb[0].mxu0
        %5429 = vmatprep.mubr.f32.mxu0 0.0
        %5430 = vmatmul.mubr.f32.gmra.mrb[0].mxu0 %v5339
        %v5431 = vpop.f32.mrb[0].mxu0
        %v5432 = vadd.f32 0.0, %v5431
        %v5433 = vpop.f32.mrb[0].mxu0
        %5434 = vmatprep.mubr.f32.mxu0 0.0
        %5435 = vmatmul.mubr.f32.gmra.mrb[0].mxu0 %v5340
        %v5436 = vpop.f32.mrb[0].mxu0
        %v5437 = vadd.f32 0.0, %v5436
        %v5438 = vpop.f32.mrb[0].mxu0
        %5439 = vmatprep.mubr.f32.mxu0 0.0
        %5440 = vmatmul.mubr.f32.gmra.mrb[0].mxu0 %v5341
        %v5441 = vpop.f32.mrb[0].mxu0
        %v5442 = vadd.f32 0.0, %v5441
        %v5443 = vpop.f32.mrb[0].mxu0
        %5444 = vmatprep.mubr.f32.mxu0 0.0
        %5445 = vmatmul.mubr.f32.gmra.mrb[0].mxu0 %v5342
        %v5446 = vpop.f32.mrb[0].mxu0
        %v5447 = vadd.f32 0.0, %v5446
        %v5448 = vpop.f32.mrb[0].mxu0
        %5449 = vdwg.mxu0
        %5450 = vmatprep.subr.mxu0 0.0
        %5451 = vmatpush1.msra.mxu0 %v5322
        %5452 = vmatprep.subr.mxu0 0.0
        %5453 = vmatpush1.msra.mxu0 %v5323
        %5454 = vmatprep.subr.mxu0 0.0
        %5455 = vmatpush1.msra.mxu0 %v5324
        %5456 = vmatprep.subr.mxu0 0.0
        %5457 = vmatpush1.msra.mxu0 %v5325
        %5458 = vmatprep.subr.mxu0 0.0
        %5459 = vmatpush1.msra.mxu0 %v5326
        %5460 = vmatprep.subr.mxu0 0.0
        %5461 = vmatpush1.msra.mxu0 %v5327
        %5462 = vmatprep.subr.mxu0 0.0
        %5463 = vmatpush1.msra.mxu0 %v5328
        %5464 = vmatprep.subr.mxu0 0.0
        %5465 = vmatpush1.msra.mxu0 %v5329
        %5466 = vmatprep.subr.mxu0 0.0
        %5467 = vmatpush1.msra.mxu0 %v5330
        %5468 = vmatprep.subr.mxu0 0.0
        %5469 = vmatpush1.msra.mxu0 %v5331
        %5470 = vmatprep.subr.mxu0 0.0
        %5471 = vmatpush1.msra.mxu0 %v5332
        %5472 = vmatprep.subr.mxu0 0.0
        %5473 = vmatpush1.msra.mxu0 %v5333
        %5474 = vmatprep.subr.mxu0 0.0
        %5475 = vmatpush1.msra.mxu0 %v5334
        %5476 = vmatprep.subr.mxu0 0.0
        %5477 = vmatpush1.msra.mxu0 %v5335
        %5478 = vmatprep.subr.mxu0 0.0
        %5479 = vmatpush1.msra.mxu0 %v5336
        %5480 = vmatprep.subr.mxu0 0.0
        %5481 = vmatpush1.msra.mxu0 %v5337
        %5482 = vmatprep.subr.mxu0 0.0
        %5483 = vmatpush1.msra.mxu0 0.0
        %5484 = vmatprep.subr.mxu0 0.0
        %5485 = vmatpush1.msra.mxu0 0.0
        %5486 = vmatprep.subr.mxu0 0.0
        %5487 = vmatpush1.msra.mxu0 0.0
        %5488 = vmatprep.subr.mxu0 0.0
        %5489 = vmatpush1.msra.mxu0 0.0
        %5490 = vmatprep.subr.mxu0 0.0
        %5491 = vmatpush1.msra.mxu0 0.0
        %5492 = vmatprep.subr.mxu0 0.0
        %5493 = vmatpush1.msra.mxu0 0.0
        %5494 = vmatprep.subr.mxu0 0.0
        %5495 = vmatpush1.msra.mxu0 0.0
        %5496 = vmatprep.subr.mxu0 0.0
        %5497 = vmatpush1.msra.mxu0 0.0
        %5498 = vmatprep.subr.mxu0 0.0
        %5499 = vmatpush1.msra.mxu0 0.0
        %5500 = vmatprep.subr.mxu0 0.0
        %5501 = vmatpush1.msra.mxu0 0.0
        %5502 = vmatprep.subr.mxu0 0.0
        %5503 = vmatpush1.msra.mxu0 0.0
        %5504 = vmatprep.subr.mxu0 0.0
        %5505 = vmatpush1.msra.mxu0 0.0
        %5506 = vmatprep.subr.mxu0 0.0
        %5507 = vmatpush1.msra.mxu0 0.0
        %5508 = vmatprep.subr.mxu0 0.0
        %5509 = vmatpush1.msra.mxu0 0.0
        %5510 = vmatprep.subr.mxu0 0.0
        %5511 = vmatpush1.msra.mxu0 0.0
        %5512 = vmatprep.subr.mxu0 0.0
        %5513 = vmatpush1.msra.mxu0 0.0
        %5514 = vmatprep.mubr.f32.mxu0 0.0
        %5515 = vmatmul.mubr.f32.gmra.mrb[0].mxu0 %v5317
        %v5516 = vpop.f32.mrb[0].mxu0
        %v5517 = vadd.f32 %v5427, %v5516
        %v5518 = vpop.f32.mrb[0].mxu0
        %5519 = vmatprep.mubr.f32.mxu0 0.0
        %5520 = vmatmul.mubr.f32.gmra.mrb[0].mxu0 %v5318
        %v5521 = vpop.f32.mrb[0].mxu0
        %v5522 = vadd.f32 %v5432, %v5521
        %v5523 = vpop.f32.mrb[0].mxu0
        %5524 = vmatprep.mubr.f32.mxu0 0.0
        %5525 = vmatmul.mubr.f32.gmra.mrb[0].mxu0 %v5319
        %v5526 = vpop.f32.mrb[0].mxu0
        %v5527 = vadd.f32 %v5437, %v5526
        %v5528 = vpop.f32.mrb[0].mxu0
        %5529 = vmatprep.mubr.f32.mxu0 0.0
        %5530 = vmatmul.mubr.f32.gmra.mrb[0].mxu0 %v5320
        %v5531 = vpop.f32.mrb[0].mxu0
        %v5532 = vadd.f32 %v5442, %v5531
        %v5533 = vpop.f32.mrb[0].mxu0
        %5534 = vmatprep.mubr.f32.mxu0 0.0
        %5535 = vmatmul.mubr.f32.gmra.mrb[0].mxu0 %v5321
        %v5536 = vpop.f32.mrb[0].mxu0
        %v5537 = vadd.f32 %v5447, %v5536
        %v5538 = vpop.f32.mrb[0].mxu0
        %5539 = vdwg.mxu0
        %v5540 = vld [vmem:[#allocation3 + $0x2] sm:$0xff]
        %v5541 = vld [vmem:[#allocation3 + $0xa] sm:$0xff]
        %v5542 = vld [vmem:[#allocation3 + $0x12] sm:$0xff]
        %v5543 = vld [vmem:[#allocation3 + $0x1a] sm:$0xff]
        %v5544 = vld [vmem:[#allocation3 + $0x22] sm:$0xf]
        %s5545 = scalar_lea.vmem [#allocation10], 256
        %v5546 = vld [vmem:[%s5545] sm:$0xff]
        %v5547 = vld [vmem:[%s5545 + $0x8] sm:$0xff]
        %v5548 = vld [vmem:[%s5545 + $0x10] sm:$0xff]
        %v5549 = vld [vmem:[%s5545 + $0x18] sm:$0xff]
        %v5550 = vld [vmem:[%s5545 + $0x20] sm:$0xff]
        %v5551 = vld [vmem:[%s5545 + $0x28] sm:$0xff]
        %v5552 = vld [vmem:[%s5545 + $0x30] sm:$0xff]
        %v5553 = vld [vmem:[%s5545 + $0x38] sm:$0xff]
        %v5554 = vld [vmem:[%s5545 + $0x40] sm:$0xff]
        %v5555 = vld [vmem:[%s5545 + $0x48] sm:$0xff]
        %v5556 = vld [vmem:[%s5545 + $0x50] sm:$0xff]
        %v5557 = vld [vmem:[%s5545 + $0x58] sm:$0xff]
        %v5558 = vld [vmem:[%s5545 + $0x60] sm:$0xff]
        %v5559 = vld [vmem:[%s5545 + $0x68] sm:$0xff]
        %v5560 = vld [vmem:[%s5545 + $0x70] sm:$0xff]
        %v5561 = vld [vmem:[%s5545 + $0x78] sm:$0xff]
        %5562 = vmatprep.subr.mxu0 0.0
        %5563 = vmatpush1.msra.mxu0 %v5546
        %5564 = vmatprep.subr.mxu0 0.0
        %5565 = vmatpush1.msra.mxu0 %v5547
        %5566 = vmatprep.subr.mxu0 0.0
        %5567 = vmatpush1.msra.mxu0 %v5548
        %5568 = vmatprep.subr.mxu0 0.0
        %5569 = vmatpush1.msra.mxu0 %v5549
        %5570 = vmatprep.subr.mxu0 0.0
        %5571 = vmatpush1.msra.mxu0 %v5550
        %5572 = vmatprep.subr.mxu0 0.0
        %5573 = vmatpush1.msra.mxu0 %v5551
        %5574 = vmatprep.subr.mxu0 0.0
        %5575 = vmatpush1.msra.mxu0 %v5552
        %5576 = vmatprep.subr.mxu0 0.0
        %5577 = vmatpush1.msra.mxu0 %v5553
        %5578 = vmatprep.subr.mxu0 0.0
        %5579 = vmatpush1.msra.mxu0 %v5554
        %5580 = vmatprep.subr.mxu0 0.0
        %5581 = vmatpush1.msra.mxu0 %v5555
        %5582 = vmatprep.subr.mxu0 0.0
        %5583 = vmatpush1.msra.mxu0 %v5556
        %5584 = vmatprep.subr.mxu0 0.0
        %5585 = vmatpush1.msra.mxu0 %v5557
        %5586 = vmatprep.subr.mxu0 0.0
        %5587 = vmatpush1.msra.mxu0 %v5558
        %5588 = vmatprep.subr.mxu0 0.0
        %5589 = vmatpush1.msra.mxu0 %v5559
        %5590 = vmatprep.subr.mxu0 0.0
        %5591 = vmatpush1.msra.mxu0 %v5560
        %5592 = vmatprep.subr.mxu0 0.0
        %5593 = vmatpush1.msra.mxu0 %v5561
        %5594 = vmatprep.subr.mxu0 0.0
        %5595 = vmatpush1.msra.mxu0 0.0
        %5596 = vmatprep.subr.mxu0 0.0
        %5597 = vmatpush1.msra.mxu0 0.0
        %5598 = vmatprep.subr.mxu0 0.0
        %5599 = vmatpush1.msra.mxu0 0.0
        %5600 = vmatprep.subr.mxu0 0.0
        %5601 = vmatpush1.msra.mxu0 0.0
        %5602 = vmatprep.subr.mxu0 0.0
        %5603 = vmatpush1.msra.mxu0 0.0
        %5604 = vmatprep.subr.mxu0 0.0
        %5605 = vmatpush1.msra.mxu0 0.0
        %5606 = vmatprep.subr.mxu0 0.0
        %5607 = vmatpush1.msra.mxu0 0.0
        %5608 = vmatprep.subr.mxu0 0.0
        %5609 = vmatpush1.msra.mxu0 0.0
        %5610 = vmatprep.subr.mxu0 0.0
        %5611 = vmatpush1.msra.mxu0 0.0
        %5612 = vmatprep.subr.mxu0 0.0
        %5613 = vmatpush1.msra.mxu0 0.0
        %5614 = vmatprep.subr.mxu0 0.0
        %5615 = vmatpush1.msra.mxu0 0.0
        %5616 = vmatprep.subr.mxu0 0.0
        %5617 = vmatpush1.msra.mxu0 0.0
        %5618 = vmatprep.subr.mxu0 0.0
        %5619 = vmatpush1.msra.mxu0 0.0
        %5620 = vmatprep.subr.mxu0 0.0
        %5621 = vmatpush1.msra.mxu0 0.0
        %5622 = vmatprep.subr.mxu0 0.0
        %5623 = vmatpush1.msra.mxu0 0.0
        %5624 = vmatprep.subr.mxu0 0.0
        %5625 = vmatpush1.msra.mxu0 0.0
        %5626 = vmatprep.mubr.f32.mxu0 0.0
        %5627 = vmatmul.mubr.f32.gmra.mrb[0].mxu0 %v5540
        %v5628 = vpop.f32.mrb[0].mxu0
        %v5629 = vadd.f32 0.0, %v5628
        %v5630 = vpop.f32.mrb[0].mxu0
        %5631 = vmatprep.mubr.f32.mxu0 0.0
        %5632 = vmatmul.mubr.f32.gmra.mrb[0].mxu0 %v5541
        %v5633 = vpop.f32.mrb[0].mxu0
        %v5634 = vadd.f32 0.0, %v5633
        %v5635 = vpop.f32.mrb[0].mxu0
        %5636 = vmatprep.mubr.f32.mxu0 0.0
        %5637 = vmatmul.mubr.f32.gmra.mrb[0].mxu0 %v5542
        %v5638 = vpop.f32.mrb[0].mxu0
        %v5639 = vadd.f32 0.0, %v5638
        %v5640 = vpop.f32.mrb[0].mxu0
        %5641 = vmatprep.mubr.f32.mxu0 0.0
        %5642 = vmatmul.mubr.f32.gmra.mrb[0].mxu0 %v5543
        %v5643 = vpop.f32.mrb[0].mxu0
        %v5644 = vadd.f32 0.0, %v5643
        %v5645 = vpop.f32.mrb[0].mxu0
        %5646 = vmatprep.mubr.f32.mxu0 0.0
        %5647 = vmatmul.mubr.f32.gmra.mrb[0].mxu0 %v5544
        %v5648 = vpop.f32.mrb[0].mxu0
        %v5649 = vadd.f32 0.0, %v5648
        %v5650 = vpop.f32.mrb[0].mxu0
        %5651 = vdwg.mxu0
        %v5652 = vadd.f32 %v5517, %v5629
        %v5653 = vadd.f32 %v5522, %v5634
        %v5654 = vadd.f32 %v5527, %v5639
        %v5655 = vadd.f32 %v5532, %v5644
        %v5656 = vadd.f32 %v5537, %v5649
        %v5657 = vld [vmem:[#allocation3 + $0x6] sm:$0xff]
        %v5658 = vld [vmem:[#allocation3 + $0xe] sm:$0xff]
        %v5659 = vld [vmem:[#allocation3 + $0x16] sm:$0xff]
        %v5660 = vld [vmem:[#allocation3 + $0x1e] sm:$0xff]
        %v5661 = vld [vmem:[#allocation3 + $0x26] sm:$0xf]
        %s5662 = scalar_lea.vmem [#allocation10], 384
        %v5663 = vld [vmem:[%s5662] sm:$0xff]
        %v5664 = vld [vmem:[%s5662 + $0x8] sm:$0xff]
        %v5665 = vld [vmem:[%s5662 + $0x10] sm:$0xff]
        %v5666 = vld [vmem:[%s5662 + $0x18] sm:$0xff]
        %v5667 = vld [vmem:[%s5662 + $0x20] sm:$0xff]
        %v5668 = vld [vmem:[%s5662 + $0x28] sm:$0xff]
        %v5669 = vld [vmem:[%s5662 + $0x30] sm:$0xff]
        %v5670 = vld [vmem:[%s5662 + $0x38] sm:$0xff]
        %v5671 = vld [vmem:[%s5662 + $0x40] sm:$0xff]
        %v5672 = vld [vmem:[%s5662 + $0x48] sm:$0xff]
        %v5673 = vld [vmem:[%s5662 + $0x50] sm:$0xff]
        %v5674 = vld [vmem:[%s5662 + $0x58] sm:$0xff]
        %v5675 = vld [vmem:[%s5662 + $0x60] sm:$0xff]
        %v5676 = vld [vmem:[%s5662 + $0x68] sm:$0xff]
        %v5677 = vld [vmem:[%s5662 + $0x70] sm:$0xff]
        %v5678 = vld [vmem:[%s5662 + $0x78] sm:$0xff]
        %5679 = vmatprep.subr.mxu0 0.0
        %5680 = vmatpush1.msra.mxu0 %v5663
        %5681 = vmatprep.subr.mxu0 0.0
        %5682 = vmatpush1.msra.mxu0 %v5664
        %5683 = vmatprep.subr.mxu0 0.0
        %5684 = vmatpush1.msra.mxu0 %v5665
        %5685 = vmatprep.subr.mxu0 0.0
        %5686 = vmatpush1.msra.mxu0 %v5666
        %5687 = vmatprep.subr.mxu0 0.0
        %5688 = vmatpush1.msra.mxu0 %v5667
        %5689 = vmatprep.subr.mxu0 0.0
        %5690 = vmatpush1.msra.mxu0 %v5668
        %5691 = vmatprep.subr.mxu0 0.0
        %5692 = vmatpush1.msra.mxu0 %v5669
        %5693 = vmatprep.subr.mxu0 0.0
        %5694 = vmatpush1.msra.mxu0 %v5670
        %5695 = vmatprep.subr.mxu0 0.0
        %5696 = vmatpush1.msra.mxu0 %v5671
        %5697 = vmatprep.subr.mxu0 0.0
        %5698 = vmatpush1.msra.mxu0 %v5672
        %5699 = vmatprep.subr.mxu0 0.0
        %5700 = vmatpush1.msra.mxu0 %v5673
        %5701 = vmatprep.subr.mxu0 0.0
        %5702 = vmatpush1.msra.mxu0 %v5674
        %5703 = vmatprep.subr.mxu0 0.0
        %5704 = vmatpush1.msra.mxu0 %v5675
        %5705 = vmatprep.subr.mxu0 0.0
        %5706 = vmatpush1.msra.mxu0 %v5676
        %5707 = vmatprep.subr.mxu0 0.0
        %5708 = vmatpush1.msra.mxu0 %v5677
        %5709 = vmatprep.subr.mxu0 0.0
        %5710 = vmatpush1.msra.mxu0 %v5678
        %5711 = vmatprep.subr.mxu0 0.0
        %5712 = vmatpush1.msra.mxu0 0.0
        %5713 = vmatprep.subr.mxu0 0.0
        %5714 = vmatpush1.msra.mxu0 0.0
        %5715 = vmatprep.subr.mxu0 0.0
        %5716 = vmatpush1.msra.mxu0 0.0
        %5717 = vmatprep.subr.mxu0 0.0
        %5718 = vmatpush1.msra.mxu0 0.0
        %5719 = vmatprep.subr.mxu0 0.0
        %5720 = vmatpush1.msra.mxu0 0.0
        %5721 = vmatprep.subr.mxu0 0.0
        %5722 = vmatpush1.msra.mxu0 0.0
        %5723 = vmatprep.subr.mxu0 0.0
        %5724 = vmatpush1.msra.mxu0 0.0
        %5725 = vmatprep.subr.mxu0 0.0
        %5726 = vmatpush1.msra.mxu0 0.0
        %5727 = vmatprep.subr.mxu0 0.0
        %5728 = vmatpush1.msra.mxu0 0.0
        %5729 = vmatprep.subr.mxu0 0.0
        %5730 = vmatpush1.msra.mxu0 0.0
        %5731 = vmatprep.subr.mxu0 0.0
        %5732 = vmatpush1.msra.mxu0 0.0
        %5733 = vmatprep.subr.mxu0 0.0
        %5734 = vmatpush1.msra.mxu0 0.0
        %5735 = vmatprep.subr.mxu0 0.0
        %5736 = vmatpush1.msra.mxu0 0.0
        %5737 = vmatprep.subr.mxu0 0.0
        %5738 = vmatpush1.msra.mxu0 0.0
        %5739 = vmatprep.subr.mxu0 0.0
        %5740 = vmatpush1.msra.mxu0 0.0
        %5741 = vmatprep.subr.mxu0 0.0
        %5742 = vmatpush1.msra.mxu0 0.0
        %5743 = vmatprep.mubr.f32.mxu0 0.0
        %5744 = vmatmul.mubr.f32.gmra.mrb[0].mxu0 %v5657
        %v5745 = vpop.f32.mrb[0].mxu0
        %v5746 = vadd.f32 0.0, %v5745
        %v5747 = vpop.f32.mrb[0].mxu0
        %5748 = vmatprep.mubr.f32.mxu0 0.0
        %5749 = vmatmul.mubr.f32.gmra.mrb[0].mxu0 %v5658
        %v5750 = vpop.f32.mrb[0].mxu0
        %v5751 = vadd.f32 0.0, %v5750
        %v5752 = vpop.f32.mrb[0].mxu0
        %5753 = vmatprep.mubr.f32.mxu0 0.0
        %5754 = vmatmul.mubr.f32.gmra.mrb[0].mxu0 %v5659
        %v5755 = vpop.f32.mrb[0].mxu0
        %v5756 = vadd.f32 0.0, %v5755
        %v5757 = vpop.f32.mrb[0].mxu0
        %5758 = vmatprep.mubr.f32.mxu0 0.0
        %5759 = vmatmul.mubr.f32.gmra.mrb[0].mxu0 %v5660
        %v5760 = vpop.f32.mrb[0].mxu0
        %v5761 = vadd.f32 0.0, %v5760
        %v5762 = vpop.f32.mrb[0].mxu0
        %5763 = vmatprep.mubr.f32.mxu0 0.0
        %5764 = vmatmul.mubr.f32.gmra.mrb[0].mxu0 %v5661
        %v5765 = vpop.f32.mrb[0].mxu0
        %v5766 = vadd.f32 0.0, %v5765
        %v5767 = vpop.f32.mrb[0].mxu0
        %5768 = vdwg.mxu0
        %v5769 = vadd.f32 %v5652, %v5746
        %v5770 = vadd.f32 %v5653, %v5751
        %v5771 = vadd.f32 %v5654, %v5756
        %v5772 = vadd.f32 %v5655, %v5761
        %v5773 = vadd.f32 %v5656, %v5766
        %v5774 = vld [vmem:[#allocation3 + $0x7] sm:$0xff]
        %v5775 = vld [vmem:[#allocation3 + $0xf] sm:$0xff]
        %v5776 = vld [vmem:[#allocation3 + $0x17] sm:$0xff]
        %v5777 = vld [vmem:[#allocation3 + $0x1f] sm:$0xff]
        %v5778 = vld [vmem:[#allocation3 + $0x27] sm:$0xf]
        %s5779 = scalar_lea.vmem [#allocation10], 512
        %v5780 = vld [vmem:[%s5779] sm:$0xff]
        %v5781 = vld [vmem:[%s5779 + $0x8] sm:$0xff]
        %v5782 = vld [vmem:[%s5779 + $0x10] sm:$0xff]
        %v5783 = vld [vmem:[%s5779 + $0x18] sm:$0xff]
        %v5784 = vld [vmem:[%s5779 + $0x20] sm:$0xff]
        %v5785 = vld [vmem:[%s5779 + $0x28] sm:$0xff]
        %v5786 = vld [vmem:[%s5779 + $0x30] sm:$0xff]
        %v5787 = vld [vmem:[%s5779 + $0x38] sm:$0xff]
        %v5788 = vld [vmem:[%s5779 + $0x40] sm:$0xff]
        %v5789 = vld [vmem:[%s5779 + $0x48] sm:$0xff]
        %v5790 = vld [vmem:[%s5779 + $0x50] sm:$0xff]
        %v5791 = vld [vmem:[%s5779 + $0x58] sm:$0xff]
        %v5792 = vld [vmem:[%s5779 + $0x60] sm:$0xff]
        %v5793 = vld [vmem:[%s5779 + $0x68] sm:$0xff]
        %v5794 = vld [vmem:[%s5779 + $0x70] sm:$0xff]
        %v5795 = vld [vmem:[%s5779 + $0x78] sm:$0xff]
        %5796 = vmatprep.subr.mxu0 0.0
        %5797 = vmatpush1.msra.mxu0 %v5780
        %5798 = vmatprep.subr.mxu0 0.0
        %5799 = vmatpush1.msra.mxu0 %v5781
        %5800 = vmatprep.subr.mxu0 0.0
        %5801 = vmatpush1.msra.mxu0 %v5782
        %5802 = vmatprep.subr.mxu0 0.0
        %5803 = vmatpush1.msra.mxu0 %v5783
        %5804 = vmatprep.subr.mxu0 0.0
        %5805 = vmatpush1.msra.mxu0 %v5784
        %5806 = vmatprep.subr.mxu0 0.0
        %5807 = vmatpush1.msra.mxu0 %v5785
        %5808 = vmatprep.subr.mxu0 0.0
        %5809 = vmatpush1.msra.mxu0 %v5786
        %5810 = vmatprep.subr.mxu0 0.0
        %5811 = vmatpush1.msra.mxu0 %v5787
        %5812 = vmatprep.subr.mxu0 0.0
        %5813 = vmatpush1.msra.mxu0 %v5788
        %5814 = vmatprep.subr.mxu0 0.0
        %5815 = vmatpush1.msra.mxu0 %v5789
        %5816 = vmatprep.subr.mxu0 0.0
        %5817 = vmatpush1.msra.mxu0 %v5790
        %5818 = vmatprep.subr.mxu0 0.0
        %5819 = vmatpush1.msra.mxu0 %v5791
        %5820 = vmatprep.subr.mxu0 0.0
        %5821 = vmatpush1.msra.mxu0 %v5792
        %5822 = vmatprep.subr.mxu0 0.0
        %5823 = vmatpush1.msra.mxu0 %v5793
        %5824 = vmatprep.subr.mxu0 0.0
        %5825 = vmatpush1.msra.mxu0 %v5794
        %5826 = vmatprep.subr.mxu0 0.0
        %5827 = vmatpush1.msra.mxu0 %v5795
        %5828 = vmatprep.subr.mxu0 0.0
        %5829 = vmatpush1.msra.mxu0 0.0
        %5830 = vmatprep.subr.mxu0 0.0
        %5831 = vmatpush1.msra.mxu0 0.0
        %5832 = vmatprep.subr.mxu0 0.0
        %5833 = vmatpush1.msra.mxu0 0.0
        %5834 = vmatprep.subr.mxu0 0.0
        %5835 = vmatpush1.msra.mxu0 0.0
        %5836 = vmatprep.subr.mxu0 0.0
        %5837 = vmatpush1.msra.mxu0 0.0
        %5838 = vmatprep.subr.mxu0 0.0
        %5839 = vmatpush1.msra.mxu0 0.0
        %5840 = vmatprep.subr.mxu0 0.0
        %5841 = vmatpush1.msra.mxu0 0.0
        %5842 = vmatprep.subr.mxu0 0.0
        %5843 = vmatpush1.msra.mxu0 0.0
        %5844 = vmatprep.subr.mxu0 0.0
        %5845 = vmatpush1.msra.mxu0 0.0
        %5846 = vmatprep.subr.mxu0 0.0
        %5847 = vmatpush1.msra.mxu0 0.0
        %5848 = vmatprep.subr.mxu0 0.0
        %5849 = vmatpush1.msra.mxu0 0.0
        %5850 = vmatprep.subr.mxu0 0.0
        %5851 = vmatpush1.msra.mxu0 0.0
        %5852 = vmatprep.subr.mxu0 0.0
        %5853 = vmatpush1.msra.mxu0 0.0
        %5854 = vmatprep.subr.mxu0 0.0
        %5855 = vmatpush1.msra.mxu0 0.0
        %5856 = vmatprep.subr.mxu0 0.0
        %5857 = vmatpush1.msra.mxu0 0.0
        %5858 = vmatprep.subr.mxu0 0.0
        %5859 = vmatpush1.msra.mxu0 0.0
        %5860 = vmatprep.mubr.f32.mxu0 0.0
        %5861 = vmatmul.mubr.f32.gmra.mrb[0].mxu0 %v5774
        %v5862 = vpop.f32.mrb[0].mxu0
        %v5863 = vadd.f32 0.0, %v5862
        %v5864 = vpop.f32.mrb[0].mxu0
        %5865 = vmatprep.mubr.f32.mxu0 0.0
        %5866 = vmatmul.mubr.f32.gmra.mrb[0].mxu0 %v5775
        %v5867 = vpop.f32.mrb[0].mxu0
        %v5868 = vadd.f32 0.0, %v5867
        %v5869 = vpop.f32.mrb[0].mxu0
        %5870 = vmatprep.mubr.f32.mxu0 0.0
        %5871 = vmatmul.mubr.f32.gmra.mrb[0].mxu0 %v5776
        %v5872 = vpop.f32.mrb[0].mxu0
        %v5873 = vadd.f32 0.0, %v5872
        %v5874 = vpop.f32.mrb[0].mxu0
        %5875 = vmatprep.mubr.f32.mxu0 0.0
        %5876 = vmatmul.mubr.f32.gmra.mrb[0].mxu0 %v5777
        %v5877 = vpop.f32.mrb[0].mxu0
        %v5878 = vadd.f32 0.0, %v5877
        %v5879 = vpop.f32.mrb[0].mxu0
        %5880 = vmatprep.mubr.f32.mxu0 0.0
        %5881 = vmatmul.mubr.f32.gmra.mrb[0].mxu0 %v5778
        %v5882 = vpop.f32.mrb[0].mxu0
        %v5883 = vadd.f32 0.0, %v5882
        %v5884 = vpop.f32.mrb[0].mxu0
        %5885 = vdwg.mxu0
        %v5886 = vadd.f32 %v5769, %v5863
        %v5887 = vadd.f32 %v5770, %v5868
        %v5888 = vadd.f32 %v5771, %v5873
        %v5889 = vadd.f32 %v5772, %v5878
        %v5890 = vadd.f32 %v5773, %v5883
        %v5891 = vld [vmem:[#allocation3 + $0x8] sm:$0xff]
        %v5892 = vld [vmem:[#allocation3 + $0x10] sm:$0xff]
        %v5893 = vld [vmem:[#allocation3 + $0x18] sm:$0xff]
        %v5894 = vld [vmem:[#allocation3 + $0x20] sm:$0xff]
        %v5895 = vld [vmem:[#allocation3 + $0x28] sm:$0xf]
        %s5896 = scalar_lea.vmem [#allocation10], 640
        %v5897 = vld [vmem:[%s5896] sm:$0xff]
        %v5898 = vld [vmem:[%s5896 + $0x8] sm:$0xff]
        %v5899 = vld [vmem:[%s5896 + $0x10] sm:$0xff]
        %v5900 = vld [vmem:[%s5896 + $0x18] sm:$0xff]
        %v5901 = vld [vmem:[%s5896 + $0x20] sm:$0xff]
        %v5902 = vld [vmem:[%s5896 + $0x28] sm:$0xff]
        %v5903 = vld [vmem:[%s5896 + $0x30] sm:$0xff]
        %v5904 = vld [vmem:[%s5896 + $0x38] sm:$0xff]
        %v5905 = vld [vmem:[%s5896 + $0x40] sm:$0xff]
        %v5906 = vld [vmem:[%s5896 + $0x48] sm:$0xff]
        %v5907 = vld [vmem:[%s5896 + $0x50] sm:$0xff]
        %v5908 = vld [vmem:[%s5896 + $0x58] sm:$0xff]
        %v5909 = vld [vmem:[%s5896 + $0x60] sm:$0xff]
        %v5910 = vld [vmem:[%s5896 + $0x68] sm:$0xff]
        %v5911 = vld [vmem:[%s5896 + $0x70] sm:$0xff]
        %v5912 = vld [vmem:[%s5896 + $0x78] sm:$0xff]
        %5913 = vmatprep.subr.mxu0 0.0
        %5914 = vmatpush1.msra.mxu0 %v5897
        %5915 = vmatprep.subr.mxu0 0.0
        %5916 = vmatpush1.msra.mxu0 %v5898
        %5917 = vmatprep.subr.mxu0 0.0
        %5918 = vmatpush1.msra.mxu0 %v5899
        %5919 = vmatprep.subr.mxu0 0.0
        %5920 = vmatpush1.msra.mxu0 %v5900
        %5921 = vmatprep.subr.mxu0 0.0
        %5922 = vmatpush1.msra.mxu0 %v5901
        %5923 = vmatprep.subr.mxu0 0.0
        %5924 = vmatpush1.msra.mxu0 %v5902
        %5925 = vmatprep.subr.mxu0 0.0
        %5926 = vmatpush1.msra.mxu0 %v5903
        %5927 = vmatprep.subr.mxu0 0.0
        %5928 = vmatpush1.msra.mxu0 %v5904
        %5929 = vmatprep.subr.mxu0 0.0
        %5930 = vmatpush1.msra.mxu0 %v5905
        %5931 = vmatprep.subr.mxu0 0.0
        %5932 = vmatpush1.msra.mxu0 %v5906
        %5933 = vmatprep.subr.mxu0 0.0
        %5934 = vmatpush1.msra.mxu0 %v5907
        %5935 = vmatprep.subr.mxu0 0.0
        %5936 = vmatpush1.msra.mxu0 %v5908
        %5937 = vmatprep.subr.mxu0 0.0
        %5938 = vmatpush1.msra.mxu0 %v5909
        %5939 = vmatprep.subr.mxu0 0.0
        %5940 = vmatpush1.msra.mxu0 %v5910
        %5941 = vmatprep.subr.mxu0 0.0
        %5942 = vmatpush1.msra.mxu0 %v5911
        %5943 = vmatprep.subr.mxu0 0.0
        %5944 = vmatpush1.msra.mxu0 %v5912
        %5945 = vmatprep.subr.mxu0 0.0
        %5946 = vmatpush1.msra.mxu0 0.0
        %5947 = vmatprep.subr.mxu0 0.0
        %5948 = vmatpush1.msra.mxu0 0.0
        %5949 = vmatprep.subr.mxu0 0.0
        %5950 = vmatpush1.msra.mxu0 0.0
        %5951 = vmatprep.subr.mxu0 0.0
        %5952 = vmatpush1.msra.mxu0 0.0
        %5953 = vmatprep.subr.mxu0 0.0
        %5954 = vmatpush1.msra.mxu0 0.0
        %5955 = vmatprep.subr.mxu0 0.0
        %5956 = vmatpush1.msra.mxu0 0.0
        %5957 = vmatprep.subr.mxu0 0.0
        %5958 = vmatpush1.msra.mxu0 0.0
        %5959 = vmatprep.subr.mxu0 0.0
        %5960 = vmatpush1.msra.mxu0 0.0
        %5961 = vmatprep.subr.mxu0 0.0
        %5962 = vmatpush1.msra.mxu0 0.0
        %5963 = vmatprep.subr.mxu0 0.0
        %5964 = vmatpush1.msra.mxu0 0.0
        %5965 = vmatprep.subr.mxu0 0.0
        %5966 = vmatpush1.msra.mxu0 0.0
        %5967 = vmatprep.subr.mxu0 0.0
        %5968 = vmatpush1.msra.mxu0 0.0
        %5969 = vmatprep.subr.mxu0 0.0
        %5970 = vmatpush1.msra.mxu0 0.0
        %5971 = vmatprep.subr.mxu0 0.0
        %5972 = vmatpush1.msra.mxu0 0.0
        %5973 = vmatprep.subr.mxu0 0.0
        %5974 = vmatpush1.msra.mxu0 0.0
        %5975 = vmatprep.subr.mxu0 0.0
        %5976 = vmatpush1.msra.mxu0 0.0
        %5977 = vmatprep.mubr.f32.mxu0 0.0
        %5978 = vmatmul.mubr.f32.gmra.mrb[0].mxu0 %v5891
        %v5979 = vpop.f32.mrb[0].mxu0
        %v5980 = vadd.f32 0.0, %v5979
        %v5981 = vpop.f32.mrb[0].mxu0
        %5982 = vmatprep.mubr.f32.mxu0 0.0
        %5983 = vmatmul.mubr.f32.gmra.mrb[0].mxu0 %v5892
        %v5984 = vpop.f32.mrb[0].mxu0
        %v5985 = vadd.f32 0.0, %v5984
        %v5986 = vpop.f32.mrb[0].mxu0
        %5987 = vmatprep.mubr.f32.mxu0 0.0
        %5988 = vmatmul.mubr.f32.gmra.mrb[0].mxu0 %v5893
        %v5989 = vpop.f32.mrb[0].mxu0
        %v5990 = vadd.f32 0.0, %v5989
        %v5991 = vpop.f32.mrb[0].mxu0
        %5992 = vmatprep.mubr.f32.mxu0 0.0
        %5993 = vmatmul.mubr.f32.gmra.mrb[0].mxu0 %v5894
        %v5994 = vpop.f32.mrb[0].mxu0
        %v5995 = vadd.f32 0.0, %v5994
        %v5996 = vpop.f32.mrb[0].mxu0
        %5997 = vmatprep.mubr.f32.mxu0 0.0
        %5998 = vmatmul.mubr.f32.gmra.mrb[0].mxu0 %v5895
        %v5999 = vpop.f32.mrb[0].mxu0
        %v6000 = vadd.f32 0.0, %v5999
        %v6001 = vpop.f32.mrb[0].mxu0
        %6002 = vdwg.mxu0
        %v6003 = vadd.f32 %v5886, %v5980
        %v6004 = vadd.f32 %v5887, %v5985
        %v6005 = vadd.f32 %v5888, %v5990
        %v6006 = vadd.f32 %v5889, %v5995
        %v6007 = vadd.f32 %v5890, %v6000
        %v6008 = vld [vmem:[#allocation3 + $0xc] sm:$0xff]
        %v6009 = vld [vmem:[#allocation3 + $0x14] sm:$0xff]
        %v6010 = vld [vmem:[#allocation3 + $0x1c] sm:$0xff]
        %v6011 = vld [vmem:[#allocation3 + $0x24] sm:$0xff]
        %v6012 = vld [vmem:[#allocation3 + $0x2c] sm:$0xf]
        %s6013 = scalar_lea.vmem [#allocation10], 768
        %v6014 = vld [vmem:[%s6013] sm:$0xff]
        %v6015 = vld [vmem:[%s6013 + $0x8] sm:$0xff]
        %v6016 = vld [vmem:[%s6013 + $0x10] sm:$0xff]
        %v6017 = vld [vmem:[%s6013 + $0x18] sm:$0xff]
        %v6018 = vld [vmem:[%s6013 + $0x20] sm:$0xff]
        %v6019 = vld [vmem:[%s6013 + $0x28] sm:$0xff]
        %v6020 = vld [vmem:[%s6013 + $0x30] sm:$0xff]
        %v6021 = vld [vmem:[%s6013 + $0x38] sm:$0xff]
        %v6022 = vld [vmem:[%s6013 + $0x40] sm:$0xff]
        %v6023 = vld [vmem:[%s6013 + $0x48] sm:$0xff]
        %v6024 = vld [vmem:[%s6013 + $0x50] sm:$0xff]
        %v6025 = vld [vmem:[%s6013 + $0x58] sm:$0xff]
        %v6026 = vld [vmem:[%s6013 + $0x60] sm:$0xff]
        %v6027 = vld [vmem:[%s6013 + $0x68] sm:$0xff]
        %v6028 = vld [vmem:[%s6013 + $0x70] sm:$0xff]
        %v6029 = vld [vmem:[%s6013 + $0x78] sm:$0xff]
        %6030 = vmatprep.subr.mxu0 0.0
        %6031 = vmatpush1.msra.mxu0 %v6014
        %6032 = vmatprep.subr.mxu0 0.0
        %6033 = vmatpush1.msra.mxu0 %v6015
        %6034 = vmatprep.subr.mxu0 0.0
        %6035 = vmatpush1.msra.mxu0 %v6016
        %6036 = vmatprep.subr.mxu0 0.0
        %6037 = vmatpush1.msra.mxu0 %v6017
        %6038 = vmatprep.subr.mxu0 0.0
        %6039 = vmatpush1.msra.mxu0 %v6018
        %6040 = vmatprep.subr.mxu0 0.0
        %6041 = vmatpush1.msra.mxu0 %v6019
        %6042 = vmatprep.subr.mxu0 0.0
        %6043 = vmatpush1.msra.mxu0 %v6020
        %6044 = vmatprep.subr.mxu0 0.0
        %6045 = vmatpush1.msra.mxu0 %v6021
        %6046 = vmatprep.subr.mxu0 0.0
        %6047 = vmatpush1.msra.mxu0 %v6022
        %6048 = vmatprep.subr.mxu0 0.0
        %6049 = vmatpush1.msra.mxu0 %v6023
        %6050 = vmatprep.subr.mxu0 0.0
        %6051 = vmatpush1.msra.mxu0 %v6024
        %6052 = vmatprep.subr.mxu0 0.0
        %6053 = vmatpush1.msra.mxu0 %v6025
        %6054 = vmatprep.subr.mxu0 0.0
        %6055 = vmatpush1.msra.mxu0 %v6026
        %6056 = vmatprep.subr.mxu0 0.0
        %6057 = vmatpush1.msra.mxu0 %v6027
        %6058 = vmatprep.subr.mxu0 0.0
        %6059 = vmatpush1.msra.mxu0 %v6028
        %6060 = vmatprep.subr.mxu0 0.0
        %6061 = vmatpush1.msra.mxu0 %v6029
        %6062 = vmatprep.subr.mxu0 0.0
        %6063 = vmatpush1.msra.mxu0 0.0
        %6064 = vmatprep.subr.mxu0 0.0
        %6065 = vmatpush1.msra.mxu0 0.0
        %6066 = vmatprep.subr.mxu0 0.0
        %6067 = vmatpush1.msra.mxu0 0.0
        %6068 = vmatprep.subr.mxu0 0.0
        %6069 = vmatpush1.msra.mxu0 0.0
        %6070 = vmatprep.subr.mxu0 0.0
        %6071 = vmatpush1.msra.mxu0 0.0
        %6072 = vmatprep.subr.mxu0 0.0
        %6073 = vmatpush1.msra.mxu0 0.0
        %6074 = vmatprep.subr.mxu0 0.0
        %6075 = vmatpush1.msra.mxu0 0.0
        %6076 = vmatprep.subr.mxu0 0.0
        %6077 = vmatpush1.msra.mxu0 0.0
        %6078 = vmatprep.subr.mxu0 0.0
        %6079 = vmatpush1.msra.mxu0 0.0
        %6080 = vmatprep.subr.mxu0 0.0
        %6081 = vmatpush1.msra.mxu0 0.0
        %6082 = vmatprep.subr.mxu0 0.0
        %6083 = vmatpush1.msra.mxu0 0.0
        %6084 = vmatprep.subr.mxu0 0.0
        %6085 = vmatpush1.msra.mxu0 0.0
        %6086 = vmatprep.subr.mxu0 0.0
        %6087 = vmatpush1.msra.mxu0 0.0
        %6088 = vmatprep.subr.mxu0 0.0
        %6089 = vmatpush1.msra.mxu0 0.0
        %6090 = vmatprep.subr.mxu0 0.0
        %6091 = vmatpush1.msra.mxu0 0.0
        %6092 = vmatprep.subr.mxu0 0.0
        %6093 = vmatpush1.msra.mxu0 0.0
        %6094 = vmatprep.mubr.f32.mxu0 0.0
        %6095 = vmatmul.mubr.f32.gmra.mrb[0].mxu0 %v6008
        %v6096 = vpop.f32.mrb[0].mxu0
        %v6097 = vadd.f32 0.0, %v6096
        %v6098 = vpop.f32.mrb[0].mxu0
        %6099 = vmatprep.mubr.f32.mxu0 0.0
        %6100 = vmatmul.mubr.f32.gmra.mrb[0].mxu0 %v6009
        %v6101 = vpop.f32.mrb[0].mxu0
        %v6102 = vadd.f32 0.0, %v6101
        %v6103 = vpop.f32.mrb[0].mxu0
        %6104 = vmatprep.mubr.f32.mxu0 0.0
        %6105 = vmatmul.mubr.f32.gmra.mrb[0].mxu0 %v6010
        %v6106 = vpop.f32.mrb[0].mxu0
        %v6107 = vadd.f32 0.0, %v6106
        %v6108 = vpop.f32.mrb[0].mxu0
        %6109 = vmatprep.mubr.f32.mxu0 0.0
        %6110 = vmatmul.mubr.f32.gmra.mrb[0].mxu0 %v6011
        %v6111 = vpop.f32.mrb[0].mxu0
        %v6112 = vadd.f32 0.0, %v6111
        %v6113 = vpop.f32.mrb[0].mxu0
        %6114 = vmatprep.mubr.f32.mxu0 0.0
        %6115 = vmatmul.mubr.f32.gmra.mrb[0].mxu0 %v6012
        %v6116 = vpop.f32.mrb[0].mxu0
        %v6117 = vadd.f32 0.0, %v6116
        %v6118 = vpop.f32.mrb[0].mxu0
        %6119 = vdwg.mxu0
        %v6120 = vadd.f32 %v6003, %v6097
        %v6121 = vadd.f32 %v6004, %v6102
        %v6122 = vadd.f32 %v6005, %v6107
        %v6123 = vadd.f32 %v6006, %v6112
        %v6124 = vadd.f32 %v6007, %v6117
        %v6125 = vld [vmem:[#allocation3 + $0xd] sm:$0xff]
        %v6126 = vld [vmem:[#allocation3 + $0x15] sm:$0xff]
        %v6127 = vld [vmem:[#allocation3 + $0x1d] sm:$0xff]
        %v6128 = vld [vmem:[#allocation3 + $0x25] sm:$0xff]
        %v6129 = vld [vmem:[#allocation3 + $0x2d] sm:$0xf]
        %s6130 = scalar_lea.vmem [#allocation10], 896
        %v6131 = vld [vmem:[%s6130] sm:$0xff]
        %v6132 = vld [vmem:[%s6130 + $0x8] sm:$0xff]
        %v6133 = vld [vmem:[%s6130 + $0x10] sm:$0xff]
        %v6134 = vld [vmem:[%s6130 + $0x18] sm:$0xff]
        %v6135 = vld [vmem:[%s6130 + $0x20] sm:$0xff]
        %v6136 = vld [vmem:[%s6130 + $0x28] sm:$0xff]
        %v6137 = vld [vmem:[%s6130 + $0x30] sm:$0xff]
        %v6138 = vld [vmem:[%s6130 + $0x38] sm:$0xff]
        %v6139 = vld [vmem:[%s6130 + $0x40] sm:$0xff]
        %v6140 = vld [vmem:[%s6130 + $0x48] sm:$0xff]
        %v6141 = vld [vmem:[%s6130 + $0x50] sm:$0xff]
        %v6142 = vld [vmem:[%s6130 + $0x58] sm:$0xff]
        %v6143 = vld [vmem:[%s6130 + $0x60] sm:$0xff]
        %v6144 = vld [vmem:[%s6130 + $0x68] sm:$0xff]
        %v6145 = vld [vmem:[%s6130 + $0x70] sm:$0xff]
        %v6146 = vld [vmem:[%s6130 + $0x78] sm:$0xff]
        %6147 = vmatprep.subr.mxu0 0.0
        %6148 = vmatpush1.msra.mxu0 %v6131
        %6149 = vmatprep.subr.mxu0 0.0
        %6150 = vmatpush1.msra.mxu0 %v6132
        %6151 = vmatprep.subr.mxu0 0.0
        %6152 = vmatpush1.msra.mxu0 %v6133
        %6153 = vmatprep.subr.mxu0 0.0
        %6154 = vmatpush1.msra.mxu0 %v6134
        %6155 = vmatprep.subr.mxu0 0.0
        %6156 = vmatpush1.msra.mxu0 %v6135
        %6157 = vmatprep.subr.mxu0 0.0
        %6158 = vmatpush1.msra.mxu0 %v6136
        %6159 = vmatprep.subr.mxu0 0.0
        %6160 = vmatpush1.msra.mxu0 %v6137
        %6161 = vmatprep.subr.mxu0 0.0
        %6162 = vmatpush1.msra.mxu0 %v6138
        %6163 = vmatprep.subr.mxu0 0.0
        %6164 = vmatpush1.msra.mxu0 %v6139
        %6165 = vmatprep.subr.mxu0 0.0
        %6166 = vmatpush1.msra.mxu0 %v6140
        %6167 = vmatprep.subr.mxu0 0.0
        %6168 = vmatpush1.msra.mxu0 %v6141
        %6169 = vmatprep.subr.mxu0 0.0
        %6170 = vmatpush1.msra.mxu0 %v6142
        %6171 = vmatprep.subr.mxu0 0.0
        %6172 = vmatpush1.msra.mxu0 %v6143
        %6173 = vmatprep.subr.mxu0 0.0
        %6174 = vmatpush1.msra.mxu0 %v6144
        %6175 = vmatprep.subr.mxu0 0.0
        %6176 = vmatpush1.msra.mxu0 %v6145
        %6177 = vmatprep.subr.mxu0 0.0
        %6178 = vmatpush1.msra.mxu0 %v6146
        %6179 = vmatprep.subr.mxu0 0.0
        %6180 = vmatpush1.msra.mxu0 0.0
        %6181 = vmatprep.subr.mxu0 0.0
        %6182 = vmatpush1.msra.mxu0 0.0
        %6183 = vmatprep.subr.mxu0 0.0
        %6184 = vmatpush1.msra.mxu0 0.0
        %6185 = vmatprep.subr.mxu0 0.0
        %6186 = vmatpush1.msra.mxu0 0.0
        %6187 = vmatprep.subr.mxu0 0.0
        %6188 = vmatpush1.msra.mxu0 0.0
        %6189 = vmatprep.subr.mxu0 0.0
        %6190 = vmatpush1.msra.mxu0 0.0
        %6191 = vmatprep.subr.mxu0 0.0
        %6192 = vmatpush1.msra.mxu0 0.0
        %6193 = vmatprep.subr.mxu0 0.0
        %6194 = vmatpush1.msra.mxu0 0.0
        %6195 = vmatprep.subr.mxu0 0.0
        %6196 = vmatpush1.msra.mxu0 0.0
        %6197 = vmatprep.subr.mxu0 0.0
        %6198 = vmatpush1.msra.mxu0 0.0
        %6199 = vmatprep.subr.mxu0 0.0
        %6200 = vmatpush1.msra.mxu0 0.0
        %6201 = vmatprep.subr.mxu0 0.0
        %6202 = vmatpush1.msra.mxu0 0.0
        %6203 = vmatprep.subr.mxu0 0.0
        %6204 = vmatpush1.msra.mxu0 0.0
        %6205 = vmatprep.subr.mxu0 0.0
        %6206 = vmatpush1.msra.mxu0 0.0
        %6207 = vmatprep.subr.mxu0 0.0
        %6208 = vmatpush1.msra.mxu0 0.0
        %6209 = vmatprep.subr.mxu0 0.0
        %6210 = vmatpush1.msra.mxu0 0.0
        %6211 = vmatprep.mubr.f32.mxu0 0.0
        %6212 = vmatmul.mubr.f32.gmra.mrb[0].mxu0 %v6125
        %v6213 = vpop.f32.mrb[0].mxu0
        %v6214 = vadd.f32 0.0, %v6213
        %v6215 = vpop.f32.mrb[0].mxu0
        %6216 = vmatprep.mubr.f32.mxu0 0.0
        %6217 = vmatmul.mubr.f32.gmra.mrb[0].mxu0 %v6126
        %v6218 = vpop.f32.mrb[0].mxu0
        %v6219 = vadd.f32 0.0, %v6218
        %v6220 = vpop.f32.mrb[0].mxu0
        %6221 = vmatprep.mubr.f32.mxu0 0.0
        %6222 = vmatmul.mubr.f32.gmra.mrb[0].mxu0 %v6127
        %v6223 = vpop.f32.mrb[0].mxu0
        %v6224 = vadd.f32 0.0, %v6223
        %v6225 = vpop.f32.mrb[0].mxu0
        %6226 = vmatprep.mubr.f32.mxu0 0.0
        %6227 = vmatmul.mubr.f32.gmra.mrb[0].mxu0 %v6128
        %v6228 = vpop.f32.mrb[0].mxu0
        %v6229 = vadd.f32 0.0, %v6228
        %v6230 = vpop.f32.mrb[0].mxu0
        %6231 = vmatprep.mubr.f32.mxu0 0.0
        %6232 = vmatmul.mubr.f32.gmra.mrb[0].mxu0 %v6129
        %v6233 = vpop.f32.mrb[0].mxu0
        %v6234 = vadd.f32 0.0, %v6233
        %v6235 = vpop.f32.mrb[0].mxu0
        %6236 = vdwg.mxu0
        %v6237 = vadd.f32 %v6120, %v6214
        %v6238 = vadd.f32 %v6121, %v6219
        %v6239 = vadd.f32 %v6122, %v6224
        %v6240 = vadd.f32 %v6123, %v6229
        %v6241 = vadd.f32 %v6124, %v6234
        %v6242 = vld [vmem:[#allocation3 + $0xe] sm:$0xff]
        %v6243 = vld [vmem:[#allocation3 + $0x16] sm:$0xff]
        %v6244 = vld [vmem:[#allocation3 + $0x1e] sm:$0xff]
        %v6245 = vld [vmem:[#allocation3 + $0x26] sm:$0xff]
        %v6246 = vld [vmem:[#allocation3 + $0x2e] sm:$0xf]
        %s6247 = scalar_lea.vmem [#allocation10], 1024
        %v6248 = vld [vmem:[%s6247] sm:$0xff]
        %v6249 = vld [vmem:[%s6247 + $0x8] sm:$0xff]
        %v6250 = vld [vmem:[%s6247 + $0x10] sm:$0xff]
        %v6251 = vld [vmem:[%s6247 + $0x18] sm:$0xff]
        %v6252 = vld [vmem:[%s6247 + $0x20] sm:$0xff]
        %v6253 = vld [vmem:[%s6247 + $0x28] sm:$0xff]
        %v6254 = vld [vmem:[%s6247 + $0x30] sm:$0xff]
        %v6255 = vld [vmem:[%s6247 + $0x38] sm:$0xff]
        %v6256 = vld [vmem:[%s6247 + $0x40] sm:$0xff]
        %v6257 = vld [vmem:[%s6247 + $0x48] sm:$0xff]
        %v6258 = vld [vmem:[%s6247 + $0x50] sm:$0xff]
        %v6259 = vld [vmem:[%s6247 + $0x58] sm:$0xff]
        %v6260 = vld [vmem:[%s6247 + $0x60] sm:$0xff]
        %v6261 = vld [vmem:[%s6247 + $0x68] sm:$0xff]
        %v6262 = vld [vmem:[%s6247 + $0x70] sm:$0xff]
        %v6263 = vld [vmem:[%s6247 + $0x78] sm:$0xff]
        %6264 = vmatprep.subr.mxu0 0.0
        %6265 = vmatpush1.msra.mxu0 %v6248
        %6266 = vmatprep.subr.mxu0 0.0
        %6267 = vmatpush1.msra.mxu0 %v6249
        %6268 = vmatprep.subr.mxu0 0.0
        %6269 = vmatpush1.msra.mxu0 %v6250
        %6270 = vmatprep.subr.mxu0 0.0
        %6271 = vmatpush1.msra.mxu0 %v6251
        %6272 = vmatprep.subr.mxu0 0.0
        %6273 = vmatpush1.msra.mxu0 %v6252
        %6274 = vmatprep.subr.mxu0 0.0
        %6275 = vmatpush1.msra.mxu0 %v6253
        %6276 = vmatprep.subr.mxu0 0.0
        %6277 = vmatpush1.msra.mxu0 %v6254
        %6278 = vmatprep.subr.mxu0 0.0
        %6279 = vmatpush1.msra.mxu0 %v6255
        %6280 = vmatprep.subr.mxu0 0.0
        %6281 = vmatpush1.msra.mxu0 %v6256
        %6282 = vmatprep.subr.mxu0 0.0
        %6283 = vmatpush1.msra.mxu0 %v6257
        %6284 = vmatprep.subr.mxu0 0.0
        %6285 = vmatpush1.msra.mxu0 %v6258
        %6286 = vmatprep.subr.mxu0 0.0
        %6287 = vmatpush1.msra.mxu0 %v6259
        %6288 = vmatprep.subr.mxu0 0.0
        %6289 = vmatpush1.msra.mxu0 %v6260
        %6290 = vmatprep.subr.mxu0 0.0
        %6291 = vmatpush1.msra.mxu0 %v6261
        %6292 = vmatprep.subr.mxu0 0.0
        %6293 = vmatpush1.msra.mxu0 %v6262
        %6294 = vmatprep.subr.mxu0 0.0
        %6295 = vmatpush1.msra.mxu0 %v6263
        %6296 = vmatprep.subr.mxu0 0.0
        %6297 = vmatpush1.msra.mxu0 0.0
        %6298 = vmatprep.subr.mxu0 0.0
        %6299 = vmatpush1.msra.mxu0 0.0
        %6300 = vmatprep.subr.mxu0 0.0
        %6301 = vmatpush1.msra.mxu0 0.0
        %6302 = vmatprep.subr.mxu0 0.0
        %6303 = vmatpush1.msra.mxu0 0.0
        %6304 = vmatprep.subr.mxu0 0.0
        %6305 = vmatpush1.msra.mxu0 0.0
        %6306 = vmatprep.subr.mxu0 0.0
        %6307 = vmatpush1.msra.mxu0 0.0
        %6308 = vmatprep.subr.mxu0 0.0
        %6309 = vmatpush1.msra.mxu0 0.0
        %6310 = vmatprep.subr.mxu0 0.0
        %6311 = vmatpush1.msra.mxu0 0.0
        %6312 = vmatprep.subr.mxu0 0.0
        %6313 = vmatpush1.msra.mxu0 0.0
        %6314 = vmatprep.subr.mxu0 0.0
        %6315 = vmatpush1.msra.mxu0 0.0
        %6316 = vmatprep.subr.mxu0 0.0
        %6317 = vmatpush1.msra.mxu0 0.0
        %6318 = vmatprep.subr.mxu0 0.0
        %6319 = vmatpush1.msra.mxu0 0.0
        %6320 = vmatprep.subr.mxu0 0.0
        %6321 = vmatpush1.msra.mxu0 0.0
        %6322 = vmatprep.subr.mxu0 0.0
        %6323 = vmatpush1.msra.mxu0 0.0
        %6324 = vmatprep.subr.mxu0 0.0
        %6325 = vmatpush1.msra.mxu0 0.0
        %6326 = vmatprep.subr.mxu0 0.0
        %6327 = vmatpush1.msra.mxu0 0.0
        %6328 = vmatprep.mubr.f32.mxu0 0.0
        %6329 = vmatmul.mubr.f32.gmra.mrb[0].mxu0 %v6242
        %v6330 = vpop.f32.mrb[0].mxu0
        %v6331 = vadd.f32 0.0, %v6330
        %v6332 = vpop.f32.mrb[0].mxu0
        %6333 = vmatprep.mubr.f32.mxu0 0.0
        %6334 = vmatmul.mubr.f32.gmra.mrb[0].mxu0 %v6243
        %v6335 = vpop.f32.mrb[0].mxu0
        %v6336 = vadd.f32 0.0, %v6335
        %v6337 = vpop.f32.mrb[0].mxu0
        %6338 = vmatprep.mubr.f32.mxu0 0.0
        %6339 = vmatmul.mubr.f32.gmra.mrb[0].mxu0 %v6244
        %v6340 = vpop.f32.mrb[0].mxu0
        %v6341 = vadd.f32 0.0, %v6340
        %v6342 = vpop.f32.mrb[0].mxu0
        %6343 = vmatprep.mubr.f32.mxu0 0.0
        %6344 = vmatmul.mubr.f32.gmra.mrb[0].mxu0 %v6245
        %v6345 = vpop.f32.mrb[0].mxu0
        %v6346 = vadd.f32 0.0, %v6345
        %v6347 = vpop.f32.mrb[0].mxu0
        %6348 = vmatprep.mubr.f32.mxu0 0.0
        %6349 = vmatmul.mubr.f32.gmra.mrb[0].mxu0 %v6246
        %v6350 = vpop.f32.mrb[0].mxu0
        %v6351 = vadd.f32 0.0, %v6350
        %v6352 = vpop.f32.mrb[0].mxu0
        %6353 = vdwg.mxu0
        %v6354 = vadd.f32 %v6237, %v6331
        %v6355 = vadd.f32 %v6238, %v6336
        %v6356 = vadd.f32 %v6239, %v6341
        %v6357 = vadd.f32 %v6240, %v6346
        %v6358 = vadd.f32 %v6241, %v6351
        %v6359 = vld [vmem:[%s10] sm:$0x1]
        %v6361 = vlaneseq
        %v6362 = vshrl.u32 %v6361, 7
        %v6363 = vsub.s32 0, %v6362
        %v6364 = vrot.slane %v6359, %v6363
        %v6366 = vadd.f32 %v6354, %v6364
        %v6367 = vadd.f32 %v6355, %v6364
        %v6368 = vadd.f32 %v6356, %v6364
        %v6369 = vadd.f32 %v6357, %v6364
        %v6370 = vadd.f32 %v6358, %v6364
        %v6371 = vmax.f32 %v6366, 0.0
        %v6372 = vmax.f32 %v6367, 0.0
        %v6373 = vmax.f32 %v6368, 0.0
        %v6374 = vmax.f32 %v6369, 0.0
        %v6375 = vmax.f32 %v6370, 0.0
        %v6376 = vmul.f32 %v6371, %v3174
        %v6377 = vmul.f32 %v6372, %v3175
        %v6378 = vmul.f32 %v6373, %v3176
        %v6379 = vmul.f32 %v6374, %v3177
        %v6380 = vmul.f32 %v6375, %v3178
        %v6381 = vadd.f32 %v6376, %v6377
        %v6382 = vadd.f32 %v6381, %v6378
        %v6383 = vadd.f32 %v6382, %v6379
        %v6384 = vsel %vm719, %v6380, 0.0
        %v6385 = vadd.f32 %v6383, %v6384
        %v6386 = vrot.slane %v6385, 4
        %v6387 = vadd.f32 %v6385, %v6386
        %v6388 = vrot.slane %v6387, 2
        %v6389 = vadd.f32 %v6387, %v6388
        %v6390 = vrot.slane %v6389, 1
        %v6391 = vadd.f32 %v6389, %v6390
        %v6392 = vmul.f32 %v6391, 0.0625
        %v6393 = vld [vmem:[%s11] sm:$0xff]
        %v6394 = vld [vmem:[%s11 + $0x8] sm:$0xff]
        %v6395 = vld [vmem:[%s11 + $0x10] sm:$0xff]
        %v6396 = vld [vmem:[%s11 + $0x18] sm:$0xff]
        %v6397 = vld [vmem:[%s11 + $0x20] sm:$0xff]
        %v6398 = vld [vmem:[%s11 + $0x28] sm:$0xff]
        %v6399 = vld [vmem:[%s11 + $0x30] sm:$0xff]
        %v6400 = vld [vmem:[%s11 + $0x38] sm:$0xff]
        %v6401 = vld [vmem:[%s11 + $0x40] sm:$0xff]
        %v6402 = vld [vmem:[%s11 + $0x48] sm:$0xff]
        %v6403 = vld [vmem:[%s11 + $0x50] sm:$0xff]
        %v6404 = vld [vmem:[%s11 + $0x58] sm:$0xff]
        %v6405 = vld [vmem:[%s11 + $0x60] sm:$0xff]
        %v6406 = vld [vmem:[%s11 + $0x68] sm:$0xff]
        %v6407 = vld [vmem:[%s11 + $0x70] sm:$0xff]
        %v6408 = vld [vmem:[%s11 + $0x78] sm:$0xff]
        %v6409 = vld [vmem:[%s12] sm:$0x1]
        %6410 = vmatprep.subr.mxu0 0.0
        %6411 = vmatpush1.msra.mxu0 %v6393
        %6412 = vmatprep.subr.mxu0 0.0
        %6413 = vmatpush1.msra.mxu0 %v6394
        %6414 = vmatprep.subr.mxu0 0.0
        %6415 = vmatpush1.msra.mxu0 %v6395
        %6416 = vmatprep.subr.mxu0 0.0
        %6417 = vmatpush1.msra.mxu0 %v6396
        %6418 = vmatprep.subr.mxu0 0.0
        %6419 = vmatpush1.msra.mxu0 %v6397
        %6420 = vmatprep.subr.mxu0 0.0
        %6421 = vmatpush1.msra.mxu0 %v6398
        %6422 = vmatprep.subr.mxu0 0.0
        %6423 = vmatpush1.msra.mxu0 %v6399
        %6424 = vmatprep.subr.mxu0 0.0
        %6425 = vmatpush1.msra.mxu0 %v6400
        %6426 = vmatprep.subr.mxu0 0.0
        %6427 = vmatpush1.msra.mxu0 %v6401
        %6428 = vmatprep.subr.mxu0 0.0
        %6429 = vmatpush1.msra.mxu0 %v6402
        %6430 = vmatprep.subr.mxu0 0.0
        %6431 = vmatpush1.msra.mxu0 %v6403
        %6432 = vmatprep.subr.mxu0 0.0
        %6433 = vmatpush1.msra.mxu0 %v6404
        %6434 = vmatprep.subr.mxu0 0.0
        %6435 = vmatpush1.msra.mxu0 %v6405
        %6436 = vmatprep.subr.mxu0 0.0
        %6437 = vmatpush1.msra.mxu0 %v6406
        %6438 = vmatprep.subr.mxu0 0.0
        %6439 = vmatpush1.msra.mxu0 %v6407
        %6440 = vmatprep.subr.mxu0 0.0
        %6441 = vmatpush1.msra.mxu0 %v6408
        %6442 = vmatprep.subr.mxu0 0.0
        %6443 = vmatpush1.msra.mxu0 0.0
        %6444 = vmatprep.subr.mxu0 0.0
        %6445 = vmatpush1.msra.mxu0 0.0
        %6446 = vmatprep.subr.mxu0 0.0
        %6447 = vmatpush1.msra.mxu0 0.0
        %6448 = vmatprep.subr.mxu0 0.0
        %6449 = vmatpush1.msra.mxu0 0.0
        %6450 = vmatprep.subr.mxu0 0.0
        %6451 = vmatpush1.msra.mxu0 0.0
        %6452 = vmatprep.subr.mxu0 0.0
        %6453 = vmatpush1.msra.mxu0 0.0
        %6454 = vmatprep.subr.mxu0 0.0
        %6455 = vmatpush1.msra.mxu0 0.0
        %6456 = vmatprep.subr.mxu0 0.0
        %6457 = vmatpush1.msra.mxu0 0.0
        %6458 = vmatprep.subr.mxu0 0.0
        %6459 = vmatpush1.msra.mxu0 0.0
        %6460 = vmatprep.subr.mxu0 0.0
        %6461 = vmatpush1.msra.mxu0 0.0
        %6462 = vmatprep.subr.mxu0 0.0
        %6463 = vmatpush1.msra.mxu0 0.0
        %6464 = vmatprep.subr.mxu0 0.0
        %6465 = vmatpush1.msra.mxu0 0.0
        %6466 = vmatprep.subr.mxu0 0.0
        %6467 = vmatpush1.msra.mxu0 0.0
        %6468 = vmatprep.subr.mxu0 0.0
        %6469 = vmatpush1.msra.mxu0 0.0
        %6470 = vmatprep.subr.mxu0 0.0
        %6471 = vmatpush1.msra.mxu0 0.0
        %6472 = vmatprep.subr.mxu0 0.0
        %6473 = vmatpush1.msra.mxu0 0.0
        %6474 = vmatprep.mubr.f32.mxu0 0.0
        %6475 = vmatmul.mubr.f32.gmra.mrb[0].mxu0 %v6392
        %v6476 = vpop.f32.mrb[0].mxu0
        %v6477 = vadd.f32 %v6409, %v6476
        %v6478 = vpop.f32.mrb[0].mxu0
        %6479 = vdwg.mxu0
        %6480 = vst [vmem:[%s572] sm:$0x1] %v6477
        %s6481 = sand.u32 %s382, 1
        %s6482 = scalar_lea.sflag [#allocation6], %s6481
        %s6483 = sand.u32 %s382, 1
        %s6484 = scalar_lea.vmem [#allocation12], %s6483
        // Predicated region
        $region101: #{tpu_custom_call.1} parent=83 // pred_check
          %p6485 = pneg %p392
        $region102: #{tpu_custom_call.1} parent=83 // pred_check_branch
          %6487 = sbr.rel (%p6485) target = $region104
        $region103: #{tpu_custom_call.1} parent=83 // pred_region
          %s6489 = ssub.s32 16, 16
          %6490 = vsyncadd %s6482, %s6489
          %s6491 = smul.addr %s33, 16
          %s6492 = scalar_lea.hbm %s16, %s6491
          %s6494 = sshll.u32 %s6484, 4
          %s6495 = int_to_ptr.vmem [resolvable:$true] %s6494
          %6497 = dma.vmem_to_hbm [thread:$0]  %s6495, 16, %s6492, %s6482
        $region104: #{tpu_custom_call.1} parent=83 // pred_fallthru
          _
      $region84: #{tpu_custom_call.1} parent=5 // pred_fallthru
        _
      %p6498 = scmp.le.s32.totalorder 2, %s28
      // Predicated region
      $region105: #{tpu_custom_call.1} parent=5 // pred_check
        %p6499 = pneg %p6498
      $region106: #{tpu_custom_call.1} parent=5 // pred_check_branch
        %6501 = sbr.rel (%p6499) target = $region108
      $region107: #{tpu_custom_call.1} parent=5 // pred_region
        %s6502 = ssub.s32 %s28, 2
        // Predicated region
        $region109: #{tpu_custom_call.1} parent=107 // pred_check
          %p6503 = pneg %p398
        $region110: #{tpu_custom_call.1} parent=107 // pred_check_branch
          %6505 = sbr.rel (%p6503) target = $region112
        $region111: #{tpu_custom_call.1} parent=107 // pred_region
          %s6506 = sand.u32 %s383, 1
          %s6507 = scalar_lea.sflag [#allocation6], %s6506
          %s6508 = sand.u32 %s383, 1
          %s6509 = scalar_lea.vmem [#allocation12], %s6508
          %6510 = dma.done %s6507, 16
        $region112: #{tpu_custom_call.1} parent=107 // pred_fallthru
          _
      $region108: #{tpu_custom_call.1} parent=5 // pred_fallthru
        _
    $region6: #{tpu_custom_call.1} parent=1 // loop_footer
      %s32 = sadd.s32 1, %s28
    $region7: #{tpu_custom_call.1} parent=1 // loop_footer_branch
      %27 = sbr.rel target = $region3
    $region8: #{tpu_custom_call.1} parent=1 // loop_exit
      _
    %6511 = vsyncpa [#allocation5], 1
    %s6512 = scalar_lea.sflag [#allocation5], 1
    %6513 = vsyncpa %s6512, 1
    %6514 = vsyncpa [#allocation8], 1
    %6515 = vsyncpa [#allocation11], 1
    %6516 = vsyncpa [#allocation6], 1
    %s6517 = scalar_lea.sflag [#allocation6], 1
    %6518 = vsyncpa %s6517, 1

</llo_original>
